<compile_context>
chip_gen: v6e
topology: v6e:2x2x1
jax: 0.10.0
libtpu: 0.0.40
codegen_flags: <defaults>
</compile_context>

<pallas_src>
import jax
import jax.numpy as jnp
from jax.experimental import pallas as pl
from jax.experimental.pallas import tpu as pltpu

# ---- model hyper-parameters (mirrors eegSexNet.__init__) --------------------
K = 7                         # Conv1d kernel_size
DIL = 3                       # Conv1d dilation
C1 = 32                       # conv1 out_channels
C2 = 64                       # conv2 / residual channels
FC_HIDDEN = 100               # first Linear out_features
FC_PAD = 128                  # hidden dim padded to a full lane width
PAD = (K - 1) * DIL // 2      # = 9, 'same' padding for the residual convs


def _conv_len(L):
    # valid (padding=0) dilated conv output length
    return L - (K - 1) * DIL


# ---------------------------- fused kernel ----------------------------------
def fused_kernel(x_ref, w1_ref, b1_ref, w2_ref, b2_ref,
                 rw1_ref, rb1_ref, rw2_ref, rb2_ref,
                 fw1_ref, fb1_ref, fw2_ref, fb2_ref,
                 out_ref, pad_ref):
    L = x_ref.shape[1]
    L1 = _conv_len(L)
    L2 = _conv_len(L1)

    def folded_conv(taps, w_ref, b_ref):
        # taps: K bf16 (C_in, L_out) lane-shifted slices; stack along the
        # contraction (sublane) axis -> single deep-contraction MXU dot.
        stacked = jnp.concatenate(taps, axis=0)              # (K*C_in, L_out)
        acc = jnp.dot(w_ref[...], stacked,
                      preferred_element_type=jnp.float32)    # (C_out, L_out) f32
        return acc + b_ref[...]

    # ---- CNN: two valid dilated convs, tap-folded ---------------------------
    xb = x_ref[...].astype(jnp.bfloat16)                     # (C_in, L)
    h1 = jnp.maximum(
        folded_conv([xb[:, k * DIL:k * DIL + L1] for k in range(K)],
                    w1_ref, b1_ref), 0.0)                    # (32, L1) f32
    h1b = h1.astype(jnp.bfloat16)
    h2 = jnp.maximum(
        folded_conv([h1b[:, k * DIL:k * DIL + L2] for k in range(K)],
                    w2_ref, b2_ref), 0.0)                    # (64, L2) f32

    # ---- Residual block: 'same' padding via a zero-edged VMEM scratch -------
    pad_ref[...] = jnp.zeros(pad_ref.shape, pad_ref.dtype)   # (C2, L2 + 2*PAD)

    def same_conv(w_ref, b_ref):
        taps = [pad_ref[:, k * DIL:k * DIL + L2] for k in range(K)]
        return folded_conv(taps, w_ref, b_ref)

    pad_ref[:, PAD:PAD + L2] = h2.astype(jnp.bfloat16)
    r1 = jnp.maximum(same_conv(rw1_ref, rb1_ref), 0.0)       # (64, L2) f32
    pad_ref[:, PAD:PAD + L2] = r1.astype(jnp.bfloat16)
    r2 = same_conv(rw2_ref, rb2_ref)
    feat = jnp.maximum(h2 + r2, 0.0).astype(jnp.bfloat16)    # (64, L2)

    # ---- FC head, fused per sample ------------------------------------------
    # The torch flatten features.view(N, -1) (row-major over (C, L)) is folded
    # into the FC1 weight layout: fw1[c, l, j] == torch_fc1.weight[j, c*L2 + l].
    # The (c, l) contraction is issued as C2 chunks of depth L2, which avoids a
    # sublane->lane flatten relayout of feat inside the kernel.
    h = fb1_ref[...]                                         # (1, FC_PAD) f32
    for c in range(C2):
        h = h + jnp.dot(feat[c:c + 1, :], fw1_ref[c],
                        preferred_element_type=jnp.float32)
    h = jnp.maximum(h, 0.0)                                  # (1, FC_PAD)
    score = jnp.dot(h, fw2_ref[...],
                    preferred_element_type=jnp.float32) + fb2_ref[...]  # (1, 1)
    sig = 1.0 / (1.0 + jnp.exp(-score))                      # exact sigmoid
    out_ref[...] = jnp.broadcast_to(sig, out_ref.shape)      # lane-dense store


# ---------------------------- params ----------------------------------------
def init_params(key, c_in, L):
    L2 = _conv_len(_conv_len(L))
    ks = jax.random.split(key, 12)

    def w(k, shape, fan_in, dtype=jnp.float32):
        v = jax.random.normal(k, shape, jnp.float32) / jnp.sqrt(float(fan_in))
        return v.astype(dtype)

    params = dict(
        # Conv weights tap-folded: w[co, k*C_in + ci] == torch_conv.weight[co, ci, k]
        w1=w(ks[0], (C1, K * c_in), c_in * K, jnp.bfloat16),
        b1=w(ks[1], (C1, 1), c_in * K),
        w2=w(ks[2], (C2, K * C1), C1 * K, jnp.bfloat16),
        b2=w(ks[3], (C2, 1), C1 * K),
        rw1=w(ks[4], (C2, K * C2), C2 * K, jnp.bfloat16),
        rb1=w(ks[5], (C2, 1), C2 * K),
        rw2=w(ks[6], (C2, K * C2), C2 * K, jnp.bfloat16),
        rb2=w(ks[7], (C2, 1), C2 * K),
    )
    # FC1 (torch weight (100, C2*L2)) stored once, pre-laid-out as (C2, L2, 128)
    # bf16 with the hidden axis zero-padded 100 -> 128; bias padded to (1, 128).
    fw1 = w(ks[8], (C2, L2, FC_HIDDEN), C2 * L2)
    params["fw1"] = jnp.pad(
        fw1, ((0, 0), (0, 0), (0, FC_PAD - FC_HIDDEN))).astype(jnp.bfloat16)
    params["fb1"] = jnp.pad(w(ks[9], (1, FC_HIDDEN), C2 * L2),
                            ((0, 0), (0, FC_PAD - FC_HIDDEN)))
    # FC2 (torch weight (1, 100)) stored as (128, 1); rows >= 100 are zero.
    params["fw2"] = jnp.pad(w(ks[10], (FC_HIDDEN, 1), FC_HIDDEN),
                            ((0, FC_PAD - FC_HIDDEN), (0, 0)))
    params["fb2"] = w(ks[11], (1, 1), FC_HIDDEN)
    return params


# ---------------------------- wrapper ----------------------------------------
def eeg_sex_net_forward(x, params):
    N, c_in, L = x.shape
    L2 = _conv_len(_conv_len(L))
    p = params

    const2d = lambda n: (0, 0)
    const3d = lambda n: (0, 0, 0)

    # TODO(synk): for long recordings on v7x, add an L-tile grid axis with a
    # 36-sample halo and K-tile the FC1 reduction so fw1 need not be fully
    # VMEM-resident.
    scores = pl.pallas_call(
        fused_kernel,
        out_shape=jax.ShapeDtypeStruct((N, 1, FC_PAD), jnp.float32),
        grid=(N,),
        in_specs=[
            pl.BlockSpec((None, c_in, L), lambda n: (n, 0, 0)),   # x: one sample
            pl.BlockSpec((C1, K * c_in), const2d),                # w1
            pl.BlockSpec((C1, 1), const2d),                       # b1
            pl.BlockSpec((C2, K * C1), const2d),                  # w2
            pl.BlockSpec((C2, 1), const2d),                       # b2
            pl.BlockSpec((C2, K * C2), const2d),                  # rw1
            pl.BlockSpec((C2, 1), const2d),                       # rb1
            pl.BlockSpec((C2, K * C2), const2d),                  # rw2
            pl.BlockSpec((C2, 1), const2d),                       # rb2
            pl.BlockSpec((C2, L2, FC_PAD), const3d),              # fw1 (resident)
            pl.BlockSpec((1, FC_PAD), const2d),                   # fb1
            pl.BlockSpec((FC_PAD, 1), const2d),                   # fw2
            pl.BlockSpec((1, 1), const2d),                        # fb2
        ],
        out_specs=pl.BlockSpec((None, 1, FC_PAD), lambda n: (n, 0, 0)),
        scratch_shapes=[pltpu.VMEM((C2, L2 + 2 * PAD), jnp.bfloat16)],
        compiler_params=pltpu.CompilerParams(
            dimension_semantics=("parallel",)),
    )(x, p["w1"], p["b1"], p["w2"], p["b2"],
      p["rw1"], p["rb1"], p["rw2"], p["rb2"],
      p["fw1"], p["fb1"], p["fw2"], p["fb2"])

    # lane 0 holds the score; match torch.squeeze(scores) on the (N, 1) result
    return jnp.squeeze(scores[:, 0, 0])


if __name__ == "__main__":
    key = jax.random.PRNGKey(0)
    kx, kp = jax.random.split(key)

    # small shapes consistent with nn.Conv1d input (N, C, L); L must exceed 36
    N, C_IN, L = 2, 4, 64
    x = jax.random.normal(kx, (N, C_IN, L), jnp.float32)
    params = init_params(kp, C_IN, L)

    fwd = jax.jit(eeg_sex_net_forward)
    out = jax.block_until_ready(fwd(x, params))

    assert out.shape == (N,), out.shape
    assert bool(jnp.all(jnp.isfinite(out)))
    assert bool(jnp.all((out >= 0.0) & (out <= 1.0)))
    print("KERNEL_OK")
</pallas_src>

<mosaic_0001>
module attributes {stable_mosaic.version = 11 : i64} {
  func.func @fused_kernel(%arg0: i32, %arg1: memref<1x4x64xf32, #tpu.memory_space<vmem>>, %arg2: memref<32x28xbf16, #tpu.memory_space<vmem>>, %arg3: memref<32x1xf32, #tpu.memory_space<vmem>>, %arg4: memref<64x224xbf16, #tpu.memory_space<vmem>>, %arg5: memref<64x1xf32, #tpu.memory_space<vmem>>, %arg6: memref<64x448xbf16, #tpu.memory_space<vmem>>, %arg7: memref<64x1xf32, #tpu.memory_space<vmem>>, %arg8: memref<64x448xbf16, #tpu.memory_space<vmem>>, %arg9: memref<64x1xf32, #tpu.memory_space<vmem>>, %arg10: memref<64x28x128xbf16, #tpu.memory_space<vmem>>, %arg11: memref<1x128xf32, #tpu.memory_space<vmem>>, %arg12: memref<128x1xf32, #tpu.memory_space<vmem>>, %arg13: memref<1x1xf32, #tpu.memory_space<vmem>>, %arg14: memref<1x1x128xf32, #tpu.memory_space<vmem>>, %arg15: memref<64x46xbf16, #tpu.memory_space<vmem>>) attributes {dimension_semantics = [#tpu.dimension_semantics<parallel>], iteration_bounds = array<i64: 2>, scalar_prefetch = 0 : i64, scratch_operands = 1 : i64, tpu.core_type = #tpu.core_type<tc>, window_params = [{transform_indices = @transform_0, window_bounds = array<i64: 1, 4, 64>}, {pipeline_mode = #tpu.pipeline_mode<synchronous>, transform_indices = @transform_1, window_bounds = array<i64: 32, 28>}, {pipeline_mode = #tpu.pipeline_mode<synchronous>, transform_indices = @transform_2, window_bounds = array<i64: 32, 1>}, {pipeline_mode = #tpu.pipeline_mode<synchronous>, transform_indices = @transform_3, window_bounds = array<i64: 64, 224>}, {pipeline_mode = #tpu.pipeline_mode<synchronous>, transform_indices = @transform_4, window_bounds = array<i64: 64, 1>}, {pipeline_mode = #tpu.pipeline_mode<synchronous>, transform_indices = @transform_5, window_bounds = array<i64: 64, 448>}, {pipeline_mode = #tpu.pipeline_mode<synchronous>, transform_indices = @transform_6, window_bounds = array<i64: 64, 1>}, {pipeline_mode = #tpu.pipeline_mode<synchronous>, transform_indices = @transform_7, window_bounds = array<i64: 64, 448>}, {pipeline_mode = #tpu.pipeline_mode<synchronous>, transform_indices = @transform_8, window_bounds = array<i64: 64, 1>}, {pipeline_mode = #tpu.pipeline_mode<synchronous>, transform_indices = @transform_9, window_bounds = array<i64: 64, 28, 128>}, {pipeline_mode = #tpu.pipeline_mode<synchronous>, transform_indices = @transform_10, window_bounds = array<i64: 1, 128>}, {pipeline_mode = #tpu.pipeline_mode<synchronous>, transform_indices = @transform_11, window_bounds = array<i64: 128, 1>}, {pipeline_mode = #tpu.pipeline_mode<synchronous>, transform_indices = @transform_12, window_bounds = array<i64: 1, 1>}, {transform_indices = @transform_13, window_bounds = array<i64: 1, 1, 128>}]} {
    %c0 = arith.constant 0 : index
    %c0_0 = arith.constant 0 : index
    %c0_1 = arith.constant 0 : index
    %0 = vector.load %arg1[%c0, %c0_0, %c0_1] : memref<1x4x64xf32, #tpu.memory_space<vmem>>, vector<1x4x64xf32>
    %1 = vector.shape_cast %0 : vector<1x4x64xf32> to vector<4x64xf32>
    %2 = arith.truncf %1 : vector<4x64xf32> to vector<4x64xbf16>
    %3 = vector.extract_strided_slice %2 {offsets = [0, 0], sizes = [4, 46], strides = [1, 1]} : vector<4x64xbf16> to vector<4x46xbf16>
    %4 = vector.extract_strided_slice %2 {offsets = [0, 3], sizes = [4, 46], strides = [1, 1]} : vector<4x64xbf16> to vector<4x46xbf16>
    %5 = vector.extract_strided_slice %2 {offsets = [0, 6], sizes = [4, 46], strides = [1, 1]} : vector<4x64xbf16> to vector<4x46xbf16>
    %6 = vector.extract_strided_slice %2 {offsets = [0, 9], sizes = [4, 46], strides = [1, 1]} : vector<4x64xbf16> to vector<4x46xbf16>
    %7 = vector.extract_strided_slice %2 {offsets = [0, 12], sizes = [4, 46], strides = [1, 1]} : vector<4x64xbf16> to vector<4x46xbf16>
    %8 = vector.extract_strided_slice %2 {offsets = [0, 15], sizes = [4, 46], strides = [1, 1]} : vector<4x64xbf16> to vector<4x46xbf16>
    %9 = vector.extract_strided_slice %2 {offsets = [0, 18], sizes = [4, 46], strides = [1, 1]} : vector<4x64xbf16> to vector<4x46xbf16>
    %10 = tpu.concatenate %3, %4, %5, %6, %7, %8, %9 in 0 : vector<4x46xbf16>, vector<4x46xbf16>, vector<4x46xbf16>, vector<4x46xbf16>, vector<4x46xbf16>, vector<4x46xbf16>, vector<4x46xbf16> -> vector<28x46xbf16>
    %c0_2 = arith.constant 0 : index
    %c0_3 = arith.constant 0 : index
    %11 = vector.load %arg2[%c0_2, %c0_3] : memref<32x28xbf16, #tpu.memory_space<vmem>>, vector<32x28xbf16>
    %cst = arith.constant dense<0.000000e+00> : vector<32x46xf32>
    %12 = tpu.matmul %11, %10, %cst {dimension_numbers = #tpu.dot_dimension_numbers<[1], [0], [0], [1], [0, 0, 1, 1], [], []>} : vector<32x28xbf16>, vector<28x46xbf16>, vector<32x46xf32> -> vector<32x46xf32>
    %c0_4 = arith.constant 0 : index
    %c0_5 = arith.constant 0 : index
    %13 = vector.load %arg3[%c0_4, %c0_5] : memref<32x1xf32, #tpu.memory_space<vmem>>, vector<32x1xf32>
    %14 = vector.broadcast %13 : vector<32x1xf32> to vector<32x46xf32>
    %15 = arith.addf %12, %14 : vector<32x46xf32>
    %cst_6 = arith.constant 0.000000e+00 : f32
    %16 = vector.broadcast %cst_6 : f32 to vector<32x46xf32>
    %17 = arith.maximumf %15, %16 : vector<32x46xf32>
    %18 = arith.truncf %17 : vector<32x46xf32> to vector<32x46xbf16>
    %19 = vector.extract_strided_slice %18 {offsets = [0, 0], sizes = [32, 28], strides = [1, 1]} : vector<32x46xbf16> to vector<32x28xbf16>
    %20 = vector.extract_strided_slice %18 {offsets = [0, 3], sizes = [32, 28], strides = [1, 1]} : vector<32x46xbf16> to vector<32x28xbf16>
    %21 = vector.extract_strided_slice %18 {offsets = [0, 6], sizes = [32, 28], strides = [1, 1]} : vector<32x46xbf16> to vector<32x28xbf16>
    %22 = vector.extract_strided_slice %18 {offsets = [0, 9], sizes = [32, 28], strides = [1, 1]} : vector<32x46xbf16> to vector<32x28xbf16>
    %23 = vector.extract_strided_slice %18 {offsets = [0, 12], sizes = [32, 28], strides = [1, 1]} : vector<32x46xbf16> to vector<32x28xbf16>
    %24 = vector.extract_strided_slice %18 {offsets = [0, 15], sizes = [32, 28], strides = [1, 1]} : vector<32x46xbf16> to vector<32x28xbf16>
    %25 = vector.extract_strided_slice %18 {offsets = [0, 18], sizes = [32, 28], strides = [1, 1]} : vector<32x46xbf16> to vector<32x28xbf16>
    %26 = tpu.concatenate %19, %20, %21, %22, %23, %24, %25 in 0 : vector<32x28xbf16>, vector<32x28xbf16>, vector<32x28xbf16>, vector<32x28xbf16>, vector<32x28xbf16>, vector<32x28xbf16>, vector<32x28xbf16> -> vector<224x28xbf16>
    %c0_7 = arith.constant 0 : index
    %c0_8 = arith.constant 0 : index
    %27 = vector.load %arg4[%c0_7, %c0_8] : memref<64x224xbf16, #tpu.memory_space<vmem>>, vector<64x224xbf16>
    %cst_9 = arith.constant dense<0.000000e+00> : vector<64x28xf32>
    %28 = tpu.matmul %27, %26, %cst_9 {dimension_numbers = #tpu.dot_dimension_numbers<[1], [0], [0], [1], [0, 0, 1, 1], [], []>} : vector<64x224xbf16>, vector<224x28xbf16>, vector<64x28xf32> -> vector<64x28xf32>
    %c0_10 = arith.constant 0 : index
    %c0_11 = arith.constant 0 : index
    %29 = vector.load %arg5[%c0_10, %c0_11] : memref<64x1xf32, #tpu.memory_space<vmem>>, vector<64x1xf32>
    %30 = vector.broadcast %29 : vector<64x1xf32> to vector<64x28xf32>
    %31 = arith.addf %28, %30 : vector<64x28xf32>
    %cst_12 = arith.constant 0.000000e+00 : f32
    %32 = vector.broadcast %cst_12 : f32 to vector<64x28xf32>
    %33 = arith.maximumf %31, %32 : vector<64x28xf32>
    %cst_13 = arith.constant 0.000000e+00 : bf16
    %34 = vector.broadcast %cst_13 : bf16 to vector<64x46xbf16>
    %c0_14 = arith.constant 0 : index
    %c0_15 = arith.constant 0 : index
    %35 = vector.load %arg15[%c0_14, %c0_15] : memref<64x46xbf16, #tpu.memory_space<vmem>>, vector<64x46xbf16>
    tpu.vector_store %arg15[%c0_14, %c0_15], %34 {strides = array<i32>} : memref<64x46xbf16, #tpu.memory_space<vmem>>, vector<64x46xbf16>,
    %36 = arith.truncf %33 : vector<64x28xf32> to vector<64x28xbf16>
    %c0_16 = arith.constant 0 : index
    %c9 = arith.constant 9 : index
    %37 = vector.load %arg15[%c0_16, %c9] : memref<64x46xbf16, #tpu.memory_space<vmem>>, vector<64x28xbf16>
    tpu.vector_store %arg15[%c0_16, %c9], %36 {strides = array<i32>} : memref<64x46xbf16, #tpu.memory_space<vmem>>, vector<64x28xbf16>,
    %c0_17 = arith.constant 0 : index
    %c0_18 = arith.constant 0 : index
    %38 = vector.load %arg15[%c0_17, %c0_18] : memref<64x46xbf16, #tpu.memory_space<vmem>>, vector<64x28xbf16>
    %c0_19 = arith.constant 0 : index
    %c3 = arith.constant 3 : index
    %39 = vector.load %arg15[%c0_19, %c3] : memref<64x46xbf16, #tpu.memory_space<vmem>>, vector<64x28xbf16>
    %c0_20 = arith.constant 0 : index
    %c6 = arith.constant 6 : index
    %40 = vector.load %arg15[%c0_20, %c6] : memref<64x46xbf16, #tpu.memory_space<vmem>>, vector<64x28xbf16>
    %c0_21 = arith.constant 0 : index
    %c9_22 = arith.constant 9 : index
    %41 = vector.load %arg15[%c0_21, %c9_22] : memref<64x46xbf16, #tpu.memory_space<vmem>>, vector<64x28xbf16>
    %c0_23 = arith.constant 0 : index
    %c12 = arith.constant 12 : index
    %42 = vector.load %arg15[%c0_23, %c12] : memref<64x46xbf16, #tpu.memory_space<vmem>>, vector<64x28xbf16>
    %c0_24 = arith.constant 0 : index
    %c15 = arith.constant 15 : index
    %43 = vector.load %arg15[%c0_24, %c15] : memref<64x46xbf16, #tpu.memory_space<vmem>>, vector<64x28xbf16>
    %c0_25 = arith.constant 0 : index
    %c18 = arith.constant 18 : index
    %44 = vector.load %arg15[%c0_25, %c18] : memref<64x46xbf16, #tpu.memory_space<vmem>>, vector<64x28xbf16>
    %45 = tpu.concatenate %38, %39, %40, %41, %42, %43, %44 in 0 : vector<64x28xbf16>, vector<64x28xbf16>, vector<64x28xbf16>, vector<64x28xbf16>, vector<64x28xbf16>, vector<64x28xbf16>, vector<64x28xbf16> -> vector<448x28xbf16>
    %c0_26 = arith.constant 0 : index
    %c0_27 = arith.constant 0 : index
    %46 = vector.load %arg6[%c0_26, %c0_27] : memref<64x448xbf16, #tpu.memory_space<vmem>>, vector<64x448xbf16>
    %cst_28 = arith.constant dense<0.000000e+00> : vector<64x28xf32>
    %47 = tpu.matmul %46, %45, %cst_28 {dimension_numbers = #tpu.dot_dimension_numbers<[1], [0], [0], [1], [0, 0, 1, 1], [], []>} : vector<64x448xbf16>, vector<448x28xbf16>, vector<64x28xf32> -> vector<64x28xf32>
    %c0_29 = arith.constant 0 : index
    %c0_30 = arith.constant 0 : index
    %48 = vector.load %arg7[%c0_29, %c0_30] : memref<64x1xf32, #tpu.memory_space<vmem>>, vector<64x1xf32>
    %49 = vector.broadcast %48 : vector<64x1xf32> to vector<64x28xf32>
    %50 = arith.addf %47, %49 : vector<64x28xf32>
    %cst_31 = arith.constant 0.000000e+00 : f32
    %51 = vector.broadcast %cst_31 : f32 to vector<64x28xf32>
    %52 = arith.maximumf %50, %51 : vector<64x28xf32>
    %53 = arith.truncf %52 : vector<64x28xf32> to vector<64x28xbf16>
    %c0_32 = arith.constant 0 : index
    %c9_33 = arith.constant 9 : index
    %54 = vector.load %arg15[%c0_32, %c9_33] : memref<64x46xbf16, #tpu.memory_space<vmem>>, vector<64x28xbf16>
    tpu.vector_store %arg15[%c0_32, %c9_33], %53 {strides = array<i32>} : memref<64x46xbf16, #tpu.memory_space<vmem>>, vector<64x28xbf16>,
    %c0_34 = arith.constant 0 : index
    %c0_35 = arith.constant 0 : index
    %55 = vector.load %arg15[%c0_34, %c0_35] : memref<64x46xbf16, #tpu.memory_space<vmem>>, vector<64x28xbf16>
    %c0_36 = arith.constant 0 : index
    %c3_37 = arith.constant 3 : index
    %56 = vector.load %arg15[%c0_36, %c3_37] : memref<64x46xbf16, #tpu.memory_space<vmem>>, vector<64x28xbf16>
    %c0_38 = arith.constant 0 : index
    %c6_39 = arith.constant 6 : index
    %57 = vector.load %arg15[%c0_38, %c6_39] : memref<64x46xbf16, #tpu.memory_space<vmem>>, vector<64x28xbf16>
    %c0_40 = arith.constant 0 : index
    %c9_41 = arith.constant 9 : index
    %58 = vector.load %arg15[%c0_40, %c9_41] : memref<64x46xbf16, #tpu.memory_space<vmem>>, vector<64x28xbf16>
    %c0_42 = arith.constant 0 : index
    %c12_43 = arith.constant 12 : index
    %59 = vector.load %arg15[%c0_42, %c12_43] : memref<64x46xbf16, #tpu.memory_space<vmem>>, vector<64x28xbf16>
    %c0_44 = arith.constant 0 : index
    %c15_45 = arith.constant 15 : index
    %60 = vector.load %arg15[%c0_44, %c15_45] : memref<64x46xbf16, #tpu.memory_space<vmem>>, vector<64x28xbf16>
    %c0_46 = arith.constant 0 : index
    %c18_47 = arith.constant 18 : index
    %61 = vector.load %arg15[%c0_46, %c18_47] : memref<64x46xbf16, #tpu.memory_space<vmem>>, vector<64x28xbf16>
    %62 = tpu.concatenate %55, %56, %57, %58, %59, %60, %61 in 0 : vector<64x28xbf16>, vector<64x28xbf16>, vector<64x28xbf16>, vector<64x28xbf16>, vector<64x28xbf16>, vector<64x28xbf16>, vector<64x28xbf16> -> vector<448x28xbf16>
    %c0_48 = arith.constant 0 : index
    %c0_49 = arith.constant 0 : index
    %63 = vector.load %arg8[%c0_48, %c0_49] : memref<64x448xbf16, #tpu.memory_space<vmem>>, vector<64x448xbf16>
    %cst_50 = arith.constant dense<0.000000e+00> : vector<64x28xf32>
    %64 = tpu.matmul %63, %62, %cst_50 {dimension_numbers = #tpu.dot_dimension_numbers<[1], [0], [0], [1], [0, 0, 1, 1], [], []>} : vector<64x448xbf16>, vector<448x28xbf16>, vector<64x28xf32> -> vector<64x28xf32>
    %c0_51 = arith.constant 0 : index
    %c0_52 = arith.constant 0 : index
    %65 = vector.load %arg9[%c0_51, %c0_52] : memref<64x1xf32, #tpu.memory_space<vmem>>, vector<64x1xf32>
    %66 = vector.broadcast %65 : vector<64x1xf32> to vector<64x28xf32>
    %67 = arith.addf %64, %66 : vector<64x28xf32>
    %68 = arith.addf %33, %67 : vector<64x28xf32>
    %cst_53 = arith.constant 0.000000e+00 : f32
    %69 = vector.broadcast %cst_53 : f32 to vector<64x28xf32>
    %70 = arith.maximumf %68, %69 : vector<64x28xf32>
    %71 = arith.truncf %70 : vector<64x28xf32> to vector<64x28xbf16>
    %c0_54 = arith.constant 0 : index
    %c0_55 = arith.constant 0 : index
    %72 = vector.load %arg11[%c0_54, %c0_55] : memref<1x128xf32, #tpu.memory_space<vmem>>, vector<1x128xf32>
    %73 = vector.extract_strided_slice %71 {offsets = [0, 0], sizes = [1, 28], strides = [1, 1]} : vector<64x28xbf16> to vector<1x28xbf16>
    %c0_56 = arith.constant 0 : index
    %c0_57 = arith.constant 0 : index
    %c0_58 = arith.constant 0 : index
    %74 = vector.load %arg10[%c0_56, %c0_57, %c0_58] : memref<64x28x128xbf16, #tpu.memory_space<vmem>>, vector<1x28x128xbf16>
    %75 = vector.shape_cast %74 : vector<1x28x128xbf16> to vector<28x128xbf16>
    %cst_59 = arith.constant dense<0.000000e+00> : vector<1x128xf32>
    %76 = tpu.matmul %73, %75, %cst_59 {dimension_numbers = #tpu.dot_dimension_numbers<[1], [0], [0], [1], [0, 0, 1, 1], [], []>} : vector<1x28xbf16>, vector<28x128xbf16>, vector<1x128xf32> -> vector<1x128xf32>
    %77 = arith.addf %72, %76 : vector<1x128xf32>
    %78 = vector.extract_strided_slice %71 {offsets = [1, 0], sizes = [1, 28], strides = [1, 1]} : vector<64x28xbf16> to vector<1x28xbf16>
    %c1 = arith.constant 1 : index
    %c0_60 = arith.constant 0 : index
    %c0_61 = arith.constant 0 : index
    %79 = vector.load %arg10[%c1, %c0_60, %c0_61] : memref<64x28x128xbf16, #tpu.memory_space<vmem>>, vector<1x28x128xbf16>
    %80 = vector.shape_cast %79 : vector<1x28x128xbf16> to vector<28x128xbf16>
    %cst_62 = arith.constant dense<0.000000e+00> : vector<1x128xf32>
    %81 = tpu.matmul %78, %80, %cst_62 {dimension_numbers = #tpu.dot_dimension_numbers<[1], [0], [0], [1], [0, 0, 1, 1], [], []>} : vector<1x28xbf16>, vector<28x128xbf16>, vector<1x128xf32> -> vector<1x128xf32>
    %82 = arith.addf %77, %81 : vector<1x128xf32>
    %83 = vector.extract_strided_slice %71 {offsets = [2, 0], sizes = [1, 28], strides = [1, 1]} : vector<64x28xbf16> to vector<1x28xbf16>
    %c2 = arith.constant 2 : index
    %c0_63 = arith.constant 0 : index
    %c0_64 = arith.constant 0 : index
    %84 = vector.load %arg10[%c2, %c0_63, %c0_64] : memref<64x28x128xbf16, #tpu.memory_space<vmem>>, vector<1x28x128xbf16>
    %85 = vector.shape_cast %84 : vector<1x28x128xbf16> to vector<28x128xbf16>
    %cst_65 = arith.constant dense<0.000000e+00> : vector<1x128xf32>
    %86 = tpu.matmul %83, %85, %cst_65 {dimension_numbers = #tpu.dot_dimension_numbers<[1], [0], [0], [1], [0, 0, 1, 1], [], []>} : vector<1x28xbf16>, vector<28x128xbf16>, vector<1x128xf32> -> vector<1x128xf32>
    %87 = arith.addf %82, %86 : vector<1x128xf32>
    %88 = vector.extract_strided_slice %71 {offsets = [3, 0], sizes = [1, 28], strides = [1, 1]} : vector<64x28xbf16> to vector<1x28xbf16>
    %c3_66 = arith.constant 3 : index
    %c0_67 = arith.constant 0 : index
    %c0_68 = arith.constant 0 : index
    %89 = vector.load %arg10[%c3_66, %c0_67, %c0_68] : memref<64x28x128xbf16, #tpu.memory_space<vmem>>, vector<1x28x128xbf16>
    %90 = vector.shape_cast %89 : vector<1x28x128xbf16> to vector<28x128xbf16>
    %cst_69 = arith.constant dense<0.000000e+00> : vector<1x128xf32>
    %91 = tpu.matmul %88, %90, %cst_69 {dimension_numbers = #tpu.dot_dimension_numbers<[1], [0], [0], [1], [0, 0, 1, 1], [], []>} : vector<1x28xbf16>, vector<28x128xbf16>, vector<1x128xf32> -> vector<1x128xf32>
    %92 = arith.addf %87, %91 : vector<1x128xf32>
    %93 = vector.extract_strided_slice %71 {offsets = [4, 0], sizes = [1, 28], strides = [1, 1]} : vector<64x28xbf16> to vector<1x28xbf16>
    %c4 = arith.constant 4 : index
    %c0_70 = arith.constant 0 : index
    %c0_71 = arith.constant 0 : index
    %94 = vector.load %arg10[%c4, %c0_70, %c0_71] : memref<64x28x128xbf16, #tpu.memory_space<vmem>>, vector<1x28x128xbf16>
    %95 = vector.shape_cast %94 : vector<1x28x128xbf16> to vector<28x128xbf16>
    %cst_72 = arith.constant dense<0.000000e+00> : vector<1x128xf32>
    %96 = tpu.matmul %93, %95, %cst_72 {dimension_numbers = #tpu.dot_dimension_numbers<[1], [0], [0], [1], [0, 0, 1, 1], [], []>} : vector<1x28xbf16>, vector<28x128xbf16>, vector<1x128xf32> -> vector<1x128xf32>
    %97 = arith.addf %92, %96 : vector<1x128xf32>
    %98 = vector.extract_strided_slice %71 {offsets = [5, 0], sizes = [1, 28], strides = [1, 1]} : vector<64x28xbf16> to vector<1x28xbf16>
    %c5 = arith.constant 5 : index
    %c0_73 = arith.constant 0 : index
    %c0_74 = arith.constant 0 : index
    %99 = vector.load %arg10[%c5, %c0_73, %c0_74] : memref<64x28x128xbf16, #tpu.memory_space<vmem>>, vector<1x28x128xbf16>
    %100 = vector.shape_cast %99 : vector<1x28x128xbf16> to vector<28x128xbf16>
    %cst_75 = arith.constant dense<0.000000e+00> : vector<1x128xf32>
    %101 = tpu.matmul %98, %100, %cst_75 {dimension_numbers = #tpu.dot_dimension_numbers<[1], [0], [0], [1], [0, 0, 1, 1], [], []>} : vector<1x28xbf16>, vector<28x128xbf16>, vector<1x128xf32> -> vector<1x128xf32>
    %102 = arith.addf %97, %101 : vector<1x128xf32>
    %103 = vector.extract_strided_slice %71 {offsets = [6, 0], sizes = [1, 28], strides = [1, 1]} : vector<64x28xbf16> to vector<1x28xbf16>
    %c6_76 = arith.constant 6 : index
    %c0_77 = arith.constant 0 : index
    %c0_78 = arith.constant 0 : index
    %104 = vector.load %arg10[%c6_76, %c0_77, %c0_78] : memref<64x28x128xbf16, #tpu.memory_space<vmem>>, vector<1x28x128xbf16>
    %105 = vector.shape_cast %104 : vector<1x28x128xbf16> to vector<28x128xbf16>
    %cst_79 = arith.constant dense<0.000000e+00> : vector<1x128xf32>
    %106 = tpu.matmul %103, %105, %cst_79 {dimension_numbers = #tpu.dot_dimension_numbers<[1], [0], [0], [1], [0, 0, 1, 1], [], []>} : vector<1x28xbf16>, vector<28x128xbf16>, vector<1x128xf32> -> vector<1x128xf32>
    %107 = arith.addf %102, %106 : vector<1x128xf32>
    %108 = vector.extract_strided_slice %71 {offsets = [7, 0], sizes = [1, 28], strides = [1, 1]} : vector<64x28xbf16> to vector<1x28xbf16>
    %c7 = arith.constant 7 : index
    %c0_80 = arith.constant 0 : index
    %c0_81 = arith.constant 0 : index
    %109 = vector.load %arg10[%c7, %c0_80, %c0_81] : memref<64x28x128xbf16, #tpu.memory_space<vmem>>, vector<1x28x128xbf16>
    %110 = vector.shape_cast %109 : vector<1x28x128xbf16> to vector<28x128xbf16>
    %cst_82 = arith.constant dense<0.000000e+00> : vector<1x128xf32>
    %111 = tpu.matmul %108, %110, %cst_82 {dimension_numbers = #tpu.dot_dimension_numbers<[1], [0], [0], [1], [0, 0, 1, 1], [], []>} : vector<1x28xbf16>, vector<28x128xbf16>, vector<1x128xf32> -> vector<1x128xf32>
    %112 = arith.addf %107, %111 : vector<1x128xf32>
    %113 = vector.extract_strided_slice %71 {offsets = [8, 0], sizes = [1, 28], strides = [1, 1]} : vector<64x28xbf16> to vector<1x28xbf16>
    %c8 = arith.constant 8 : index
    %c0_83 = arith.constant 0 : index
    %c0_84 = arith.constant 0 : index
    %114 = vector.load %arg10[%c8, %c0_83, %c0_84] : memref<64x28x128xbf16, #tpu.memory_space<vmem>>, vector<1x28x128xbf16>
    %115 = vector.shape_cast %114 : vector<1x28x128xbf16> to vector<28x128xbf16>
    %cst_85 = arith.constant dense<0.000000e+00> : vector<1x128xf32>
    %116 = tpu.matmul %113, %115, %cst_85 {dimension_numbers = #tpu.dot_dimension_numbers<[1], [0], [0], [1], [0, 0, 1, 1], [], []>} : vector<1x28xbf16>, vector<28x128xbf16>, vector<1x128xf32> -> vector<1x128xf32>
    %117 = arith.addf %112, %116 : vector<1x128xf32>
    %118 = vector.extract_strided_slice %71 {offsets = [9, 0], sizes = [1, 28], strides = [1, 1]} : vector<64x28xbf16> to vector<1x28xbf16>
    %c9_86 = arith.constant 9 : index
    %c0_87 = arith.constant 0 : index
    %c0_88 = arith.constant 0 : index
    %119 = vector.load %arg10[%c9_86, %c0_87, %c0_88] : memref<64x28x128xbf16, #tpu.memory_space<vmem>>, vector<1x28x128xbf16>
    %120 = vector.shape_cast %119 : vector<1x28x128xbf16> to vector<28x128xbf16>
    %cst_89 = arith.constant dense<0.000000e+00> : vector<1x128xf32>
    %121 = tpu.matmul %118, %120, %cst_89 {dimension_numbers = #tpu.dot_dimension_numbers<[1], [0], [0], [1], [0, 0, 1, 1], [], []>} : vector<1x28xbf16>, vector<28x128xbf16>, vector<1x128xf32> -> vector<1x128xf32>
    %122 = arith.addf %117, %121 : vector<1x128xf32>
    %123 = vector.extract_strided_slice %71 {offsets = [10, 0], sizes = [1, 28], strides = [1, 1]} : vector<64x28xbf16> to vector<1x28xbf16>
    %c10 = arith.constant 10 : index
    %c0_90 = arith.constant 0 : index
    %c0_91 = arith.constant 0 : index
    %124 = vector.load %arg10[%c10, %c0_90, %c0_91] : memref<64x28x128xbf16, #tpu.memory_space<vmem>>, vector<1x28x128xbf16>
    %125 = vector.shape_cast %124 : vector<1x28x128xbf16> to vector<28x128xbf16>
    %cst_92 = arith.constant dense<0.000000e+00> : vector<1x128xf32>
    %126 = tpu.matmul %123, %125, %cst_92 {dimension_numbers = #tpu.dot_dimension_numbers<[1], [0], [0], [1], [0, 0, 1, 1], [], []>} : vector<1x28xbf16>, vector<28x128xbf16>, vector<1x128xf32> -> vector<1x128xf32>
    %127 = arith.addf %122, %126 : vector<1x128xf32>
    %128 = vector.extract_strided_slice %71 {offsets = [11, 0], sizes = [1, 28], strides = [1, 1]} : vector<64x28xbf16> to vector<1x28xbf16>
    %c11 = arith.constant 11 : index
    %c0_93 = arith.constant 0 : index
    %c0_94 = arith.constant 0 : index
    %129 = vector.load %arg10[%c11, %c0_93, %c0_94] : memref<64x28x128xbf16, #tpu.memory_space<vmem>>, vector<1x28x128xbf16>
    %130 = vector.shape_cast %129 : vector<1x28x128xbf16> to vector<28x128xbf16>
    %cst_95 = arith.constant dense<0.000000e+00> : vector<1x128xf32>
    %131 = tpu.matmul %128, %130, %cst_95 {dimension_numbers = #tpu.dot_dimension_numbers<[1], [0], [0], [1], [0, 0, 1, 1], [], []>} : vector<1x28xbf16>, vector<28x128xbf16>, vector<1x128xf32> -> vector<1x128xf32>
    %132 = arith.addf %127, %131 : vector<1x128xf32>
    %133 = vector.extract_strided_slice %71 {offsets = [12, 0], sizes = [1, 28], strides = [1, 1]} : vector<64x28xbf16> to vector<1x28xbf16>
    %c12_96 = arith.constant 12 : index
    %c0_97 = arith.constant 0 : index
    %c0_98 = arith.constant 0 : index
    %134 = vector.load %arg10[%c12_96, %c0_97, %c0_98] : memref<64x28x128xbf16, #tpu.memory_space<vmem>>, vector<1x28x128xbf16>
    %135 = vector.shape_cast %134 : vector<1x28x128xbf16> to vector<28x128xbf16>
    %cst_99 = arith.constant dense<0.000000e+00> : vector<1x128xf32>
    %136 = tpu.matmul %133, %135, %cst_99 {dimension_numbers = #tpu.dot_dimension_numbers<[1], [0], [0], [1], [0, 0, 1, 1], [], []>} : vector<1x28xbf16>, vector<28x128xbf16>, vector<1x128xf32> -> vector<1x128xf32>
    %137 = arith.addf %132, %136 : vector<1x128xf32>
    %138 = vector.extract_strided_slice %71 {offsets = [13, 0], sizes = [1, 28], strides = [1, 1]} : vector<64x28xbf16> to vector<1x28xbf16>
    %c13 = arith.constant 13 : index
    %c0_100 = arith.constant 0 : index
    %c0_101 = arith.constant 0 : index
    %139 = vector.load %arg10[%c13, %c0_100, %c0_101] : memref<64x28x128xbf16, #tpu.memory_space<vmem>>, vector<1x28x128xbf16>
    %140 = vector.shape_cast %139 : vector<1x28x128xbf16> to vector<28x128xbf16>
    %cst_102 = arith.constant dense<0.000000e+00> : vector<1x128xf32>
    %141 = tpu.matmul %138, %140, %cst_102 {dimension_numbers = #tpu.dot_dimension_numbers<[1], [0], [0], [1], [0, 0, 1, 1], [], []>} : vector<1x28xbf16>, vector<28x128xbf16>, vector<1x128xf32> -> vector<1x128xf32>
    %142 = arith.addf %137, %141 : vector<1x128xf32>
    %143 = vector.extract_strided_slice %71 {offsets = [14, 0], sizes = [1, 28], strides = [1, 1]} : vector<64x28xbf16> to vector<1x28xbf16>
    %c14 = arith.constant 14 : index
    %c0_103 = arith.constant 0 : index
    %c0_104 = arith.constant 0 : index
    %144 = vector.load %arg10[%c14, %c0_103, %c0_104] : memref<64x28x128xbf16, #tpu.memory_space<vmem>>, vector<1x28x128xbf16>
    %145 = vector.shape_cast %144 : vector<1x28x128xbf16> to vector<28x128xbf16>
    %cst_105 = arith.constant dense<0.000000e+00> : vector<1x128xf32>
    %146 = tpu.matmul %143, %145, %cst_105 {dimension_numbers = #tpu.dot_dimension_numbers<[1], [0], [0], [1], [0, 0, 1, 1], [], []>} : vector<1x28xbf16>, vector<28x128xbf16>, vector<1x128xf32> -> vector<1x128xf32>
    %147 = arith.addf %142, %146 : vector<1x128xf32>
    %148 = vector.extract_strided_slice %71 {offsets = [15, 0], sizes = [1, 28], strides = [1, 1]} : vector<64x28xbf16> to vector<1x28xbf16>
    %c15_106 = arith.constant 15 : index
    %c0_107 = arith.constant 0 : index
    %c0_108 = arith.constant 0 : index
    %149 = vector.load %arg10[%c15_106, %c0_107, %c0_108] : memref<64x28x128xbf16, #tpu.memory_space<vmem>>, vector<1x28x128xbf16>
    %150 = vector.shape_cast %149 : vector<1x28x128xbf16> to vector<28x128xbf16>
    %cst_109 = arith.constant dense<0.000000e+00> : vector<1x128xf32>
    %151 = tpu.matmul %148, %150, %cst_109 {dimension_numbers = #tpu.dot_dimension_numbers<[1], [0], [0], [1], [0, 0, 1, 1], [], []>} : vector<1x28xbf16>, vector<28x128xbf16>, vector<1x128xf32> -> vector<1x128xf32>
    %152 = arith.addf %147, %151 : vector<1x128xf32>
    %153 = vector.extract_strided_slice %71 {offsets = [16, 0], sizes = [1, 28], strides = [1, 1]} : vector<64x28xbf16> to vector<1x28xbf16>
    %c16 = arith.constant 16 : index
    %c0_110 = arith.constant 0 : index
    %c0_111 = arith.constant 0 : index
    %154 = vector.load %arg10[%c16, %c0_110, %c0_111] : memref<64x28x128xbf16, #tpu.memory_space<vmem>>, vector<1x28x128xbf16>
    %155 = vector.shape_cast %154 : vector<1x28x128xbf16> to vector<28x128xbf16>
    %cst_112 = arith.constant dense<0.000000e+00> : vector<1x128xf32>
    %156 = tpu.matmul %153, %155, %cst_112 {dimension_numbers = #tpu.dot_dimension_numbers<[1], [0], [0], [1], [0, 0, 1, 1], [], []>} : vector<1x28xbf16>, vector<28x128xbf16>, vector<1x128xf32> -> vector<1x128xf32>
    %157 = arith.addf %152, %156 : vector<1x128xf32>
    %158 = vector.extract_strided_slice %71 {offsets = [17, 0], sizes = [1, 28], strides = [1, 1]} : vector<64x28xbf16> to vector<1x28xbf16>
    %c17 = arith.constant 17 : index
    %c0_113 = arith.constant 0 : index
    %c0_114 = arith.constant 0 : index
    %159 = vector.load %arg10[%c17, %c0_113, %c0_114] : memref<64x28x128xbf16, #tpu.memory_space<vmem>>, vector<1x28x128xbf16>
    %160 = vector.shape_cast %159 : vector<1x28x128xbf16> to vector<28x128xbf16>
    %cst_115 = arith.constant dense<0.000000e+00> : vector<1x128xf32>
    %161 = tpu.matmul %158, %160, %cst_115 {dimension_numbers = #tpu.dot_dimension_numbers<[1], [0], [0], [1], [0, 0, 1, 1], [], []>} : vector<1x28xbf16>, vector<28x128xbf16>, vector<1x128xf32> -> vector<1x128xf32>
    %162 = arith.addf %157, %161 : vector<1x128xf32>
    %163 = vector.extract_strided_slice %71 {offsets = [18, 0], sizes = [1, 28], strides = [1, 1]} : vector<64x28xbf16> to vector<1x28xbf16>
    %c18_116 = arith.constant 18 : index
    %c0_117 = arith.constant 0 : index
    %c0_118 = arith.constant 0 : index
    %164 = vector.load %arg10[%c18_116, %c0_117, %c0_118] : memref<64x28x128xbf16, #tpu.memory_space<vmem>>, vector<1x28x128xbf16>
    %165 = vector.shape_cast %164 : vector<1x28x128xbf16> to vector<28x128xbf16>
    %cst_119 = arith.constant dense<0.000000e+00> : vector<1x128xf32>
    %166 = tpu.matmul %163, %165, %cst_119 {dimension_numbers = #tpu.dot_dimension_numbers<[1], [0], [0], [1], [0, 0, 1, 1], [], []>} : vector<1x28xbf16>, vector<28x128xbf16>, vector<1x128xf32> -> vector<1x128xf32>
    %167 = arith.addf %162, %166 : vector<1x128xf32>
    %168 = vector.extract_strided_slice %71 {offsets = [19, 0], sizes = [1, 28], strides = [1, 1]} : vector<64x28xbf16> to vector<1x28xbf16>
    %c19 = arith.constant 19 : index
    %c0_120 = arith.constant 0 : index
    %c0_121 = arith.constant 0 : index
    %169 = vector.load %arg10[%c19, %c0_120, %c0_121] : memref<64x28x128xbf16, #tpu.memory_space<vmem>>, vector<1x28x128xbf16>
    %170 = vector.shape_cast %169 : vector<1x28x128xbf16> to vector<28x128xbf16>
    %cst_122 = arith.constant dense<0.000000e+00> : vector<1x128xf32>
    %171 = tpu.matmul %168, %170, %cst_122 {dimension_numbers = #tpu.dot_dimension_numbers<[1], [0], [0], [1], [0, 0, 1, 1], [], []>} : vector<1x28xbf16>, vector<28x128xbf16>, vector<1x128xf32> -> vector<1x128xf32>
    %172 = arith.addf %167, %171 : vector<1x128xf32>
    %173 = vector.extract_strided_slice %71 {offsets = [20, 0], sizes = [1, 28], strides = [1, 1]} : vector<64x28xbf16> to vector<1x28xbf16>
    %c20 = arith.constant 20 : index
    %c0_123 = arith.constant 0 : index
    %c0_124 = arith.constant 0 : index
    %174 = vector.load %arg10[%c20, %c0_123, %c0_124] : memref<64x28x128xbf16, #tpu.memory_space<vmem>>, vector<1x28x128xbf16>
    %175 = vector.shape_cast %174 : vector<1x28x128xbf16> to vector<28x128xbf16>
    %cst_125 = arith.constant dense<0.000000e+00> : vector<1x128xf32>
    %176 = tpu.matmul %173, %175, %cst_125 {dimension_numbers = #tpu.dot_dimension_numbers<[1], [0], [0], [1], [0, 0, 1, 1], [], []>} : vector<1x28xbf16>, vector<28x128xbf16>, vector<1x128xf32> -> vector<1x128xf32>
    %177 = arith.addf %172, %176 : vector<1x128xf32>
    %178 = vector.extract_strided_slice %71 {offsets = [21, 0], sizes = [1, 28], strides = [1, 1]} : vector<64x28xbf16> to vector<1x28xbf16>
    %c21 = arith.constant 21 : index
    %c0_126 = arith.constant 0 : index
    %c0_127 = arith.constant 0 : index
    %179 = vector.load %arg10[%c21, %c0_126, %c0_127] : memref<64x28x128xbf16, #tpu.memory_space<vmem>>, vector<1x28x128xbf16>
    %180 = vector.shape_cast %179 : vector<1x28x128xbf16> to vector<28x128xbf16>
    %cst_128 = arith.constant dense<0.000000e+00> : vector<1x128xf32>
    %181 = tpu.matmul %178, %180, %cst_128 {dimension_numbers = #tpu.dot_dimension_numbers<[1], [0], [0], [1], [0, 0, 1, 1], [], []>} : vector<1x28xbf16>, vector<28x128xbf16>, vector<1x128xf32> -> vector<1x128xf32>
    %182 = arith.addf %177, %181 : vector<1x128xf32>
    %183 = vector.extract_strided_slice %71 {offsets = [22, 0], sizes = [1, 28], strides = [1, 1]} : vector<64x28xbf16> to vector<1x28xbf16>
    %c22 = arith.constant 22 : index
    %c0_129 = arith.constant 0 : index
    %c0_130 = arith.constant 0 : index
    %184 = vector.load %arg10[%c22, %c0_129, %c0_130] : memref<64x28x128xbf16, #tpu.memory_space<vmem>>, vector<1x28x128xbf16>
    %185 = vector.shape_cast %184 : vector<1x28x128xbf16> to vector<28x128xbf16>
    %cst_131 = arith.constant dense<0.000000e+00> : vector<1x128xf32>
    %186 = tpu.matmul %183, %185, %cst_131 {dimension_numbers = #tpu.dot_dimension_numbers<[1], [0], [0], [1], [0, 0, 1, 1], [], []>} : vector<1x28xbf16>, vector<28x128xbf16>, vector<1x128xf32> -> vector<1x128xf32>
    %187 = arith.addf %182, %186 : vector<1x128xf32>
    %188 = vector.extract_strided_slice %71 {offsets = [23, 0], sizes = [1, 28], strides = [1, 1]} : vector<64x28xbf16> to vector<1x28xbf16>
    %c23 = arith.constant 23 : index
    %c0_132 = arith.constant 0 : index
    %c0_133 = arith.constant 0 : index
    %189 = vector.load %arg10[%c23, %c0_132, %c0_133] : memref<64x28x128xbf16, #tpu.memory_space<vmem>>, vector<1x28x128xbf16>
    %190 = vector.shape_cast %189 : vector<1x28x128xbf16> to vector<28x128xbf16>
    %cst_134 = arith.constant dense<0.000000e+00> : vector<1x128xf32>
    %191 = tpu.matmul %188, %190, %cst_134 {dimension_numbers = #tpu.dot_dimension_numbers<[1], [0], [0], [1], [0, 0, 1, 1], [], []>} : vector<1x28xbf16>, vector<28x128xbf16>, vector<1x128xf32> -> vector<1x128xf32>
    %192 = arith.addf %187, %191 : vector<1x128xf32>
    %193 = vector.extract_strided_slice %71 {offsets = [24, 0], sizes = [1, 28], strides = [1, 1]} : vector<64x28xbf16> to vector<1x28xbf16>
    %c24 = arith.constant 24 : index
    %c0_135 = arith.constant 0 : index
    %c0_136 = arith.constant 0 : index
    %194 = vector.load %arg10[%c24, %c0_135, %c0_136] : memref<64x28x128xbf16, #tpu.memory_space<vmem>>, vector<1x28x128xbf16>
    %195 = vector.shape_cast %194 : vector<1x28x128xbf16> to vector<28x128xbf16>
    %cst_137 = arith.constant dense<0.000000e+00> : vector<1x128xf32>
    %196 = tpu.matmul %193, %195, %cst_137 {dimension_numbers = #tpu.dot_dimension_numbers<[1], [0], [0], [1], [0, 0, 1, 1], [], []>} : vector<1x28xbf16>, vector<28x128xbf16>, vector<1x128xf32> -> vector<1x128xf32>
    %197 = arith.addf %192, %196 : vector<1x128xf32>
    %198 = vector.extract_strided_slice %71 {offsets = [25, 0], sizes = [1, 28], strides = [1, 1]} : vector<64x28xbf16> to vector<1x28xbf16>
    %c25 = arith.constant 25 : index
    %c0_138 = arith.constant 0 : index
    %c0_139 = arith.constant 0 : index
    %199 = vector.load %arg10[%c25, %c0_138, %c0_139] : memref<64x28x128xbf16, #tpu.memory_space<vmem>>, vector<1x28x128xbf16>
    %200 = vector.shape_cast %199 : vector<1x28x128xbf16> to vector<28x128xbf16>
    %cst_140 = arith.constant dense<0.000000e+00> : vector<1x128xf32>
    %201 = tpu.matmul %198, %200, %cst_140 {dimension_numbers = #tpu.dot_dimension_numbers<[1], [0], [0], [1], [0, 0, 1, 1], [], []>} : vector<1x28xbf16>, vector<28x128xbf16>, vector<1x128xf32> -> vector<1x128xf32>
    %202 = arith.addf %197, %201 : vector<1x128xf32>
    %203 = vector.extract_strided_slice %71 {offsets = [26, 0], sizes = [1, 28], strides = [1, 1]} : vector<64x28xbf16> to vector<1x28xbf16>
    %c26 = arith.constant 26 : index
    %c0_141 = arith.constant 0 : index
    %c0_142 = arith.constant 0 : index
    %204 = vector.load %arg10[%c26, %c0_141, %c0_142] : memref<64x28x128xbf16, #tpu.memory_space<vmem>>, vector<1x28x128xbf16>
    %205 = vector.shape_cast %204 : vector<1x28x128xbf16> to vector<28x128xbf16>
    %cst_143 = arith.constant dense<0.000000e+00> : vector<1x128xf32>
    %206 = tpu.matmul %203, %205, %cst_143 {dimension_numbers = #tpu.dot_dimension_numbers<[1], [0], [0], [1], [0, 0, 1, 1], [], []>} : vector<1x28xbf16>, vector<28x128xbf16>, vector<1x128xf32> -> vector<1x128xf32>
    %207 = arith.addf %202, %206 : vector<1x128xf32>
    %208 = vector.extract_strided_slice %71 {offsets = [27, 0], sizes = [1, 28], strides = [1, 1]} : vector<64x28xbf16> to vector<1x28xbf16>
    %c27 = arith.constant 27 : index
    %c0_144 = arith.constant 0 : index
    %c0_145 = arith.constant 0 : index
    %209 = vector.load %arg10[%c27, %c0_144, %c0_145] : memref<64x28x128xbf16, #tpu.memory_space<vmem>>, vector<1x28x128xbf16>
    %210 = vector.shape_cast %209 : vector<1x28x128xbf16> to vector<28x128xbf16>
    %cst_146 = arith.constant dense<0.000000e+00> : vector<1x128xf32>
    %211 = tpu.matmul %208, %210, %cst_146 {dimension_numbers = #tpu.dot_dimension_numbers<[1], [0], [0], [1], [0, 0, 1, 1], [], []>} : vector<1x28xbf16>, vector<28x128xbf16>, vector<1x128xf32> -> vector<1x128xf32>
    %212 = arith.addf %207, %211 : vector<1x128xf32>
    %213 = vector.extract_strided_slice %71 {offsets = [28, 0], sizes = [1, 28], strides = [1, 1]} : vector<64x28xbf16> to vector<1x28xbf16>
    %c28 = arith.constant 28 : index
    %c0_147 = arith.constant 0 : index
    %c0_148 = arith.constant 0 : index
    %214 = vector.load %arg10[%c28, %c0_147, %c0_148] : memref<64x28x128xbf16, #tpu.memory_space<vmem>>, vector<1x28x128xbf16>
    %215 = vector.shape_cast %214 : vector<1x28x128xbf16> to vector<28x128xbf16>
    %cst_149 = arith.constant dense<0.000000e+00> : vector<1x128xf32>
    %216 = tpu.matmul %213, %215, %cst_149 {dimension_numbers = #tpu.dot_dimension_numbers<[1], [0], [0], [1], [0, 0, 1, 1], [], []>} : vector<1x28xbf16>, vector<28x128xbf16>, vector<1x128xf32> -> vector<1x128xf32>
    %217 = arith.addf %212, %216 : vector<1x128xf32>
    %218 = vector.extract_strided_slice %71 {offsets = [29, 0], sizes = [1, 28], strides = [1, 1]} : vector<64x28xbf16> to vector<1x28xbf16>
    %c29 = arith.constant 29 : index
    %c0_150 = arith.constant 0 : index
    %c0_151 = arith.constant 0 : index
    %219 = vector.load %arg10[%c29, %c0_150, %c0_151] : memref<64x28x128xbf16, #tpu.memory_space<vmem>>, vector<1x28x128xbf16>
    %220 = vector.shape_cast %219 : vector<1x28x128xbf16> to vector<28x128xbf16>
    %cst_152 = arith.constant dense<0.000000e+00> : vector<1x128xf32>
    %221 = tpu.matmul %218, %220, %cst_152 {dimension_numbers = #tpu.dot_dimension_numbers<[1], [0], [0], [1], [0, 0, 1, 1], [], []>} : vector<1x28xbf16>, vector<28x128xbf16>, vector<1x128xf32> -> vector<1x128xf32>
    %222 = arith.addf %217, %221 : vector<1x128xf32>
    %223 = vector.extract_strided_slice %71 {offsets = [30, 0], sizes = [1, 28], strides = [1, 1]} : vector<64x28xbf16> to vector<1x28xbf16>
    %c30 = arith.constant 30 : index
    %c0_153 = arith.constant 0 : index
    %c0_154 = arith.constant 0 : index
    %224 = vector.load %arg10[%c30, %c0_153, %c0_154] : memref<64x28x128xbf16, #tpu.memory_space<vmem>>, vector<1x28x128xbf16>
    %225 = vector.shape_cast %224 : vector<1x28x128xbf16> to vector<28x128xbf16>
    %cst_155 = arith.constant dense<0.000000e+00> : vector<1x128xf32>
    %226 = tpu.matmul %223, %225, %cst_155 {dimension_numbers = #tpu.dot_dimension_numbers<[1], [0], [0], [1], [0, 0, 1, 1], [], []>} : vector<1x28xbf16>, vector<28x128xbf16>, vector<1x128xf32> -> vector<1x128xf32>
    %227 = arith.addf %222, %226 : vector<1x128xf32>
    %228 = vector.extract_strided_slice %71 {offsets = [31, 0], sizes = [1, 28], strides = [1, 1]} : vector<64x28xbf16> to vector<1x28xbf16>
    %c31 = arith.constant 31 : index
    %c0_156 = arith.constant 0 : index
    %c0_157 = arith.constant 0 : index
    %229 = vector.load %arg10[%c31, %c0_156, %c0_157] : memref<64x28x128xbf16, #tpu.memory_space<vmem>>, vector<1x28x128xbf16>
    %230 = vector.shape_cast %229 : vector<1x28x128xbf16> to vector<28x128xbf16>
    %cst_158 = arith.constant dense<0.000000e+00> : vector<1x128xf32>
    %231 = tpu.matmul %228, %230, %cst_158 {dimension_numbers = #tpu.dot_dimension_numbers<[1], [0], [0], [1], [0, 0, 1, 1], [], []>} : vector<1x28xbf16>, vector<28x128xbf16>, vector<1x128xf32> -> vector<1x128xf32>
    %232 = arith.addf %227, %231 : vector<1x128xf32>
    %233 = vector.extract_strided_slice %71 {offsets = [32, 0], sizes = [1, 28], strides = [1, 1]} : vector<64x28xbf16> to vector<1x28xbf16>
    %c32 = arith.constant 32 : index
    %c0_159 = arith.constant 0 : index
    %c0_160 = arith.constant 0 : index
    %234 = vector.load %arg10[%c32, %c0_159, %c0_160] : memref<64x28x128xbf16, #tpu.memory_space<vmem>>, vector<1x28x128xbf16>
    %235 = vector.shape_cast %234 : vector<1x28x128xbf16> to vector<28x128xbf16>
    %cst_161 = arith.constant dense<0.000000e+00> : vector<1x128xf32>
    %236 = tpu.matmul %233, %235, %cst_161 {dimension_numbers = #tpu.dot_dimension_numbers<[1], [0], [0], [1], [0, 0, 1, 1], [], []>} : vector<1x28xbf16>, vector<28x128xbf16>, vector<1x128xf32> -> vector<1x128xf32>
    %237 = arith.addf %232, %236 : vector<1x128xf32>
    %238 = vector.extract_strided_slice %71 {offsets = [33, 0], sizes = [1, 28], strides = [1, 1]} : vector<64x28xbf16> to vector<1x28xbf16>
    %c33 = arith.constant 33 : index
    %c0_162 = arith.constant 0 : index
    %c0_163 = arith.constant 0 : index
    %239 = vector.load %arg10[%c33, %c0_162, %c0_163] : memref<64x28x128xbf16, #tpu.memory_space<vmem>>, vector<1x28x128xbf16>
    %240 = vector.shape_cast %239 : vector<1x28x128xbf16> to vector<28x128xbf16>
    %cst_164 = arith.constant dense<0.000000e+00> : vector<1x128xf32>
    %241 = tpu.matmul %238, %240, %cst_164 {dimension_numbers = #tpu.dot_dimension_numbers<[1], [0], [0], [1], [0, 0, 1, 1], [], []>} : vector<1x28xbf16>, vector<28x128xbf16>, vector<1x128xf32> -> vector<1x128xf32>
    %242 = arith.addf %237, %241 : vector<1x128xf32>
    %243 = vector.extract_strided_slice %71 {offsets = [34, 0], sizes = [1, 28], strides = [1, 1]} : vector<64x28xbf16> to vector<1x28xbf16>
    %c34 = arith.constant 34 : index
    %c0_165 = arith.constant 0 : index
    %c0_166 = arith.constant 0 : index
    %244 = vector.load %arg10[%c34, %c0_165, %c0_166] : memref<64x28x128xbf16, #tpu.memory_space<vmem>>, vector<1x28x128xbf16>
    %245 = vector.shape_cast %244 : vector<1x28x128xbf16> to vector<28x128xbf16>
    %cst_167 = arith.constant dense<0.000000e+00> : vector<1x128xf32>
    %246 = tpu.matmul %243, %245, %cst_167 {dimension_numbers = #tpu.dot_dimension_numbers<[1], [0], [0], [1], [0, 0, 1, 1], [], []>} : vector<1x28xbf16>, vector<28x128xbf16>, vector<1x128xf32> -> vector<1x128xf32>
    %247 = arith.addf %242, %246 : vector<1x128xf32>
    %248 = vector.extract_strided_slice %71 {offsets = [35, 0], sizes = [1, 28], strides = [1, 1]} : vector<64x28xbf16> to vector<1x28xbf16>
    %c35 = arith.constant 35 : index
    %c0_168 = arith.constant 0 : index
    %c0_169 = arith.constant 0 : index
    %249 = vector.load %arg10[%c35, %c0_168, %c0_169] : memref<64x28x128xbf16, #tpu.memory_space<vmem>>, vector<1x28x128xbf16>
    %250 = vector.shape_cast %249 : vector<1x28x128xbf16> to vector<28x128xbf16>
    %cst_170 = arith.constant dense<0.000000e+00> : vector<1x128xf32>
    %251 = tpu.matmul %248, %250, %cst_170 {dimension_numbers = #tpu.dot_dimension_numbers<[1], [0], [0], [1], [0, 0, 1, 1], [], []>} : vector<1x28xbf16>, vector<28x128xbf16>, vector<1x128xf32> -> vector<1x128xf32>
    %252 = arith.addf %247, %251 : vector<1x128xf32>
    %253 = vector.extract_strided_slice %71 {offsets = [36, 0], sizes = [1, 28], strides = [1, 1]} : vector<64x28xbf16> to vector<1x28xbf16>
    %c36 = arith.constant 36 : index
    %c0_171 = arith.constant 0 : index
    %c0_172 = arith.constant 0 : index
    %254 = vector.load %arg10[%c36, %c0_171, %c0_172] : memref<64x28x128xbf16, #tpu.memory_space<vmem>>, vector<1x28x128xbf16>
    %255 = vector.shape_cast %254 : vector<1x28x128xbf16> to vector<28x128xbf16>
    %cst_173 = arith.constant dense<0.000000e+00> : vector<1x128xf32>
    %256 = tpu.matmul %253, %255, %cst_173 {dimension_numbers = #tpu.dot_dimension_numbers<[1], [0], [0], [1], [0, 0, 1, 1], [], []>} : vector<1x28xbf16>, vector<28x128xbf16>, vector<1x128xf32> -> vector<1x128xf32>
    %257 = arith.addf %252, %256 : vector<1x128xf32>
    %258 = vector.extract_strided_slice %71 {offsets = [37, 0], sizes = [1, 28], strides = [1, 1]} : vector<64x28xbf16> to vector<1x28xbf16>
    %c37 = arith.constant 37 : index
    %c0_174 = arith.constant 0 : index
    %c0_175 = arith.constant 0 : index
    %259 = vector.load %arg10[%c37, %c0_174, %c0_175] : memref<64x28x128xbf16, #tpu.memory_space<vmem>>, vector<1x28x128xbf16>
    %260 = vector.shape_cast %259 : vector<1x28x128xbf16> to vector<28x128xbf16>
    %cst_176 = arith.constant dense<0.000000e+00> : vector<1x128xf32>
    %261 = tpu.matmul %258, %260, %cst_176 {dimension_numbers = #tpu.dot_dimension_numbers<[1], [0], [0], [1], [0, 0, 1, 1], [], []>} : vector<1x28xbf16>, vector<28x128xbf16>, vector<1x128xf32> -> vector<1x128xf32>
    %262 = arith.addf %257, %261 : vector<1x128xf32>
    %263 = vector.extract_strided_slice %71 {offsets = [38, 0], sizes = [1, 28], strides = [1, 1]} : vector<64x28xbf16> to vector<1x28xbf16>
    %c38 = arith.constant 38 : index
    %c0_177 = arith.constant 0 : index
    %c0_178 = arith.constant 0 : index
    %264 = vector.load %arg10[%c38, %c0_177, %c0_178] : memref<64x28x128xbf16, #tpu.memory_space<vmem>>, vector<1x28x128xbf16>
    %265 = vector.shape_cast %264 : vector<1x28x128xbf16> to vector<28x128xbf16>
    %cst_179 = arith.constant dense<0.000000e+00> : vector<1x128xf32>
    %266 = tpu.matmul %263, %265, %cst_179 {dimension_numbers = #tpu.dot_dimension_numbers<[1], [0], [0], [1], [0, 0, 1, 1], [], []>} : vector<1x28xbf16>, vector<28x128xbf16>, vector<1x128xf32> -> vector<1x128xf32>
    %267 = arith.addf %262, %266 : vector<1x128xf32>
    %268 = vector.extract_strided_slice %71 {offsets = [39, 0], sizes = [1, 28], strides = [1, 1]} : vector<64x28xbf16> to vector<1x28xbf16>
    %c39 = arith.constant 39 : index
    %c0_180 = arith.constant 0 : index
    %c0_181 = arith.constant 0 : index
    %269 = vector.load %arg10[%c39, %c0_180, %c0_181] : memref<64x28x128xbf16, #tpu.memory_space<vmem>>, vector<1x28x128xbf16>
    %270 = vector.shape_cast %269 : vector<1x28x128xbf16> to vector<28x128xbf16>
    %cst_182 = arith.constant dense<0.000000e+00> : vector<1x128xf32>
    %271 = tpu.matmul %268, %270, %cst_182 {dimension_numbers = #tpu.dot_dimension_numbers<[1], [0], [0], [1], [0, 0, 1, 1], [], []>} : vector<1x28xbf16>, vector<28x128xbf16>, vector<1x128xf32> -> vector<1x128xf32>
    %272 = arith.addf %267, %271 : vector<1x128xf32>
    %273 = vector.extract_strided_slice %71 {offsets = [40, 0], sizes = [1, 28], strides = [1, 1]} : vector<64x28xbf16> to vector<1x28xbf16>
    %c40 = arith.constant 40 : index
    %c0_183 = arith.constant 0 : index
    %c0_184 = arith.constant 0 : index
    %274 = vector.load %arg10[%c40, %c0_183, %c0_184] : memref<64x28x128xbf16, #tpu.memory_space<vmem>>, vector<1x28x128xbf16>
    %275 = vector.shape_cast %274 : vector<1x28x128xbf16> to vector<28x128xbf16>
    %cst_185 = arith.constant dense<0.000000e+00> : vector<1x128xf32>
    %276 = tpu.matmul %273, %275, %cst_185 {dimension_numbers = #tpu.dot_dimension_numbers<[1], [0], [0], [1], [0, 0, 1, 1], [], []>} : vector<1x28xbf16>, vector<28x128xbf16>, vector<1x128xf32> -> vector<1x128xf32>
    %277 = arith.addf %272, %276 : vector<1x128xf32>
    %278 = vector.extract_strided_slice %71 {offsets = [41, 0], sizes = [1, 28], strides = [1, 1]} : vector<64x28xbf16> to vector<1x28xbf16>
    %c41 = arith.constant 41 : index
    %c0_186 = arith.constant 0 : index
    %c0_187 = arith.constant 0 : index
    %279 = vector.load %arg10[%c41, %c0_186, %c0_187] : memref<64x28x128xbf16, #tpu.memory_space<vmem>>, vector<1x28x128xbf16>
    %280 = vector.shape_cast %279 : vector<1x28x128xbf16> to vector<28x128xbf16>
    %cst_188 = arith.constant dense<0.000000e+00> : vector<1x128xf32>
    %281 = tpu.matmul %278, %280, %cst_188 {dimension_numbers = #tpu.dot_dimension_numbers<[1], [0], [0], [1], [0, 0, 1, 1], [], []>} : vector<1x28xbf16>, vector<28x128xbf16>, vector<1x128xf32> -> vector<1x128xf32>
    %282 = arith.addf %277, %281 : vector<1x128xf32>
    %283 = vector.extract_strided_slice %71 {offsets = [42, 0], sizes = [1, 28], strides = [1, 1]} : vector<64x28xbf16> to vector<1x28xbf16>
    %c42 = arith.constant 42 : index
    %c0_189 = arith.constant 0 : index
    %c0_190 = arith.constant 0 : index
    %284 = vector.load %arg10[%c42, %c0_189, %c0_190] : memref<64x28x128xbf16, #tpu.memory_space<vmem>>, vector<1x28x128xbf16>
    %285 = vector.shape_cast %284 : vector<1x28x128xbf16> to vector<28x128xbf16>
    %cst_191 = arith.constant dense<0.000000e+00> : vector<1x128xf32>
    %286 = tpu.matmul %283, %285, %cst_191 {dimension_numbers = #tpu.dot_dimension_numbers<[1], [0], [0], [1], [0, 0, 1, 1], [], []>} : vector<1x28xbf16>, vector<28x128xbf16>, vector<1x128xf32> -> vector<1x128xf32>
    %287 = arith.addf %282, %286 : vector<1x128xf32>
    %288 = vector.extract_strided_slice %71 {offsets = [43, 0], sizes = [1, 28], strides = [1, 1]} : vector<64x28xbf16> to vector<1x28xbf16>
    %c43 = arith.constant 43 : index
    %c0_192 = arith.constant 0 : index
    %c0_193 = arith.constant 0 : index
    %289 = vector.load %arg10[%c43, %c0_192, %c0_193] : memref<64x28x128xbf16, #tpu.memory_space<vmem>>, vector<1x28x128xbf16>
    %290 = vector.shape_cast %289 : vector<1x28x128xbf16> to vector<28x128xbf16>
    %cst_194 = arith.constant dense<0.000000e+00> : vector<1x128xf32>
    %291 = tpu.matmul %288, %290, %cst_194 {dimension_numbers = #tpu.dot_dimension_numbers<[1], [0], [0], [1], [0, 0, 1, 1], [], []>} : vector<1x28xbf16>, vector<28x128xbf16>, vector<1x128xf32> -> vector<1x128xf32>
    %292 = arith.addf %287, %291 : vector<1x128xf32>
    %293 = vector.extract_strided_slice %71 {offsets = [44, 0], sizes = [1, 28], strides = [1, 1]} : vector<64x28xbf16> to vector<1x28xbf16>
    %c44 = arith.constant 44 : index
    %c0_195 = arith.constant 0 : index
    %c0_196 = arith.constant 0 : index
    %294 = vector.load %arg10[%c44, %c0_195, %c0_196] : memref<64x28x128xbf16, #tpu.memory_space<vmem>>, vector<1x28x128xbf16>
    %295 = vector.shape_cast %294 : vector<1x28x128xbf16> to vector<28x128xbf16>
    %cst_197 = arith.constant dense<0.000000e+00> : vector<1x128xf32>
    %296 = tpu.matmul %293, %295, %cst_197 {dimension_numbers = #tpu.dot_dimension_numbers<[1], [0], [0], [1], [0, 0, 1, 1], [], []>} : vector<1x28xbf16>, vector<28x128xbf16>, vector<1x128xf32> -> vector<1x128xf32>
    %297 = arith.addf %292, %296 : vector<1x128xf32>
    %298 = vector.extract_strided_slice %71 {offsets = [45, 0], sizes = [1, 28], strides = [1, 1]} : vector<64x28xbf16> to vector<1x28xbf16>
    %c45 = arith.constant 45 : index
    %c0_198 = arith.constant 0 : index
    %c0_199 = arith.constant 0 : index
    %299 = vector.load %arg10[%c45, %c0_198, %c0_199] : memref<64x28x128xbf16, #tpu.memory_space<vmem>>, vector<1x28x128xbf16>
    %300 = vector.shape_cast %299 : vector<1x28x128xbf16> to vector<28x128xbf16>
    %cst_200 = arith.constant dense<0.000000e+00> : vector<1x128xf32>
    %301 = tpu.matmul %298, %300, %cst_200 {dimension_numbers = #tpu.dot_dimension_numbers<[1], [0], [0], [1], [0, 0, 1, 1], [], []>} : vector<1x28xbf16>, vector<28x128xbf16>, vector<1x128xf32> -> vector<1x128xf32>
    %302 = arith.addf %297, %301 : vector<1x128xf32>
    %303 = vector.extract_strided_slice %71 {offsets = [46, 0], sizes = [1, 28], strides = [1, 1]} : vector<64x28xbf16> to vector<1x28xbf16>
    %c46 = arith.constant 46 : index
    %c0_201 = arith.constant 0 : index
    %c0_202 = arith.constant 0 : index
    %304 = vector.load %arg10[%c46, %c0_201, %c0_202] : memref<64x28x128xbf16, #tpu.memory_space<vmem>>, vector<1x28x128xbf16>
    %305 = vector.shape_cast %304 : vector<1x28x128xbf16> to vector<28x128xbf16>
    %cst_203 = arith.constant dense<0.000000e+00> : vector<1x128xf32>
    %306 = tpu.matmul %303, %305, %cst_203 {dimension_numbers = #tpu.dot_dimension_numbers<[1], [0], [0], [1], [0, 0, 1, 1], [], []>} : vector<1x28xbf16>, vector<28x128xbf16>, vector<1x128xf32> -> vector<1x128xf32>
    %307 = arith.addf %302, %306 : vector<1x128xf32>
    %308 = vector.extract_strided_slice %71 {offsets = [47, 0], sizes = [1, 28], strides = [1, 1]} : vector<64x28xbf16> to vector<1x28xbf16>
    %c47 = arith.constant 47 : index
    %c0_204 = arith.constant 0 : index
    %c0_205 = arith.constant 0 : index
    %309 = vector.load %arg10[%c47, %c0_204, %c0_205] : memref<64x28x128xbf16, #tpu.memory_space<vmem>>, vector<1x28x128xbf16>
    %310 = vector.shape_cast %309 : vector<1x28x128xbf16> to vector<28x128xbf16>
    %cst_206 = arith.constant dense<0.000000e+00> : vector<1x128xf32>
    %311 = tpu.matmul %308, %310, %cst_206 {dimension_numbers = #tpu.dot_dimension_numbers<[1], [0], [0], [1], [0, 0, 1, 1], [], []>} : vector<1x28xbf16>, vector<28x128xbf16>, vector<1x128xf32> -> vector<1x128xf32>
    %312 = arith.addf %307, %311 : vector<1x128xf32>
    %313 = vector.extract_strided_slice %71 {offsets = [48, 0], sizes = [1, 28], strides = [1, 1]} : vector<64x28xbf16> to vector<1x28xbf16>
    %c48 = arith.constant 48 : index
    %c0_207 = arith.constant 0 : index
    %c0_208 = arith.constant 0 : index
    %314 = vector.load %arg10[%c48, %c0_207, %c0_208] : memref<64x28x128xbf16, #tpu.memory_space<vmem>>, vector<1x28x128xbf16>
    %315 = vector.shape_cast %314 : vector<1x28x128xbf16> to vector<28x128xbf16>
    %cst_209 = arith.constant dense<0.000000e+00> : vector<1x128xf32>
    %316 = tpu.matmul %313, %315, %cst_209 {dimension_numbers = #tpu.dot_dimension_numbers<[1], [0], [0], [1], [0, 0, 1, 1], [], []>} : vector<1x28xbf16>, vector<28x128xbf16>, vector<1x128xf32> -> vector<1x128xf32>
    %317 = arith.addf %312, %316 : vector<1x128xf32>
    %318 = vector.extract_strided_slice %71 {offsets = [49, 0], sizes = [1, 28], strides = [1, 1]} : vector<64x28xbf16> to vector<1x28xbf16>
    %c49 = arith.constant 49 : index
    %c0_210 = arith.constant 0 : index
    %c0_211 = arith.constant 0 : index
    %319 = vector.load %arg10[%c49, %c0_210, %c0_211] : memref<64x28x128xbf16, #tpu.memory_space<vmem>>, vector<1x28x128xbf16>
    %320 = vector.shape_cast %319 : vector<1x28x128xbf16> to vector<28x128xbf16>
    %cst_212 = arith.constant dense<0.000000e+00> : vector<1x128xf32>
    %321 = tpu.matmul %318, %320, %cst_212 {dimension_numbers = #tpu.dot_dimension_numbers<[1], [0], [0], [1], [0, 0, 1, 1], [], []>} : vector<1x28xbf16>, vector<28x128xbf16>, vector<1x128xf32> -> vector<1x128xf32>
    %322 = arith.addf %317, %321 : vector<1x128xf32>
    %323 = vector.extract_strided_slice %71 {offsets = [50, 0], sizes = [1, 28], strides = [1, 1]} : vector<64x28xbf16> to vector<1x28xbf16>
    %c50 = arith.constant 50 : index
    %c0_213 = arith.constant 0 : index
    %c0_214 = arith.constant 0 : index
    %324 = vector.load %arg10[%c50, %c0_213, %c0_214] : memref<64x28x128xbf16, #tpu.memory_space<vmem>>, vector<1x28x128xbf16>
    %325 = vector.shape_cast %324 : vector<1x28x128xbf16> to vector<28x128xbf16>
    %cst_215 = arith.constant dense<0.000000e+00> : vector<1x128xf32>
    %326 = tpu.matmul %323, %325, %cst_215 {dimension_numbers = #tpu.dot_dimension_numbers<[1], [0], [0], [1], [0, 0, 1, 1], [], []>} : vector<1x28xbf16>, vector<28x128xbf16>, vector<1x128xf32> -> vector<1x128xf32>
    %327 = arith.addf %322, %326 : vector<1x128xf32>
    %328 = vector.extract_strided_slice %71 {offsets = [51, 0], sizes = [1, 28], strides = [1, 1]} : vector<64x28xbf16> to vector<1x28xbf16>
    %c51 = arith.constant 51 : index
    %c0_216 = arith.constant 0 : index
    %c0_217 = arith.constant 0 : index
    %329 = vector.load %arg10[%c51, %c0_216, %c0_217] : memref<64x28x128xbf16, #tpu.memory_space<vmem>>, vector<1x28x128xbf16>
    %330 = vector.shape_cast %329 : vector<1x28x128xbf16> to vector<28x128xbf16>
    %cst_218 = arith.constant dense<0.000000e+00> : vector<1x128xf32>
    %331 = tpu.matmul %328, %330, %cst_218 {dimension_numbers = #tpu.dot_dimension_numbers<[1], [0], [0], [1], [0, 0, 1, 1], [], []>} : vector<1x28xbf16>, vector<28x128xbf16>, vector<1x128xf32> -> vector<1x128xf32>
    %332 = arith.addf %327, %331 : vector<1x128xf32>
    %333 = vector.extract_strided_slice %71 {offsets = [52, 0], sizes = [1, 28], strides = [1, 1]} : vector<64x28xbf16> to vector<1x28xbf16>
    %c52 = arith.constant 52 : index
    %c0_219 = arith.constant 0 : index
    %c0_220 = arith.constant 0 : index
    %334 = vector.load %arg10[%c52, %c0_219, %c0_220] : memref<64x28x128xbf16, #tpu.memory_space<vmem>>, vector<1x28x128xbf16>
    %335 = vector.shape_cast %334 : vector<1x28x128xbf16> to vector<28x128xbf16>
    %cst_221 = arith.constant dense<0.000000e+00> : vector<1x128xf32>
    %336 = tpu.matmul %333, %335, %cst_221 {dimension_numbers = #tpu.dot_dimension_numbers<[1], [0], [0], [1], [0, 0, 1, 1], [], []>} : vector<1x28xbf16>, vector<28x128xbf16>, vector<1x128xf32> -> vector<1x128xf32>
    %337 = arith.addf %332, %336 : vector<1x128xf32>
    %338 = vector.extract_strided_slice %71 {offsets = [53, 0], sizes = [1, 28], strides = [1, 1]} : vector<64x28xbf16> to vector<1x28xbf16>
    %c53 = arith.constant 53 : index
    %c0_222 = arith.constant 0 : index
    %c0_223 = arith.constant 0 : index
    %339 = vector.load %arg10[%c53, %c0_222, %c0_223] : memref<64x28x128xbf16, #tpu.memory_space<vmem>>, vector<1x28x128xbf16>
    %340 = vector.shape_cast %339 : vector<1x28x128xbf16> to vector<28x128xbf16>
    %cst_224 = arith.constant dense<0.000000e+00> : vector<1x128xf32>
    %341 = tpu.matmul %338, %340, %cst_224 {dimension_numbers = #tpu.dot_dimension_numbers<[1], [0], [0], [1], [0, 0, 1, 1], [], []>} : vector<1x28xbf16>, vector<28x128xbf16>, vector<1x128xf32> -> vector<1x128xf32>
    %342 = arith.addf %337, %341 : vector<1x128xf32>
    %343 = vector.extract_strided_slice %71 {offsets = [54, 0], sizes = [1, 28], strides = [1, 1]} : vector<64x28xbf16> to vector<1x28xbf16>
    %c54 = arith.constant 54 : index
    %c0_225 = arith.constant 0 : index
    %c0_226 = arith.constant 0 : index
    %344 = vector.load %arg10[%c54, %c0_225, %c0_226] : memref<64x28x128xbf16, #tpu.memory_space<vmem>>, vector<1x28x128xbf16>
    %345 = vector.shape_cast %344 : vector<1x28x128xbf16> to vector<28x128xbf16>
    %cst_227 = arith.constant dense<0.000000e+00> : vector<1x128xf32>
    %346 = tpu.matmul %343, %345, %cst_227 {dimension_numbers = #tpu.dot_dimension_numbers<[1], [0], [0], [1], [0, 0, 1, 1], [], []>} : vector<1x28xbf16>, vector<28x128xbf16>, vector<1x128xf32> -> vector<1x128xf32>
    %347 = arith.addf %342, %346 : vector<1x128xf32>
    %348 = vector.extract_strided_slice %71 {offsets = [55, 0], sizes = [1, 28], strides = [1, 1]} : vector<64x28xbf16> to vector<1x28xbf16>
    %c55 = arith.constant 55 : index
    %c0_228 = arith.constant 0 : index
    %c0_229 = arith.constant 0 : index
    %349 = vector.load %arg10[%c55, %c0_228, %c0_229] : memref<64x28x128xbf16, #tpu.memory_space<vmem>>, vector<1x28x128xbf16>
    %350 = vector.shape_cast %349 : vector<1x28x128xbf16> to vector<28x128xbf16>
    %cst_230 = arith.constant dense<0.000000e+00> : vector<1x128xf32>
    %351 = tpu.matmul %348, %350, %cst_230 {dimension_numbers = #tpu.dot_dimension_numbers<[1], [0], [0], [1], [0, 0, 1, 1], [], []>} : vector<1x28xbf16>, vector<28x128xbf16>, vector<1x128xf32> -> vector<1x128xf32>
    %352 = arith.addf %347, %351 : vector<1x128xf32>
    %353 = vector.extract_strided_slice %71 {offsets = [56, 0], sizes = [1, 28], strides = [1, 1]} : vector<64x28xbf16> to vector<1x28xbf16>
    %c56 = arith.constant 56 : index
    %c0_231 = arith.constant 0 : index
    %c0_232 = arith.constant 0 : index
    %354 = vector.load %arg10[%c56, %c0_231, %c0_232] : memref<64x28x128xbf16, #tpu.memory_space<vmem>>, vector<1x28x128xbf16>
    %355 = vector.shape_cast %354 : vector<1x28x128xbf16> to vector<28x128xbf16>
    %cst_233 = arith.constant dense<0.000000e+00> : vector<1x128xf32>
    %356 = tpu.matmul %353, %355, %cst_233 {dimension_numbers = #tpu.dot_dimension_numbers<[1], [0], [0], [1], [0, 0, 1, 1], [], []>} : vector<1x28xbf16>, vector<28x128xbf16>, vector<1x128xf32> -> vector<1x128xf32>
    %357 = arith.addf %352, %356 : vector<1x128xf32>
    %358 = vector.extract_strided_slice %71 {offsets = [57, 0], sizes = [1, 28], strides = [1, 1]} : vector<64x28xbf16> to vector<1x28xbf16>
    %c57 = arith.constant 57 : index
    %c0_234 = arith.constant 0 : index
    %c0_235 = arith.constant 0 : index
    %359 = vector.load %arg10[%c57, %c0_234, %c0_235] : memref<64x28x128xbf16, #tpu.memory_space<vmem>>, vector<1x28x128xbf16>
    %360 = vector.shape_cast %359 : vector<1x28x128xbf16> to vector<28x128xbf16>
    %cst_236 = arith.constant dense<0.000000e+00> : vector<1x128xf32>
    %361 = tpu.matmul %358, %360, %cst_236 {dimension_numbers = #tpu.dot_dimension_numbers<[1], [0], [0], [1], [0, 0, 1, 1], [], []>} : vector<1x28xbf16>, vector<28x128xbf16>, vector<1x128xf32> -> vector<1x128xf32>
    %362 = arith.addf %357, %361 : vector<1x128xf32>
    %363 = vector.extract_strided_slice %71 {offsets = [58, 0], sizes = [1, 28], strides = [1, 1]} : vector<64x28xbf16> to vector<1x28xbf16>
    %c58 = arith.constant 58 : index
    %c0_237 = arith.constant 0 : index
    %c0_238 = arith.constant 0 : index
    %364 = vector.load %arg10[%c58, %c0_237, %c0_238] : memref<64x28x128xbf16, #tpu.memory_space<vmem>>, vector<1x28x128xbf16>
    %365 = vector.shape_cast %364 : vector<1x28x128xbf16> to vector<28x128xbf16>
    %cst_239 = arith.constant dense<0.000000e+00> : vector<1x128xf32>
    %366 = tpu.matmul %363, %365, %cst_239 {dimension_numbers = #tpu.dot_dimension_numbers<[1], [0], [0], [1], [0, 0, 1, 1], [], []>} : vector<1x28xbf16>, vector<28x128xbf16>, vector<1x128xf32> -> vector<1x128xf32>
    %367 = arith.addf %362, %366 : vector<1x128xf32>
    %368 = vector.extract_strided_slice %71 {offsets = [59, 0], sizes = [1, 28], strides = [1, 1]} : vector<64x28xbf16> to vector<1x28xbf16>
    %c59 = arith.constant 59 : index
    %c0_240 = arith.constant 0 : index
    %c0_241 = arith.constant 0 : index
    %369 = vector.load %arg10[%c59, %c0_240, %c0_241] : memref<64x28x128xbf16, #tpu.memory_space<vmem>>, vector<1x28x128xbf16>
    %370 = vector.shape_cast %369 : vector<1x28x128xbf16> to vector<28x128xbf16>
    %cst_242 = arith.constant dense<0.000000e+00> : vector<1x128xf32>
    %371 = tpu.matmul %368, %370, %cst_242 {dimension_numbers = #tpu.dot_dimension_numbers<[1], [0], [0], [1], [0, 0, 1, 1], [], []>} : vector<1x28xbf16>, vector<28x128xbf16>, vector<1x128xf32> -> vector<1x128xf32>
    %372 = arith.addf %367, %371 : vector<1x128xf32>
    %373 = vector.extract_strided_slice %71 {offsets = [60, 0], sizes = [1, 28], strides = [1, 1]} : vector<64x28xbf16> to vector<1x28xbf16>
    %c60 = arith.constant 60 : index
    %c0_243 = arith.constant 0 : index
    %c0_244 = arith.constant 0 : index
    %374 = vector.load %arg10[%c60, %c0_243, %c0_244] : memref<64x28x128xbf16, #tpu.memory_space<vmem>>, vector<1x28x128xbf16>
    %375 = vector.shape_cast %374 : vector<1x28x128xbf16> to vector<28x128xbf16>
    %cst_245 = arith.constant dense<0.000000e+00> : vector<1x128xf32>
    %376 = tpu.matmul %373, %375, %cst_245 {dimension_numbers = #tpu.dot_dimension_numbers<[1], [0], [0], [1], [0, 0, 1, 1], [], []>} : vector<1x28xbf16>, vector<28x128xbf16>, vector<1x128xf32> -> vector<1x128xf32>
    %377 = arith.addf %372, %376 : vector<1x128xf32>
    %378 = vector.extract_strided_slice %71 {offsets = [61, 0], sizes = [1, 28], strides = [1, 1]} : vector<64x28xbf16> to vector<1x28xbf16>
    %c61 = arith.constant 61 : index
    %c0_246 = arith.constant 0 : index
    %c0_247 = arith.constant 0 : index
    %379 = vector.load %arg10[%c61, %c0_246, %c0_247] : memref<64x28x128xbf16, #tpu.memory_space<vmem>>, vector<1x28x128xbf16>
    %380 = vector.shape_cast %379 : vector<1x28x128xbf16> to vector<28x128xbf16>
    %cst_248 = arith.constant dense<0.000000e+00> : vector<1x128xf32>
    %381 = tpu.matmul %378, %380, %cst_248 {dimension_numbers = #tpu.dot_dimension_numbers<[1], [0], [0], [1], [0, 0, 1, 1], [], []>} : vector<1x28xbf16>, vector<28x128xbf16>, vector<1x128xf32> -> vector<1x128xf32>
    %382 = arith.addf %377, %381 : vector<1x128xf32>
    %383 = vector.extract_strided_slice %71 {offsets = [62, 0], sizes = [1, 28], strides = [1, 1]} : vector<64x28xbf16> to vector<1x28xbf16>
    %c62 = arith.constant 62 : index
    %c0_249 = arith.constant 0 : index
    %c0_250 = arith.constant 0 : index
    %384 = vector.load %arg10[%c62, %c0_249, %c0_250] : memref<64x28x128xbf16, #tpu.memory_space<vmem>>, vector<1x28x128xbf16>
    %385 = vector.shape_cast %384 : vector<1x28x128xbf16> to vector<28x128xbf16>
    %cst_251 = arith.constant dense<0.000000e+00> : vector<1x128xf32>
    %386 = tpu.matmul %383, %385, %cst_251 {dimension_numbers = #tpu.dot_dimension_numbers<[1], [0], [0], [1], [0, 0, 1, 1], [], []>} : vector<1x28xbf16>, vector<28x128xbf16>, vector<1x128xf32> -> vector<1x128xf32>
    %387 = arith.addf %382, %386 : vector<1x128xf32>
    %388 = vector.extract_strided_slice %71 {offsets = [63, 0], sizes = [1, 28], strides = [1, 1]} : vector<64x28xbf16> to vector<1x28xbf16>
    %c63 = arith.constant 63 : index
    %c0_252 = arith.constant 0 : index
    %c0_253 = arith.constant 0 : index
    %389 = vector.load %arg10[%c63, %c0_252, %c0_253] : memref<64x28x128xbf16, #tpu.memory_space<vmem>>, vector<1x28x128xbf16>
    %390 = vector.shape_cast %389 : vector<1x28x128xbf16> to vector<28x128xbf16>
    %cst_254 = arith.constant dense<0.000000e+00> : vector<1x128xf32>
    %391 = tpu.matmul %388, %390, %cst_254 {dimension_numbers = #tpu.dot_dimension_numbers<[1], [0], [0], [1], [0, 0, 1, 1], [], []>} : vector<1x28xbf16>, vector<28x128xbf16>, vector<1x128xf32> -> vector<1x128xf32>
    %392 = arith.addf %387, %391 : vector<1x128xf32>
    %cst_255 = arith.constant 0.000000e+00 : f32
    %393 = vector.broadcast %cst_255 : f32 to vector<1x128xf32>
    %394 = arith.maximumf %392, %393 : vector<1x128xf32>
    %c0_256 = arith.constant 0 : index
    %c0_257 = arith.constant 0 : index
    %395 = vector.load %arg12[%c0_256, %c0_257] : memref<128x1xf32, #tpu.memory_space<vmem>>, vector<128x1xf32>
    %cst_258 = arith.constant dense<0.000000e+00> : vector<1x1xf32>
    %396 = tpu.matmul %394, %395, %cst_258 {dimension_numbers = #tpu.dot_dimension_numbers<[1], [0], [0], [1], [0, 0, 1, 1], [], []>} : vector<1x128xf32>, vector<128x1xf32>, vector<1x1xf32> -> vector<1x1xf32>
    %c0_259 = arith.constant 0 : index
    %c0_260 = arith.constant 0 : index
    %397 = vector.load %arg13[%c0_259, %c0_260] : memref<1x1xf32, #tpu.memory_space<vmem>>, vector<1x1xf32>
    %398 = arith.addf %396, %397 : vector<1x1xf32>
    %cst_261 = arith.constant 0.000000e+00 : f32
    %399 = vector.broadcast %cst_261 : f32 to vector<1x1xf32>
    %400 = arith.subf %399, %398 : vector<1x1xf32>
    %401 = math.exp %400 : vector<1x1xf32>
    %cst_262 = arith.constant 1.000000e+00 : f32
    %402 = vector.broadcast %cst_262 : f32 to vector<1x1xf32>
    %403 = arith.addf %402, %401 : vector<1x1xf32>
    %cst_263 = arith.constant 1.000000e+00 : f32
    %404 = vector.broadcast %cst_263 : f32 to vector<1x1xf32>
    %405 = arith.divf %404, %403 : vector<1x1xf32>
    %406 = vector.shape_cast %405 : vector<1x1xf32> to vector<1x1xf32>
    %407 = vector.broadcast %406 : vector<1x1xf32> to vector<1x128xf32>
    %c0_264 = arith.constant 0 : index
    %c0_265 = arith.constant 0 : index
    %c0_266 = arith.constant 0 : index
    %408 = vector.load %arg14[%c0_264, %c0_265, %c0_266] : memref<1x1x128xf32, #tpu.memory_space<vmem>>, vector<1x1x128xf32>
    %409 = vector.shape_cast %408 : vector<1x1x128xf32> to vector<1x128xf32>
    %410 = vector.shape_cast %407 : vector<1x128xf32> to vector<1x1x128xf32>
    tpu.vector_store %arg14[%c0_264, %c0_265, %c0_266], %410 {strides = array<i32>} : memref<1x1x128xf32, #tpu.memory_space<vmem>>, vector<1x1x128xf32>,
    return
  }
  func.func @transform_0(%arg0: i32) -> (i32, i32, i32) {
    %c0_i32 = arith.constant 0 : i32
    %c0_i32_0 = arith.constant 0 : i32
    %c0_i32_1 = arith.constant 0 : i32
    return %arg0, %c0_i32, %c0_i32_0 : i32, i32, i32
  }
  func.func @transform_1(%arg0: i32) -> (i32, i32) {
    %c0_i32 = arith.constant 0 : i32
    %c0_i32_0 = arith.constant 0 : i32
    %c0_i32_1 = arith.constant 0 : i32
    return %c0_i32, %c0_i32_0 : i32, i32
  }
  func.func @transform_2(%arg0: i32) -> (i32, i32) {
    %c0_i32 = arith.constant 0 : i32
    %c0_i32_0 = arith.constant 0 : i32
    %c0_i32_1 = arith.constant 0 : i32
    return %c0_i32, %c0_i32_0 : i32, i32
  }
  func.func @transform_3(%arg0: i32) -> (i32, i32) {
    %c0_i32 = arith.constant 0 : i32
    %c0_i32_0 = arith.constant 0 : i32
    %c0_i32_1 = arith.constant 0 : i32
    return %c0_i32, %c0_i32_0 : i32, i32
  }
  func.func @transform_4(%arg0: i32) -> (i32, i32) {
    %c0_i32 = arith.constant 0 : i32
    %c0_i32_0 = arith.constant 0 : i32
    %c0_i32_1 = arith.constant 0 : i32
    return %c0_i32, %c0_i32_0 : i32, i32
  }
  func.func @transform_5(%arg0: i32) -> (i32, i32) {
    %c0_i32 = arith.constant 0 : i32
    %c0_i32_0 = arith.constant 0 : i32
    %c0_i32_1 = arith.constant 0 : i32
    return %c0_i32, %c0_i32_0 : i32, i32
  }
  func.func @transform_6(%arg0: i32) -> (i32, i32) {
    %c0_i32 = arith.constant 0 : i32
    %c0_i32_0 = arith.constant 0 : i32
    %c0_i32_1 = arith.constant 0 : i32
    return %c0_i32, %c0_i32_0 : i32, i32
  }
  func.func @transform_7(%arg0: i32) -> (i32, i32) {
    %c0_i32 = arith.constant 0 : i32
    %c0_i32_0 = arith.constant 0 : i32
    %c0_i32_1 = arith.constant 0 : i32
    return %c0_i32, %c0_i32_0 : i32, i32
  }
  func.func @transform_8(%arg0: i32) -> (i32, i32) {
    %c0_i32 = arith.constant 0 : i32
    %c0_i32_0 = arith.constant 0 : i32
    %c0_i32_1 = arith.constant 0 : i32
    return %c0_i32, %c0_i32_0 : i32, i32
  }
  func.func @transform_9(%arg0: i32) -> (i32, i32, i32) {
    %c0_i32 = arith.constant 0 : i32
    %c0_i32_0 = arith.constant 0 : i32
    %c0_i32_1 = arith.constant 0 : i32
    %c0_i32_2 = arith.constant 0 : i32
    return %c0_i32, %c0_i32_0, %c0_i32_1 : i32, i32, i32
  }
  func.func @transform_10(%arg0: i32) -> (i32, i32) {
    %c0_i32 = arith.constant 0 : i32
    %c0_i32_0 = arith.constant 0 : i32
    %c0_i32_1 = arith.constant 0 : i32
    return %c0_i32, %c0_i32_0 : i32, i32
  }
  func.func @transform_11(%arg0: i32) -> (i32, i32) {
    %c0_i32 = arith.constant 0 : i32
    %c0_i32_0 = arith.constant 0 : i32
    %c0_i32_1 = arith.constant 0 : i32
    return %c0_i32, %c0_i32_0 : i32, i32
  }
  func.func @transform_12(%arg0: i32) -> (i32, i32) {
    %c0_i32 = arith.constant 0 : i32
    %c0_i32_0 = arith.constant 0 : i32
    %c0_i32_1 = arith.constant 0 : i32
    return %c0_i32, %c0_i32_0 : i32, i32
  }
  func.func @transform_13(%arg0: i32) -> (i32, i32, i32) {
    %c0_i32 = arith.constant 0 : i32
    %c0_i32_0 = arith.constant 0 : i32
    %c0_i32_1 = arith.constant 0 : i32
    return %arg0, %c0_i32, %c0_i32_0 : i32, i32, i32
  }
}

</mosaic_0001>

<llo_original>
// kernel: eeg_sex_net_forward.1
$region0: #{eeg_sex_net_forward.1}
  #allocation0 [shape = 'u32[]', space=smem, size = 0x4, offset = 0x4, fixed_abs, tag = 'smem constant byte address 0x4 - core index']
  #allocation1 [shape = 'u32[144,128]{1,0:T(1,128)}', space=vmem, size = 0x12000, scoped, tag = 'internal scratch']
  #allocation2 [shape = 'bf16[64,46]{1,0:T(8,128)(2,1)}', space=vmem, size = 0x4000, scoped, tag = 'scratch operand']
  #allocation3 [shape = 'f32[1,1]{1,0:T(1,128)S(1)}', space=vmem, size = 0x200, scoped, tag = 'scoped memory for eeg_sex_net_forward.1']
  %s0 = inlined_call_operand.vmem [shape: f32[2,4,64], index: 0, kind: input, shape index: {}]
  %s1 = inlined_call_operand.vmem [shape: bf16[32,28], index: 1, kind: input, shape index: {}]
  %s2 = inlined_call_operand.vmem [shape: f32[32,1], index: 2, kind: input, shape index: {}]
  %s3 = inlined_call_operand.vmem [shape: bf16[64,224], index: 3, kind: input, shape index: {}]
  %s4 = inlined_call_operand.vmem [shape: f32[64,1], index: 4, kind: input, shape index: {}]
  %s5 = inlined_call_operand.vmem [shape: bf16[64,448], index: 5, kind: input, shape index: {}]
  %s6 = inlined_call_operand.vmem [shape: f32[64,1], index: 6, kind: input, shape index: {}]
  %s7 = inlined_call_operand.vmem [shape: bf16[64,448], index: 7, kind: input, shape index: {}]
  %s8 = inlined_call_operand.vmem [shape: f32[64,1], index: 8, kind: input, shape index: {}]
  %s9 = inlined_call_operand.vmem [shape: bf16[64,28,128], index: 9, kind: input, shape index: {}]
  %s10 = inlined_call_operand.vmem [shape: f32[1,128], index: 10, kind: input, shape index: {}]
  %s11 = inlined_call_operand.vmem [shape: f32[128,1], index: 11, kind: input, shape index: {}]
  %s12 = inlined_call_operand.<no memory space> [shape: f32[1,1], index: 12, kind: input, shape index: {}]
  %s13 = inlined_call_operand.vmem [shape: f32[2,1,128], index: 13, kind: output, shape index: {}]
  %s14 = sld [smem:[#allocation0]]
  $region85: #{eeg_sex_net_forward.1} parent=0
    _
  %s16 = ssub.s32 1, %s14
  %s17 = scalar_select 0, %s16, %s14
  %v18 = vstv %s12
  %19 = vst [vmem:[#allocation3] sm:$0x1] %v18
  loop: start=0, step=1, limit=4
  $region2: #{eeg_sex_net_forward.1} parent=0 // loop_pre_header
    _
  $region3: #{eeg_sex_net_forward.1} parent=0 // loop_header
    %s21 = sphi 0, %s25
    %p22 = scmp.ge.s32.totalorder %s21, 4
    %s31 = sphi 0, %s33
    %s34 = sphi 0, %s31
    %s35 = sphi 0, %s34
    %s51 = sphi 0, %s35
    %s55 = sphi 0, %s55
    %s57 = sphi 0, %s55
    %s58 = sphi 0, %s57
    %s72 = sphi 0, %s58
    %s76 = sphi 0, %s76
    %s78 = sphi 0, %s76
    %s79 = sphi 0, %s78
    %s93 = sphi 0, %s79
    %s97 = sphi 0, %s97
    %s99 = sphi 0, %s97
    %s100 = sphi 0, %s99
    %s114 = sphi 0, %s100
    %s118 = sphi 0, %s118
    %s120 = sphi 0, %s118
    %s121 = sphi 0, %s120
    %s135 = sphi 0, %s121
    %s139 = sphi 0, %s139
    %s141 = sphi 0, %s139
    %s142 = sphi 0, %s141
    %s156 = sphi 0, %s142
    %s160 = sphi 0, %s160
    %s162 = sphi 0, %s160
    %s163 = sphi 0, %s162
    %s177 = sphi 0, %s163
    %s181 = sphi 0, %s181
    %s183 = sphi 0, %s181
    %s184 = sphi 0, %s183
    %s198 = sphi 0, %s184
    %s202 = sphi 0, %s202
    %s204 = sphi 0, %s202
    %s205 = sphi 0, %s204
    %s219 = sphi 0, %s205
    %s223 = sphi 0, %s223
    %s225 = sphi 0, %s223
    %s226 = sphi 0, %s225
    %s240 = sphi 0, %s226
    %s244 = sphi 0, %s244
    %s246 = sphi 0, %s244
    %s247 = sphi 0, %s246
    %s261 = sphi 0, %s247
    %s265 = sphi 0, %s265
    %s267 = sphi 0, %s265
    %s268 = sphi 0, %s267
    %s282 = sphi 0, %s268
    %s286 = sphi 0, %s286
    %s288 = sphi 0, %s286
    %s289 = sphi 0, %s288
    %s303 = sphi 0, %s289
    %s309 = sphi 0, %s311
    %s312 = sphi 0, %s309
    %s313 = sphi 0, %s312
    %s329 = sphi 0, %s313
  $region4: #{eeg_sex_net_forward.1} parent=0 // loop_header_branch
    %24 = sbr.rel (%p22) target = $region8
  $region5: #{eeg_sex_net_forward.1} parent=0 // loop_body
    %s26 = ssub.s32 %s21, 1
    %s27 = ssub.s32 %s21, 2
    %s28 = sadd.s32 %s21, 1
    %s29 = ssub.s32 %s21, %s28
    %p30 = scmp.eq.s32.totalorder %s29, 0
    %s32 = sadd.s32 %s31, 1
    %s33 = scalar_select %p30, %s31, %s32
    %p36 = pneg %p30
    %p37 = scmp.eq.s32.totalorder %s21, 1
    %p38 = por %p36, %p37
    %p39 = scmp.ne.s32.totalorder %s31, %s34
    %p40 = scmp.eq.s32.totalorder %s21, 0
    %p41 = por %p39, %p40
    %p42 = scmp.ne.s32.totalorder %s31, %s34
    %p43 = scmp.eq.s32.totalorder %s26, 1
    %p44 = por %p42, %p43
    %p45 = scmp.ne.s32.totalorder %s34, %s35
    %p46 = scmp.eq.s32.totalorder %s26, 0
    %p47 = por %p45, %p46
    %p48 = scmp.ne.s32.totalorder %s34, %s35
    %p49 = scmp.eq.s32.totalorder %s27, 1
    %p50 = por %p48, %p49
    %p52 = scmp.ne.s32.totalorder %s35, %s51
    %p53 = scmp.eq.s32.totalorder %s27, 0
    %p54 = por %p52, %p53
    %s56 = sadd.s32 %s55, 1
    %p59 = scmp.eq.s32.totalorder %s21, 1
    %p60 = scmp.ne.s32.totalorder %s55, %s57
    %p61 = scmp.eq.s32.totalorder %s21, 0
    %p62 = por %p60, %p61
    %p63 = scmp.ne.s32.totalorder %s55, %s57
    %p64 = scmp.eq.s32.totalorder %s26, 1
    %p65 = por %p63, %p64
    %p66 = scmp.ne.s32.totalorder %s57, %s58
    %p67 = scmp.eq.s32.totalorder %s26, 0
    %p68 = por %p66, %p67
    %p69 = scmp.ne.s32.totalorder %s57, %s58
    %p70 = scmp.eq.s32.totalorder %s27, 1
    %p71 = por %p69, %p70
    %p73 = scmp.ne.s32.totalorder %s58, %s72
    %p74 = scmp.eq.s32.totalorder %s27, 0
    %p75 = por %p73, %p74
    %s77 = sadd.s32 %s76, 1
    %p80 = scmp.eq.s32.totalorder %s21, 1
    %p81 = scmp.ne.s32.totalorder %s76, %s78
    %p82 = scmp.eq.s32.totalorder %s21, 0
    %p83 = por %p81, %p82
    %p84 = scmp.ne.s32.totalorder %s76, %s78
    %p85 = scmp.eq.s32.totalorder %s26, 1
    %p86 = por %p84, %p85
    %p87 = scmp.ne.s32.totalorder %s78, %s79
    %p88 = scmp.eq.s32.totalorder %s26, 0
    %p89 = por %p87, %p88
    %p90 = scmp.ne.s32.totalorder %s78, %s79
    %p91 = scmp.eq.s32.totalorder %s27, 1
    %p92 = por %p90, %p91
    %p94 = scmp.ne.s32.totalorder %s79, %s93
    %p95 = scmp.eq.s32.totalorder %s27, 0
    %p96 = por %p94, %p95
    %s98 = sadd.s32 %s97, 1
    %p101 = scmp.eq.s32.totalorder %s21, 1
    %p102 = scmp.ne.s32.totalorder %s97, %s99
    %p103 = scmp.eq.s32.totalorder %s21, 0
    %p104 = por %p102, %p103
    %p105 = scmp.ne.s32.totalorder %s97, %s99
    %p106 = scmp.eq.s32.totalorder %s26, 1
    %p107 = por %p105, %p106
    %p108 = scmp.ne.s32.totalorder %s99, %s100
    %p109 = scmp.eq.s32.totalorder %s26, 0
    %p110 = por %p108, %p109
    %p111 = scmp.ne.s32.totalorder %s99, %s100
    %p112 = scmp.eq.s32.totalorder %s27, 1
    %p113 = por %p111, %p112
    %p115 = scmp.ne.s32.totalorder %s100, %s114
    %p116 = scmp.eq.s32.totalorder %s27, 0
    %p117 = por %p115, %p116
    %s119 = sadd.s32 %s118, 1
    %p122 = scmp.eq.s32.totalorder %s21, 1
    %p123 = scmp.ne.s32.totalorder %s118, %s120
    %p124 = scmp.eq.s32.totalorder %s21, 0
    %p125 = por %p123, %p124
    %p126 = scmp.ne.s32.totalorder %s118, %s120
    %p127 = scmp.eq.s32.totalorder %s26, 1
    %p128 = por %p126, %p127
    %p129 = scmp.ne.s32.totalorder %s120, %s121
    %p130 = scmp.eq.s32.totalorder %s26, 0
    %p131 = por %p129, %p130
    %p132 = scmp.ne.s32.totalorder %s120, %s121
    %p133 = scmp.eq.s32.totalorder %s27, 1
    %p134 = por %p132, %p133
    %p136 = scmp.ne.s32.totalorder %s121, %s135
    %p137 = scmp.eq.s32.totalorder %s27, 0
    %p138 = por %p136, %p137
    %s140 = sadd.s32 %s139, 1
    %p143 = scmp.eq.s32.totalorder %s21, 1
    %p144 = scmp.ne.s32.totalorder %s139, %s141
    %p145 = scmp.eq.s32.totalorder %s21, 0
    %p146 = por %p144, %p145
    %p147 = scmp.ne.s32.totalorder %s139, %s141
    %p148 = scmp.eq.s32.totalorder %s26, 1
    %p149 = por %p147, %p148
    %p150 = scmp.ne.s32.totalorder %s141, %s142
    %p151 = scmp.eq.s32.totalorder %s26, 0
    %p152 = por %p150, %p151
    %p153 = scmp.ne.s32.totalorder %s141, %s142
    %p154 = scmp.eq.s32.totalorder %s27, 1
    %p155 = por %p153, %p154
    %p157 = scmp.ne.s32.totalorder %s142, %s156
    %p158 = scmp.eq.s32.totalorder %s27, 0
    %p159 = por %p157, %p158
    %s161 = sadd.s32 %s160, 1
    %p164 = scmp.eq.s32.totalorder %s21, 1
    %p165 = scmp.ne.s32.totalorder %s160, %s162
    %p166 = scmp.eq.s32.totalorder %s21, 0
    %p167 = por %p165, %p166
    %p168 = scmp.ne.s32.totalorder %s160, %s162
    %p169 = scmp.eq.s32.totalorder %s26, 1
    %p170 = por %p168, %p169
    %p171 = scmp.ne.s32.totalorder %s162, %s163
    %p172 = scmp.eq.s32.totalorder %s26, 0
    %p173 = por %p171, %p172
    %p174 = scmp.ne.s32.totalorder %s162, %s163
    %p175 = scmp.eq.s32.totalorder %s27, 1
    %p176 = por %p174, %p175
    %p178 = scmp.ne.s32.totalorder %s163, %s177
    %p179 = scmp.eq.s32.totalorder %s27, 0
    %p180 = por %p178, %p179
    %s182 = sadd.s32 %s181, 1
    %p185 = scmp.eq.s32.totalorder %s21, 1
    %p186 = scmp.ne.s32.totalorder %s181, %s183
    %p187 = scmp.eq.s32.totalorder %s21, 0
    %p188 = por %p186, %p187
    %p189 = scmp.ne.s32.totalorder %s181, %s183
    %p190 = scmp.eq.s32.totalorder %s26, 1
    %p191 = por %p189, %p190
    %p192 = scmp.ne.s32.totalorder %s183, %s184
    %p193 = scmp.eq.s32.totalorder %s26, 0
    %p194 = por %p192, %p193
    %p195 = scmp.ne.s32.totalorder %s183, %s184
    %p196 = scmp.eq.s32.totalorder %s27, 1
    %p197 = por %p195, %p196
    %p199 = scmp.ne.s32.totalorder %s184, %s198
    %p200 = scmp.eq.s32.totalorder %s27, 0
    %p201 = por %p199, %p200
    %s203 = sadd.s32 %s202, 1
    %p206 = scmp.eq.s32.totalorder %s21, 1
    %p207 = scmp.ne.s32.totalorder %s202, %s204
    %p208 = scmp.eq.s32.totalorder %s21, 0
    %p209 = por %p207, %p208
    %p210 = scmp.ne.s32.totalorder %s202, %s204
    %p211 = scmp.eq.s32.totalorder %s26, 1
    %p212 = por %p210, %p211
    %p213 = scmp.ne.s32.totalorder %s204, %s205
    %p214 = scmp.eq.s32.totalorder %s26, 0
    %p215 = por %p213, %p214
    %p216 = scmp.ne.s32.totalorder %s204, %s205
    %p217 = scmp.eq.s32.totalorder %s27, 1
    %p218 = por %p216, %p217
    %p220 = scmp.ne.s32.totalorder %s205, %s219
    %p221 = scmp.eq.s32.totalorder %s27, 0
    %p222 = por %p220, %p221
    %s224 = sadd.s32 %s223, 1
    %p227 = scmp.eq.s32.totalorder %s21, 1
    %p228 = scmp.ne.s32.totalorder %s223, %s225
    %p229 = scmp.eq.s32.totalorder %s21, 0
    %p230 = por %p228, %p229
    %p231 = scmp.ne.s32.totalorder %s223, %s225
    %p232 = scmp.eq.s32.totalorder %s26, 1
    %p233 = por %p231, %p232
    %p234 = scmp.ne.s32.totalorder %s225, %s226
    %p235 = scmp.eq.s32.totalorder %s26, 0
    %p236 = por %p234, %p235
    %p237 = scmp.ne.s32.totalorder %s225, %s226
    %p238 = scmp.eq.s32.totalorder %s27, 1
    %p239 = por %p237, %p238
    %p241 = scmp.ne.s32.totalorder %s226, %s240
    %p242 = scmp.eq.s32.totalorder %s27, 0
    %p243 = por %p241, %p242
    %s245 = sadd.s32 %s244, 1
    %p248 = scmp.eq.s32.totalorder %s21, 1
    %p249 = scmp.ne.s32.totalorder %s244, %s246
    %p250 = scmp.eq.s32.totalorder %s21, 0
    %p251 = por %p249, %p250
    %p252 = scmp.ne.s32.totalorder %s244, %s246
    %p253 = scmp.eq.s32.totalorder %s26, 1
    %p254 = por %p252, %p253
    %p255 = scmp.ne.s32.totalorder %s246, %s247
    %p256 = scmp.eq.s32.totalorder %s26, 0
    %p257 = por %p255, %p256
    %p258 = scmp.ne.s32.totalorder %s246, %s247
    %p259 = scmp.eq.s32.totalorder %s27, 1
    %p260 = por %p258, %p259
    %p262 = scmp.ne.s32.totalorder %s247, %s261
    %p263 = scmp.eq.s32.totalorder %s27, 0
    %p264 = por %p262, %p263
    %s266 = sadd.s32 %s265, 1
    %p269 = scmp.eq.s32.totalorder %s21, 1
    %p270 = scmp.ne.s32.totalorder %s265, %s267
    %p271 = scmp.eq.s32.totalorder %s21, 0
    %p272 = por %p270, %p271
    %p273 = scmp.ne.s32.totalorder %s265, %s267
    %p274 = scmp.eq.s32.totalorder %s26, 1
    %p275 = por %p273, %p274
    %p276 = scmp.ne.s32.totalorder %s267, %s268
    %p277 = scmp.eq.s32.totalorder %s26, 0
    %p278 = por %p276, %p277
    %p279 = scmp.ne.s32.totalorder %s267, %s268
    %p280 = scmp.eq.s32.totalorder %s27, 1
    %p281 = por %p279, %p280
    %p283 = scmp.ne.s32.totalorder %s268, %s282
    %p284 = scmp.eq.s32.totalorder %s27, 0
    %p285 = por %p283, %p284
    %s287 = sadd.s32 %s286, 1
    %p290 = scmp.eq.s32.totalorder %s21, 1
    %p291 = scmp.ne.s32.totalorder %s286, %s288
    %p292 = scmp.eq.s32.totalorder %s21, 0
    %p293 = por %p291, %p292
    %p294 = scmp.ne.s32.totalorder %s286, %s288
    %p295 = scmp.eq.s32.totalorder %s26, 1
    %p296 = por %p294, %p295
    %p297 = scmp.ne.s32.totalorder %s288, %s289
    %p298 = scmp.eq.s32.totalorder %s26, 0
    %p299 = por %p297, %p298
    %p300 = scmp.ne.s32.totalorder %s288, %s289
    %p301 = scmp.eq.s32.totalorder %s27, 1
    %p302 = por %p300, %p301
    %p304 = scmp.ne.s32.totalorder %s289, %s303
    %p305 = scmp.eq.s32.totalorder %s27, 0
    %p306 = por %p304, %p305
    %s307 = ssub.s32 %s21, %s28
    %p308 = scmp.eq.s32.totalorder %s307, 0
    %s310 = sadd.s32 %s309, 1
    %s311 = scalar_select %p308, %s309, %s310
    %p314 = pneg %p308
    %p315 = scmp.eq.s32.totalorder %s21, 1
    %p316 = por %p314, %p315
    %p317 = scmp.ne.s32.totalorder %s309, %s312
    %p318 = scmp.eq.s32.totalorder %s21, 0
    %p319 = por %p317, %p318
    %p320 = scmp.ne.s32.totalorder %s309, %s312
    %p321 = scmp.eq.s32.totalorder %s26, 1
    %p322 = por %p320, %p321
    %p323 = scmp.ne.s32.totalorder %s312, %s313
    %p324 = scmp.eq.s32.totalorder %s26, 0
    %p325 = por %p323, %p324
    %p326 = scmp.ne.s32.totalorder %s312, %s313
    %p327 = scmp.eq.s32.totalorder %s27, 1
    %p328 = por %p326, %p327
    %p330 = scmp.ne.s32.totalorder %s313, %s329
    %p331 = scmp.eq.s32.totalorder %s27, 0
    %p332 = por %p330, %p331
    %p333 = scmp.le.s32.totalorder 1, %s21
    %p334 = scmp.lt.s32.totalorder %s21, 3
    %p335 = pnand %p333, %p334
    %p336 = pneg %p335
    // Predicated region
    $region9: #{eeg_sex_net_forward.1} parent=5 // pred_check
      _
    $region10: #{eeg_sex_net_forward.1} parent=5 // pred_check_branch
      %338 = sbr.rel (%p335) target = $region12
    $region11: #{eeg_sex_net_forward.1} parent=5 // pred_region
      %s339 = ssub.s32 %s21, 1
      // Predicated region
      $region13: #{eeg_sex_net_forward.1} parent=11 // pred_check
        %p340 = pneg %p68
      $region14: #{eeg_sex_net_forward.1} parent=11 // pred_check_branch
        %342 = sbr.rel (%p340) target = $region16
      $region15: #{eeg_sex_net_forward.1} parent=11 // pred_region
        _
      $region16: #{eeg_sex_net_forward.1} parent=11 // pred_fallthru
        _
      // Predicated region
      $region17: #{eeg_sex_net_forward.1} parent=11 // pred_check
        %p343 = pneg %p89
      $region18: #{eeg_sex_net_forward.1} parent=11 // pred_check_branch
        %345 = sbr.rel (%p343) target = $region20
      $region19: #{eeg_sex_net_forward.1} parent=11 // pred_region
        _
      $region20: #{eeg_sex_net_forward.1} parent=11 // pred_fallthru
        _
      // Predicated region
      $region21: #{eeg_sex_net_forward.1} parent=11 // pred_check
        %p346 = pneg %p110
      $region22: #{eeg_sex_net_forward.1} parent=11 // pred_check_branch
        %348 = sbr.rel (%p346) target = $region24
      $region23: #{eeg_sex_net_forward.1} parent=11 // pred_region
        _
      $region24: #{eeg_sex_net_forward.1} parent=11 // pred_fallthru
        _
      // Predicated region
      $region25: #{eeg_sex_net_forward.1} parent=11 // pred_check
        %p349 = pneg %p131
      $region26: #{eeg_sex_net_forward.1} parent=11 // pred_check_branch
        %351 = sbr.rel (%p349) target = $region28
      $region27: #{eeg_sex_net_forward.1} parent=11 // pred_region
        _
      $region28: #{eeg_sex_net_forward.1} parent=11 // pred_fallthru
        _
      // Predicated region
      $region29: #{eeg_sex_net_forward.1} parent=11 // pred_check
        %p352 = pneg %p152
      $region30: #{eeg_sex_net_forward.1} parent=11 // pred_check_branch
        %354 = sbr.rel (%p352) target = $region32
      $region31: #{eeg_sex_net_forward.1} parent=11 // pred_region
        _
      $region32: #{eeg_sex_net_forward.1} parent=11 // pred_fallthru
        _
      // Predicated region
      $region33: #{eeg_sex_net_forward.1} parent=11 // pred_check
        %p355 = pneg %p173
      $region34: #{eeg_sex_net_forward.1} parent=11 // pred_check_branch
        %357 = sbr.rel (%p355) target = $region36
      $region35: #{eeg_sex_net_forward.1} parent=11 // pred_region
        _
      $region36: #{eeg_sex_net_forward.1} parent=11 // pred_fallthru
        _
      // Predicated region
      $region37: #{eeg_sex_net_forward.1} parent=11 // pred_check
        %p358 = pneg %p194
      $region38: #{eeg_sex_net_forward.1} parent=11 // pred_check_branch
        %360 = sbr.rel (%p358) target = $region40
      $region39: #{eeg_sex_net_forward.1} parent=11 // pred_region
        _
      $region40: #{eeg_sex_net_forward.1} parent=11 // pred_fallthru
        _
      // Predicated region
      $region41: #{eeg_sex_net_forward.1} parent=11 // pred_check
        %p361 = pneg %p215
      $region42: #{eeg_sex_net_forward.1} parent=11 // pred_check_branch
        %363 = sbr.rel (%p361) target = $region44
      $region43: #{eeg_sex_net_forward.1} parent=11 // pred_region
        _
      $region44: #{eeg_sex_net_forward.1} parent=11 // pred_fallthru
        _
      // Predicated region
      $region45: #{eeg_sex_net_forward.1} parent=11 // pred_check
        %p364 = pneg %p236
      $region46: #{eeg_sex_net_forward.1} parent=11 // pred_check_branch
        %366 = sbr.rel (%p364) target = $region48
      $region47: #{eeg_sex_net_forward.1} parent=11 // pred_region
        _
      $region48: #{eeg_sex_net_forward.1} parent=11 // pred_fallthru
        _
      // Predicated region
      $region49: #{eeg_sex_net_forward.1} parent=11 // pred_check
        %p367 = pneg %p257
      $region50: #{eeg_sex_net_forward.1} parent=11 // pred_check_branch
        %369 = sbr.rel (%p367) target = $region52
      $region51: #{eeg_sex_net_forward.1} parent=11 // pred_region
        _
      $region52: #{eeg_sex_net_forward.1} parent=11 // pred_fallthru
        _
      // Predicated region
      $region53: #{eeg_sex_net_forward.1} parent=11 // pred_check
        %p370 = pneg %p278
      $region54: #{eeg_sex_net_forward.1} parent=11 // pred_check_branch
        %372 = sbr.rel (%p370) target = $region56
      $region55: #{eeg_sex_net_forward.1} parent=11 // pred_region
        _
      $region56: #{eeg_sex_net_forward.1} parent=11 // pred_fallthru
        _
      // Predicated region
      $region57: #{eeg_sex_net_forward.1} parent=11 // pred_check
        %p373 = pneg %p299
      $region58: #{eeg_sex_net_forward.1} parent=11 // pred_check_branch
        %375 = sbr.rel (%p373) target = $region60
      $region59: #{eeg_sex_net_forward.1} parent=11 // pred_region
        _
      $region60: #{eeg_sex_net_forward.1} parent=11 // pred_fallthru
        _
    $region12: #{eeg_sex_net_forward.1} parent=5 // pred_fallthru
      _
    %p376 = scmp.lt.s32.totalorder %s21, 2
    // Predicated region
    $region61: #{eeg_sex_net_forward.1} parent=5 // pred_check
      %p377 = pneg %p376
    $region62: #{eeg_sex_net_forward.1} parent=5 // pred_check_branch
      %379 = sbr.rel (%p377) target = $region64
    $region63: #{eeg_sex_net_forward.1} parent=5 // pred_region
      // Predicated region
      $region65: #{eeg_sex_net_forward.1} parent=63 // pred_check
        %p380 = pneg %p41
      $region66: #{eeg_sex_net_forward.1} parent=63 // pred_check_branch
        %382 = sbr.rel (%p380) target = $region68
      $region67: #{eeg_sex_net_forward.1} parent=63 // pred_region
        %p383 = scmp.lt.s32.totalorder %s21, 1
        %s384 = scalar_select %p383, %s21, 1
        %s385 = smul.addr %s384, 4
        %s386 = scalar_lea.vmem %s0, %s385
      $region68: #{eeg_sex_net_forward.1} parent=63 // pred_fallthru
        _
    $region64: #{eeg_sex_net_forward.1} parent=5 // pred_fallthru
      _
    %p387 = scmp.le.s32.totalorder 1, %s21
    %p388 = scmp.lt.s32.totalorder %s21, 3
    %p389 = pnand %p387, %p388
    %p390 = pneg %p389
    // Predicated region
    $region69: #{eeg_sex_net_forward.1} parent=5 // pred_check
      _
    $region70: #{eeg_sex_net_forward.1} parent=5 // pred_check_branch
      %392 = sbr.rel (%p389) target = $region72
    $region71: #{eeg_sex_net_forward.1} parent=5 // pred_region
      %s393 = ssub.s32 %s21, 1
      %p394 = scmp.lt.s32.totalorder %s26, 1
      %s395 = scalar_select %p394, %s26, 1
      %s396 = smul.addr %s395, 4
      %s397 = scalar_lea.vmem %s0, %s396
      %p398 = pneg %p47
      %p399 = pneg %p44
      %p400 = pneg %p68
      %p401 = pneg %p65
      %p402 = pneg %p89
      %p403 = pneg %p86
      %p404 = pneg %p110
      %p405 = pneg %p107
      %p406 = pneg %p131
      %p407 = pneg %p128
      %p408 = pneg %p152
      %p409 = pneg %p149
      %p410 = pneg %p173
      %p411 = pneg %p170
      %p412 = pneg %p194
      %p413 = pneg %p191
      %p414 = pneg %p215
      %p415 = pneg %p212
      %p416 = pneg %p236
      %p417 = pneg %p233
      %p418 = pneg %p257
      %p419 = pneg %p254
      %p420 = pneg %p278
      %p421 = pneg %p275
      %p422 = pneg %p299
      %p423 = pneg %p296
      %p424 = pneg %p325
      %p425 = pneg %p322
      %p426 = scmp.lt.s32.totalorder %s26, 1
      %s427 = scalar_select %p426, %s26, 1
      %s428 = scalar_lea.vmem %s13, %s427
      %p429 = scmp.lt.s32.totalorder %s26, 1
      %s430 = scalar_select %p429, %s26, 1
      %s431 = smul.addr %s430, 4
      %s432 = scalar_lea.vmem %s0, %s431
      %p433 = scmp.lt.s32.totalorder %s26, 1
      %s434 = scalar_select %p433, %s26, 1
      %s435 = scalar_lea.vmem %s13, %s434
      %v437 = vld [vmem:[%s432] sm:$0xf]
      %v438 = vpack.c.bf16 %v437, %v437
      %v440 = vrot.slane %v438, 6
      %441 = vrot.lane.b32.xlu0 %v440, 125
      %v442 = vpop.permute.xlu0 %441
      %v443 = vrot.slane %v438, 4
      %444 = vrot.lane.b32.xlu0 %v443, 122
      %v445 = vpop.permute.xlu0 %444
      %v446 = vrot.slane %v438, 2
      %447 = vrot.lane.b32.xlu0 %v446, 119
      %v448 = vpop.permute.xlu0 %447
      %449 = vrot.lane.b32.xlu0 %v438, 116
      %v450 = vpop.permute.xlu0 %449
      %451 = vrot.lane.b32.xlu0 %v440, 113
      %v452 = vpop.permute.xlu0 %451
      %453 = vrot.lane.b32.xlu0 %v443, 110
      %v454 = vpop.permute.xlu0 %453
      %vm455 = vcmask 1041408
      %v458 = vsel %vm455, %v438, %v442
      %vm459 = vcmask 1043456
      %v461 = vsel %vm459, %v458, %v445
      %vm462 = vcmask 1045504
      %v464 = vsel %vm462, %v461, %v448
      %v468 = vsel %vm455, %v450, %v452
      %v470 = vsel %vm459, %v468, %v454
      %v471 = vld [vmem:[%s1] sm:$0xf]
      %v472 = vld [vmem:[%s1 + $0x4] sm:$0xf]
      %v473 = vld [vmem:[%s1 + $0x8] sm:$0xf]
      %v474 = vld [vmem:[%s1 + $0xc] sm:$0xf]
      %v475 = vld [vmem:[%s2] sm:$0xff]
      %v476 = vld [vmem:[%s2 + $0x8] sm:$0xff]
      %v477 = vld [vmem:[%s2 + $0x10] sm:$0xff]
      %v478 = vld [vmem:[%s2 + $0x18] sm:$0xff]
      %480 = vset.pattern.permute.xlu0 0
      %481 = vperm.xlu0 %480, %v475
      %v482 = vpop.permute.xlu0 %481
      %485 = vset.pattern.permute.xlu0 0
      %486 = vperm.xlu0 %485, %v476
      %v487 = vpop.permute.xlu0 %486
      %490 = vset.pattern.permute.xlu0 0
      %491 = vperm.xlu0 %490, %v477
      %v492 = vpop.permute.xlu0 %491
      %495 = vset.pattern.permute.xlu0 0
      %496 = vperm.xlu0 %495, %v478
      %v497 = vpop.permute.xlu0 %496
      %v503 = vunpack.c.l.b16 %v471
      %v504 = vunpack.c.l.b16 %v472
      %v505 = vunpack.c.l.b16 %v473
      %v506 = vunpack.c.l.b16 %v474
      %v507 = vpack.c.b16 %v504, %v503
      %v508 = vpack.c.b16 %v506, %v505
      %vm509 = vcmask 228352
      %v511 = vsel %vm509, %v507, 0
      %v514 = vsel %vm509, %v508, 0
      %v516 = vsel %vm462, %v470, 0
      %518 = vmatprep.subr.bf16.mxu0 0
      %519 = vmatpush1.bf16.msra.mxu0 0
      %520 = vmatprep.subr.bf16.mxu0 0
      %521 = vmatpush1.bf16.msra.mxu0 0
      %522 = vmatprep.subr.bf16.mxu0 0
      %523 = vmatpush1.bf16.msra.mxu0 0
      %524 = vmatprep.subr.bf16.mxu0 0
      %525 = vmatpush1.bf16.msra.mxu0 0
      %526 = vmatprep.subr.bf16.mxu0 0
      %527 = vmatpush1.bf16.msra.mxu0 0
      %528 = vmatprep.subr.bf16.mxu0 0
      %529 = vmatpush1.bf16.msra.mxu0 0
      %530 = vmatprep.subr.bf16.mxu0 0
      %531 = vmatpush1.bf16.msra.mxu0 %v516
      %532 = vmatprep.subr.bf16.mxu0 0
      %533 = vmatpush1.bf16.msra.mxu0 %v464
      %534 = vmatprep.subr.bf16.mxu0 0
      %535 = vmatpush2.bf16.msra.mxu0 0
      %536 = vmatprep.subr.bf16.mxu0 0
      %537 = vmatpush2.bf16.msra.mxu0 0
      %538 = vmatprep.subr.bf16.mxu0 0
      %539 = vmatpush2.bf16.msra.mxu0 0
      %540 = vmatprep.subr.bf16.mxu0 0
      %541 = vmatpush2.bf16.msra.mxu0 0
      %542 = vmatprep.subr.bf16.mxu0 0
      %543 = vmatpush2.bf16.msra.mxu0 0
      %544 = vmatprep.subr.bf16.mxu0 0
      %545 = vmatpush2.bf16.msra.mxu0 0
      %546 = vmatprep.subr.bf16.mxu0 0
      %547 = vmatpush2.bf16.msra.mxu0 0
      %548 = vmatprep.subr.bf16.mxu0 0
      %549 = vmatpush2.bf16.msra.mxu0 0
      %550 = vmatprep.mubr.bf16.mxu0 0
      %551 = vmatmul.mubr.bf16.gmra.mxu0 %v511
      %v552 = vpop.f32.mrf.mxu0
      %v553 = vadd.f32 %v482, %v552
      %v554 = vpop.f32.mrf.mxu0
      %v555 = vpop.f32.mrf.mxu0
      %v556 = vadd.f32 %v487, %v555
      %v557 = vpop.f32.mrf.mxu0
      %558 = vmatprep.mubr.bf16.mxu0 0
      %559 = vmatmul.mubr.bf16.gmra.mxu0 %v514
      %v560 = vpop.f32.mrf.mxu0
      %v561 = vadd.f32 %v492, %v560
      %v562 = vpop.f32.mrf.mxu0
      %v563 = vpop.f32.mrf.mxu0
      %v564 = vadd.f32 %v497, %v563
      %v565 = vpop.f32.mrf.mxu0
      %566 = vdwg.mxu0
      %v567 = vmax.f32 %v553, 0.0
      %v568 = vmax.f32 %v556, 0.0
      %v569 = vmax.f32 %v561, 0.0
      %v570 = vmax.f32 %v564, 0.0
      %v571 = vpack.c.bf16 %v568, %v567
      %v572 = vpack.c.bf16 %v570, %v569
      %575 = vrot.lane.b32.xlu0 %v571, 125
      %v576 = vpop.permute.xlu0 %575
      %577 = vrot.lane.b32.xlu0 %v572, 125
      %v578 = vpop.permute.xlu0 %577
      %581 = vrot.lane.b32.xlu0 %v571, 122
      %v582 = vpop.permute.xlu0 %581
      %583 = vrot.lane.b32.xlu0 %v572, 122
      %v584 = vpop.permute.xlu0 %583
      %587 = vrot.lane.b32.xlu0 %v571, 119
      %v588 = vpop.permute.xlu0 %587
      %589 = vrot.lane.b32.xlu0 %v572, 119
      %v590 = vpop.permute.xlu0 %589
      %593 = vrot.lane.b32.xlu0 %v571, 116
      %v594 = vpop.permute.xlu0 %593
      %595 = vrot.lane.b32.xlu0 %v572, 116
      %v596 = vpop.permute.xlu0 %595
      %599 = vrot.lane.b32.xlu0 %v571, 113
      %v600 = vpop.permute.xlu0 %599
      %601 = vrot.lane.b32.xlu0 %v572, 113
      %v602 = vpop.permute.xlu0 %601
      %605 = vrot.lane.b32.xlu0 %v571, 110
      %v606 = vpop.permute.xlu0 %605
      %607 = vrot.lane.b32.xlu0 %v572, 110
      %v608 = vpop.permute.xlu0 %607
      %v611 = vld [vmem:[%s3] sm:$0xff]
      %v612 = vld [vmem:[%s3 + $0x8] sm:$0xff]
      %v613 = vld [vmem:[%s3 + $0x10] sm:$0xff]
      %v614 = vld [vmem:[%s3 + $0x18] sm:$0xff]
      %v615 = vld [vmem:[%s3 + $0x20] sm:$0xff]
      %v616 = vld [vmem:[%s3 + $0x28] sm:$0xff]
      %v617 = vld [vmem:[%s3 + $0x30] sm:$0xff]
      %v618 = vld [vmem:[%s3 + $0x38] sm:$0xff]
      %v619 = vld [vmem:[%s4] sm:$0xff]
      %v620 = vld [vmem:[%s4 + $0x8] sm:$0xff]
      %v621 = vld [vmem:[%s4 + $0x10] sm:$0xff]
      %v622 = vld [vmem:[%s4 + $0x18] sm:$0xff]
      %v623 = vld [vmem:[%s4 + $0x20] sm:$0xff]
      %v624 = vld [vmem:[%s4 + $0x28] sm:$0xff]
      %v625 = vld [vmem:[%s4 + $0x30] sm:$0xff]
      %v626 = vld [vmem:[%s4 + $0x38] sm:$0xff]
      %628 = vset.pattern.permute.xlu0 0
      %629 = vperm.xlu0 %628, %v619
      %v630 = vpop.permute.xlu0 %629
      %633 = vset.pattern.permute.xlu0 0
      %634 = vperm.xlu0 %633, %v620
      %v635 = vpop.permute.xlu0 %634
      %638 = vset.pattern.permute.xlu0 0
      %639 = vperm.xlu0 %638, %v621
      %v640 = vpop.permute.xlu0 %639
      %643 = vset.pattern.permute.xlu0 0
      %644 = vperm.xlu0 %643, %v622
      %v645 = vpop.permute.xlu0 %644
      %648 = vset.pattern.permute.xlu0 0
      %649 = vperm.xlu0 %648, %v623
      %v650 = vpop.permute.xlu0 %649
      %653 = vset.pattern.permute.xlu0 0
      %654 = vperm.xlu0 %653, %v624
      %v655 = vpop.permute.xlu0 %654
      %658 = vset.pattern.permute.xlu0 0
      %659 = vperm.xlu0 %658, %v625
      %v660 = vpop.permute.xlu0 %659
      %663 = vset.pattern.permute.xlu0 0
      %664 = vperm.xlu0 %663, %v626
      %v665 = vpop.permute.xlu0 %664
      %v675 = vunpack.c.l.b16 %v611
      %v676 = vunpack.c.h.b16 %v611
      %v677 = vunpack.c.l.b16 %v612
      %v678 = vunpack.c.h.b16 %v612
      %v679 = vunpack.c.l.b16 %v613
      %v680 = vunpack.c.h.b16 %v613
      %v681 = vunpack.c.l.b16 %v614
      %v682 = vunpack.c.h.b16 %v614
      %v683 = vunpack.c.l.b16 %v615
      %v684 = vunpack.c.h.b16 %v615
      %v685 = vunpack.c.l.b16 %v616
      %v686 = vunpack.c.h.b16 %v616
      %v687 = vunpack.c.l.b16 %v617
      %v688 = vunpack.c.h.b16 %v617
      %v689 = vunpack.c.l.b16 %v618
      %v690 = vunpack.c.h.b16 %v618
      %v691 = vpack.c.b16 %v677, %v675
      %v692 = vpack.c.b16 %v678, %v676
      %v693 = vpack.c.b16 %v681, %v679
      %v694 = vpack.c.b16 %v682, %v680
      %v695 = vpack.c.b16 %v685, %v683
      %v696 = vpack.c.b16 %v686, %v684
      %v697 = vpack.c.b16 %v689, %v687
      %v698 = vpack.c.b16 %v690, %v688
      %vm703 = vcmask 785408
      %v705 = vsel %vm703, %v692, 0
      %v708 = vsel %vm703, %v694, 0
      %v711 = vsel %vm703, %v696, 0
      %v714 = vsel %vm703, %v698, 0
      %716 = vmatprep.subr.bf16.mxu0 0
      %717 = vmatpush1.bf16.msra.mxu0 %v590
      %718 = vmatprep.subr.bf16.mxu0 0
      %719 = vmatpush1.bf16.msra.mxu0 %v588
      %720 = vmatprep.subr.bf16.mxu0 0
      %721 = vmatpush1.bf16.msra.mxu0 %v584
      %722 = vmatprep.subr.bf16.mxu0 0
      %723 = vmatpush1.bf16.msra.mxu0 %v582
      %724 = vmatprep.subr.bf16.mxu0 0
      %725 = vmatpush1.bf16.msra.mxu0 %v578
      %726 = vmatprep.subr.bf16.mxu0 0
      %727 = vmatpush1.bf16.msra.mxu0 %v576
      %728 = vmatprep.subr.bf16.mxu0 0
      %729 = vmatpush1.bf16.msra.mxu0 %v572
      %730 = vmatprep.subr.bf16.mxu0 0
      %731 = vmatpush1.bf16.msra.mxu0 %v571
      %732 = vmatprep.subr.bf16.mxu0 0
      %733 = vmatpush2.bf16.msra.mxu0 0
      %734 = vmatprep.subr.bf16.mxu0 0
      %735 = vmatpush2.bf16.msra.mxu0 0
      %736 = vmatprep.subr.bf16.mxu0 0
      %737 = vmatpush2.bf16.msra.mxu0 %v608
      %738 = vmatprep.subr.bf16.mxu0 0
      %739 = vmatpush2.bf16.msra.mxu0 %v606
      %740 = vmatprep.subr.bf16.mxu0 0
      %741 = vmatpush2.bf16.msra.mxu0 %v602
      %742 = vmatprep.subr.bf16.mxu0 0
      %743 = vmatpush2.bf16.msra.mxu0 %v600
      %744 = vmatprep.subr.bf16.mxu0 0
      %745 = vmatpush2.bf16.msra.mxu0 %v596
      %746 = vmatprep.subr.bf16.mxu0 0
      %747 = vmatpush2.bf16.msra.mxu0 %v594
      %748 = vmatprep.mubr.bf16.mxu0 %v705
      %749 = vmatmul.mubr.bf16.gmra.mxu0 %v691
      %v750 = vpop.f32.mrf.mxu0
      %v751 = vadd.f32 %v630, %v750
      %v752 = vpop.f32.mrf.mxu0
      %v753 = vpop.f32.mrf.mxu0
      %v754 = vadd.f32 %v635, %v753
      %v755 = vpop.f32.mrf.mxu0
      %756 = vmatprep.mubr.bf16.mxu0 %v708
      %757 = vmatmul.mubr.bf16.gmra.mxu0 %v693
      %v758 = vpop.f32.mrf.mxu0
      %v759 = vadd.f32 %v640, %v758
      %v760 = vpop.f32.mrf.mxu0
      %v761 = vpop.f32.mrf.mxu0
      %v762 = vadd.f32 %v645, %v761
      %v763 = vpop.f32.mrf.mxu0
      %764 = vmatprep.mubr.bf16.mxu0 %v711
      %765 = vmatmul.mubr.bf16.gmra.mxu0 %v695
      %v766 = vpop.f32.mrf.mxu0
      %v767 = vadd.f32 %v650, %v766
      %v768 = vpop.f32.mrf.mxu0
      %v769 = vpop.f32.mrf.mxu0
      %v770 = vadd.f32 %v655, %v769
      %v771 = vpop.f32.mrf.mxu0
      %772 = vmatprep.mubr.bf16.mxu0 %v714
      %773 = vmatmul.mubr.bf16.gmra.mxu0 %v697
      %v774 = vpop.f32.mrf.mxu0
      %v775 = vadd.f32 %v660, %v774
      %v776 = vpop.f32.mrf.mxu0
      %v777 = vpop.f32.mrf.mxu0
      %v778 = vadd.f32 %v665, %v777
      %v779 = vpop.f32.mrf.mxu0
      %780 = vdwg.mxu0
      %v781 = vmax.f32 %v751, 0.0
      %v782 = vmax.f32 %v754, 0.0
      %v783 = vmax.f32 %v759, 0.0
      %v784 = vmax.f32 %v762, 0.0
      %v785 = vmax.f32 %v767, 0.0
      %v786 = vmax.f32 %v770, 0.0
      %v787 = vmax.f32 %v775, 0.0
      %v788 = vmax.f32 %v778, 0.0
      %vm789 = vcmask 371712
      %790 = vst.msk [vmem:[#allocation2] sm:$0xf] %vm789, 0
      %791 = vst.msk [vmem:[#allocation2 + $0x4] sm:$0xf] %vm789, 0
      %792 = vst.msk [vmem:[#allocation2 + $0x8] sm:$0xf] %vm789, 0
      %793 = vst.msk [vmem:[#allocation2 + $0xc] sm:$0xf] %vm789, 0
      %794 = vst.msk [vmem:[#allocation2 + $0x10] sm:$0xf] %vm789, 0
      %795 = vst.msk [vmem:[#allocation2 + $0x14] sm:$0xf] %vm789, 0
      %796 = vst.msk [vmem:[#allocation2 + $0x18] sm:$0xf] %vm789, 0
      %797 = vst.msk [vmem:[#allocation2 + $0x1c] sm:$0xf] %vm789, 0
      %v798 = vpack.c.bf16 %v782, %v781
      %v799 = vpack.c.bf16 %v784, %v783
      %v800 = vpack.c.bf16 %v786, %v785
      %v801 = vpack.c.bf16 %v788, %v787
      %v806 = vunpack.c.l.b16 %v798
      %v807 = vunpack.c.h.b16 %v798
      %v808 = vunpack.c.l.b16 %v799
      %v809 = vunpack.c.h.b16 %v799
      %v810 = vunpack.c.l.b16 %v800
      %v811 = vunpack.c.h.b16 %v800
      %v812 = vunpack.c.l.b16 %v801
      %v813 = vunpack.c.h.b16 %v801
      %v814 = vpack.c.b16 %v806, %v806
      %v815 = vpack.c.b16 %v807, %v807
      %v816 = vpack.c.b16 %v808, %v808
      %v817 = vpack.c.b16 %v809, %v809
      %v818 = vpack.c.b16 %v810, %v810
      %v819 = vpack.c.b16 %v811, %v811
      %v820 = vpack.c.b16 %v812, %v812
      %v821 = vpack.c.b16 %v813, %v813
      %822 = vrot.lane.b32.xlu0 %v814, 9
      %v823 = vpop.permute.xlu0 %822
      %824 = vrot.lane.b32.xlu0 %v815, 9
      %v825 = vpop.permute.xlu0 %824
      %826 = vrot.lane.b32.xlu0 %v816, 9
      %v827 = vpop.permute.xlu0 %826
      %828 = vrot.lane.b32.xlu0 %v817, 9
      %v829 = vpop.permute.xlu0 %828
      %830 = vrot.lane.b32.xlu0 %v818, 9
      %v831 = vpop.permute.xlu0 %830
      %832 = vrot.lane.b32.xlu0 %v819, 9
      %v833 = vpop.permute.xlu0 %832
      %834 = vrot.lane.b32.xlu0 %v820, 9
      %v835 = vpop.permute.xlu0 %834
      %836 = vrot.lane.b32.xlu0 %v821, 9
      %v837 = vpop.permute.xlu0 %836
      %vm846 = vcmask 298056
      %847 = vst.msk [vmem:[#allocation2] sm:$0xf] %vm846, %v823
      %848 = vst.msk [vmem:[#allocation2 + $0x4] sm:$0xf] %vm846, %v825
      %849 = vst.msk [vmem:[#allocation2 + $0x8] sm:$0xf] %vm846, %v827
      %850 = vst.msk [vmem:[#allocation2 + $0xc] sm:$0xf] %vm846, %v829
      %851 = vst.msk [vmem:[#allocation2 + $0x10] sm:$0xf] %vm846, %v831
      %852 = vst.msk [vmem:[#allocation2 + $0x14] sm:$0xf] %vm846, %v833
      %853 = vst.msk [vmem:[#allocation2 + $0x18] sm:$0xf] %vm846, %v835
      %854 = vst.msk [vmem:[#allocation2 + $0x1c] sm:$0xf] %vm846, %v837
      %v855 = vld [vmem:[#allocation2] sm:$0xf]
      %v856 = vld [vmem:[#allocation2 + $0x4] sm:$0xf]
      %v857 = vld [vmem:[#allocation2 + $0x8] sm:$0xf]
      %v858 = vld [vmem:[#allocation2 + $0xc] sm:$0xf]
      %v859 = vld [vmem:[#allocation2 + $0x10] sm:$0xf]
      %v860 = vld [vmem:[#allocation2 + $0x14] sm:$0xf]
      %v861 = vld [vmem:[#allocation2 + $0x18] sm:$0xf]
      %v862 = vld [vmem:[#allocation2 + $0x1c] sm:$0xf]
      %v871 = vunpack.c.l.b16 %v855
      %v872 = vunpack.c.l.b16 %v856
      %v873 = vunpack.c.l.b16 %v857
      %v874 = vunpack.c.l.b16 %v858
      %v875 = vunpack.c.l.b16 %v859
      %v876 = vunpack.c.l.b16 %v860
      %v877 = vunpack.c.l.b16 %v861
      %v878 = vunpack.c.l.b16 %v862
      %v879 = vpack.c.b16 %v872, %v871
      %v880 = vpack.c.b16 %v874, %v873
      %v881 = vpack.c.b16 %v876, %v875
      %v882 = vpack.c.b16 %v878, %v877
      %887 = vrot.lane.b32.xlu0 %v879, 125
      %v888 = vpop.permute.xlu0 %887
      %889 = vrot.lane.b32.xlu0 %v880, 125
      %v890 = vpop.permute.xlu0 %889
      %891 = vrot.lane.b32.xlu0 %v881, 125
      %v892 = vpop.permute.xlu0 %891
      %893 = vrot.lane.b32.xlu0 %v882, 125
      %v894 = vpop.permute.xlu0 %893
      %899 = vrot.lane.b32.xlu0 %v879, 122
      %v900 = vpop.permute.xlu0 %899
      %901 = vrot.lane.b32.xlu0 %v880, 122
      %v902 = vpop.permute.xlu0 %901
      %903 = vrot.lane.b32.xlu0 %v881, 122
      %v904 = vpop.permute.xlu0 %903
      %905 = vrot.lane.b32.xlu0 %v882, 122
      %v906 = vpop.permute.xlu0 %905
      %911 = vrot.lane.b32.xlu0 %v879, 119
      %v912 = vpop.permute.xlu0 %911
      %913 = vrot.lane.b32.xlu0 %v880, 119
      %v914 = vpop.permute.xlu0 %913
      %915 = vrot.lane.b32.xlu0 %v881, 119
      %v916 = vpop.permute.xlu0 %915
      %917 = vrot.lane.b32.xlu0 %v882, 119
      %v918 = vpop.permute.xlu0 %917
      %923 = vrot.lane.b32.xlu0 %v879, 116
      %v924 = vpop.permute.xlu0 %923
      %925 = vrot.lane.b32.xlu0 %v880, 116
      %v926 = vpop.permute.xlu0 %925
      %927 = vrot.lane.b32.xlu0 %v881, 116
      %v928 = vpop.permute.xlu0 %927
      %929 = vrot.lane.b32.xlu0 %v882, 116
      %v930 = vpop.permute.xlu0 %929
      %935 = vrot.lane.b32.xlu0 %v879, 113
      %v936 = vpop.permute.xlu0 %935
      %937 = vrot.lane.b32.xlu0 %v880, 113
      %v938 = vpop.permute.xlu0 %937
      %939 = vrot.lane.b32.xlu0 %v881, 113
      %v940 = vpop.permute.xlu0 %939
      %941 = vrot.lane.b32.xlu0 %v882, 113
      %v942 = vpop.permute.xlu0 %941
      %947 = vrot.lane.b32.xlu0 %v879, 110
      %v948 = vpop.permute.xlu0 %947
      %949 = vrot.lane.b32.xlu0 %v880, 110
      %v950 = vpop.permute.xlu0 %949
      %951 = vrot.lane.b32.xlu0 %v881, 110
      %v952 = vpop.permute.xlu0 %951
      %953 = vrot.lane.b32.xlu0 %v882, 110
      %v954 = vpop.permute.xlu0 %953
      %v959 = vld [vmem:[%s5] sm:$0xff]
      %v960 = vld [vmem:[%s5 + $0x8] sm:$0xff]
      %v961 = vld [vmem:[%s5 + $0x10] sm:$0xff]
      %v962 = vld [vmem:[%s5 + $0x18] sm:$0xff]
      %v963 = vld [vmem:[%s5 + $0x20] sm:$0xff]
      %v964 = vld [vmem:[%s5 + $0x28] sm:$0xff]
      %v965 = vld [vmem:[%s5 + $0x30] sm:$0xff]
      %v966 = vld [vmem:[%s5 + $0x38] sm:$0xff]
      %v967 = vld [vmem:[%s5 + $0x40] sm:$0xff]
      %v968 = vld [vmem:[%s5 + $0x48] sm:$0xff]
      %v969 = vld [vmem:[%s5 + $0x50] sm:$0xff]
      %v970 = vld [vmem:[%s5 + $0x58] sm:$0xff]
      %v971 = vld [vmem:[%s5 + $0x60] sm:$0xff]
      %v972 = vld [vmem:[%s5 + $0x68] sm:$0xff]
      %v973 = vld [vmem:[%s5 + $0x70] sm:$0xff]
      %v974 = vld [vmem:[%s5 + $0x78] sm:$0xff]
      %v975 = vld [vmem:[%s6] sm:$0xff]
      %v976 = vld [vmem:[%s6 + $0x8] sm:$0xff]
      %v977 = vld [vmem:[%s6 + $0x10] sm:$0xff]
      %v978 = vld [vmem:[%s6 + $0x18] sm:$0xff]
      %v979 = vld [vmem:[%s6 + $0x20] sm:$0xff]
      %v980 = vld [vmem:[%s6 + $0x28] sm:$0xff]
      %v981 = vld [vmem:[%s6 + $0x30] sm:$0xff]
      %v982 = vld [vmem:[%s6 + $0x38] sm:$0xff]
      %984 = vset.pattern.permute.xlu0 0
      %985 = vperm.xlu0 %984, %v975
      %v986 = vpop.permute.xlu0 %985
      %989 = vset.pattern.permute.xlu0 0
      %990 = vperm.xlu0 %989, %v976
      %v991 = vpop.permute.xlu0 %990
      %994 = vset.pattern.permute.xlu0 0
      %995 = vperm.xlu0 %994, %v977
      %v996 = vpop.permute.xlu0 %995
      %999 = vset.pattern.permute.xlu0 0
      %1000 = vperm.xlu0 %999, %v978
      %v1001 = vpop.permute.xlu0 %1000
      %1004 = vset.pattern.permute.xlu0 0
      %1005 = vperm.xlu0 %1004, %v979
      %v1006 = vpop.permute.xlu0 %1005
      %1009 = vset.pattern.permute.xlu0 0
      %1010 = vperm.xlu0 %1009, %v980
      %v1011 = vpop.permute.xlu0 %1010
      %1014 = vset.pattern.permute.xlu0 0
      %1015 = vperm.xlu0 %1014, %v981
      %v1016 = vpop.permute.xlu0 %1015
      %1019 = vset.pattern.permute.xlu0 0
      %1020 = vperm.xlu0 %1019, %v982
      %v1021 = vpop.permute.xlu0 %1020
      %v1039 = vunpack.c.l.b16 %v959
      %v1040 = vunpack.c.h.b16 %v959
      %v1041 = vunpack.c.l.b16 %v960
      %v1042 = vunpack.c.h.b16 %v960
      %v1043 = vunpack.c.l.b16 %v961
      %v1044 = vunpack.c.h.b16 %v961
      %v1045 = vunpack.c.l.b16 %v962
      %v1046 = vunpack.c.h.b16 %v962
      %v1047 = vunpack.c.l.b16 %v963
      %v1048 = vunpack.c.h.b16 %v963
      %v1049 = vunpack.c.l.b16 %v964
      %v1050 = vunpack.c.h.b16 %v964
      %v1051 = vunpack.c.l.b16 %v965
      %v1052 = vunpack.c.h.b16 %v965
      %v1053 = vunpack.c.l.b16 %v966
      %v1054 = vunpack.c.h.b16 %v966
      %v1055 = vunpack.c.l.b16 %v967
      %v1056 = vunpack.c.h.b16 %v967
      %v1057 = vunpack.c.l.b16 %v968
      %v1058 = vunpack.c.h.b16 %v968
      %v1059 = vunpack.c.l.b16 %v969
      %v1060 = vunpack.c.h.b16 %v969
      %v1061 = vunpack.c.l.b16 %v970
      %v1062 = vunpack.c.h.b16 %v970
      %v1063 = vunpack.c.l.b16 %v971
      %v1064 = vunpack.c.h.b16 %v971
      %v1065 = vunpack.c.l.b16 %v972
      %v1066 = vunpack.c.h.b16 %v972
      %v1067 = vunpack.c.l.b16 %v973
      %v1068 = vunpack.c.h.b16 %v973
      %v1069 = vunpack.c.l.b16 %v974
      %v1070 = vunpack.c.h.b16 %v974
      %v1071 = vpack.c.b16 %v1043, %v1039
      %v1072 = vpack.c.b16 %v1044, %v1040
      %v1073 = vpack.c.b16 %v1045, %v1041
      %v1074 = vpack.c.b16 %v1046, %v1042
      %v1075 = vpack.c.b16 %v1051, %v1047
      %v1076 = vpack.c.b16 %v1052, %v1048
      %v1077 = vpack.c.b16 %v1053, %v1049
      %v1078 = vpack.c.b16 %v1054, %v1050
      %v1079 = vpack.c.b16 %v1059, %v1055
      %v1080 = vpack.c.b16 %v1060, %v1056
      %v1081 = vpack.c.b16 %v1061, %v1057
      %v1082 = vpack.c.b16 %v1062, %v1058
      %v1083 = vpack.c.b16 %v1067, %v1063
      %v1084 = vpack.c.b16 %v1068, %v1064
      %v1085 = vpack.c.b16 %v1069, %v1065
      %v1086 = vpack.c.b16 %v1070, %v1066
      %vm1099 = vcmask 523264
      %v1101 = vsel %vm1099, %v1074, 0
      %v1104 = vsel %vm1099, %v1078, 0
      %v1107 = vsel %vm1099, %v1082, 0
      %v1110 = vsel %vm1099, %v1086, 0
      %1112 = vmatprep.subr.bf16.mxu0 0
      %1113 = vmatpush1.bf16.msra.mxu0 %v894
      %1114 = vmatprep.subr.bf16.mxu0 0
      %1115 = vmatpush1.bf16.msra.mxu0 %v892
      %1116 = vmatprep.subr.bf16.mxu0 0
      %1117 = vmatpush1.bf16.msra.mxu0 %v890
      %1118 = vmatprep.subr.bf16.mxu0 0
      %1119 = vmatpush1.bf16.msra.mxu0 %v888
      %1120 = vmatprep.subr.bf16.mxu0 0
      %1121 = vmatpush1.bf16.msra.mxu0 %v882
      %1122 = vmatprep.subr.bf16.mxu0 0
      %1123 = vmatpush1.bf16.msra.mxu0 %v881
      %1124 = vmatprep.subr.bf16.mxu0 0
      %1125 = vmatpush1.bf16.msra.mxu0 %v880
      %1126 = vmatprep.subr.bf16.mxu0 0
      %1127 = vmatpush1.bf16.msra.mxu0 %v879
      %1128 = vmatprep.subr.bf16.mxu0 0
      %1129 = vmatpush2.bf16.msra.mxu0 %v918
      %1130 = vmatprep.subr.bf16.mxu0 0
      %1131 = vmatpush2.bf16.msra.mxu0 %v916
      %1132 = vmatprep.subr.bf16.mxu0 0
      %1133 = vmatpush2.bf16.msra.mxu0 %v914
      %1134 = vmatprep.subr.bf16.mxu0 0
      %1135 = vmatpush2.bf16.msra.mxu0 %v912
      %1136 = vmatprep.subr.bf16.mxu0 0
      %1137 = vmatpush2.bf16.msra.mxu0 %v906
      %1138 = vmatprep.subr.bf16.mxu0 0
      %1139 = vmatpush2.bf16.msra.mxu0 %v904
      %1140 = vmatprep.subr.bf16.mxu0 0
      %1141 = vmatpush2.bf16.msra.mxu0 %v902
      %1142 = vmatprep.subr.bf16.mxu0 0
      %1143 = vmatpush2.bf16.msra.mxu0 %v900
      %1144 = vmatprep.mubr.bf16.mxu0 %v1072
      %1145 = vmatmul.mubr.bf16.gmra.mxu0 %v1071
      %v1146 = vpop.f32.mrf.mxu0
      %v1147 = vadd.f32 %v986, %v1146
      %v1148 = vpop.f32.mrf.mxu0
      %v1149 = vpop.f32.mrf.mxu0
      %v1150 = vadd.f32 %v991, %v1149
      %v1151 = vpop.f32.mrf.mxu0
      %1152 = vmatprep.mubr.bf16.mxu0 %v1076
      %1153 = vmatmul.mubr.bf16.gmra.mxu0 %v1075
      %v1154 = vpop.f32.mrf.mxu0
      %v1155 = vadd.f32 %v996, %v1154
      %v1156 = vpop.f32.mrf.mxu0
      %v1157 = vpop.f32.mrf.mxu0
      %v1158 = vadd.f32 %v1001, %v1157
      %v1159 = vpop.f32.mrf.mxu0
      %1160 = vmatprep.mubr.bf16.mxu0 %v1080
      %1161 = vmatmul.mubr.bf16.gmra.mxu0 %v1079
      %v1162 = vpop.f32.mrf.mxu0
      %v1163 = vadd.f32 %v1006, %v1162
      %v1164 = vpop.f32.mrf.mxu0
      %v1165 = vpop.f32.mrf.mxu0
      %v1166 = vadd.f32 %v1011, %v1165
      %v1167 = vpop.f32.mrf.mxu0
      %1168 = vmatprep.mubr.bf16.mxu0 %v1084
      %1169 = vmatmul.mubr.bf16.gmra.mxu0 %v1083
      %v1170 = vpop.f32.mrf.mxu0
      %v1171 = vadd.f32 %v1016, %v1170
      %v1172 = vpop.f32.mrf.mxu0
      %v1173 = vpop.f32.mrf.mxu0
      %v1174 = vadd.f32 %v1021, %v1173
      %v1175 = vpop.f32.mrf.mxu0
      %1176 = vdwg.mxu0
      %1177 = vmatprep.subr.bf16.mxu0 0
      %1178 = vmatpush1.bf16.msra.mxu0 %v942
      %1179 = vmatprep.subr.bf16.mxu0 0
      %1180 = vmatpush1.bf16.msra.mxu0 %v940
      %1181 = vmatprep.subr.bf16.mxu0 0
      %1182 = vmatpush1.bf16.msra.mxu0 %v938
      %1183 = vmatprep.subr.bf16.mxu0 0
      %1184 = vmatpush1.bf16.msra.mxu0 %v936
      %1185 = vmatprep.subr.bf16.mxu0 0
      %1186 = vmatpush1.bf16.msra.mxu0 %v930
      %1187 = vmatprep.subr.bf16.mxu0 0
      %1188 = vmatpush1.bf16.msra.mxu0 %v928
      %1189 = vmatprep.subr.bf16.mxu0 0
      %1190 = vmatpush1.bf16.msra.mxu0 %v926
      %1191 = vmatprep.subr.bf16.mxu0 0
      %1192 = vmatpush1.bf16.msra.mxu0 %v924
      %1193 = vmatprep.subr.bf16.mxu0 0
      %1194 = vmatpush2.bf16.msra.mxu0 0
      %1195 = vmatprep.subr.bf16.mxu0 0
      %1196 = vmatpush2.bf16.msra.mxu0 0
      %1197 = vmatprep.subr.bf16.mxu0 0
      %1198 = vmatpush2.bf16.msra.mxu0 0
      %1199 = vmatprep.subr.bf16.mxu0 0
      %1200 = vmatpush2.bf16.msra.mxu0 0
      %1201 = vmatprep.subr.bf16.mxu0 0
      %1202 = vmatpush2.bf16.msra.mxu0 %v954
      %1203 = vmatprep.subr.bf16.mxu0 0
      %1204 = vmatpush2.bf16.msra.mxu0 %v952
      %1205 = vmatprep.subr.bf16.mxu0 0
      %1206 = vmatpush2.bf16.msra.mxu0 %v950
      %1207 = vmatprep.subr.bf16.mxu0 0
      %1208 = vmatpush2.bf16.msra.mxu0 %v948
      %1209 = vmatprep.mubr.bf16.mxu0 %v1101
      %1210 = vmatmul.mubr.bf16.gmra.mxu0 %v1073
      %v1211 = vpop.f32.mrf.mxu0
      %v1212 = vadd.f32 %v1147, %v1211
      %v1213 = vpop.f32.mrf.mxu0
      %v1214 = vpop.f32.mrf.mxu0
      %v1215 = vadd.f32 %v1150, %v1214
      %v1216 = vpop.f32.mrf.mxu0
      %1217 = vmatprep.mubr.bf16.mxu0 %v1104
      %1218 = vmatmul.mubr.bf16.gmra.mxu0 %v1077
      %v1219 = vpop.f32.mrf.mxu0
      %v1220 = vadd.f32 %v1155, %v1219
      %v1221 = vpop.f32.mrf.mxu0
      %v1222 = vpop.f32.mrf.mxu0
      %v1223 = vadd.f32 %v1158, %v1222
      %v1224 = vpop.f32.mrf.mxu0
      %1225 = vmatprep.mubr.bf16.mxu0 %v1107
      %1226 = vmatmul.mubr.bf16.gmra.mxu0 %v1081
      %v1227 = vpop.f32.mrf.mxu0
      %v1228 = vadd.f32 %v1163, %v1227
      %v1229 = vpop.f32.mrf.mxu0
      %v1230 = vpop.f32.mrf.mxu0
      %v1231 = vadd.f32 %v1166, %v1230
      %v1232 = vpop.f32.mrf.mxu0
      %1233 = vmatprep.mubr.bf16.mxu0 %v1110
      %1234 = vmatmul.mubr.bf16.gmra.mxu0 %v1085
      %v1235 = vpop.f32.mrf.mxu0
      %v1236 = vadd.f32 %v1171, %v1235
      %v1237 = vpop.f32.mrf.mxu0
      %v1238 = vpop.f32.mrf.mxu0
      %v1239 = vadd.f32 %v1174, %v1238
      %v1240 = vpop.f32.mrf.mxu0
      %1241 = vdwg.mxu0
      %v1242 = vmax.f32 %v1212, 0.0
      %v1243 = vmax.f32 %v1215, 0.0
      %v1244 = vmax.f32 %v1220, 0.0
      %v1245 = vmax.f32 %v1223, 0.0
      %v1246 = vmax.f32 %v1228, 0.0
      %v1247 = vmax.f32 %v1231, 0.0
      %v1248 = vmax.f32 %v1236, 0.0
      %v1249 = vmax.f32 %v1239, 0.0
      %v1250 = vpack.c.bf16 %v1243, %v1242
      %v1251 = vpack.c.bf16 %v1245, %v1244
      %v1252 = vpack.c.bf16 %v1247, %v1246
      %v1253 = vpack.c.bf16 %v1249, %v1248
      %v1258 = vunpack.c.l.b16 %v1250
      %v1259 = vunpack.c.h.b16 %v1250
      %v1260 = vunpack.c.l.b16 %v1251
      %v1261 = vunpack.c.h.b16 %v1251
      %v1262 = vunpack.c.l.b16 %v1252
      %v1263 = vunpack.c.h.b16 %v1252
      %v1264 = vunpack.c.l.b16 %v1253
      %v1265 = vunpack.c.h.b16 %v1253
      %v1266 = vpack.c.b16 %v1258, %v1258
      %v1267 = vpack.c.b16 %v1259, %v1259
      %v1268 = vpack.c.b16 %v1260, %v1260
      %v1269 = vpack.c.b16 %v1261, %v1261
      %v1270 = vpack.c.b16 %v1262, %v1262
      %v1271 = vpack.c.b16 %v1263, %v1263
      %v1272 = vpack.c.b16 %v1264, %v1264
      %v1273 = vpack.c.b16 %v1265, %v1265
      %1274 = vrot.lane.b32.xlu0 %v1266, 9
      %v1275 = vpop.permute.xlu0 %1274
      %1276 = vrot.lane.b32.xlu0 %v1267, 9
      %v1277 = vpop.permute.xlu0 %1276
      %1278 = vrot.lane.b32.xlu0 %v1268, 9
      %v1279 = vpop.permute.xlu0 %1278
      %1280 = vrot.lane.b32.xlu0 %v1269, 9
      %v1281 = vpop.permute.xlu0 %1280
      %1282 = vrot.lane.b32.xlu0 %v1270, 9
      %v1283 = vpop.permute.xlu0 %1282
      %1284 = vrot.lane.b32.xlu0 %v1271, 9
      %v1285 = vpop.permute.xlu0 %1284
      %1286 = vrot.lane.b32.xlu0 %v1272, 9
      %v1287 = vpop.permute.xlu0 %1286
      %1288 = vrot.lane.b32.xlu0 %v1273, 9
      %v1289 = vpop.permute.xlu0 %1288
      %1298 = vst.msk [vmem:[#allocation2] sm:$0xf] %vm846, %v1275
      %1299 = vst.msk [vmem:[#allocation2 + $0x4] sm:$0xf] %vm846, %v1277
      %1300 = vst.msk [vmem:[#allocation2 + $0x8] sm:$0xf] %vm846, %v1279
      %1301 = vst.msk [vmem:[#allocation2 + $0xc] sm:$0xf] %vm846, %v1281
      %1302 = vst.msk [vmem:[#allocation2 + $0x10] sm:$0xf] %vm846, %v1283
      %1303 = vst.msk [vmem:[#allocation2 + $0x14] sm:$0xf] %vm846, %v1285
      %1304 = vst.msk [vmem:[#allocation2 + $0x18] sm:$0xf] %vm846, %v1287
      %1305 = vst.msk [vmem:[#allocation2 + $0x1c] sm:$0xf] %vm846, %v1289
      %v1306 = vld [vmem:[#allocation2] sm:$0xf]
      %v1307 = vld [vmem:[#allocation2 + $0x4] sm:$0xf]
      %v1308 = vld [vmem:[#allocation2 + $0x8] sm:$0xf]
      %v1309 = vld [vmem:[#allocation2 + $0xc] sm:$0xf]
      %v1310 = vld [vmem:[#allocation2 + $0x10] sm:$0xf]
      %v1311 = vld [vmem:[#allocation2 + $0x14] sm:$0xf]
      %v1312 = vld [vmem:[#allocation2 + $0x18] sm:$0xf]
      %v1313 = vld [vmem:[#allocation2 + $0x1c] sm:$0xf]
      %v1322 = vunpack.c.l.b16 %v1306
      %v1323 = vunpack.c.l.b16 %v1307
      %v1324 = vunpack.c.l.b16 %v1308
      %v1325 = vunpack.c.l.b16 %v1309
      %v1326 = vunpack.c.l.b16 %v1310
      %v1327 = vunpack.c.l.b16 %v1311
      %v1328 = vunpack.c.l.b16 %v1312
      %v1329 = vunpack.c.l.b16 %v1313
      %v1330 = vpack.c.b16 %v1323, %v1322
      %v1331 = vpack.c.b16 %v1325, %v1324
      %v1332 = vpack.c.b16 %v1327, %v1326
      %v1333 = vpack.c.b16 %v1329, %v1328
      %1338 = vrot.lane.b32.xlu0 %v1330, 125
      %v1339 = vpop.permute.xlu0 %1338
      %1340 = vrot.lane.b32.xlu0 %v1331, 125
      %v1341 = vpop.permute.xlu0 %1340
      %1342 = vrot.lane.b32.xlu0 %v1332, 125
      %v1343 = vpop.permute.xlu0 %1342
      %1344 = vrot.lane.b32.xlu0 %v1333, 125
      %v1345 = vpop.permute.xlu0 %1344
      %1350 = vrot.lane.b32.xlu0 %v1330, 122
      %v1351 = vpop.permute.xlu0 %1350
      %1352 = vrot.lane.b32.xlu0 %v1331, 122
      %v1353 = vpop.permute.xlu0 %1352
      %1354 = vrot.lane.b32.xlu0 %v1332, 122
      %v1355 = vpop.permute.xlu0 %1354
      %1356 = vrot.lane.b32.xlu0 %v1333, 122
      %v1357 = vpop.permute.xlu0 %1356
      %1362 = vrot.lane.b32.xlu0 %v1330, 119
      %v1363 = vpop.permute.xlu0 %1362
      %1364 = vrot.lane.b32.xlu0 %v1331, 119
      %v1365 = vpop.permute.xlu0 %1364
      %1366 = vrot.lane.b32.xlu0 %v1332, 119
      %v1367 = vpop.permute.xlu0 %1366
      %1368 = vrot.lane.b32.xlu0 %v1333, 119
      %v1369 = vpop.permute.xlu0 %1368
      %1374 = vrot.lane.b32.xlu0 %v1330, 116
      %v1375 = vpop.permute.xlu0 %1374
      %1376 = vrot.lane.b32.xlu0 %v1331, 116
      %v1377 = vpop.permute.xlu0 %1376
      %1378 = vrot.lane.b32.xlu0 %v1332, 116
      %v1379 = vpop.permute.xlu0 %1378
      %1380 = vrot.lane.b32.xlu0 %v1333, 116
      %v1381 = vpop.permute.xlu0 %1380
      %1386 = vrot.lane.b32.xlu0 %v1330, 113
      %v1387 = vpop.permute.xlu0 %1386
      %1388 = vrot.lane.b32.xlu0 %v1331, 113
      %v1389 = vpop.permute.xlu0 %1388
      %1390 = vrot.lane.b32.xlu0 %v1332, 113
      %v1391 = vpop.permute.xlu0 %1390
      %1392 = vrot.lane.b32.xlu0 %v1333, 113
      %v1393 = vpop.permute.xlu0 %1392
      %1398 = vrot.lane.b32.xlu0 %v1330, 110
      %v1399 = vpop.permute.xlu0 %1398
      %1400 = vrot.lane.b32.xlu0 %v1331, 110
      %v1401 = vpop.permute.xlu0 %1400
      %1402 = vrot.lane.b32.xlu0 %v1332, 110
      %v1403 = vpop.permute.xlu0 %1402
      %1404 = vrot.lane.b32.xlu0 %v1333, 110
      %v1405 = vpop.permute.xlu0 %1404
      %v1410 = vld [vmem:[%s7] sm:$0xff]
      %v1411 = vld [vmem:[%s7 + $0x8] sm:$0xff]
      %v1412 = vld [vmem:[%s7 + $0x10] sm:$0xff]
      %v1413 = vld [vmem:[%s7 + $0x18] sm:$0xff]
      %v1414 = vld [vmem:[%s7 + $0x20] sm:$0xff]
      %v1415 = vld [vmem:[%s7 + $0x28] sm:$0xff]
      %v1416 = vld [vmem:[%s7 + $0x30] sm:$0xff]
      %v1417 = vld [vmem:[%s7 + $0x38] sm:$0xff]
      %v1418 = vld [vmem:[%s7 + $0x40] sm:$0xff]
      %v1419 = vld [vmem:[%s7 + $0x48] sm:$0xff]
      %v1420 = vld [vmem:[%s7 + $0x50] sm:$0xff]
      %v1421 = vld [vmem:[%s7 + $0x58] sm:$0xff]
      %v1422 = vld [vmem:[%s7 + $0x60] sm:$0xff]
      %v1423 = vld [vmem:[%s7 + $0x68] sm:$0xff]
      %v1424 = vld [vmem:[%s7 + $0x70] sm:$0xff]
      %v1425 = vld [vmem:[%s7 + $0x78] sm:$0xff]
      %v1426 = vld [vmem:[%s8] sm:$0xff]
      %v1427 = vld [vmem:[%s8 + $0x8] sm:$0xff]
      %v1428 = vld [vmem:[%s8 + $0x10] sm:$0xff]
      %v1429 = vld [vmem:[%s8 + $0x18] sm:$0xff]
      %v1430 = vld [vmem:[%s8 + $0x20] sm:$0xff]
      %v1431 = vld [vmem:[%s8 + $0x28] sm:$0xff]
      %v1432 = vld [vmem:[%s8 + $0x30] sm:$0xff]
      %v1433 = vld [vmem:[%s8 + $0x38] sm:$0xff]
      %1435 = vset.pattern.permute.xlu0 0
      %1436 = vperm.xlu0 %1435, %v1426
      %v1437 = vpop.permute.xlu0 %1436
      %1440 = vset.pattern.permute.xlu0 0
      %1441 = vperm.xlu0 %1440, %v1427
      %v1442 = vpop.permute.xlu0 %1441
      %1445 = vset.pattern.permute.xlu0 0
      %1446 = vperm.xlu0 %1445, %v1428
      %v1447 = vpop.permute.xlu0 %1446
      %1450 = vset.pattern.permute.xlu0 0
      %1451 = vperm.xlu0 %1450, %v1429
      %v1452 = vpop.permute.xlu0 %1451
      %1455 = vset.pattern.permute.xlu0 0
      %1456 = vperm.xlu0 %1455, %v1430
      %v1457 = vpop.permute.xlu0 %1456
      %1460 = vset.pattern.permute.xlu0 0
      %1461 = vperm.xlu0 %1460, %v1431
      %v1462 = vpop.permute.xlu0 %1461
      %1465 = vset.pattern.permute.xlu0 0
      %1466 = vperm.xlu0 %1465, %v1432
      %v1467 = vpop.permute.xlu0 %1466
      %1470 = vset.pattern.permute.xlu0 0
      %1471 = vperm.xlu0 %1470, %v1433
      %v1472 = vpop.permute.xlu0 %1471
      %v1490 = vunpack.c.l.b16 %v1410
      %v1491 = vunpack.c.h.b16 %v1410
      %v1492 = vunpack.c.l.b16 %v1411
      %v1493 = vunpack.c.h.b16 %v1411
      %v1494 = vunpack.c.l.b16 %v1412
      %v1495 = vunpack.c.h.b16 %v1412
      %v1496 = vunpack.c.l.b16 %v1413
      %v1497 = vunpack.c.h.b16 %v1413
      %v1498 = vunpack.c.l.b16 %v1414
      %v1499 = vunpack.c.h.b16 %v1414
      %v1500 = vunpack.c.l.b16 %v1415
      %v1501 = vunpack.c.h.b16 %v1415
      %v1502 = vunpack.c.l.b16 %v1416
      %v1503 = vunpack.c.h.b16 %v1416
      %v1504 = vunpack.c.l.b16 %v1417
      %v1505 = vunpack.c.h.b16 %v1417
      %v1506 = vunpack.c.l.b16 %v1418
      %v1507 = vunpack.c.h.b16 %v1418
      %v1508 = vunpack.c.l.b16 %v1419
      %v1509 = vunpack.c.h.b16 %v1419
      %v1510 = vunpack.c.l.b16 %v1420
      %v1511 = vunpack.c.h.b16 %v1420
      %v1512 = vunpack.c.l.b16 %v1421
      %v1513 = vunpack.c.h.b16 %v1421
      %v1514 = vunpack.c.l.b16 %v1422
      %v1515 = vunpack.c.h.b16 %v1422
      %v1516 = vunpack.c.l.b16 %v1423
      %v1517 = vunpack.c.h.b16 %v1423
      %v1518 = vunpack.c.l.b16 %v1424
      %v1519 = vunpack.c.h.b16 %v1424
      %v1520 = vunpack.c.l.b16 %v1425
      %v1521 = vunpack.c.h.b16 %v1425
      %v1522 = vpack.c.b16 %v1494, %v1490
      %v1523 = vpack.c.b16 %v1495, %v1491
      %v1524 = vpack.c.b16 %v1496, %v1492
      %v1525 = vpack.c.b16 %v1497, %v1493
      %v1526 = vpack.c.b16 %v1502, %v1498
      %v1527 = vpack.c.b16 %v1503, %v1499
      %v1528 = vpack.c.b16 %v1504, %v1500
      %v1529 = vpack.c.b16 %v1505, %v1501
      %v1530 = vpack.c.b16 %v1510, %v1506
      %v1531 = vpack.c.b16 %v1511, %v1507
      %v1532 = vpack.c.b16 %v1512, %v1508
      %v1533 = vpack.c.b16 %v1513, %v1509
      %v1534 = vpack.c.b16 %v1518, %v1514
      %v1535 = vpack.c.b16 %v1519, %v1515
      %v1536 = vpack.c.b16 %v1520, %v1516
      %v1537 = vpack.c.b16 %v1521, %v1517
      %v1551 = vsel %vm1099, %v1525, 0
      %v1554 = vsel %vm1099, %v1529, 0
      %v1557 = vsel %vm1099, %v1533, 0
      %v1560 = vsel %vm1099, %v1537, 0
      %1562 = vmatprep.subr.bf16.mxu0 0
      %1563 = vmatpush1.bf16.msra.mxu0 %v1345
      %1564 = vmatprep.subr.bf16.mxu0 0
      %1565 = vmatpush1.bf16.msra.mxu0 %v1343
      %1566 = vmatprep.subr.bf16.mxu0 0
      %1567 = vmatpush1.bf16.msra.mxu0 %v1341
      %1568 = vmatprep.subr.bf16.mxu0 0
      %1569 = vmatpush1.bf16.msra.mxu0 %v1339
      %1570 = vmatprep.subr.bf16.mxu0 0
      %1571 = vmatpush1.bf16.msra.mxu0 %v1333
      %1572 = vmatprep.subr.bf16.mxu0 0
      %1573 = vmatpush1.bf16.msra.mxu0 %v1332
      %1574 = vmatprep.subr.bf16.mxu0 0
      %1575 = vmatpush1.bf16.msra.mxu0 %v1331
      %1576 = vmatprep.subr.bf16.mxu0 0
      %1577 = vmatpush1.bf16.msra.mxu0 %v1330
      %1578 = vmatprep.subr.bf16.mxu0 0
      %1579 = vmatpush2.bf16.msra.mxu0 %v1369
      %1580 = vmatprep.subr.bf16.mxu0 0
      %1581 = vmatpush2.bf16.msra.mxu0 %v1367
      %1582 = vmatprep.subr.bf16.mxu0 0
      %1583 = vmatpush2.bf16.msra.mxu0 %v1365
      %1584 = vmatprep.subr.bf16.mxu0 0
      %1585 = vmatpush2.bf16.msra.mxu0 %v1363
      %1586 = vmatprep.subr.bf16.mxu0 0
      %1587 = vmatpush2.bf16.msra.mxu0 %v1357
      %1588 = vmatprep.subr.bf16.mxu0 0
      %1589 = vmatpush2.bf16.msra.mxu0 %v1355
      %1590 = vmatprep.subr.bf16.mxu0 0
      %1591 = vmatpush2.bf16.msra.mxu0 %v1353
      %1592 = vmatprep.subr.bf16.mxu0 0
      %1593 = vmatpush2.bf16.msra.mxu0 %v1351
      %1594 = vmatprep.mubr.bf16.mxu0 %v1523
      %1595 = vmatmul.mubr.bf16.gmra.mxu0 %v1522
      %v1596 = vpop.f32.mrf.mxu0
      %v1597 = vadd.f32 %v1437, %v1596
      %v1598 = vpop.f32.mrf.mxu0
      %v1599 = vpop.f32.mrf.mxu0
      %v1600 = vadd.f32 %v1442, %v1599
      %v1601 = vpop.f32.mrf.mxu0
      %1602 = vmatprep.mubr.bf16.mxu0 %v1527
      %1603 = vmatmul.mubr.bf16.gmra.mxu0 %v1526
      %v1604 = vpop.f32.mrf.mxu0
      %v1605 = vadd.f32 %v1447, %v1604
      %v1606 = vpop.f32.mrf.mxu0
      %v1607 = vpop.f32.mrf.mxu0
      %v1608 = vadd.f32 %v1452, %v1607
      %v1609 = vpop.f32.mrf.mxu0
      %1610 = vmatprep.mubr.bf16.mxu0 %v1531
      %1611 = vmatmul.mubr.bf16.gmra.mxu0 %v1530
      %v1612 = vpop.f32.mrf.mxu0
      %v1613 = vadd.f32 %v1457, %v1612
      %v1614 = vpop.f32.mrf.mxu0
      %v1615 = vpop.f32.mrf.mxu0
      %v1616 = vadd.f32 %v1462, %v1615
      %v1617 = vpop.f32.mrf.mxu0
      %1618 = vmatprep.mubr.bf16.mxu0 %v1535
      %1619 = vmatmul.mubr.bf16.gmra.mxu0 %v1534
      %v1620 = vpop.f32.mrf.mxu0
      %v1621 = vadd.f32 %v1467, %v1620
      %v1622 = vpop.f32.mrf.mxu0
      %v1623 = vpop.f32.mrf.mxu0
      %v1624 = vadd.f32 %v1472, %v1623
      %v1625 = vpop.f32.mrf.mxu0
      %1626 = vdwg.mxu0
      %1627 = vmatprep.subr.bf16.mxu0 0
      %1628 = vmatpush1.bf16.msra.mxu0 %v1393
      %1629 = vmatprep.subr.bf16.mxu0 0
      %1630 = vmatpush1.bf16.msra.mxu0 %v1391
      %1631 = vmatprep.subr.bf16.mxu0 0
      %1632 = vmatpush1.bf16.msra.mxu0 %v1389
      %1633 = vmatprep.subr.bf16.mxu0 0
      %1634 = vmatpush1.bf16.msra.mxu0 %v1387
      %1635 = vmatprep.subr.bf16.mxu0 0
      %1636 = vmatpush1.bf16.msra.mxu0 %v1381
      %1637 = vmatprep.subr.bf16.mxu0 0
      %1638 = vmatpush1.bf16.msra.mxu0 %v1379
      %1639 = vmatprep.subr.bf16.mxu0 0
      %1640 = vmatpush1.bf16.msra.mxu0 %v1377
      %1641 = vmatprep.subr.bf16.mxu0 0
      %1642 = vmatpush1.bf16.msra.mxu0 %v1375
      %1643 = vmatprep.subr.bf16.mxu0 0
      %1644 = vmatpush2.bf16.msra.mxu0 0
      %1645 = vmatprep.subr.bf16.mxu0 0
      %1646 = vmatpush2.bf16.msra.mxu0 0
      %1647 = vmatprep.subr.bf16.mxu0 0
      %1648 = vmatpush2.bf16.msra.mxu0 0
      %1649 = vmatprep.subr.bf16.mxu0 0
      %1650 = vmatpush2.bf16.msra.mxu0 0
      %1651 = vmatprep.subr.bf16.mxu0 0
      %1652 = vmatpush2.bf16.msra.mxu0 %v1405
      %1653 = vmatprep.subr.bf16.mxu0 0
      %1654 = vmatpush2.bf16.msra.mxu0 %v1403
      %1655 = vmatprep.subr.bf16.mxu0 0
      %1656 = vmatpush2.bf16.msra.mxu0 %v1401
      %1657 = vmatprep.subr.bf16.mxu0 0
      %1658 = vmatpush2.bf16.msra.mxu0 %v1399
      %1659 = vmatprep.mubr.bf16.mxu0 %v1551
      %1660 = vmatmul.mubr.bf16.gmra.mxu0 %v1524
      %v1661 = vpop.f32.mrf.mxu0
      %v1662 = vadd.f32 %v1597, %v1661
      %v1663 = vpop.f32.mrf.mxu0
      %v1664 = vpop.f32.mrf.mxu0
      %v1665 = vadd.f32 %v1600, %v1664
      %v1666 = vpop.f32.mrf.mxu0
      %1667 = vmatprep.mubr.bf16.mxu0 %v1554
      %1668 = vmatmul.mubr.bf16.gmra.mxu0 %v1528
      %v1669 = vpop.f32.mrf.mxu0
      %v1670 = vadd.f32 %v1605, %v1669
      %v1671 = vpop.f32.mrf.mxu0
      %v1672 = vpop.f32.mrf.mxu0
      %v1673 = vadd.f32 %v1608, %v1672
      %v1674 = vpop.f32.mrf.mxu0
      %1675 = vmatprep.mubr.bf16.mxu0 %v1557
      %1676 = vmatmul.mubr.bf16.gmra.mxu0 %v1532
      %v1677 = vpop.f32.mrf.mxu0
      %v1678 = vadd.f32 %v1613, %v1677
      %v1679 = vpop.f32.mrf.mxu0
      %v1680 = vpop.f32.mrf.mxu0
      %v1681 = vadd.f32 %v1616, %v1680
      %v1682 = vpop.f32.mrf.mxu0
      %1683 = vmatprep.mubr.bf16.mxu0 %v1560
      %1684 = vmatmul.mubr.bf16.gmra.mxu0 %v1536
      %v1685 = vpop.f32.mrf.mxu0
      %v1686 = vadd.f32 %v1621, %v1685
      %v1687 = vpop.f32.mrf.mxu0
      %v1688 = vpop.f32.mrf.mxu0
      %v1689 = vadd.f32 %v1624, %v1688
      %v1690 = vpop.f32.mrf.mxu0
      %1691 = vdwg.mxu0
      %v1692 = vadd.f32 %v781, %v1662
      %v1693 = vadd.f32 %v782, %v1665
      %v1694 = vadd.f32 %v783, %v1670
      %v1695 = vadd.f32 %v784, %v1673
      %v1696 = vadd.f32 %v785, %v1678
      %v1697 = vadd.f32 %v786, %v1681
      %v1698 = vadd.f32 %v787, %v1686
      %v1699 = vadd.f32 %v788, %v1689
      %v1700 = vmax.f32 %v1692, 0.0
      %v1701 = vmax.f32 %v1693, 0.0
      %v1702 = vmax.f32 %v1694, 0.0
      %v1703 = vmax.f32 %v1695, 0.0
      %v1704 = vmax.f32 %v1696, 0.0
      %v1705 = vmax.f32 %v1697, 0.0
      %v1706 = vmax.f32 %v1698, 0.0
      %v1707 = vmax.f32 %v1699, 0.0
      %v1708 = vpack.c.bf16 %v1701, %v1700
      %v1709 = vpack.c.bf16 %v1703, %v1702
      %v1710 = vpack.c.bf16 %v1705, %v1704
      %v1711 = vpack.c.bf16 %v1707, %v1706
      %v1712 = vld [vmem:[%s10] sm:$0x1]
      %v1713 = vld [vmem:[%s9] sm:$0xf]
      %v1714 = vld [vmem:[%s9 + $0x4] sm:$0xf]
      %v1715 = vld [vmem:[%s9 + $0x8] sm:$0xf]
      %v1716 = vld [vmem:[%s9 + $0xc] sm:$0x3]
      %v1721 = vunpack.c.l.b16 %v1713
      %v1722 = vunpack.c.l.b16 %v1714
      %v1723 = vunpack.c.l.b16 %v1715
      %v1724 = vunpack.c.l.b16 %v1716
      %v1725 = vpack.c.b16 %v1722, %v1721
      %v1726 = vpack.c.b16 %v1724, %v1723
      %v1729 = vsel %vm509, %v1708, 0
      %v1732 = vsel %vm462, %v1726, 0
      %1734 = vmatprep.subr.bf16.mxu0 0
      %1735 = vmatpush1.bf16.msra.mxu0 0
      %1736 = vmatprep.subr.bf16.mxu0 0
      %1737 = vmatpush1.bf16.msra.mxu0 0
      %1738 = vmatprep.subr.bf16.mxu0 0
      %1739 = vmatpush1.bf16.msra.mxu0 0
      %1740 = vmatprep.subr.bf16.mxu0 0
      %1741 = vmatpush1.bf16.msra.mxu0 0
      %1742 = vmatprep.subr.bf16.mxu0 0
      %1743 = vmatpush1.bf16.msra.mxu0 0
      %1744 = vmatprep.subr.bf16.mxu0 0
      %1745 = vmatpush1.bf16.msra.mxu0 0
      %1746 = vmatprep.subr.bf16.mxu0 0
      %1747 = vmatpush1.bf16.msra.mxu0 %v1732
      %1748 = vmatprep.subr.bf16.mxu0 0
      %1749 = vmatpush1.bf16.msra.mxu0 %v1725
      %1750 = vmatprep.subr.bf16.mxu0 0
      %1751 = vmatpush2.bf16.msra.mxu0 0
      %1752 = vmatprep.subr.bf16.mxu0 0
      %1753 = vmatpush2.bf16.msra.mxu0 0
      %1754 = vmatprep.subr.bf16.mxu0 0
      %1755 = vmatpush2.bf16.msra.mxu0 0
      %1756 = vmatprep.subr.bf16.mxu0 0
      %1757 = vmatpush2.bf16.msra.mxu0 0
      %1758 = vmatprep.subr.bf16.mxu0 0
      %1759 = vmatpush2.bf16.msra.mxu0 0
      %1760 = vmatprep.subr.bf16.mxu0 0
      %1761 = vmatpush2.bf16.msra.mxu0 0
      %1762 = vmatprep.subr.bf16.mxu0 0
      %1763 = vmatpush2.bf16.msra.mxu0 0
      %1764 = vmatprep.subr.bf16.mxu0 0
      %1765 = vmatpush2.bf16.msra.mxu0 0
      %1766 = vmatprep.mubr.bf16.mxu0 0
      %1767 = vmatmul.mubr.bf16.gmra.mxu0 %v1729
      %v1768 = vpop.f32.mrf.mxu0
      %v1769 = vadd.f32 0.0, %v1768
      %v1770 = vpop.f32.mrf.mxu0
      %v1771 = vpop.f32.mrf.mxu0
      %v1772 = vpop.f32.mrf.mxu0
      %1773 = vdwg.mxu0
      %v1774 = vadd.f32 %v1712, %v1769
      %s1775 = scalar_lea.vmem %s9, 16
      %v1776 = vld [vmem:[%s1775] sm:$0xf]
      %v1777 = vld [vmem:[%s1775 + $0x4] sm:$0xf]
      %v1778 = vld [vmem:[%s1775 + $0x8] sm:$0xf]
      %v1779 = vld [vmem:[%s1775 + $0xc] sm:$0x3]
      %v1780 = vshrl.u32 %v1708, 16
      %v1786 = vunpack.c.l.b16 %v1776
      %v1787 = vunpack.c.l.b16 %v1777
      %v1788 = vunpack.c.l.b16 %v1778
      %v1789 = vunpack.c.l.b16 %v1779
      %v1790 = vpack.c.b16 %v1787, %v1786
      %v1791 = vpack.c.b16 %v1789, %v1788
      %v1794 = vsel %vm509, %v1780, 0
      %v1797 = vsel %vm462, %v1791, 0
      %1799 = vmatprep.subr.bf16.mxu0 0
      %1800 = vmatpush1.bf16.msra.mxu0 0
      %1801 = vmatprep.subr.bf16.mxu0 0
      %1802 = vmatpush1.bf16.msra.mxu0 0
      %1803 = vmatprep.subr.bf16.mxu0 0
      %1804 = vmatpush1.bf16.msra.mxu0 0
      %1805 = vmatprep.subr.bf16.mxu0 0
      %1806 = vmatpush1.bf16.msra.mxu0 0
      %1807 = vmatprep.subr.bf16.mxu0 0
      %1808 = vmatpush1.bf16.msra.mxu0 0
      %1809 = vmatprep.subr.bf16.mxu0 0
      %1810 = vmatpush1.bf16.msra.mxu0 0
      %1811 = vmatprep.subr.bf16.mxu0 0
      %1812 = vmatpush1.bf16.msra.mxu0 %v1797
      %1813 = vmatprep.subr.bf16.mxu0 0
      %1814 = vmatpush1.bf16.msra.mxu0 %v1790
      %1815 = vmatprep.subr.bf16.mxu0 0
      %1816 = vmatpush2.bf16.msra.mxu0 0
      %1817 = vmatprep.subr.bf16.mxu0 0
      %1818 = vmatpush2.bf16.msra.mxu0 0
      %1819 = vmatprep.subr.bf16.mxu0 0
      %1820 = vmatpush2.bf16.msra.mxu0 0
      %1821 = vmatprep.subr.bf16.mxu0 0
      %1822 = vmatpush2.bf16.msra.mxu0 0
      %1823 = vmatprep.subr.bf16.mxu0 0
      %1824 = vmatpush2.bf16.msra.mxu0 0
      %1825 = vmatprep.subr.bf16.mxu0 0
      %1826 = vmatpush2.bf16.msra.mxu0 0
      %1827 = vmatprep.subr.bf16.mxu0 0
      %1828 = vmatpush2.bf16.msra.mxu0 0
      %1829 = vmatprep.subr.bf16.mxu0 0
      %1830 = vmatpush2.bf16.msra.mxu0 0
      %1831 = vmatprep.mubr.bf16.mxu0 0
      %1832 = vmatmul.mubr.bf16.gmra.mxu0 %v1794
      %v1833 = vpop.f32.mrf.mxu0
      %v1834 = vadd.f32 0.0, %v1833
      %v1835 = vpop.f32.mrf.mxu0
      %v1836 = vpop.f32.mrf.mxu0
      %v1837 = vpop.f32.mrf.mxu0
      %1838 = vdwg.mxu0
      %v1839 = vadd.f32 %v1774, %v1834
      %s1840 = scalar_lea.vmem %s9, 32
      %v1841 = vld [vmem:[%s1840] sm:$0xf]
      %v1842 = vld [vmem:[%s1840 + $0x4] sm:$0xf]
      %v1843 = vld [vmem:[%s1840 + $0x8] sm:$0xf]
      %v1844 = vld [vmem:[%s1840 + $0xc] sm:$0x3]
      %v1846 = vrot.slane %v1708, 1
      %v1851 = vunpack.c.l.b16 %v1841
      %v1852 = vunpack.c.l.b16 %v1842
      %v1853 = vunpack.c.l.b16 %v1843
      %v1854 = vunpack.c.l.b16 %v1844
      %v1855 = vpack.c.b16 %v1852, %v1851
      %v1856 = vpack.c.b16 %v1854, %v1853
      %v1859 = vsel %vm509, %v1846, 0
      %v1862 = vsel %vm462, %v1856, 0
      %1864 = vmatprep.subr.bf16.mxu0 0
      %1865 = vmatpush1.bf16.msra.mxu0 0
      %1866 = vmatprep.subr.bf16.mxu0 0
      %1867 = vmatpush1.bf16.msra.mxu0 0
      %1868 = vmatprep.subr.bf16.mxu0 0
      %1869 = vmatpush1.bf16.msra.mxu0 0
      %1870 = vmatprep.subr.bf16.mxu0 0
      %1871 = vmatpush1.bf16.msra.mxu0 0
      %1872 = vmatprep.subr.bf16.mxu0 0
      %1873 = vmatpush1.bf16.msra.mxu0 0
      %1874 = vmatprep.subr.bf16.mxu0 0
      %1875 = vmatpush1.bf16.msra.mxu0 0
      %1876 = vmatprep.subr.bf16.mxu0 0
      %1877 = vmatpush1.bf16.msra.mxu0 %v1862
      %1878 = vmatprep.subr.bf16.mxu0 0
      %1879 = vmatpush1.bf16.msra.mxu0 %v1855
      %1880 = vmatprep.subr.bf16.mxu0 0
      %1881 = vmatpush2.bf16.msra.mxu0 0
      %1882 = vmatprep.subr.bf16.mxu0 0
      %1883 = vmatpush2.bf16.msra.mxu0 0
      %1884 = vmatprep.subr.bf16.mxu0 0
      %1885 = vmatpush2.bf16.msra.mxu0 0
      %1886 = vmatprep.subr.bf16.mxu0 0
      %1887 = vmatpush2.bf16.msra.mxu0 0
      %1888 = vmatprep.subr.bf16.mxu0 0
      %1889 = vmatpush2.bf16.msra.mxu0 0
      %1890 = vmatprep.subr.bf16.mxu0 0
      %1891 = vmatpush2.bf16.msra.mxu0 0
      %1892 = vmatprep.subr.bf16.mxu0 0
      %1893 = vmatpush2.bf16.msra.mxu0 0
      %1894 = vmatprep.subr.bf16.mxu0 0
      %1895 = vmatpush2.bf16.msra.mxu0 0
      %1896 = vmatprep.mubr.bf16.mxu0 0
      %1897 = vmatmul.mubr.bf16.gmra.mxu0 %v1859
      %v1898 = vpop.f32.mrf.mxu0
      %v1899 = vadd.f32 0.0, %v1898
      %v1900 = vpop.f32.mrf.mxu0
      %v1901 = vpop.f32.mrf.mxu0
      %v1902 = vpop.f32.mrf.mxu0
      %1903 = vdwg.mxu0
      %v1904 = vadd.f32 %v1839, %v1899
      %s1905 = scalar_lea.vmem %s9, 48
      %v1906 = vld [vmem:[%s1905] sm:$0xf]
      %v1907 = vld [vmem:[%s1905 + $0x4] sm:$0xf]
      %v1908 = vld [vmem:[%s1905 + $0x8] sm:$0xf]
      %v1909 = vld [vmem:[%s1905 + $0xc] sm:$0x3]
      %v1910 = vrot.slane %v1780, 1
      %v1915 = vunpack.c.l.b16 %v1906
      %v1916 = vunpack.c.l.b16 %v1907
      %v1917 = vunpack.c.l.b16 %v1908
      %v1918 = vunpack.c.l.b16 %v1909
      %v1919 = vpack.c.b16 %v1916, %v1915
      %v1920 = vpack.c.b16 %v1918, %v1917
      %v1923 = vsel %vm509, %v1910, 0
      %v1926 = vsel %vm462, %v1920, 0
      %1928 = vmatprep.subr.bf16.mxu0 0
      %1929 = vmatpush1.bf16.msra.mxu0 0
      %1930 = vmatprep.subr.bf16.mxu0 0
      %1931 = vmatpush1.bf16.msra.mxu0 0
      %1932 = vmatprep.subr.bf16.mxu0 0
      %1933 = vmatpush1.bf16.msra.mxu0 0
      %1934 = vmatprep.subr.bf16.mxu0 0
      %1935 = vmatpush1.bf16.msra.mxu0 0
      %1936 = vmatprep.subr.bf16.mxu0 0
      %1937 = vmatpush1.bf16.msra.mxu0 0
      %1938 = vmatprep.subr.bf16.mxu0 0
      %1939 = vmatpush1.bf16.msra.mxu0 0
      %1940 = vmatprep.subr.bf16.mxu0 0
      %1941 = vmatpush1.bf16.msra.mxu0 %v1926
      %1942 = vmatprep.subr.bf16.mxu0 0
      %1943 = vmatpush1.bf16.msra.mxu0 %v1919
      %1944 = vmatprep.subr.bf16.mxu0 0
      %1945 = vmatpush2.bf16.msra.mxu0 0
      %1946 = vmatprep.subr.bf16.mxu0 0
      %1947 = vmatpush2.bf16.msra.mxu0 0
      %1948 = vmatprep.subr.bf16.mxu0 0
      %1949 = vmatpush2.bf16.msra.mxu0 0
      %1950 = vmatprep.subr.bf16.mxu0 0
      %1951 = vmatpush2.bf16.msra.mxu0 0
      %1952 = vmatprep.subr.bf16.mxu0 0
      %1953 = vmatpush2.bf16.msra.mxu0 0
      %1954 = vmatprep.subr.bf16.mxu0 0
      %1955 = vmatpush2.bf16.msra.mxu0 0
      %1956 = vmatprep.subr.bf16.mxu0 0
      %1957 = vmatpush2.bf16.msra.mxu0 0
      %1958 = vmatprep.subr.bf16.mxu0 0
      %1959 = vmatpush2.bf16.msra.mxu0 0
      %1960 = vmatprep.mubr.bf16.mxu0 0
      %1961 = vmatmul.mubr.bf16.gmra.mxu0 %v1923
      %v1962 = vpop.f32.mrf.mxu0
      %v1963 = vadd.f32 0.0, %v1962
      %v1964 = vpop.f32.mrf.mxu0
      %v1965 = vpop.f32.mrf.mxu0
      %v1966 = vpop.f32.mrf.mxu0
      %1967 = vdwg.mxu0
      %v1968 = vadd.f32 %v1904, %v1963
      %s1969 = scalar_lea.vmem %s9, 64
      %v1970 = vld [vmem:[%s1969] sm:$0xf]
      %v1971 = vld [vmem:[%s1969 + $0x4] sm:$0xf]
      %v1972 = vld [vmem:[%s1969 + $0x8] sm:$0xf]
      %v1973 = vld [vmem:[%s1969 + $0xc] sm:$0x3]
      %v1974 = vrot.slane %v1708, 2
      %v1979 = vunpack.c.l.b16 %v1970
      %v1980 = vunpack.c.l.b16 %v1971
      %v1981 = vunpack.c.l.b16 %v1972
      %v1982 = vunpack.c.l.b16 %v1973
      %v1983 = vpack.c.b16 %v1980, %v1979
      %v1984 = vpack.c.b16 %v1982, %v1981
      %v1987 = vsel %vm509, %v1974, 0
      %v1990 = vsel %vm462, %v1984, 0
      %1992 = vmatprep.subr.bf16.mxu0 0
      %1993 = vmatpush1.bf16.msra.mxu0 0
      %1994 = vmatprep.subr.bf16.mxu0 0
      %1995 = vmatpush1.bf16.msra.mxu0 0
      %1996 = vmatprep.subr.bf16.mxu0 0
      %1997 = vmatpush1.bf16.msra.mxu0 0
      %1998 = vmatprep.subr.bf16.mxu0 0
      %1999 = vmatpush1.bf16.msra.mxu0 0
      %2000 = vmatprep.subr.bf16.mxu0 0
      %2001 = vmatpush1.bf16.msra.mxu0 0
      %2002 = vmatprep.subr.bf16.mxu0 0
      %2003 = vmatpush1.bf16.msra.mxu0 0
      %2004 = vmatprep.subr.bf16.mxu0 0
      %2005 = vmatpush1.bf16.msra.mxu0 %v1990
      %2006 = vmatprep.subr.bf16.mxu0 0
      %2007 = vmatpush1.bf16.msra.mxu0 %v1983
      %2008 = vmatprep.subr.bf16.mxu0 0
      %2009 = vmatpush2.bf16.msra.mxu0 0
      %2010 = vmatprep.subr.bf16.mxu0 0
      %2011 = vmatpush2.bf16.msra.mxu0 0
      %2012 = vmatprep.subr.bf16.mxu0 0
      %2013 = vmatpush2.bf16.msra.mxu0 0
      %2014 = vmatprep.subr.bf16.mxu0 0
      %2015 = vmatpush2.bf16.msra.mxu0 0
      %2016 = vmatprep.subr.bf16.mxu0 0
      %2017 = vmatpush2.bf16.msra.mxu0 0
      %2018 = vmatprep.subr.bf16.mxu0 0
      %2019 = vmatpush2.bf16.msra.mxu0 0
      %2020 = vmatprep.subr.bf16.mxu0 0
      %2021 = vmatpush2.bf16.msra.mxu0 0
      %2022 = vmatprep.subr.bf16.mxu0 0
      %2023 = vmatpush2.bf16.msra.mxu0 0
      %2024 = vmatprep.mubr.bf16.mxu0 0
      %2025 = vmatmul.mubr.bf16.gmra.mxu0 %v1987
      %v2026 = vpop.f32.mrf.mxu0
      %v2027 = vadd.f32 0.0, %v2026
      %v2028 = vpop.f32.mrf.mxu0
      %v2029 = vpop.f32.mrf.mxu0
      %v2030 = vpop.f32.mrf.mxu0
      %2031 = vdwg.mxu0
      %v2032 = vadd.f32 %v1968, %v2027
      %s2033 = scalar_lea.vmem %s9, 80
      %v2034 = vld [vmem:[%s2033] sm:$0xf]
      %v2035 = vld [vmem:[%s2033 + $0x4] sm:$0xf]
      %v2036 = vld [vmem:[%s2033 + $0x8] sm:$0xf]
      %v2037 = vld [vmem:[%s2033 + $0xc] sm:$0x3]
      %v2038 = vrot.slane %v1780, 2
      %v2043 = vunpack.c.l.b16 %v2034
      %v2044 = vunpack.c.l.b16 %v2035
      %v2045 = vunpack.c.l.b16 %v2036
      %v2046 = vunpack.c.l.b16 %v2037
      %v2047 = vpack.c.b16 %v2044, %v2043
      %v2048 = vpack.c.b16 %v2046, %v2045
      %v2051 = vsel %vm509, %v2038, 0
      %v2054 = vsel %vm462, %v2048, 0
      %2056 = vmatprep.subr.bf16.mxu0 0
      %2057 = vmatpush1.bf16.msra.mxu0 0
      %2058 = vmatprep.subr.bf16.mxu0 0
      %2059 = vmatpush1.bf16.msra.mxu0 0
      %2060 = vmatprep.subr.bf16.mxu0 0
      %2061 = vmatpush1.bf16.msra.mxu0 0
      %2062 = vmatprep.subr.bf16.mxu0 0
      %2063 = vmatpush1.bf16.msra.mxu0 0
      %2064 = vmatprep.subr.bf16.mxu0 0
      %2065 = vmatpush1.bf16.msra.mxu0 0
      %2066 = vmatprep.subr.bf16.mxu0 0
      %2067 = vmatpush1.bf16.msra.mxu0 0
      %2068 = vmatprep.subr.bf16.mxu0 0
      %2069 = vmatpush1.bf16.msra.mxu0 %v2054
      %2070 = vmatprep.subr.bf16.mxu0 0
      %2071 = vmatpush1.bf16.msra.mxu0 %v2047
      %2072 = vmatprep.subr.bf16.mxu0 0
      %2073 = vmatpush2.bf16.msra.mxu0 0
      %2074 = vmatprep.subr.bf16.mxu0 0
      %2075 = vmatpush2.bf16.msra.mxu0 0
      %2076 = vmatprep.subr.bf16.mxu0 0
      %2077 = vmatpush2.bf16.msra.mxu0 0
      %2078 = vmatprep.subr.bf16.mxu0 0
      %2079 = vmatpush2.bf16.msra.mxu0 0
      %2080 = vmatprep.subr.bf16.mxu0 0
      %2081 = vmatpush2.bf16.msra.mxu0 0
      %2082 = vmatprep.subr.bf16.mxu0 0
      %2083 = vmatpush2.bf16.msra.mxu0 0
      %2084 = vmatprep.subr.bf16.mxu0 0
      %2085 = vmatpush2.bf16.msra.mxu0 0
      %2086 = vmatprep.subr.bf16.mxu0 0
      %2087 = vmatpush2.bf16.msra.mxu0 0
      %2088 = vmatprep.mubr.bf16.mxu0 0
      %2089 = vmatmul.mubr.bf16.gmra.mxu0 %v2051
      %v2090 = vpop.f32.mrf.mxu0
      %v2091 = vadd.f32 0.0, %v2090
      %v2092 = vpop.f32.mrf.mxu0
      %v2093 = vpop.f32.mrf.mxu0
      %v2094 = vpop.f32.mrf.mxu0
      %2095 = vdwg.mxu0
      %v2096 = vadd.f32 %v2032, %v2091
      %s2097 = scalar_lea.vmem %s9, 96
      %v2098 = vld [vmem:[%s2097] sm:$0xf]
      %v2099 = vld [vmem:[%s2097 + $0x4] sm:$0xf]
      %v2100 = vld [vmem:[%s2097 + $0x8] sm:$0xf]
      %v2101 = vld [vmem:[%s2097 + $0xc] sm:$0x3]
      %v2102 = vrot.slane %v1708, 3
      %v2107 = vunpack.c.l.b16 %v2098
      %v2108 = vunpack.c.l.b16 %v2099
      %v2109 = vunpack.c.l.b16 %v2100
      %v2110 = vunpack.c.l.b16 %v2101
      %v2111 = vpack.c.b16 %v2108, %v2107
      %v2112 = vpack.c.b16 %v2110, %v2109
      %v2115 = vsel %vm509, %v2102, 0
      %v2118 = vsel %vm462, %v2112, 0
      %2120 = vmatprep.subr.bf16.mxu0 0
      %2121 = vmatpush1.bf16.msra.mxu0 0
      %2122 = vmatprep.subr.bf16.mxu0 0
      %2123 = vmatpush1.bf16.msra.mxu0 0
      %2124 = vmatprep.subr.bf16.mxu0 0
      %2125 = vmatpush1.bf16.msra.mxu0 0
      %2126 = vmatprep.subr.bf16.mxu0 0
      %2127 = vmatpush1.bf16.msra.mxu0 0
      %2128 = vmatprep.subr.bf16.mxu0 0
      %2129 = vmatpush1.bf16.msra.mxu0 0
      %2130 = vmatprep.subr.bf16.mxu0 0
      %2131 = vmatpush1.bf16.msra.mxu0 0
      %2132 = vmatprep.subr.bf16.mxu0 0
      %2133 = vmatpush1.bf16.msra.mxu0 %v2118
      %2134 = vmatprep.subr.bf16.mxu0 0
      %2135 = vmatpush1.bf16.msra.mxu0 %v2111
      %2136 = vmatprep.subr.bf16.mxu0 0
      %2137 = vmatpush2.bf16.msra.mxu0 0
      %2138 = vmatprep.subr.bf16.mxu0 0
      %2139 = vmatpush2.bf16.msra.mxu0 0
      %2140 = vmatprep.subr.bf16.mxu0 0
      %2141 = vmatpush2.bf16.msra.mxu0 0
      %2142 = vmatprep.subr.bf16.mxu0 0
      %2143 = vmatpush2.bf16.msra.mxu0 0
      %2144 = vmatprep.subr.bf16.mxu0 0
      %2145 = vmatpush2.bf16.msra.mxu0 0
      %2146 = vmatprep.subr.bf16.mxu0 0
      %2147 = vmatpush2.bf16.msra.mxu0 0
      %2148 = vmatprep.subr.bf16.mxu0 0
      %2149 = vmatpush2.bf16.msra.mxu0 0
      %2150 = vmatprep.subr.bf16.mxu0 0
      %2151 = vmatpush2.bf16.msra.mxu0 0
      %2152 = vmatprep.mubr.bf16.mxu0 0
      %2153 = vmatmul.mubr.bf16.gmra.mxu0 %v2115
      %v2154 = vpop.f32.mrf.mxu0
      %v2155 = vadd.f32 0.0, %v2154
      %v2156 = vpop.f32.mrf.mxu0
      %v2157 = vpop.f32.mrf.mxu0
      %v2158 = vpop.f32.mrf.mxu0
      %2159 = vdwg.mxu0
      %v2160 = vadd.f32 %v2096, %v2155
      %s2161 = scalar_lea.vmem %s9, 112
      %v2162 = vld [vmem:[%s2161] sm:$0xf]
      %v2163 = vld [vmem:[%s2161 + $0x4] sm:$0xf]
      %v2164 = vld [vmem:[%s2161 + $0x8] sm:$0xf]
      %v2165 = vld [vmem:[%s2161 + $0xc] sm:$0x3]
      %v2166 = vrot.slane %v1780, 3
      %v2171 = vunpack.c.l.b16 %v2162
      %v2172 = vunpack.c.l.b16 %v2163
      %v2173 = vunpack.c.l.b16 %v2164
      %v2174 = vunpack.c.l.b16 %v2165
      %v2175 = vpack.c.b16 %v2172, %v2171
      %v2176 = vpack.c.b16 %v2174, %v2173
      %v2179 = vsel %vm509, %v2166, 0
      %v2182 = vsel %vm462, %v2176, 0
      %2184 = vmatprep.subr.bf16.mxu0 0
      %2185 = vmatpush1.bf16.msra.mxu0 0
      %2186 = vmatprep.subr.bf16.mxu0 0
      %2187 = vmatpush1.bf16.msra.mxu0 0
      %2188 = vmatprep.subr.bf16.mxu0 0
      %2189 = vmatpush1.bf16.msra.mxu0 0
      %2190 = vmatprep.subr.bf16.mxu0 0
      %2191 = vmatpush1.bf16.msra.mxu0 0
      %2192 = vmatprep.subr.bf16.mxu0 0
      %2193 = vmatpush1.bf16.msra.mxu0 0
      %2194 = vmatprep.subr.bf16.mxu0 0
      %2195 = vmatpush1.bf16.msra.mxu0 0
      %2196 = vmatprep.subr.bf16.mxu0 0
      %2197 = vmatpush1.bf16.msra.mxu0 %v2182
      %2198 = vmatprep.subr.bf16.mxu0 0
      %2199 = vmatpush1.bf16.msra.mxu0 %v2175
      %2200 = vmatprep.subr.bf16.mxu0 0
      %2201 = vmatpush2.bf16.msra.mxu0 0
      %2202 = vmatprep.subr.bf16.mxu0 0
      %2203 = vmatpush2.bf16.msra.mxu0 0
      %2204 = vmatprep.subr.bf16.mxu0 0
      %2205 = vmatpush2.bf16.msra.mxu0 0
      %2206 = vmatprep.subr.bf16.mxu0 0
      %2207 = vmatpush2.bf16.msra.mxu0 0
      %2208 = vmatprep.subr.bf16.mxu0 0
      %2209 = vmatpush2.bf16.msra.mxu0 0
      %2210 = vmatprep.subr.bf16.mxu0 0
      %2211 = vmatpush2.bf16.msra.mxu0 0
      %2212 = vmatprep.subr.bf16.mxu0 0
      %2213 = vmatpush2.bf16.msra.mxu0 0
      %2214 = vmatprep.subr.bf16.mxu0 0
      %2215 = vmatpush2.bf16.msra.mxu0 0
      %2216 = vmatprep.mubr.bf16.mxu0 0
      %2217 = vmatmul.mubr.bf16.gmra.mxu0 %v2179
      %v2218 = vpop.f32.mrf.mxu0
      %v2219 = vadd.f32 0.0, %v2218
      %v2220 = vpop.f32.mrf.mxu0
      %v2221 = vpop.f32.mrf.mxu0
      %v2222 = vpop.f32.mrf.mxu0
      %2223 = vdwg.mxu0
      %v2224 = vadd.f32 %v2160, %v2219
      %s2225 = scalar_lea.vmem %s9, 128
      %v2226 = vld [vmem:[%s2225] sm:$0xf]
      %v2227 = vld [vmem:[%s2225 + $0x4] sm:$0xf]
      %v2228 = vld [vmem:[%s2225 + $0x8] sm:$0xf]
      %v2229 = vld [vmem:[%s2225 + $0xc] sm:$0x3]
      %v2230 = vrot.slane %v1708, 4
      %v2235 = vunpack.c.l.b16 %v2226
      %v2236 = vunpack.c.l.b16 %v2227
      %v2237 = vunpack.c.l.b16 %v2228
      %v2238 = vunpack.c.l.b16 %v2229
      %v2239 = vpack.c.b16 %v2236, %v2235
      %v2240 = vpack.c.b16 %v2238, %v2237
      %v2243 = vsel %vm509, %v2230, 0
      %v2246 = vsel %vm462, %v2240, 0
      %2248 = vmatprep.subr.bf16.mxu0 0
      %2249 = vmatpush1.bf16.msra.mxu0 0
      %2250 = vmatprep.subr.bf16.mxu0 0
      %2251 = vmatpush1.bf16.msra.mxu0 0
      %2252 = vmatprep.subr.bf16.mxu0 0
      %2253 = vmatpush1.bf16.msra.mxu0 0
      %2254 = vmatprep.subr.bf16.mxu0 0
      %2255 = vmatpush1.bf16.msra.mxu0 0
      %2256 = vmatprep.subr.bf16.mxu0 0
      %2257 = vmatpush1.bf16.msra.mxu0 0
      %2258 = vmatprep.subr.bf16.mxu0 0
      %2259 = vmatpush1.bf16.msra.mxu0 0
      %2260 = vmatprep.subr.bf16.mxu0 0
      %2261 = vmatpush1.bf16.msra.mxu0 %v2246
      %2262 = vmatprep.subr.bf16.mxu0 0
      %2263 = vmatpush1.bf16.msra.mxu0 %v2239
      %2264 = vmatprep.subr.bf16.mxu0 0
      %2265 = vmatpush2.bf16.msra.mxu0 0
      %2266 = vmatprep.subr.bf16.mxu0 0
      %2267 = vmatpush2.bf16.msra.mxu0 0
      %2268 = vmatprep.subr.bf16.mxu0 0
      %2269 = vmatpush2.bf16.msra.mxu0 0
      %2270 = vmatprep.subr.bf16.mxu0 0
      %2271 = vmatpush2.bf16.msra.mxu0 0
      %2272 = vmatprep.subr.bf16.mxu0 0
      %2273 = vmatpush2.bf16.msra.mxu0 0
      %2274 = vmatprep.subr.bf16.mxu0 0
      %2275 = vmatpush2.bf16.msra.mxu0 0
      %2276 = vmatprep.subr.bf16.mxu0 0
      %2277 = vmatpush2.bf16.msra.mxu0 0
      %2278 = vmatprep.subr.bf16.mxu0 0
      %2279 = vmatpush2.bf16.msra.mxu0 0
      %2280 = vmatprep.mubr.bf16.mxu0 0
      %2281 = vmatmul.mubr.bf16.gmra.mxu0 %v2243
      %v2282 = vpop.f32.mrf.mxu0
      %v2283 = vadd.f32 0.0, %v2282
      %v2284 = vpop.f32.mrf.mxu0
      %v2285 = vpop.f32.mrf.mxu0
      %v2286 = vpop.f32.mrf.mxu0
      %2287 = vdwg.mxu0
      %v2288 = vadd.f32 %v2224, %v2283
      %s2289 = scalar_lea.vmem %s9, 144
      %v2290 = vld [vmem:[%s2289] sm:$0xf]
      %v2291 = vld [vmem:[%s2289 + $0x4] sm:$0xf]
      %v2292 = vld [vmem:[%s2289 + $0x8] sm:$0xf]
      %v2293 = vld [vmem:[%s2289 + $0xc] sm:$0x3]
      %v2294 = vrot.slane %v1780, 4
      %v2299 = vunpack.c.l.b16 %v2290
      %v2300 = vunpack.c.l.b16 %v2291
      %v2301 = vunpack.c.l.b16 %v2292
      %v2302 = vunpack.c.l.b16 %v2293
      %v2303 = vpack.c.b16 %v2300, %v2299
      %v2304 = vpack.c.b16 %v2302, %v2301
      %v2307 = vsel %vm509, %v2294, 0
      %v2310 = vsel %vm462, %v2304, 0
      %2312 = vmatprep.subr.bf16.mxu0 0
      %2313 = vmatpush1.bf16.msra.mxu0 0
      %2314 = vmatprep.subr.bf16.mxu0 0
      %2315 = vmatpush1.bf16.msra.mxu0 0
      %2316 = vmatprep.subr.bf16.mxu0 0
      %2317 = vmatpush1.bf16.msra.mxu0 0
      %2318 = vmatprep.subr.bf16.mxu0 0
      %2319 = vmatpush1.bf16.msra.mxu0 0
      %2320 = vmatprep.subr.bf16.mxu0 0
      %2321 = vmatpush1.bf16.msra.mxu0 0
      %2322 = vmatprep.subr.bf16.mxu0 0
      %2323 = vmatpush1.bf16.msra.mxu0 0
      %2324 = vmatprep.subr.bf16.mxu0 0
      %2325 = vmatpush1.bf16.msra.mxu0 %v2310
      %2326 = vmatprep.subr.bf16.mxu0 0
      %2327 = vmatpush1.bf16.msra.mxu0 %v2303
      %2328 = vmatprep.subr.bf16.mxu0 0
      %2329 = vmatpush2.bf16.msra.mxu0 0
      %2330 = vmatprep.subr.bf16.mxu0 0
      %2331 = vmatpush2.bf16.msra.mxu0 0
      %2332 = vmatprep.subr.bf16.mxu0 0
      %2333 = vmatpush2.bf16.msra.mxu0 0
      %2334 = vmatprep.subr.bf16.mxu0 0
      %2335 = vmatpush2.bf16.msra.mxu0 0
      %2336 = vmatprep.subr.bf16.mxu0 0
      %2337 = vmatpush2.bf16.msra.mxu0 0
      %2338 = vmatprep.subr.bf16.mxu0 0
      %2339 = vmatpush2.bf16.msra.mxu0 0
      %2340 = vmatprep.subr.bf16.mxu0 0
      %2341 = vmatpush2.bf16.msra.mxu0 0
      %2342 = vmatprep.subr.bf16.mxu0 0
      %2343 = vmatpush2.bf16.msra.mxu0 0
      %2344 = vmatprep.mubr.bf16.mxu0 0
      %2345 = vmatmul.mubr.bf16.gmra.mxu0 %v2307
      %v2346 = vpop.f32.mrf.mxu0
      %v2347 = vadd.f32 0.0, %v2346
      %v2348 = vpop.f32.mrf.mxu0
      %v2349 = vpop.f32.mrf.mxu0
      %v2350 = vpop.f32.mrf.mxu0
      %2351 = vdwg.mxu0
      %v2352 = vadd.f32 %v2288, %v2347
      %s2353 = scalar_lea.vmem %s9, 160
      %v2354 = vld [vmem:[%s2353] sm:$0xf]
      %v2355 = vld [vmem:[%s2353 + $0x4] sm:$0xf]
      %v2356 = vld [vmem:[%s2353 + $0x8] sm:$0xf]
      %v2357 = vld [vmem:[%s2353 + $0xc] sm:$0x3]
      %v2358 = vrot.slane %v1708, 5
      %v2363 = vunpack.c.l.b16 %v2354
      %v2364 = vunpack.c.l.b16 %v2355
      %v2365 = vunpack.c.l.b16 %v2356
      %v2366 = vunpack.c.l.b16 %v2357
      %v2367 = vpack.c.b16 %v2364, %v2363
      %v2368 = vpack.c.b16 %v2366, %v2365
      %v2371 = vsel %vm509, %v2358, 0
      %v2374 = vsel %vm462, %v2368, 0
      %2376 = vmatprep.subr.bf16.mxu0 0
      %2377 = vmatpush1.bf16.msra.mxu0 0
      %2378 = vmatprep.subr.bf16.mxu0 0
      %2379 = vmatpush1.bf16.msra.mxu0 0
      %2380 = vmatprep.subr.bf16.mxu0 0
      %2381 = vmatpush1.bf16.msra.mxu0 0
      %2382 = vmatprep.subr.bf16.mxu0 0
      %2383 = vmatpush1.bf16.msra.mxu0 0
      %2384 = vmatprep.subr.bf16.mxu0 0
      %2385 = vmatpush1.bf16.msra.mxu0 0
      %2386 = vmatprep.subr.bf16.mxu0 0
      %2387 = vmatpush1.bf16.msra.mxu0 0
      %2388 = vmatprep.subr.bf16.mxu0 0
      %2389 = vmatpush1.bf16.msra.mxu0 %v2374
      %2390 = vmatprep.subr.bf16.mxu0 0
      %2391 = vmatpush1.bf16.msra.mxu0 %v2367
      %2392 = vmatprep.subr.bf16.mxu0 0
      %2393 = vmatpush2.bf16.msra.mxu0 0
      %2394 = vmatprep.subr.bf16.mxu0 0
      %2395 = vmatpush2.bf16.msra.mxu0 0
      %2396 = vmatprep.subr.bf16.mxu0 0
      %2397 = vmatpush2.bf16.msra.mxu0 0
      %2398 = vmatprep.subr.bf16.mxu0 0
      %2399 = vmatpush2.bf16.msra.mxu0 0
      %2400 = vmatprep.subr.bf16.mxu0 0
      %2401 = vmatpush2.bf16.msra.mxu0 0
      %2402 = vmatprep.subr.bf16.mxu0 0
      %2403 = vmatpush2.bf16.msra.mxu0 0
      %2404 = vmatprep.subr.bf16.mxu0 0
      %2405 = vmatpush2.bf16.msra.mxu0 0
      %2406 = vmatprep.subr.bf16.mxu0 0
      %2407 = vmatpush2.bf16.msra.mxu0 0
      %2408 = vmatprep.mubr.bf16.mxu0 0
      %2409 = vmatmul.mubr.bf16.gmra.mxu0 %v2371
      %v2410 = vpop.f32.mrf.mxu0
      %v2411 = vadd.f32 0.0, %v2410
      %v2412 = vpop.f32.mrf.mxu0
      %v2413 = vpop.f32.mrf.mxu0
      %v2414 = vpop.f32.mrf.mxu0
      %2415 = vdwg.mxu0
      %v2416 = vadd.f32 %v2352, %v2411
      %s2417 = scalar_lea.vmem %s9, 176
      %v2418 = vld [vmem:[%s2417] sm:$0xf]
      %v2419 = vld [vmem:[%s2417 + $0x4] sm:$0xf]
      %v2420 = vld [vmem:[%s2417 + $0x8] sm:$0xf]
      %v2421 = vld [vmem:[%s2417 + $0xc] sm:$0x3]
      %v2422 = vrot.slane %v1780, 5
      %v2427 = vunpack.c.l.b16 %v2418
      %v2428 = vunpack.c.l.b16 %v2419
      %v2429 = vunpack.c.l.b16 %v2420
      %v2430 = vunpack.c.l.b16 %v2421
      %v2431 = vpack.c.b16 %v2428, %v2427
      %v2432 = vpack.c.b16 %v2430, %v2429
      %v2435 = vsel %vm509, %v2422, 0
      %v2438 = vsel %vm462, %v2432, 0
      %2440 = vmatprep.subr.bf16.mxu0 0
      %2441 = vmatpush1.bf16.msra.mxu0 0
      %2442 = vmatprep.subr.bf16.mxu0 0
      %2443 = vmatpush1.bf16.msra.mxu0 0
      %2444 = vmatprep.subr.bf16.mxu0 0
      %2445 = vmatpush1.bf16.msra.mxu0 0
      %2446 = vmatprep.subr.bf16.mxu0 0
      %2447 = vmatpush1.bf16.msra.mxu0 0
      %2448 = vmatprep.subr.bf16.mxu0 0
      %2449 = vmatpush1.bf16.msra.mxu0 0
      %2450 = vmatprep.subr.bf16.mxu0 0
      %2451 = vmatpush1.bf16.msra.mxu0 0
      %2452 = vmatprep.subr.bf16.mxu0 0
      %2453 = vmatpush1.bf16.msra.mxu0 %v2438
      %2454 = vmatprep.subr.bf16.mxu0 0
      %2455 = vmatpush1.bf16.msra.mxu0 %v2431
      %2456 = vmatprep.subr.bf16.mxu0 0
      %2457 = vmatpush2.bf16.msra.mxu0 0
      %2458 = vmatprep.subr.bf16.mxu0 0
      %2459 = vmatpush2.bf16.msra.mxu0 0
      %2460 = vmatprep.subr.bf16.mxu0 0
      %2461 = vmatpush2.bf16.msra.mxu0 0
      %2462 = vmatprep.subr.bf16.mxu0 0
      %2463 = vmatpush2.bf16.msra.mxu0 0
      %2464 = vmatprep.subr.bf16.mxu0 0
      %2465 = vmatpush2.bf16.msra.mxu0 0
      %2466 = vmatprep.subr.bf16.mxu0 0
      %2467 = vmatpush2.bf16.msra.mxu0 0
      %2468 = vmatprep.subr.bf16.mxu0 0
      %2469 = vmatpush2.bf16.msra.mxu0 0
      %2470 = vmatprep.subr.bf16.mxu0 0
      %2471 = vmatpush2.bf16.msra.mxu0 0
      %2472 = vmatprep.mubr.bf16.mxu0 0
      %2473 = vmatmul.mubr.bf16.gmra.mxu0 %v2435
      %v2474 = vpop.f32.mrf.mxu0
      %v2475 = vadd.f32 0.0, %v2474
      %v2476 = vpop.f32.mrf.mxu0
      %v2477 = vpop.f32.mrf.mxu0
      %v2478 = vpop.f32.mrf.mxu0
      %2479 = vdwg.mxu0
      %v2480 = vadd.f32 %v2416, %v2475
      %s2481 = scalar_lea.vmem %s9, 192
      %v2482 = vld [vmem:[%s2481] sm:$0xf]
      %v2483 = vld [vmem:[%s2481 + $0x4] sm:$0xf]
      %v2484 = vld [vmem:[%s2481 + $0x8] sm:$0xf]
      %v2485 = vld [vmem:[%s2481 + $0xc] sm:$0x3]
      %v2486 = vrot.slane %v1708, 6
      %v2491 = vunpack.c.l.b16 %v2482
      %v2492 = vunpack.c.l.b16 %v2483
      %v2493 = vunpack.c.l.b16 %v2484
      %v2494 = vunpack.c.l.b16 %v2485
      %v2495 = vpack.c.b16 %v2492, %v2491
      %v2496 = vpack.c.b16 %v2494, %v2493
      %v2499 = vsel %vm509, %v2486, 0
      %v2502 = vsel %vm462, %v2496, 0
      %2504 = vmatprep.subr.bf16.mxu0 0
      %2505 = vmatpush1.bf16.msra.mxu0 0
      %2506 = vmatprep.subr.bf16.mxu0 0
      %2507 = vmatpush1.bf16.msra.mxu0 0
      %2508 = vmatprep.subr.bf16.mxu0 0
      %2509 = vmatpush1.bf16.msra.mxu0 0
      %2510 = vmatprep.subr.bf16.mxu0 0
      %2511 = vmatpush1.bf16.msra.mxu0 0
      %2512 = vmatprep.subr.bf16.mxu0 0
      %2513 = vmatpush1.bf16.msra.mxu0 0
      %2514 = vmatprep.subr.bf16.mxu0 0
      %2515 = vmatpush1.bf16.msra.mxu0 0
      %2516 = vmatprep.subr.bf16.mxu0 0
      %2517 = vmatpush1.bf16.msra.mxu0 %v2502
      %2518 = vmatprep.subr.bf16.mxu0 0
      %2519 = vmatpush1.bf16.msra.mxu0 %v2495
      %2520 = vmatprep.subr.bf16.mxu0 0
      %2521 = vmatpush2.bf16.msra.mxu0 0
      %2522 = vmatprep.subr.bf16.mxu0 0
      %2523 = vmatpush2.bf16.msra.mxu0 0
      %2524 = vmatprep.subr.bf16.mxu0 0
      %2525 = vmatpush2.bf16.msra.mxu0 0
      %2526 = vmatprep.subr.bf16.mxu0 0
      %2527 = vmatpush2.bf16.msra.mxu0 0
      %2528 = vmatprep.subr.bf16.mxu0 0
      %2529 = vmatpush2.bf16.msra.mxu0 0
      %2530 = vmatprep.subr.bf16.mxu0 0
      %2531 = vmatpush2.bf16.msra.mxu0 0
      %2532 = vmatprep.subr.bf16.mxu0 0
      %2533 = vmatpush2.bf16.msra.mxu0 0
      %2534 = vmatprep.subr.bf16.mxu0 0
      %2535 = vmatpush2.bf16.msra.mxu0 0
      %2536 = vmatprep.mubr.bf16.mxu0 0
      %2537 = vmatmul.mubr.bf16.gmra.mxu0 %v2499
      %v2538 = vpop.f32.mrf.mxu0
      %v2539 = vadd.f32 0.0, %v2538
      %v2540 = vpop.f32.mrf.mxu0
      %v2541 = vpop.f32.mrf.mxu0
      %v2542 = vpop.f32.mrf.mxu0
      %2543 = vdwg.mxu0
      %v2544 = vadd.f32 %v2480, %v2539
      %s2545 = scalar_lea.vmem %s9, 208
      %v2546 = vld [vmem:[%s2545] sm:$0xf]
      %v2547 = vld [vmem:[%s2545 + $0x4] sm:$0xf]
      %v2548 = vld [vmem:[%s2545 + $0x8] sm:$0xf]
      %v2549 = vld [vmem:[%s2545 + $0xc] sm:$0x3]
      %v2550 = vrot.slane %v1780, 6
      %v2555 = vunpack.c.l.b16 %v2546
      %v2556 = vunpack.c.l.b16 %v2547
      %v2557 = vunpack.c.l.b16 %v2548
      %v2558 = vunpack.c.l.b16 %v2549
      %v2559 = vpack.c.b16 %v2556, %v2555
      %v2560 = vpack.c.b16 %v2558, %v2557
      %v2563 = vsel %vm509, %v2550, 0
      %v2566 = vsel %vm462, %v2560, 0
      %2568 = vmatprep.subr.bf16.mxu0 0
      %2569 = vmatpush1.bf16.msra.mxu0 0
      %2570 = vmatprep.subr.bf16.mxu0 0
      %2571 = vmatpush1.bf16.msra.mxu0 0
      %2572 = vmatprep.subr.bf16.mxu0 0
      %2573 = vmatpush1.bf16.msra.mxu0 0
      %2574 = vmatprep.subr.bf16.mxu0 0
      %2575 = vmatpush1.bf16.msra.mxu0 0
      %2576 = vmatprep.subr.bf16.mxu0 0
      %2577 = vmatpush1.bf16.msra.mxu0 0
      %2578 = vmatprep.subr.bf16.mxu0 0
      %2579 = vmatpush1.bf16.msra.mxu0 0
      %2580 = vmatprep.subr.bf16.mxu0 0
      %2581 = vmatpush1.bf16.msra.mxu0 %v2566
      %2582 = vmatprep.subr.bf16.mxu0 0
      %2583 = vmatpush1.bf16.msra.mxu0 %v2559
      %2584 = vmatprep.subr.bf16.mxu0 0
      %2585 = vmatpush2.bf16.msra.mxu0 0
      %2586 = vmatprep.subr.bf16.mxu0 0
      %2587 = vmatpush2.bf16.msra.mxu0 0
      %2588 = vmatprep.subr.bf16.mxu0 0
      %2589 = vmatpush2.bf16.msra.mxu0 0
      %2590 = vmatprep.subr.bf16.mxu0 0
      %2591 = vmatpush2.bf16.msra.mxu0 0
      %2592 = vmatprep.subr.bf16.mxu0 0
      %2593 = vmatpush2.bf16.msra.mxu0 0
      %2594 = vmatprep.subr.bf16.mxu0 0
      %2595 = vmatpush2.bf16.msra.mxu0 0
      %2596 = vmatprep.subr.bf16.mxu0 0
      %2597 = vmatpush2.bf16.msra.mxu0 0
      %2598 = vmatprep.subr.bf16.mxu0 0
      %2599 = vmatpush2.bf16.msra.mxu0 0
      %2600 = vmatprep.mubr.bf16.mxu0 0
      %2601 = vmatmul.mubr.bf16.gmra.mxu0 %v2563
      %v2602 = vpop.f32.mrf.mxu0
      %v2603 = vadd.f32 0.0, %v2602
      %v2604 = vpop.f32.mrf.mxu0
      %v2605 = vpop.f32.mrf.mxu0
      %v2606 = vpop.f32.mrf.mxu0
      %2607 = vdwg.mxu0
      %v2608 = vadd.f32 %v2544, %v2603
      %s2609 = scalar_lea.vmem %s9, 224
      %v2610 = vld [vmem:[%s2609] sm:$0xf]
      %v2611 = vld [vmem:[%s2609 + $0x4] sm:$0xf]
      %v2612 = vld [vmem:[%s2609 + $0x8] sm:$0xf]
      %v2613 = vld [vmem:[%s2609 + $0xc] sm:$0x3]
      %v2614 = vrot.slane %v1708, 7
      %v2619 = vunpack.c.l.b16 %v2610
      %v2620 = vunpack.c.l.b16 %v2611
      %v2621 = vunpack.c.l.b16 %v2612
      %v2622 = vunpack.c.l.b16 %v2613
      %v2623 = vpack.c.b16 %v2620, %v2619
      %v2624 = vpack.c.b16 %v2622, %v2621
      %v2627 = vsel %vm509, %v2614, 0
      %v2630 = vsel %vm462, %v2624, 0
      %2632 = vmatprep.subr.bf16.mxu0 0
      %2633 = vmatpush1.bf16.msra.mxu0 0
      %2634 = vmatprep.subr.bf16.mxu0 0
      %2635 = vmatpush1.bf16.msra.mxu0 0
      %2636 = vmatprep.subr.bf16.mxu0 0
      %2637 = vmatpush1.bf16.msra.mxu0 0
      %2638 = vmatprep.subr.bf16.mxu0 0
      %2639 = vmatpush1.bf16.msra.mxu0 0
      %2640 = vmatprep.subr.bf16.mxu0 0
      %2641 = vmatpush1.bf16.msra.mxu0 0
      %2642 = vmatprep.subr.bf16.mxu0 0
      %2643 = vmatpush1.bf16.msra.mxu0 0
      %2644 = vmatprep.subr.bf16.mxu0 0
      %2645 = vmatpush1.bf16.msra.mxu0 %v2630
      %2646 = vmatprep.subr.bf16.mxu0 0
      %2647 = vmatpush1.bf16.msra.mxu0 %v2623
      %2648 = vmatprep.subr.bf16.mxu0 0
      %2649 = vmatpush2.bf16.msra.mxu0 0
      %2650 = vmatprep.subr.bf16.mxu0 0
      %2651 = vmatpush2.bf16.msra.mxu0 0
      %2652 = vmatprep.subr.bf16.mxu0 0
      %2653 = vmatpush2.bf16.msra.mxu0 0
      %2654 = vmatprep.subr.bf16.mxu0 0
      %2655 = vmatpush2.bf16.msra.mxu0 0
      %2656 = vmatprep.subr.bf16.mxu0 0
      %2657 = vmatpush2.bf16.msra.mxu0 0
      %2658 = vmatprep.subr.bf16.mxu0 0
      %2659 = vmatpush2.bf16.msra.mxu0 0
      %2660 = vmatprep.subr.bf16.mxu0 0
      %2661 = vmatpush2.bf16.msra.mxu0 0
      %2662 = vmatprep.subr.bf16.mxu0 0
      %2663 = vmatpush2.bf16.msra.mxu0 0
      %2664 = vmatprep.mubr.bf16.mxu0 0
      %2665 = vmatmul.mubr.bf16.gmra.mxu0 %v2627
      %v2666 = vpop.f32.mrf.mxu0
      %v2667 = vadd.f32 0.0, %v2666
      %v2668 = vpop.f32.mrf.mxu0
      %v2669 = vpop.f32.mrf.mxu0
      %v2670 = vpop.f32.mrf.mxu0
      %2671 = vdwg.mxu0
      %v2672 = vadd.f32 %v2608, %v2667
      %s2673 = scalar_lea.vmem %s9, 240
      %v2674 = vld [vmem:[%s2673] sm:$0xf]
      %v2675 = vld [vmem:[%s2673 + $0x4] sm:$0xf]
      %v2676 = vld [vmem:[%s2673 + $0x8] sm:$0xf]
      %v2677 = vld [vmem:[%s2673 + $0xc] sm:$0x3]
      %v2678 = vrot.slane %v1780, 7
      %v2683 = vunpack.c.l.b16 %v2674
      %v2684 = vunpack.c.l.b16 %v2675
      %v2685 = vunpack.c.l.b16 %v2676
      %v2686 = vunpack.c.l.b16 %v2677
      %v2687 = vpack.c.b16 %v2684, %v2683
      %v2688 = vpack.c.b16 %v2686, %v2685
      %v2691 = vsel %vm509, %v2678, 0
      %v2694 = vsel %vm462, %v2688, 0
      %2696 = vmatprep.subr.bf16.mxu0 0
      %2697 = vmatpush1.bf16.msra.mxu0 0
      %2698 = vmatprep.subr.bf16.mxu0 0
      %2699 = vmatpush1.bf16.msra.mxu0 0
      %2700 = vmatprep.subr.bf16.mxu0 0
      %2701 = vmatpush1.bf16.msra.mxu0 0
      %2702 = vmatprep.subr.bf16.mxu0 0
      %2703 = vmatpush1.bf16.msra.mxu0 0
      %2704 = vmatprep.subr.bf16.mxu0 0
      %2705 = vmatpush1.bf16.msra.mxu0 0
      %2706 = vmatprep.subr.bf16.mxu0 0
      %2707 = vmatpush1.bf16.msra.mxu0 0
      %2708 = vmatprep.subr.bf16.mxu0 0
      %2709 = vmatpush1.bf16.msra.mxu0 %v2694
      %2710 = vmatprep.subr.bf16.mxu0 0
      %2711 = vmatpush1.bf16.msra.mxu0 %v2687
      %2712 = vmatprep.subr.bf16.mxu0 0
      %2713 = vmatpush2.bf16.msra.mxu0 0
      %2714 = vmatprep.subr.bf16.mxu0 0
      %2715 = vmatpush2.bf16.msra.mxu0 0
      %2716 = vmatprep.subr.bf16.mxu0 0
      %2717 = vmatpush2.bf16.msra.mxu0 0
      %2718 = vmatprep.subr.bf16.mxu0 0
      %2719 = vmatpush2.bf16.msra.mxu0 0
      %2720 = vmatprep.subr.bf16.mxu0 0
      %2721 = vmatpush2.bf16.msra.mxu0 0
      %2722 = vmatprep.subr.bf16.mxu0 0
      %2723 = vmatpush2.bf16.msra.mxu0 0
      %2724 = vmatprep.subr.bf16.mxu0 0
      %2725 = vmatpush2.bf16.msra.mxu0 0
      %2726 = vmatprep.subr.bf16.mxu0 0
      %2727 = vmatpush2.bf16.msra.mxu0 0
      %2728 = vmatprep.mubr.bf16.mxu0 0
      %2729 = vmatmul.mubr.bf16.gmra.mxu0 %v2691
      %v2730 = vpop.f32.mrf.mxu0
      %v2731 = vadd.f32 0.0, %v2730
      %v2732 = vpop.f32.mrf.mxu0
      %v2733 = vpop.f32.mrf.mxu0
      %v2734 = vpop.f32.mrf.mxu0
      %2735 = vdwg.mxu0
      %v2736 = vadd.f32 %v2672, %v2731
      %s2737 = scalar_lea.vmem %s9, 256
      %v2738 = vld [vmem:[%s2737] sm:$0xf]
      %v2739 = vld [vmem:[%s2737 + $0x4] sm:$0xf]
      %v2740 = vld [vmem:[%s2737 + $0x8] sm:$0xf]
      %v2741 = vld [vmem:[%s2737 + $0xc] sm:$0x3]
      %v2746 = vunpack.c.l.b16 %v2738
      %v2747 = vunpack.c.l.b16 %v2739
      %v2748 = vunpack.c.l.b16 %v2740
      %v2749 = vunpack.c.l.b16 %v2741
      %v2750 = vpack.c.b16 %v2747, %v2746
      %v2751 = vpack.c.b16 %v2749, %v2748
      %v2754 = vsel %vm509, %v1709, 0
      %v2757 = vsel %vm462, %v2751, 0
      %2759 = vmatprep.subr.bf16.mxu0 0
      %2760 = vmatpush1.bf16.msra.mxu0 0
      %2761 = vmatprep.subr.bf16.mxu0 0
      %2762 = vmatpush1.bf16.msra.mxu0 0
      %2763 = vmatprep.subr.bf16.mxu0 0
      %2764 = vmatpush1.bf16.msra.mxu0 0
      %2765 = vmatprep.subr.bf16.mxu0 0
      %2766 = vmatpush1.bf16.msra.mxu0 0
      %2767 = vmatprep.subr.bf16.mxu0 0
      %2768 = vmatpush1.bf16.msra.mxu0 0
      %2769 = vmatprep.subr.bf16.mxu0 0
      %2770 = vmatpush1.bf16.msra.mxu0 0
      %2771 = vmatprep.subr.bf16.mxu0 0
      %2772 = vmatpush1.bf16.msra.mxu0 %v2757
      %2773 = vmatprep.subr.bf16.mxu0 0
      %2774 = vmatpush1.bf16.msra.mxu0 %v2750
      %2775 = vmatprep.subr.bf16.mxu0 0
      %2776 = vmatpush2.bf16.msra.mxu0 0
      %2777 = vmatprep.subr.bf16.mxu0 0
      %2778 = vmatpush2.bf16.msra.mxu0 0
      %2779 = vmatprep.subr.bf16.mxu0 0
      %2780 = vmatpush2.bf16.msra.mxu0 0
      %2781 = vmatprep.subr.bf16.mxu0 0
      %2782 = vmatpush2.bf16.msra.mxu0 0
      %2783 = vmatprep.subr.bf16.mxu0 0
      %2784 = vmatpush2.bf16.msra.mxu0 0
      %2785 = vmatprep.subr.bf16.mxu0 0
      %2786 = vmatpush2.bf16.msra.mxu0 0
      %2787 = vmatprep.subr.bf16.mxu0 0
      %2788 = vmatpush2.bf16.msra.mxu0 0
      %2789 = vmatprep.subr.bf16.mxu0 0
      %2790 = vmatpush2.bf16.msra.mxu0 0
      %2791 = vmatprep.mubr.bf16.mxu0 0
      %2792 = vmatmul.mubr.bf16.gmra.mxu0 %v2754
      %v2793 = vpop.f32.mrf.mxu0
      %v2794 = vadd.f32 0.0, %v2793
      %v2795 = vpop.f32.mrf.mxu0
      %v2796 = vpop.f32.mrf.mxu0
      %v2797 = vpop.f32.mrf.mxu0
      %2798 = vdwg.mxu0
      %v2799 = vadd.f32 %v2736, %v2794
      %s2800 = scalar_lea.vmem %s9, 272
      %v2801 = vld [vmem:[%s2800] sm:$0xf]
      %v2802 = vld [vmem:[%s2800 + $0x4] sm:$0xf]
      %v2803 = vld [vmem:[%s2800 + $0x8] sm:$0xf]
      %v2804 = vld [vmem:[%s2800 + $0xc] sm:$0x3]
      %v2805 = vshrl.u32 %v1709, 16
      %v2811 = vunpack.c.l.b16 %v2801
      %v2812 = vunpack.c.l.b16 %v2802
      %v2813 = vunpack.c.l.b16 %v2803
      %v2814 = vunpack.c.l.b16 %v2804
      %v2815 = vpack.c.b16 %v2812, %v2811
      %v2816 = vpack.c.b16 %v2814, %v2813
      %v2819 = vsel %vm509, %v2805, 0
      %v2822 = vsel %vm462, %v2816, 0
      %2824 = vmatprep.subr.bf16.mxu0 0
      %2825 = vmatpush1.bf16.msra.mxu0 0
      %2826 = vmatprep.subr.bf16.mxu0 0
      %2827 = vmatpush1.bf16.msra.mxu0 0
      %2828 = vmatprep.subr.bf16.mxu0 0
      %2829 = vmatpush1.bf16.msra.mxu0 0
      %2830 = vmatprep.subr.bf16.mxu0 0
      %2831 = vmatpush1.bf16.msra.mxu0 0
      %2832 = vmatprep.subr.bf16.mxu0 0
      %2833 = vmatpush1.bf16.msra.mxu0 0
      %2834 = vmatprep.subr.bf16.mxu0 0
      %2835 = vmatpush1.bf16.msra.mxu0 0
      %2836 = vmatprep.subr.bf16.mxu0 0
      %2837 = vmatpush1.bf16.msra.mxu0 %v2822
      %2838 = vmatprep.subr.bf16.mxu0 0
      %2839 = vmatpush1.bf16.msra.mxu0 %v2815
      %2840 = vmatprep.subr.bf16.mxu0 0
      %2841 = vmatpush2.bf16.msra.mxu0 0
      %2842 = vmatprep.subr.bf16.mxu0 0
      %2843 = vmatpush2.bf16.msra.mxu0 0
      %2844 = vmatprep.subr.bf16.mxu0 0
      %2845 = vmatpush2.bf16.msra.mxu0 0
      %2846 = vmatprep.subr.bf16.mxu0 0
      %2847 = vmatpush2.bf16.msra.mxu0 0
      %2848 = vmatprep.subr.bf16.mxu0 0
      %2849 = vmatpush2.bf16.msra.mxu0 0
      %2850 = vmatprep.subr.bf16.mxu0 0
      %2851 = vmatpush2.bf16.msra.mxu0 0
      %2852 = vmatprep.subr.bf16.mxu0 0
      %2853 = vmatpush2.bf16.msra.mxu0 0
      %2854 = vmatprep.subr.bf16.mxu0 0
      %2855 = vmatpush2.bf16.msra.mxu0 0
      %2856 = vmatprep.mubr.bf16.mxu0 0
      %2857 = vmatmul.mubr.bf16.gmra.mxu0 %v2819
      %v2858 = vpop.f32.mrf.mxu0
      %v2859 = vadd.f32 0.0, %v2858
      %v2860 = vpop.f32.mrf.mxu0
      %v2861 = vpop.f32.mrf.mxu0
      %v2862 = vpop.f32.mrf.mxu0
      %2863 = vdwg.mxu0
      %v2864 = vadd.f32 %v2799, %v2859
      %s2865 = scalar_lea.vmem %s9, 288
      %v2866 = vld [vmem:[%s2865] sm:$0xf]
      %v2867 = vld [vmem:[%s2865 + $0x4] sm:$0xf]
      %v2868 = vld [vmem:[%s2865 + $0x8] sm:$0xf]
      %v2869 = vld [vmem:[%s2865 + $0xc] sm:$0x3]
      %v2871 = vrot.slane %v1709, 1
      %v2876 = vunpack.c.l.b16 %v2866
      %v2877 = vunpack.c.l.b16 %v2867
      %v2878 = vunpack.c.l.b16 %v2868
      %v2879 = vunpack.c.l.b16 %v2869
      %v2880 = vpack.c.b16 %v2877, %v2876
      %v2881 = vpack.c.b16 %v2879, %v2878
      %v2884 = vsel %vm509, %v2871, 0
      %v2887 = vsel %vm462, %v2881, 0
      %2889 = vmatprep.subr.bf16.mxu0 0
      %2890 = vmatpush1.bf16.msra.mxu0 0
      %2891 = vmatprep.subr.bf16.mxu0 0
      %2892 = vmatpush1.bf16.msra.mxu0 0
      %2893 = vmatprep.subr.bf16.mxu0 0
      %2894 = vmatpush1.bf16.msra.mxu0 0
      %2895 = vmatprep.subr.bf16.mxu0 0
      %2896 = vmatpush1.bf16.msra.mxu0 0
      %2897 = vmatprep.subr.bf16.mxu0 0
      %2898 = vmatpush1.bf16.msra.mxu0 0
      %2899 = vmatprep.subr.bf16.mxu0 0
      %2900 = vmatpush1.bf16.msra.mxu0 0
      %2901 = vmatprep.subr.bf16.mxu0 0
      %2902 = vmatpush1.bf16.msra.mxu0 %v2887
      %2903 = vmatprep.subr.bf16.mxu0 0
      %2904 = vmatpush1.bf16.msra.mxu0 %v2880
      %2905 = vmatprep.subr.bf16.mxu0 0
      %2906 = vmatpush2.bf16.msra.mxu0 0
      %2907 = vmatprep.subr.bf16.mxu0 0
      %2908 = vmatpush2.bf16.msra.mxu0 0
      %2909 = vmatprep.subr.bf16.mxu0 0
      %2910 = vmatpush2.bf16.msra.mxu0 0
      %2911 = vmatprep.subr.bf16.mxu0 0
      %2912 = vmatpush2.bf16.msra.mxu0 0
      %2913 = vmatprep.subr.bf16.mxu0 0
      %2914 = vmatpush2.bf16.msra.mxu0 0
      %2915 = vmatprep.subr.bf16.mxu0 0
      %2916 = vmatpush2.bf16.msra.mxu0 0
      %2917 = vmatprep.subr.bf16.mxu0 0
      %2918 = vmatpush2.bf16.msra.mxu0 0
      %2919 = vmatprep.subr.bf16.mxu0 0
      %2920 = vmatpush2.bf16.msra.mxu0 0
      %2921 = vmatprep.mubr.bf16.mxu0 0
      %2922 = vmatmul.mubr.bf16.gmra.mxu0 %v2884
      %v2923 = vpop.f32.mrf.mxu0
      %v2924 = vadd.f32 0.0, %v2923
      %v2925 = vpop.f32.mrf.mxu0
      %v2926 = vpop.f32.mrf.mxu0
      %v2927 = vpop.f32.mrf.mxu0
      %2928 = vdwg.mxu0
      %v2929 = vadd.f32 %v2864, %v2924
      %s2930 = scalar_lea.vmem %s9, 304
      %v2931 = vld [vmem:[%s2930] sm:$0xf]
      %v2932 = vld [vmem:[%s2930 + $0x4] sm:$0xf]
      %v2933 = vld [vmem:[%s2930 + $0x8] sm:$0xf]
      %v2934 = vld [vmem:[%s2930 + $0xc] sm:$0x3]
      %v2935 = vrot.slane %v2805, 1
      %v2940 = vunpack.c.l.b16 %v2931
      %v2941 = vunpack.c.l.b16 %v2932
      %v2942 = vunpack.c.l.b16 %v2933
      %v2943 = vunpack.c.l.b16 %v2934
      %v2944 = vpack.c.b16 %v2941, %v2940
      %v2945 = vpack.c.b16 %v2943, %v2942
      %v2948 = vsel %vm509, %v2935, 0
      %v2951 = vsel %vm462, %v2945, 0
      %2953 = vmatprep.subr.bf16.mxu0 0
      %2954 = vmatpush1.bf16.msra.mxu0 0
      %2955 = vmatprep.subr.bf16.mxu0 0
      %2956 = vmatpush1.bf16.msra.mxu0 0
      %2957 = vmatprep.subr.bf16.mxu0 0
      %2958 = vmatpush1.bf16.msra.mxu0 0
      %2959 = vmatprep.subr.bf16.mxu0 0
      %2960 = vmatpush1.bf16.msra.mxu0 0
      %2961 = vmatprep.subr.bf16.mxu0 0
      %2962 = vmatpush1.bf16.msra.mxu0 0
      %2963 = vmatprep.subr.bf16.mxu0 0
      %2964 = vmatpush1.bf16.msra.mxu0 0
      %2965 = vmatprep.subr.bf16.mxu0 0
      %2966 = vmatpush1.bf16.msra.mxu0 %v2951
      %2967 = vmatprep.subr.bf16.mxu0 0
      %2968 = vmatpush1.bf16.msra.mxu0 %v2944
      %2969 = vmatprep.subr.bf16.mxu0 0
      %2970 = vmatpush2.bf16.msra.mxu0 0
      %2971 = vmatprep.subr.bf16.mxu0 0
      %2972 = vmatpush2.bf16.msra.mxu0 0
      %2973 = vmatprep.subr.bf16.mxu0 0
      %2974 = vmatpush2.bf16.msra.mxu0 0
      %2975 = vmatprep.subr.bf16.mxu0 0
      %2976 = vmatpush2.bf16.msra.mxu0 0
      %2977 = vmatprep.subr.bf16.mxu0 0
      %2978 = vmatpush2.bf16.msra.mxu0 0
      %2979 = vmatprep.subr.bf16.mxu0 0
      %2980 = vmatpush2.bf16.msra.mxu0 0
      %2981 = vmatprep.subr.bf16.mxu0 0
      %2982 = vmatpush2.bf16.msra.mxu0 0
      %2983 = vmatprep.subr.bf16.mxu0 0
      %2984 = vmatpush2.bf16.msra.mxu0 0
      %2985 = vmatprep.mubr.bf16.mxu0 0
      %2986 = vmatmul.mubr.bf16.gmra.mxu0 %v2948
      %v2987 = vpop.f32.mrf.mxu0
      %v2988 = vadd.f32 0.0, %v2987
      %v2989 = vpop.f32.mrf.mxu0
      %v2990 = vpop.f32.mrf.mxu0
      %v2991 = vpop.f32.mrf.mxu0
      %2992 = vdwg.mxu0
      %v2993 = vadd.f32 %v2929, %v2988
      %s2994 = scalar_lea.vmem %s9, 320
      %v2995 = vld [vmem:[%s2994] sm:$0xf]
      %v2996 = vld [vmem:[%s2994 + $0x4] sm:$0xf]
      %v2997 = vld [vmem:[%s2994 + $0x8] sm:$0xf]
      %v2998 = vld [vmem:[%s2994 + $0xc] sm:$0x3]
      %v2999 = vrot.slane %v1709, 2
      %v3004 = vunpack.c.l.b16 %v2995
      %v3005 = vunpack.c.l.b16 %v2996
      %v3006 = vunpack.c.l.b16 %v2997
      %v3007 = vunpack.c.l.b16 %v2998
      %v3008 = vpack.c.b16 %v3005, %v3004
      %v3009 = vpack.c.b16 %v3007, %v3006
      %v3012 = vsel %vm509, %v2999, 0
      %v3015 = vsel %vm462, %v3009, 0
      %3017 = vmatprep.subr.bf16.mxu0 0
      %3018 = vmatpush1.bf16.msra.mxu0 0
      %3019 = vmatprep.subr.bf16.mxu0 0
      %3020 = vmatpush1.bf16.msra.mxu0 0
      %3021 = vmatprep.subr.bf16.mxu0 0
      %3022 = vmatpush1.bf16.msra.mxu0 0
      %3023 = vmatprep.subr.bf16.mxu0 0
      %3024 = vmatpush1.bf16.msra.mxu0 0
      %3025 = vmatprep.subr.bf16.mxu0 0
      %3026 = vmatpush1.bf16.msra.mxu0 0
      %3027 = vmatprep.subr.bf16.mxu0 0
      %3028 = vmatpush1.bf16.msra.mxu0 0
      %3029 = vmatprep.subr.bf16.mxu0 0
      %3030 = vmatpush1.bf16.msra.mxu0 %v3015
      %3031 = vmatprep.subr.bf16.mxu0 0
      %3032 = vmatpush1.bf16.msra.mxu0 %v3008
      %3033 = vmatprep.subr.bf16.mxu0 0
      %3034 = vmatpush2.bf16.msra.mxu0 0
      %3035 = vmatprep.subr.bf16.mxu0 0
      %3036 = vmatpush2.bf16.msra.mxu0 0
      %3037 = vmatprep.subr.bf16.mxu0 0
      %3038 = vmatpush2.bf16.msra.mxu0 0
      %3039 = vmatprep.subr.bf16.mxu0 0
      %3040 = vmatpush2.bf16.msra.mxu0 0
      %3041 = vmatprep.subr.bf16.mxu0 0
      %3042 = vmatpush2.bf16.msra.mxu0 0
      %3043 = vmatprep.subr.bf16.mxu0 0
      %3044 = vmatpush2.bf16.msra.mxu0 0
      %3045 = vmatprep.subr.bf16.mxu0 0
      %3046 = vmatpush2.bf16.msra.mxu0 0
      %3047 = vmatprep.subr.bf16.mxu0 0
      %3048 = vmatpush2.bf16.msra.mxu0 0
      %3049 = vmatprep.mubr.bf16.mxu0 0
      %3050 = vmatmul.mubr.bf16.gmra.mxu0 %v3012
      %v3051 = vpop.f32.mrf.mxu0
      %v3052 = vadd.f32 0.0, %v3051
      %v3053 = vpop.f32.mrf.mxu0
      %v3054 = vpop.f32.mrf.mxu0
      %v3055 = vpop.f32.mrf.mxu0
      %3056 = vdwg.mxu0
      %v3057 = vadd.f32 %v2993, %v3052
      %s3058 = scalar_lea.vmem %s9, 336
      %v3059 = vld [vmem:[%s3058] sm:$0xf]
      %v3060 = vld [vmem:[%s3058 + $0x4] sm:$0xf]
      %v3061 = vld [vmem:[%s3058 + $0x8] sm:$0xf]
      %v3062 = vld [vmem:[%s3058 + $0xc] sm:$0x3]
      %v3063 = vrot.slane %v2805, 2
      %v3068 = vunpack.c.l.b16 %v3059
      %v3069 = vunpack.c.l.b16 %v3060
      %v3070 = vunpack.c.l.b16 %v3061
      %v3071 = vunpack.c.l.b16 %v3062
      %v3072 = vpack.c.b16 %v3069, %v3068
      %v3073 = vpack.c.b16 %v3071, %v3070
      %v3076 = vsel %vm509, %v3063, 0
      %v3079 = vsel %vm462, %v3073, 0
      %3081 = vmatprep.subr.bf16.mxu0 0
      %3082 = vmatpush1.bf16.msra.mxu0 0
      %3083 = vmatprep.subr.bf16.mxu0 0
      %3084 = vmatpush1.bf16.msra.mxu0 0
      %3085 = vmatprep.subr.bf16.mxu0 0
      %3086 = vmatpush1.bf16.msra.mxu0 0
      %3087 = vmatprep.subr.bf16.mxu0 0
      %3088 = vmatpush1.bf16.msra.mxu0 0
      %3089 = vmatprep.subr.bf16.mxu0 0
      %3090 = vmatpush1.bf16.msra.mxu0 0
      %3091 = vmatprep.subr.bf16.mxu0 0
      %3092 = vmatpush1.bf16.msra.mxu0 0
      %3093 = vmatprep.subr.bf16.mxu0 0
      %3094 = vmatpush1.bf16.msra.mxu0 %v3079
      %3095 = vmatprep.subr.bf16.mxu0 0
      %3096 = vmatpush1.bf16.msra.mxu0 %v3072
      %3097 = vmatprep.subr.bf16.mxu0 0
      %3098 = vmatpush2.bf16.msra.mxu0 0
      %3099 = vmatprep.subr.bf16.mxu0 0
      %3100 = vmatpush2.bf16.msra.mxu0 0
      %3101 = vmatprep.subr.bf16.mxu0 0
      %3102 = vmatpush2.bf16.msra.mxu0 0
      %3103 = vmatprep.subr.bf16.mxu0 0
      %3104 = vmatpush2.bf16.msra.mxu0 0
      %3105 = vmatprep.subr.bf16.mxu0 0
      %3106 = vmatpush2.bf16.msra.mxu0 0
      %3107 = vmatprep.subr.bf16.mxu0 0
      %3108 = vmatpush2.bf16.msra.mxu0 0
      %3109 = vmatprep.subr.bf16.mxu0 0
      %3110 = vmatpush2.bf16.msra.mxu0 0
      %3111 = vmatprep.subr.bf16.mxu0 0
      %3112 = vmatpush2.bf16.msra.mxu0 0
      %3113 = vmatprep.mubr.bf16.mxu0 0
      %3114 = vmatmul.mubr.bf16.gmra.mxu0 %v3076
      %v3115 = vpop.f32.mrf.mxu0
      %v3116 = vadd.f32 0.0, %v3115
      %v3117 = vpop.f32.mrf.mxu0
      %v3118 = vpop.f32.mrf.mxu0
      %v3119 = vpop.f32.mrf.mxu0
      %3120 = vdwg.mxu0
      %v3121 = vadd.f32 %v3057, %v3116
      %s3122 = scalar_lea.vmem %s9, 352
      %v3123 = vld [vmem:[%s3122] sm:$0xf]
      %v3124 = vld [vmem:[%s3122 + $0x4] sm:$0xf]
      %v3125 = vld [vmem:[%s3122 + $0x8] sm:$0xf]
      %v3126 = vld [vmem:[%s3122 + $0xc] sm:$0x3]
      %v3127 = vrot.slane %v1709, 3
      %v3132 = vunpack.c.l.b16 %v3123
      %v3133 = vunpack.c.l.b16 %v3124
      %v3134 = vunpack.c.l.b16 %v3125
      %v3135 = vunpack.c.l.b16 %v3126
      %v3136 = vpack.c.b16 %v3133, %v3132
      %v3137 = vpack.c.b16 %v3135, %v3134
      %v3140 = vsel %vm509, %v3127, 0
      %v3143 = vsel %vm462, %v3137, 0
      %3145 = vmatprep.subr.bf16.mxu0 0
      %3146 = vmatpush1.bf16.msra.mxu0 0
      %3147 = vmatprep.subr.bf16.mxu0 0
      %3148 = vmatpush1.bf16.msra.mxu0 0
      %3149 = vmatprep.subr.bf16.mxu0 0
      %3150 = vmatpush1.bf16.msra.mxu0 0
      %3151 = vmatprep.subr.bf16.mxu0 0
      %3152 = vmatpush1.bf16.msra.mxu0 0
      %3153 = vmatprep.subr.bf16.mxu0 0
      %3154 = vmatpush1.bf16.msra.mxu0 0
      %3155 = vmatprep.subr.bf16.mxu0 0
      %3156 = vmatpush1.bf16.msra.mxu0 0
      %3157 = vmatprep.subr.bf16.mxu0 0
      %3158 = vmatpush1.bf16.msra.mxu0 %v3143
      %3159 = vmatprep.subr.bf16.mxu0 0
      %3160 = vmatpush1.bf16.msra.mxu0 %v3136
      %3161 = vmatprep.subr.bf16.mxu0 0
      %3162 = vmatpush2.bf16.msra.mxu0 0
      %3163 = vmatprep.subr.bf16.mxu0 0
      %3164 = vmatpush2.bf16.msra.mxu0 0
      %3165 = vmatprep.subr.bf16.mxu0 0
      %3166 = vmatpush2.bf16.msra.mxu0 0
      %3167 = vmatprep.subr.bf16.mxu0 0
      %3168 = vmatpush2.bf16.msra.mxu0 0
      %3169 = vmatprep.subr.bf16.mxu0 0
      %3170 = vmatpush2.bf16.msra.mxu0 0
      %3171 = vmatprep.subr.bf16.mxu0 0
      %3172 = vmatpush2.bf16.msra.mxu0 0
      %3173 = vmatprep.subr.bf16.mxu0 0
      %3174 = vmatpush2.bf16.msra.mxu0 0
      %3175 = vmatprep.subr.bf16.mxu0 0
      %3176 = vmatpush2.bf16.msra.mxu0 0
      %3177 = vmatprep.mubr.bf16.mxu0 0
      %3178 = vmatmul.mubr.bf16.gmra.mxu0 %v3140
      %v3179 = vpop.f32.mrf.mxu0
      %v3180 = vadd.f32 0.0, %v3179
      %v3181 = vpop.f32.mrf.mxu0
      %v3182 = vpop.f32.mrf.mxu0
      %v3183 = vpop.f32.mrf.mxu0
      %3184 = vdwg.mxu0
      %v3185 = vadd.f32 %v3121, %v3180
      %s3186 = scalar_lea.vmem %s9, 368
      %v3187 = vld [vmem:[%s3186] sm:$0xf]
      %v3188 = vld [vmem:[%s3186 + $0x4] sm:$0xf]
      %v3189 = vld [vmem:[%s3186 + $0x8] sm:$0xf]
      %v3190 = vld [vmem:[%s3186 + $0xc] sm:$0x3]
      %v3191 = vrot.slane %v2805, 3
      %v3196 = vunpack.c.l.b16 %v3187
      %v3197 = vunpack.c.l.b16 %v3188
      %v3198 = vunpack.c.l.b16 %v3189
      %v3199 = vunpack.c.l.b16 %v3190
      %v3200 = vpack.c.b16 %v3197, %v3196
      %v3201 = vpack.c.b16 %v3199, %v3198
      %v3204 = vsel %vm509, %v3191, 0
      %v3207 = vsel %vm462, %v3201, 0
      %3209 = vmatprep.subr.bf16.mxu0 0
      %3210 = vmatpush1.bf16.msra.mxu0 0
      %3211 = vmatprep.subr.bf16.mxu0 0
      %3212 = vmatpush1.bf16.msra.mxu0 0
      %3213 = vmatprep.subr.bf16.mxu0 0
      %3214 = vmatpush1.bf16.msra.mxu0 0
      %3215 = vmatprep.subr.bf16.mxu0 0
      %3216 = vmatpush1.bf16.msra.mxu0 0
      %3217 = vmatprep.subr.bf16.mxu0 0
      %3218 = vmatpush1.bf16.msra.mxu0 0
      %3219 = vmatprep.subr.bf16.mxu0 0
      %3220 = vmatpush1.bf16.msra.mxu0 0
      %3221 = vmatprep.subr.bf16.mxu0 0
      %3222 = vmatpush1.bf16.msra.mxu0 %v3207
      %3223 = vmatprep.subr.bf16.mxu0 0
      %3224 = vmatpush1.bf16.msra.mxu0 %v3200
      %3225 = vmatprep.subr.bf16.mxu0 0
      %3226 = vmatpush2.bf16.msra.mxu0 0
      %3227 = vmatprep.subr.bf16.mxu0 0
      %3228 = vmatpush2.bf16.msra.mxu0 0
      %3229 = vmatprep.subr.bf16.mxu0 0
      %3230 = vmatpush2.bf16.msra.mxu0 0
      %3231 = vmatprep.subr.bf16.mxu0 0
      %3232 = vmatpush2.bf16.msra.mxu0 0
      %3233 = vmatprep.subr.bf16.mxu0 0
      %3234 = vmatpush2.bf16.msra.mxu0 0
      %3235 = vmatprep.subr.bf16.mxu0 0
      %3236 = vmatpush2.bf16.msra.mxu0 0
      %3237 = vmatprep.subr.bf16.mxu0 0
      %3238 = vmatpush2.bf16.msra.mxu0 0
      %3239 = vmatprep.subr.bf16.mxu0 0
      %3240 = vmatpush2.bf16.msra.mxu0 0
      %3241 = vmatprep.mubr.bf16.mxu0 0
      %3242 = vmatmul.mubr.bf16.gmra.mxu0 %v3204
      %v3243 = vpop.f32.mrf.mxu0
      %v3244 = vadd.f32 0.0, %v3243
      %v3245 = vpop.f32.mrf.mxu0
      %v3246 = vpop.f32.mrf.mxu0
      %v3247 = vpop.f32.mrf.mxu0
      %3248 = vdwg.mxu0
      %v3249 = vadd.f32 %v3185, %v3244
      %s3250 = scalar_lea.vmem %s9, 384
      %v3251 = vld [vmem:[%s3250] sm:$0xf]
      %v3252 = vld [vmem:[%s3250 + $0x4] sm:$0xf]
      %v3253 = vld [vmem:[%s3250 + $0x8] sm:$0xf]
      %v3254 = vld [vmem:[%s3250 + $0xc] sm:$0x3]
      %v3255 = vrot.slane %v1709, 4
      %v3260 = vunpack.c.l.b16 %v3251
      %v3261 = vunpack.c.l.b16 %v3252
      %v3262 = vunpack.c.l.b16 %v3253
      %v3263 = vunpack.c.l.b16 %v3254
      %v3264 = vpack.c.b16 %v3261, %v3260
      %v3265 = vpack.c.b16 %v3263, %v3262
      %v3268 = vsel %vm509, %v3255, 0
      %v3271 = vsel %vm462, %v3265, 0
      %3273 = vmatprep.subr.bf16.mxu0 0
      %3274 = vmatpush1.bf16.msra.mxu0 0
      %3275 = vmatprep.subr.bf16.mxu0 0
      %3276 = vmatpush1.bf16.msra.mxu0 0
      %3277 = vmatprep.subr.bf16.mxu0 0
      %3278 = vmatpush1.bf16.msra.mxu0 0
      %3279 = vmatprep.subr.bf16.mxu0 0
      %3280 = vmatpush1.bf16.msra.mxu0 0
      %3281 = vmatprep.subr.bf16.mxu0 0
      %3282 = vmatpush1.bf16.msra.mxu0 0
      %3283 = vmatprep.subr.bf16.mxu0 0
      %3284 = vmatpush1.bf16.msra.mxu0 0
      %3285 = vmatprep.subr.bf16.mxu0 0
      %3286 = vmatpush1.bf16.msra.mxu0 %v3271
      %3287 = vmatprep.subr.bf16.mxu0 0
      %3288 = vmatpush1.bf16.msra.mxu0 %v3264
      %3289 = vmatprep.subr.bf16.mxu0 0
      %3290 = vmatpush2.bf16.msra.mxu0 0
      %3291 = vmatprep.subr.bf16.mxu0 0
      %3292 = vmatpush2.bf16.msra.mxu0 0
      %3293 = vmatprep.subr.bf16.mxu0 0
      %3294 = vmatpush2.bf16.msra.mxu0 0
      %3295 = vmatprep.subr.bf16.mxu0 0
      %3296 = vmatpush2.bf16.msra.mxu0 0
      %3297 = vmatprep.subr.bf16.mxu0 0
      %3298 = vmatpush2.bf16.msra.mxu0 0
      %3299 = vmatprep.subr.bf16.mxu0 0
      %3300 = vmatpush2.bf16.msra.mxu0 0
      %3301 = vmatprep.subr.bf16.mxu0 0
      %3302 = vmatpush2.bf16.msra.mxu0 0
      %3303 = vmatprep.subr.bf16.mxu0 0
      %3304 = vmatpush2.bf16.msra.mxu0 0
      %3305 = vmatprep.mubr.bf16.mxu0 0
      %3306 = vmatmul.mubr.bf16.gmra.mxu0 %v3268
      %v3307 = vpop.f32.mrf.mxu0
      %v3308 = vadd.f32 0.0, %v3307
      %v3309 = vpop.f32.mrf.mxu0
      %v3310 = vpop.f32.mrf.mxu0
      %v3311 = vpop.f32.mrf.mxu0
      %3312 = vdwg.mxu0
      %v3313 = vadd.f32 %v3249, %v3308
      %s3314 = scalar_lea.vmem %s9, 400
      %v3315 = vld [vmem:[%s3314] sm:$0xf]
      %v3316 = vld [vmem:[%s3314 + $0x4] sm:$0xf]
      %v3317 = vld [vmem:[%s3314 + $0x8] sm:$0xf]
      %v3318 = vld [vmem:[%s3314 + $0xc] sm:$0x3]
      %v3319 = vrot.slane %v2805, 4
      %v3324 = vunpack.c.l.b16 %v3315
      %v3325 = vunpack.c.l.b16 %v3316
      %v3326 = vunpack.c.l.b16 %v3317
      %v3327 = vunpack.c.l.b16 %v3318
      %v3328 = vpack.c.b16 %v3325, %v3324
      %v3329 = vpack.c.b16 %v3327, %v3326
      %v3332 = vsel %vm509, %v3319, 0
      %v3335 = vsel %vm462, %v3329, 0
      %3337 = vmatprep.subr.bf16.mxu0 0
      %3338 = vmatpush1.bf16.msra.mxu0 0
      %3339 = vmatprep.subr.bf16.mxu0 0
      %3340 = vmatpush1.bf16.msra.mxu0 0
      %3341 = vmatprep.subr.bf16.mxu0 0
      %3342 = vmatpush1.bf16.msra.mxu0 0
      %3343 = vmatprep.subr.bf16.mxu0 0
      %3344 = vmatpush1.bf16.msra.mxu0 0
      %3345 = vmatprep.subr.bf16.mxu0 0
      %3346 = vmatpush1.bf16.msra.mxu0 0
      %3347 = vmatprep.subr.bf16.mxu0 0
      %3348 = vmatpush1.bf16.msra.mxu0 0
      %3349 = vmatprep.subr.bf16.mxu0 0
      %3350 = vmatpush1.bf16.msra.mxu0 %v3335
      %3351 = vmatprep.subr.bf16.mxu0 0
      %3352 = vmatpush1.bf16.msra.mxu0 %v3328
      %3353 = vmatprep.subr.bf16.mxu0 0
      %3354 = vmatpush2.bf16.msra.mxu0 0
      %3355 = vmatprep.subr.bf16.mxu0 0
      %3356 = vmatpush2.bf16.msra.mxu0 0
      %3357 = vmatprep.subr.bf16.mxu0 0
      %3358 = vmatpush2.bf16.msra.mxu0 0
      %3359 = vmatprep.subr.bf16.mxu0 0
      %3360 = vmatpush2.bf16.msra.mxu0 0
      %3361 = vmatprep.subr.bf16.mxu0 0
      %3362 = vmatpush2.bf16.msra.mxu0 0
      %3363 = vmatprep.subr.bf16.mxu0 0
      %3364 = vmatpush2.bf16.msra.mxu0 0
      %3365 = vmatprep.subr.bf16.mxu0 0
      %3366 = vmatpush2.bf16.msra.mxu0 0
      %3367 = vmatprep.subr.bf16.mxu0 0
      %3368 = vmatpush2.bf16.msra.mxu0 0
      %3369 = vmatprep.mubr.bf16.mxu0 0
      %3370 = vmatmul.mubr.bf16.gmra.mxu0 %v3332
      %v3371 = vpop.f32.mrf.mxu0
      %v3372 = vadd.f32 0.0, %v3371
      %v3373 = vpop.f32.mrf.mxu0
      %v3374 = vpop.f32.mrf.mxu0
      %v3375 = vpop.f32.mrf.mxu0
      %3376 = vdwg.mxu0
      %v3377 = vadd.f32 %v3313, %v3372
      %s3378 = scalar_lea.vmem %s9, 416
      %v3379 = vld [vmem:[%s3378] sm:$0xf]
      %v3380 = vld [vmem:[%s3378 + $0x4] sm:$0xf]
      %v3381 = vld [vmem:[%s3378 + $0x8] sm:$0xf]
      %v3382 = vld [vmem:[%s3378 + $0xc] sm:$0x3]
      %v3383 = vrot.slane %v1709, 5
      %v3388 = vunpack.c.l.b16 %v3379
      %v3389 = vunpack.c.l.b16 %v3380
      %v3390 = vunpack.c.l.b16 %v3381
      %v3391 = vunpack.c.l.b16 %v3382
      %v3392 = vpack.c.b16 %v3389, %v3388
      %v3393 = vpack.c.b16 %v3391, %v3390
      %v3396 = vsel %vm509, %v3383, 0
      %v3399 = vsel %vm462, %v3393, 0
      %3401 = vmatprep.subr.bf16.mxu0 0
      %3402 = vmatpush1.bf16.msra.mxu0 0
      %3403 = vmatprep.subr.bf16.mxu0 0
      %3404 = vmatpush1.bf16.msra.mxu0 0
      %3405 = vmatprep.subr.bf16.mxu0 0
      %3406 = vmatpush1.bf16.msra.mxu0 0
      %3407 = vmatprep.subr.bf16.mxu0 0
      %3408 = vmatpush1.bf16.msra.mxu0 0
      %3409 = vmatprep.subr.bf16.mxu0 0
      %3410 = vmatpush1.bf16.msra.mxu0 0
      %3411 = vmatprep.subr.bf16.mxu0 0
      %3412 = vmatpush1.bf16.msra.mxu0 0
      %3413 = vmatprep.subr.bf16.mxu0 0
      %3414 = vmatpush1.bf16.msra.mxu0 %v3399
      %3415 = vmatprep.subr.bf16.mxu0 0
      %3416 = vmatpush1.bf16.msra.mxu0 %v3392
      %3417 = vmatprep.subr.bf16.mxu0 0
      %3418 = vmatpush2.bf16.msra.mxu0 0
      %3419 = vmatprep.subr.bf16.mxu0 0
      %3420 = vmatpush2.bf16.msra.mxu0 0
      %3421 = vmatprep.subr.bf16.mxu0 0
      %3422 = vmatpush2.bf16.msra.mxu0 0
      %3423 = vmatprep.subr.bf16.mxu0 0
      %3424 = vmatpush2.bf16.msra.mxu0 0
      %3425 = vmatprep.subr.bf16.mxu0 0
      %3426 = vmatpush2.bf16.msra.mxu0 0
      %3427 = vmatprep.subr.bf16.mxu0 0
      %3428 = vmatpush2.bf16.msra.mxu0 0
      %3429 = vmatprep.subr.bf16.mxu0 0
      %3430 = vmatpush2.bf16.msra.mxu0 0
      %3431 = vmatprep.subr.bf16.mxu0 0
      %3432 = vmatpush2.bf16.msra.mxu0 0
      %3433 = vmatprep.mubr.bf16.mxu0 0
      %3434 = vmatmul.mubr.bf16.gmra.mxu0 %v3396
      %v3435 = vpop.f32.mrf.mxu0
      %v3436 = vadd.f32 0.0, %v3435
      %v3437 = vpop.f32.mrf.mxu0
      %v3438 = vpop.f32.mrf.mxu0
      %v3439 = vpop.f32.mrf.mxu0
      %3440 = vdwg.mxu0
      %v3441 = vadd.f32 %v3377, %v3436
      %s3442 = scalar_lea.vmem %s9, 432
      %v3443 = vld [vmem:[%s3442] sm:$0xf]
      %v3444 = vld [vmem:[%s3442 + $0x4] sm:$0xf]
      %v3445 = vld [vmem:[%s3442 + $0x8] sm:$0xf]
      %v3446 = vld [vmem:[%s3442 + $0xc] sm:$0x3]
      %v3447 = vrot.slane %v2805, 5
      %v3452 = vunpack.c.l.b16 %v3443
      %v3453 = vunpack.c.l.b16 %v3444
      %v3454 = vunpack.c.l.b16 %v3445
      %v3455 = vunpack.c.l.b16 %v3446
      %v3456 = vpack.c.b16 %v3453, %v3452
      %v3457 = vpack.c.b16 %v3455, %v3454
      %v3460 = vsel %vm509, %v3447, 0
      %v3463 = vsel %vm462, %v3457, 0
      %3465 = vmatprep.subr.bf16.mxu0 0
      %3466 = vmatpush1.bf16.msra.mxu0 0
      %3467 = vmatprep.subr.bf16.mxu0 0
      %3468 = vmatpush1.bf16.msra.mxu0 0
      %3469 = vmatprep.subr.bf16.mxu0 0
      %3470 = vmatpush1.bf16.msra.mxu0 0
      %3471 = vmatprep.subr.bf16.mxu0 0
      %3472 = vmatpush1.bf16.msra.mxu0 0
      %3473 = vmatprep.subr.bf16.mxu0 0
      %3474 = vmatpush1.bf16.msra.mxu0 0
      %3475 = vmatprep.subr.bf16.mxu0 0
      %3476 = vmatpush1.bf16.msra.mxu0 0
      %3477 = vmatprep.subr.bf16.mxu0 0
      %3478 = vmatpush1.bf16.msra.mxu0 %v3463
      %3479 = vmatprep.subr.bf16.mxu0 0
      %3480 = vmatpush1.bf16.msra.mxu0 %v3456
      %3481 = vmatprep.subr.bf16.mxu0 0
      %3482 = vmatpush2.bf16.msra.mxu0 0
      %3483 = vmatprep.subr.bf16.mxu0 0
      %3484 = vmatpush2.bf16.msra.mxu0 0
      %3485 = vmatprep.subr.bf16.mxu0 0
      %3486 = vmatpush2.bf16.msra.mxu0 0
      %3487 = vmatprep.subr.bf16.mxu0 0
      %3488 = vmatpush2.bf16.msra.mxu0 0
      %3489 = vmatprep.subr.bf16.mxu0 0
      %3490 = vmatpush2.bf16.msra.mxu0 0
      %3491 = vmatprep.subr.bf16.mxu0 0
      %3492 = vmatpush2.bf16.msra.mxu0 0
      %3493 = vmatprep.subr.bf16.mxu0 0
      %3494 = vmatpush2.bf16.msra.mxu0 0
      %3495 = vmatprep.subr.bf16.mxu0 0
      %3496 = vmatpush2.bf16.msra.mxu0 0
      %3497 = vmatprep.mubr.bf16.mxu0 0
      %3498 = vmatmul.mubr.bf16.gmra.mxu0 %v3460
      %v3499 = vpop.f32.mrf.mxu0
      %v3500 = vadd.f32 0.0, %v3499
      %v3501 = vpop.f32.mrf.mxu0
      %v3502 = vpop.f32.mrf.mxu0
      %v3503 = vpop.f32.mrf.mxu0
      %3504 = vdwg.mxu0
      %v3505 = vadd.f32 %v3441, %v3500
      %s3506 = scalar_lea.vmem %s9, 448
      %v3507 = vld [vmem:[%s3506] sm:$0xf]
      %v3508 = vld [vmem:[%s3506 + $0x4] sm:$0xf]
      %v3509 = vld [vmem:[%s3506 + $0x8] sm:$0xf]
      %v3510 = vld [vmem:[%s3506 + $0xc] sm:$0x3]
      %v3511 = vrot.slane %v1709, 6
      %v3516 = vunpack.c.l.b16 %v3507
      %v3517 = vunpack.c.l.b16 %v3508
      %v3518 = vunpack.c.l.b16 %v3509
      %v3519 = vunpack.c.l.b16 %v3510
      %v3520 = vpack.c.b16 %v3517, %v3516
      %v3521 = vpack.c.b16 %v3519, %v3518
      %v3524 = vsel %vm509, %v3511, 0
      %v3527 = vsel %vm462, %v3521, 0
      %3529 = vmatprep.subr.bf16.mxu0 0
      %3530 = vmatpush1.bf16.msra.mxu0 0
      %3531 = vmatprep.subr.bf16.mxu0 0
      %3532 = vmatpush1.bf16.msra.mxu0 0
      %3533 = vmatprep.subr.bf16.mxu0 0
      %3534 = vmatpush1.bf16.msra.mxu0 0
      %3535 = vmatprep.subr.bf16.mxu0 0
      %3536 = vmatpush1.bf16.msra.mxu0 0
      %3537 = vmatprep.subr.bf16.mxu0 0
      %3538 = vmatpush1.bf16.msra.mxu0 0
      %3539 = vmatprep.subr.bf16.mxu0 0
      %3540 = vmatpush1.bf16.msra.mxu0 0
      %3541 = vmatprep.subr.bf16.mxu0 0
      %3542 = vmatpush1.bf16.msra.mxu0 %v3527
      %3543 = vmatprep.subr.bf16.mxu0 0
      %3544 = vmatpush1.bf16.msra.mxu0 %v3520
      %3545 = vmatprep.subr.bf16.mxu0 0
      %3546 = vmatpush2.bf16.msra.mxu0 0
      %3547 = vmatprep.subr.bf16.mxu0 0
      %3548 = vmatpush2.bf16.msra.mxu0 0
      %3549 = vmatprep.subr.bf16.mxu0 0
      %3550 = vmatpush2.bf16.msra.mxu0 0
      %3551 = vmatprep.subr.bf16.mxu0 0
      %3552 = vmatpush2.bf16.msra.mxu0 0
      %3553 = vmatprep.subr.bf16.mxu0 0
      %3554 = vmatpush2.bf16.msra.mxu0 0
      %3555 = vmatprep.subr.bf16.mxu0 0
      %3556 = vmatpush2.bf16.msra.mxu0 0
      %3557 = vmatprep.subr.bf16.mxu0 0
      %3558 = vmatpush2.bf16.msra.mxu0 0
      %3559 = vmatprep.subr.bf16.mxu0 0
      %3560 = vmatpush2.bf16.msra.mxu0 0
      %3561 = vmatprep.mubr.bf16.mxu0 0
      %3562 = vmatmul.mubr.bf16.gmra.mxu0 %v3524
      %v3563 = vpop.f32.mrf.mxu0
      %v3564 = vadd.f32 0.0, %v3563
      %v3565 = vpop.f32.mrf.mxu0
      %v3566 = vpop.f32.mrf.mxu0
      %v3567 = vpop.f32.mrf.mxu0
      %3568 = vdwg.mxu0
      %v3569 = vadd.f32 %v3505, %v3564
      %s3570 = scalar_lea.vmem %s9, 464
      %v3571 = vld [vmem:[%s3570] sm:$0xf]
      %v3572 = vld [vmem:[%s3570 + $0x4] sm:$0xf]
      %v3573 = vld [vmem:[%s3570 + $0x8] sm:$0xf]
      %v3574 = vld [vmem:[%s3570 + $0xc] sm:$0x3]
      %v3575 = vrot.slane %v2805, 6
      %v3580 = vunpack.c.l.b16 %v3571
      %v3581 = vunpack.c.l.b16 %v3572
      %v3582 = vunpack.c.l.b16 %v3573
      %v3583 = vunpack.c.l.b16 %v3574
      %v3584 = vpack.c.b16 %v3581, %v3580
      %v3585 = vpack.c.b16 %v3583, %v3582
      %v3588 = vsel %vm509, %v3575, 0
      %v3591 = vsel %vm462, %v3585, 0
      %3593 = vmatprep.subr.bf16.mxu0 0
      %3594 = vmatpush1.bf16.msra.mxu0 0
      %3595 = vmatprep.subr.bf16.mxu0 0
      %3596 = vmatpush1.bf16.msra.mxu0 0
      %3597 = vmatprep.subr.bf16.mxu0 0
      %3598 = vmatpush1.bf16.msra.mxu0 0
      %3599 = vmatprep.subr.bf16.mxu0 0
      %3600 = vmatpush1.bf16.msra.mxu0 0
      %3601 = vmatprep.subr.bf16.mxu0 0
      %3602 = vmatpush1.bf16.msra.mxu0 0
      %3603 = vmatprep.subr.bf16.mxu0 0
      %3604 = vmatpush1.bf16.msra.mxu0 0
      %3605 = vmatprep.subr.bf16.mxu0 0
      %3606 = vmatpush1.bf16.msra.mxu0 %v3591
      %3607 = vmatprep.subr.bf16.mxu0 0
      %3608 = vmatpush1.bf16.msra.mxu0 %v3584
      %3609 = vmatprep.subr.bf16.mxu0 0
      %3610 = vmatpush2.bf16.msra.mxu0 0
      %3611 = vmatprep.subr.bf16.mxu0 0
      %3612 = vmatpush2.bf16.msra.mxu0 0
      %3613 = vmatprep.subr.bf16.mxu0 0
      %3614 = vmatpush2.bf16.msra.mxu0 0
      %3615 = vmatprep.subr.bf16.mxu0 0
      %3616 = vmatpush2.bf16.msra.mxu0 0
      %3617 = vmatprep.subr.bf16.mxu0 0
      %3618 = vmatpush2.bf16.msra.mxu0 0
      %3619 = vmatprep.subr.bf16.mxu0 0
      %3620 = vmatpush2.bf16.msra.mxu0 0
      %3621 = vmatprep.subr.bf16.mxu0 0
      %3622 = vmatpush2.bf16.msra.mxu0 0
      %3623 = vmatprep.subr.bf16.mxu0 0
      %3624 = vmatpush2.bf16.msra.mxu0 0
      %3625 = vmatprep.mubr.bf16.mxu0 0
      %3626 = vmatmul.mubr.bf16.gmra.mxu0 %v3588
      %v3627 = vpop.f32.mrf.mxu0
      %v3628 = vadd.f32 0.0, %v3627
      %v3629 = vpop.f32.mrf.mxu0
      %v3630 = vpop.f32.mrf.mxu0
      %v3631 = vpop.f32.mrf.mxu0
      %3632 = vdwg.mxu0
      %v3633 = vadd.f32 %v3569, %v3628
      %s3634 = scalar_lea.vmem %s9, 480
      %v3635 = vld [vmem:[%s3634] sm:$0xf]
      %v3636 = vld [vmem:[%s3634 + $0x4] sm:$0xf]
      %v3637 = vld [vmem:[%s3634 + $0x8] sm:$0xf]
      %v3638 = vld [vmem:[%s3634 + $0xc] sm:$0x3]
      %v3639 = vrot.slane %v1709, 7
      %v3644 = vunpack.c.l.b16 %v3635
      %v3645 = vunpack.c.l.b16 %v3636
      %v3646 = vunpack.c.l.b16 %v3637
      %v3647 = vunpack.c.l.b16 %v3638
      %v3648 = vpack.c.b16 %v3645, %v3644
      %v3649 = vpack.c.b16 %v3647, %v3646
      %v3652 = vsel %vm509, %v3639, 0
      %v3655 = vsel %vm462, %v3649, 0
      %3657 = vmatprep.subr.bf16.mxu0 0
      %3658 = vmatpush1.bf16.msra.mxu0 0
      %3659 = vmatprep.subr.bf16.mxu0 0
      %3660 = vmatpush1.bf16.msra.mxu0 0
      %3661 = vmatprep.subr.bf16.mxu0 0
      %3662 = vmatpush1.bf16.msra.mxu0 0
      %3663 = vmatprep.subr.bf16.mxu0 0
      %3664 = vmatpush1.bf16.msra.mxu0 0
      %3665 = vmatprep.subr.bf16.mxu0 0
      %3666 = vmatpush1.bf16.msra.mxu0 0
      %3667 = vmatprep.subr.bf16.mxu0 0
      %3668 = vmatpush1.bf16.msra.mxu0 0
      %3669 = vmatprep.subr.bf16.mxu0 0
      %3670 = vmatpush1.bf16.msra.mxu0 %v3655
      %3671 = vmatprep.subr.bf16.mxu0 0
      %3672 = vmatpush1.bf16.msra.mxu0 %v3648
      %3673 = vmatprep.subr.bf16.mxu0 0
      %3674 = vmatpush2.bf16.msra.mxu0 0
      %3675 = vmatprep.subr.bf16.mxu0 0
      %3676 = vmatpush2.bf16.msra.mxu0 0
      %3677 = vmatprep.subr.bf16.mxu0 0
      %3678 = vmatpush2.bf16.msra.mxu0 0
      %3679 = vmatprep.subr.bf16.mxu0 0
      %3680 = vmatpush2.bf16.msra.mxu0 0
      %3681 = vmatprep.subr.bf16.mxu0 0
      %3682 = vmatpush2.bf16.msra.mxu0 0
      %3683 = vmatprep.subr.bf16.mxu0 0
      %3684 = vmatpush2.bf16.msra.mxu0 0
      %3685 = vmatprep.subr.bf16.mxu0 0
      %3686 = vmatpush2.bf16.msra.mxu0 0
      %3687 = vmatprep.subr.bf16.mxu0 0
      %3688 = vmatpush2.bf16.msra.mxu0 0
      %3689 = vmatprep.mubr.bf16.mxu0 0
      %3690 = vmatmul.mubr.bf16.gmra.mxu0 %v3652
      %v3691 = vpop.f32.mrf.mxu0
      %v3692 = vadd.f32 0.0, %v3691
      %v3693 = vpop.f32.mrf.mxu0
      %v3694 = vpop.f32.mrf.mxu0
      %v3695 = vpop.f32.mrf.mxu0
      %3696 = vdwg.mxu0
      %v3697 = vadd.f32 %v3633, %v3692
      %s3698 = scalar_lea.vmem %s9, 496
      %v3699 = vld [vmem:[%s3698] sm:$0xf]
      %v3700 = vld [vmem:[%s3698 + $0x4] sm:$0xf]
      %v3701 = vld [vmem:[%s3698 + $0x8] sm:$0xf]
      %v3702 = vld [vmem:[%s3698 + $0xc] sm:$0x3]
      %v3703 = vrot.slane %v2805, 7
      %v3708 = vunpack.c.l.b16 %v3699
      %v3709 = vunpack.c.l.b16 %v3700
      %v3710 = vunpack.c.l.b16 %v3701
      %v3711 = vunpack.c.l.b16 %v3702
      %v3712 = vpack.c.b16 %v3709, %v3708
      %v3713 = vpack.c.b16 %v3711, %v3710
      %v3716 = vsel %vm509, %v3703, 0
      %v3719 = vsel %vm462, %v3713, 0
      %3721 = vmatprep.subr.bf16.mxu0 0
      %3722 = vmatpush1.bf16.msra.mxu0 0
      %3723 = vmatprep.subr.bf16.mxu0 0
      %3724 = vmatpush1.bf16.msra.mxu0 0
      %3725 = vmatprep.subr.bf16.mxu0 0
      %3726 = vmatpush1.bf16.msra.mxu0 0
      %3727 = vmatprep.subr.bf16.mxu0 0
      %3728 = vmatpush1.bf16.msra.mxu0 0
      %3729 = vmatprep.subr.bf16.mxu0 0
      %3730 = vmatpush1.bf16.msra.mxu0 0
      %3731 = vmatprep.subr.bf16.mxu0 0
      %3732 = vmatpush1.bf16.msra.mxu0 0
      %3733 = vmatprep.subr.bf16.mxu0 0
      %3734 = vmatpush1.bf16.msra.mxu0 %v3719
      %3735 = vmatprep.subr.bf16.mxu0 0
      %3736 = vmatpush1.bf16.msra.mxu0 %v3712
      %3737 = vmatprep.subr.bf16.mxu0 0
      %3738 = vmatpush2.bf16.msra.mxu0 0
      %3739 = vmatprep.subr.bf16.mxu0 0
      %3740 = vmatpush2.bf16.msra.mxu0 0
      %3741 = vmatprep.subr.bf16.mxu0 0
      %3742 = vmatpush2.bf16.msra.mxu0 0
      %3743 = vmatprep.subr.bf16.mxu0 0
      %3744 = vmatpush2.bf16.msra.mxu0 0
      %3745 = vmatprep.subr.bf16.mxu0 0
      %3746 = vmatpush2.bf16.msra.mxu0 0
      %3747 = vmatprep.subr.bf16.mxu0 0
      %3748 = vmatpush2.bf16.msra.mxu0 0
      %3749 = vmatprep.subr.bf16.mxu0 0
      %3750 = vmatpush2.bf16.msra.mxu0 0
      %3751 = vmatprep.subr.bf16.mxu0 0
      %3752 = vmatpush2.bf16.msra.mxu0 0
      %3753 = vmatprep.mubr.bf16.mxu0 0
      %3754 = vmatmul.mubr.bf16.gmra.mxu0 %v3716
      %v3755 = vpop.f32.mrf.mxu0
      %v3756 = vadd.f32 0.0, %v3755
      %v3757 = vpop.f32.mrf.mxu0
      %v3758 = vpop.f32.mrf.mxu0
      %v3759 = vpop.f32.mrf.mxu0
      %3760 = vdwg.mxu0
      %v3761 = vadd.f32 %v3697, %v3756
      %s3762 = scalar_lea.vmem %s9, 512
      %v3763 = vld [vmem:[%s3762] sm:$0xf]
      %v3764 = vld [vmem:[%s3762 + $0x4] sm:$0xf]
      %v3765 = vld [vmem:[%s3762 + $0x8] sm:$0xf]
      %v3766 = vld [vmem:[%s3762 + $0xc] sm:$0x3]
      %v3771 = vunpack.c.l.b16 %v3763
      %v3772 = vunpack.c.l.b16 %v3764
      %v3773 = vunpack.c.l.b16 %v3765
      %v3774 = vunpack.c.l.b16 %v3766
      %v3775 = vpack.c.b16 %v3772, %v3771
      %v3776 = vpack.c.b16 %v3774, %v3773
      %v3779 = vsel %vm509, %v1710, 0
      %v3782 = vsel %vm462, %v3776, 0
      %3784 = vmatprep.subr.bf16.mxu0 0
      %3785 = vmatpush1.bf16.msra.mxu0 0
      %3786 = vmatprep.subr.bf16.mxu0 0
      %3787 = vmatpush1.bf16.msra.mxu0 0
      %3788 = vmatprep.subr.bf16.mxu0 0
      %3789 = vmatpush1.bf16.msra.mxu0 0
      %3790 = vmatprep.subr.bf16.mxu0 0
      %3791 = vmatpush1.bf16.msra.mxu0 0
      %3792 = vmatprep.subr.bf16.mxu0 0
      %3793 = vmatpush1.bf16.msra.mxu0 0
      %3794 = vmatprep.subr.bf16.mxu0 0
      %3795 = vmatpush1.bf16.msra.mxu0 0
      %3796 = vmatprep.subr.bf16.mxu0 0
      %3797 = vmatpush1.bf16.msra.mxu0 %v3782
      %3798 = vmatprep.subr.bf16.mxu0 0
      %3799 = vmatpush1.bf16.msra.mxu0 %v3775
      %3800 = vmatprep.subr.bf16.mxu0 0
      %3801 = vmatpush2.bf16.msra.mxu0 0
      %3802 = vmatprep.subr.bf16.mxu0 0
      %3803 = vmatpush2.bf16.msra.mxu0 0
      %3804 = vmatprep.subr.bf16.mxu0 0
      %3805 = vmatpush2.bf16.msra.mxu0 0
      %3806 = vmatprep.subr.bf16.mxu0 0
      %3807 = vmatpush2.bf16.msra.mxu0 0
      %3808 = vmatprep.subr.bf16.mxu0 0
      %3809 = vmatpush2.bf16.msra.mxu0 0
      %3810 = vmatprep.subr.bf16.mxu0 0
      %3811 = vmatpush2.bf16.msra.mxu0 0
      %3812 = vmatprep.subr.bf16.mxu0 0
      %3813 = vmatpush2.bf16.msra.mxu0 0
      %3814 = vmatprep.subr.bf16.mxu0 0
      %3815 = vmatpush2.bf16.msra.mxu0 0
      %3816 = vmatprep.mubr.bf16.mxu0 0
      %3817 = vmatmul.mubr.bf16.gmra.mxu0 %v3779
      %v3818 = vpop.f32.mrf.mxu0
      %v3819 = vadd.f32 0.0, %v3818
      %v3820 = vpop.f32.mrf.mxu0
      %v3821 = vpop.f32.mrf.mxu0
      %v3822 = vpop.f32.mrf.mxu0
      %3823 = vdwg.mxu0
      %v3824 = vadd.f32 %v3761, %v3819
      %s3825 = scalar_lea.vmem %s9, 528
      %v3826 = vld [vmem:[%s3825] sm:$0xf]
      %v3827 = vld [vmem:[%s3825 + $0x4] sm:$0xf]
      %v3828 = vld [vmem:[%s3825 + $0x8] sm:$0xf]
      %v3829 = vld [vmem:[%s3825 + $0xc] sm:$0x3]
      %v3830 = vshrl.u32 %v1710, 16
      %v3836 = vunpack.c.l.b16 %v3826
      %v3837 = vunpack.c.l.b16 %v3827
      %v3838 = vunpack.c.l.b16 %v3828
      %v3839 = vunpack.c.l.b16 %v3829
      %v3840 = vpack.c.b16 %v3837, %v3836
      %v3841 = vpack.c.b16 %v3839, %v3838
      %v3844 = vsel %vm509, %v3830, 0
      %v3847 = vsel %vm462, %v3841, 0
      %3849 = vmatprep.subr.bf16.mxu0 0
      %3850 = vmatpush1.bf16.msra.mxu0 0
      %3851 = vmatprep.subr.bf16.mxu0 0
      %3852 = vmatpush1.bf16.msra.mxu0 0
      %3853 = vmatprep.subr.bf16.mxu0 0
      %3854 = vmatpush1.bf16.msra.mxu0 0
      %3855 = vmatprep.subr.bf16.mxu0 0
      %3856 = vmatpush1.bf16.msra.mxu0 0
      %3857 = vmatprep.subr.bf16.mxu0 0
      %3858 = vmatpush1.bf16.msra.mxu0 0
      %3859 = vmatprep.subr.bf16.mxu0 0
      %3860 = vmatpush1.bf16.msra.mxu0 0
      %3861 = vmatprep.subr.bf16.mxu0 0
      %3862 = vmatpush1.bf16.msra.mxu0 %v3847
      %3863 = vmatprep.subr.bf16.mxu0 0
      %3864 = vmatpush1.bf16.msra.mxu0 %v3840
      %3865 = vmatprep.subr.bf16.mxu0 0
      %3866 = vmatpush2.bf16.msra.mxu0 0
      %3867 = vmatprep.subr.bf16.mxu0 0
      %3868 = vmatpush2.bf16.msra.mxu0 0
      %3869 = vmatprep.subr.bf16.mxu0 0
      %3870 = vmatpush2.bf16.msra.mxu0 0
      %3871 = vmatprep.subr.bf16.mxu0 0
      %3872 = vmatpush2.bf16.msra.mxu0 0
      %3873 = vmatprep.subr.bf16.mxu0 0
      %3874 = vmatpush2.bf16.msra.mxu0 0
      %3875 = vmatprep.subr.bf16.mxu0 0
      %3876 = vmatpush2.bf16.msra.mxu0 0
      %3877 = vmatprep.subr.bf16.mxu0 0
      %3878 = vmatpush2.bf16.msra.mxu0 0
      %3879 = vmatprep.subr.bf16.mxu0 0
      %3880 = vmatpush2.bf16.msra.mxu0 0
      %3881 = vmatprep.mubr.bf16.mxu0 0
      %3882 = vmatmul.mubr.bf16.gmra.mxu0 %v3844
      %v3883 = vpop.f32.mrf.mxu0
      %v3884 = vadd.f32 0.0, %v3883
      %v3885 = vpop.f32.mrf.mxu0
      %v3886 = vpop.f32.mrf.mxu0
      %v3887 = vpop.f32.mrf.mxu0
      %3888 = vdwg.mxu0
      %v3889 = vadd.f32 %v3824, %v3884
      %s3890 = scalar_lea.vmem %s9, 544
      %v3891 = vld [vmem:[%s3890] sm:$0xf]
      %v3892 = vld [vmem:[%s3890 + $0x4] sm:$0xf]
      %v3893 = vld [vmem:[%s3890 + $0x8] sm:$0xf]
      %v3894 = vld [vmem:[%s3890 + $0xc] sm:$0x3]
      %v3896 = vrot.slane %v1710, 1
      %v3901 = vunpack.c.l.b16 %v3891
      %v3902 = vunpack.c.l.b16 %v3892
      %v3903 = vunpack.c.l.b16 %v3893
      %v3904 = vunpack.c.l.b16 %v3894
      %v3905 = vpack.c.b16 %v3902, %v3901
      %v3906 = vpack.c.b16 %v3904, %v3903
      %v3909 = vsel %vm509, %v3896, 0
      %v3912 = vsel %vm462, %v3906, 0
      %3914 = vmatprep.subr.bf16.mxu0 0
      %3915 = vmatpush1.bf16.msra.mxu0 0
      %3916 = vmatprep.subr.bf16.mxu0 0
      %3917 = vmatpush1.bf16.msra.mxu0 0
      %3918 = vmatprep.subr.bf16.mxu0 0
      %3919 = vmatpush1.bf16.msra.mxu0 0
      %3920 = vmatprep.subr.bf16.mxu0 0
      %3921 = vmatpush1.bf16.msra.mxu0 0
      %3922 = vmatprep.subr.bf16.mxu0 0
      %3923 = vmatpush1.bf16.msra.mxu0 0
      %3924 = vmatprep.subr.bf16.mxu0 0
      %3925 = vmatpush1.bf16.msra.mxu0 0
      %3926 = vmatprep.subr.bf16.mxu0 0
      %3927 = vmatpush1.bf16.msra.mxu0 %v3912
      %3928 = vmatprep.subr.bf16.mxu0 0
      %3929 = vmatpush1.bf16.msra.mxu0 %v3905
      %3930 = vmatprep.subr.bf16.mxu0 0
      %3931 = vmatpush2.bf16.msra.mxu0 0
      %3932 = vmatprep.subr.bf16.mxu0 0
      %3933 = vmatpush2.bf16.msra.mxu0 0
      %3934 = vmatprep.subr.bf16.mxu0 0
      %3935 = vmatpush2.bf16.msra.mxu0 0
      %3936 = vmatprep.subr.bf16.mxu0 0
      %3937 = vmatpush2.bf16.msra.mxu0 0
      %3938 = vmatprep.subr.bf16.mxu0 0
      %3939 = vmatpush2.bf16.msra.mxu0 0
      %3940 = vmatprep.subr.bf16.mxu0 0
      %3941 = vmatpush2.bf16.msra.mxu0 0
      %3942 = vmatprep.subr.bf16.mxu0 0
      %3943 = vmatpush2.bf16.msra.mxu0 0
      %3944 = vmatprep.subr.bf16.mxu0 0
      %3945 = vmatpush2.bf16.msra.mxu0 0
      %3946 = vmatprep.mubr.bf16.mxu0 0
      %3947 = vmatmul.mubr.bf16.gmra.mxu0 %v3909
      %v3948 = vpop.f32.mrf.mxu0
      %v3949 = vadd.f32 0.0, %v3948
      %v3950 = vpop.f32.mrf.mxu0
      %v3951 = vpop.f32.mrf.mxu0
      %v3952 = vpop.f32.mrf.mxu0
      %3953 = vdwg.mxu0
      %v3954 = vadd.f32 %v3889, %v3949
      %s3955 = scalar_lea.vmem %s9, 560
      %v3956 = vld [vmem:[%s3955] sm:$0xf]
      %v3957 = vld [vmem:[%s3955 + $0x4] sm:$0xf]
      %v3958 = vld [vmem:[%s3955 + $0x8] sm:$0xf]
      %v3959 = vld [vmem:[%s3955 + $0xc] sm:$0x3]
      %v3960 = vrot.slane %v3830, 1
      %v3965 = vunpack.c.l.b16 %v3956
      %v3966 = vunpack.c.l.b16 %v3957
      %v3967 = vunpack.c.l.b16 %v3958
      %v3968 = vunpack.c.l.b16 %v3959
      %v3969 = vpack.c.b16 %v3966, %v3965
      %v3970 = vpack.c.b16 %v3968, %v3967
      %v3973 = vsel %vm509, %v3960, 0
      %v3976 = vsel %vm462, %v3970, 0
      %3978 = vmatprep.subr.bf16.mxu0 0
      %3979 = vmatpush1.bf16.msra.mxu0 0
      %3980 = vmatprep.subr.bf16.mxu0 0
      %3981 = vmatpush1.bf16.msra.mxu0 0
      %3982 = vmatprep.subr.bf16.mxu0 0
      %3983 = vmatpush1.bf16.msra.mxu0 0
      %3984 = vmatprep.subr.bf16.mxu0 0
      %3985 = vmatpush1.bf16.msra.mxu0 0
      %3986 = vmatprep.subr.bf16.mxu0 0
      %3987 = vmatpush1.bf16.msra.mxu0 0
      %3988 = vmatprep.subr.bf16.mxu0 0
      %3989 = vmatpush1.bf16.msra.mxu0 0
      %3990 = vmatprep.subr.bf16.mxu0 0
      %3991 = vmatpush1.bf16.msra.mxu0 %v3976
      %3992 = vmatprep.subr.bf16.mxu0 0
      %3993 = vmatpush1.bf16.msra.mxu0 %v3969
      %3994 = vmatprep.subr.bf16.mxu0 0
      %3995 = vmatpush2.bf16.msra.mxu0 0
      %3996 = vmatprep.subr.bf16.mxu0 0
      %3997 = vmatpush2.bf16.msra.mxu0 0
      %3998 = vmatprep.subr.bf16.mxu0 0
      %3999 = vmatpush2.bf16.msra.mxu0 0
      %4000 = vmatprep.subr.bf16.mxu0 0
      %4001 = vmatpush2.bf16.msra.mxu0 0
      %4002 = vmatprep.subr.bf16.mxu0 0
      %4003 = vmatpush2.bf16.msra.mxu0 0
      %4004 = vmatprep.subr.bf16.mxu0 0
      %4005 = vmatpush2.bf16.msra.mxu0 0
      %4006 = vmatprep.subr.bf16.mxu0 0
      %4007 = vmatpush2.bf16.msra.mxu0 0
      %4008 = vmatprep.subr.bf16.mxu0 0
      %4009 = vmatpush2.bf16.msra.mxu0 0
      %4010 = vmatprep.mubr.bf16.mxu0 0
      %4011 = vmatmul.mubr.bf16.gmra.mxu0 %v3973
      %v4012 = vpop.f32.mrf.mxu0
      %v4013 = vadd.f32 0.0, %v4012
      %v4014 = vpop.f32.mrf.mxu0
      %v4015 = vpop.f32.mrf.mxu0
      %v4016 = vpop.f32.mrf.mxu0
      %4017 = vdwg.mxu0
      %v4018 = vadd.f32 %v3954, %v4013
      %s4019 = scalar_lea.vmem %s9, 576
      %v4020 = vld [vmem:[%s4019] sm:$0xf]
      %v4021 = vld [vmem:[%s4019 + $0x4] sm:$0xf]
      %v4022 = vld [vmem:[%s4019 + $0x8] sm:$0xf]
      %v4023 = vld [vmem:[%s4019 + $0xc] sm:$0x3]
      %v4024 = vrot.slane %v1710, 2
      %v4029 = vunpack.c.l.b16 %v4020
      %v4030 = vunpack.c.l.b16 %v4021
      %v4031 = vunpack.c.l.b16 %v4022
      %v4032 = vunpack.c.l.b16 %v4023
      %v4033 = vpack.c.b16 %v4030, %v4029
      %v4034 = vpack.c.b16 %v4032, %v4031
      %v4037 = vsel %vm509, %v4024, 0
      %v4040 = vsel %vm462, %v4034, 0
      %4042 = vmatprep.subr.bf16.mxu0 0
      %4043 = vmatpush1.bf16.msra.mxu0 0
      %4044 = vmatprep.subr.bf16.mxu0 0
      %4045 = vmatpush1.bf16.msra.mxu0 0
      %4046 = vmatprep.subr.bf16.mxu0 0
      %4047 = vmatpush1.bf16.msra.mxu0 0
      %4048 = vmatprep.subr.bf16.mxu0 0
      %4049 = vmatpush1.bf16.msra.mxu0 0
      %4050 = vmatprep.subr.bf16.mxu0 0
      %4051 = vmatpush1.bf16.msra.mxu0 0
      %4052 = vmatprep.subr.bf16.mxu0 0
      %4053 = vmatpush1.bf16.msra.mxu0 0
      %4054 = vmatprep.subr.bf16.mxu0 0
      %4055 = vmatpush1.bf16.msra.mxu0 %v4040
      %4056 = vmatprep.subr.bf16.mxu0 0
      %4057 = vmatpush1.bf16.msra.mxu0 %v4033
      %4058 = vmatprep.subr.bf16.mxu0 0
      %4059 = vmatpush2.bf16.msra.mxu0 0
      %4060 = vmatprep.subr.bf16.mxu0 0
      %4061 = vmatpush2.bf16.msra.mxu0 0
      %4062 = vmatprep.subr.bf16.mxu0 0
      %4063 = vmatpush2.bf16.msra.mxu0 0
      %4064 = vmatprep.subr.bf16.mxu0 0
      %4065 = vmatpush2.bf16.msra.mxu0 0
      %4066 = vmatprep.subr.bf16.mxu0 0
      %4067 = vmatpush2.bf16.msra.mxu0 0
      %4068 = vmatprep.subr.bf16.mxu0 0
      %4069 = vmatpush2.bf16.msra.mxu0 0
      %4070 = vmatprep.subr.bf16.mxu0 0
      %4071 = vmatpush2.bf16.msra.mxu0 0
      %4072 = vmatprep.subr.bf16.mxu0 0
      %4073 = vmatpush2.bf16.msra.mxu0 0
      %4074 = vmatprep.mubr.bf16.mxu0 0
      %4075 = vmatmul.mubr.bf16.gmra.mxu0 %v4037
      %v4076 = vpop.f32.mrf.mxu0
      %v4077 = vadd.f32 0.0, %v4076
      %v4078 = vpop.f32.mrf.mxu0
      %v4079 = vpop.f32.mrf.mxu0
      %v4080 = vpop.f32.mrf.mxu0
      %4081 = vdwg.mxu0
      %v4082 = vadd.f32 %v4018, %v4077
      %s4083 = scalar_lea.vmem %s9, 592
      %v4084 = vld [vmem:[%s4083] sm:$0xf]
      %v4085 = vld [vmem:[%s4083 + $0x4] sm:$0xf]
      %v4086 = vld [vmem:[%s4083 + $0x8] sm:$0xf]
      %v4087 = vld [vmem:[%s4083 + $0xc] sm:$0x3]
      %v4088 = vrot.slane %v3830, 2
      %v4093 = vunpack.c.l.b16 %v4084
      %v4094 = vunpack.c.l.b16 %v4085
      %v4095 = vunpack.c.l.b16 %v4086
      %v4096 = vunpack.c.l.b16 %v4087
      %v4097 = vpack.c.b16 %v4094, %v4093
      %v4098 = vpack.c.b16 %v4096, %v4095
      %v4101 = vsel %vm509, %v4088, 0
      %v4104 = vsel %vm462, %v4098, 0
      %4106 = vmatprep.subr.bf16.mxu0 0
      %4107 = vmatpush1.bf16.msra.mxu0 0
      %4108 = vmatprep.subr.bf16.mxu0 0
      %4109 = vmatpush1.bf16.msra.mxu0 0
      %4110 = vmatprep.subr.bf16.mxu0 0
      %4111 = vmatpush1.bf16.msra.mxu0 0
      %4112 = vmatprep.subr.bf16.mxu0 0
      %4113 = vmatpush1.bf16.msra.mxu0 0
      %4114 = vmatprep.subr.bf16.mxu0 0
      %4115 = vmatpush1.bf16.msra.mxu0 0
      %4116 = vmatprep.subr.bf16.mxu0 0
      %4117 = vmatpush1.bf16.msra.mxu0 0
      %4118 = vmatprep.subr.bf16.mxu0 0
      %4119 = vmatpush1.bf16.msra.mxu0 %v4104
      %4120 = vmatprep.subr.bf16.mxu0 0
      %4121 = vmatpush1.bf16.msra.mxu0 %v4097
      %4122 = vmatprep.subr.bf16.mxu0 0
      %4123 = vmatpush2.bf16.msra.mxu0 0
      %4124 = vmatprep.subr.bf16.mxu0 0
      %4125 = vmatpush2.bf16.msra.mxu0 0
      %4126 = vmatprep.subr.bf16.mxu0 0
      %4127 = vmatpush2.bf16.msra.mxu0 0
      %4128 = vmatprep.subr.bf16.mxu0 0
      %4129 = vmatpush2.bf16.msra.mxu0 0
      %4130 = vmatprep.subr.bf16.mxu0 0
      %4131 = vmatpush2.bf16.msra.mxu0 0
      %4132 = vmatprep.subr.bf16.mxu0 0
      %4133 = vmatpush2.bf16.msra.mxu0 0
      %4134 = vmatprep.subr.bf16.mxu0 0
      %4135 = vmatpush2.bf16.msra.mxu0 0
      %4136 = vmatprep.subr.bf16.mxu0 0
      %4137 = vmatpush2.bf16.msra.mxu0 0
      %4138 = vmatprep.mubr.bf16.mxu0 0
      %4139 = vmatmul.mubr.bf16.gmra.mxu0 %v4101
      %v4140 = vpop.f32.mrf.mxu0
      %v4141 = vadd.f32 0.0, %v4140
      %v4142 = vpop.f32.mrf.mxu0
      %v4143 = vpop.f32.mrf.mxu0
      %v4144 = vpop.f32.mrf.mxu0
      %4145 = vdwg.mxu0
      %v4146 = vadd.f32 %v4082, %v4141
      %s4147 = scalar_lea.vmem %s9, 608
      %v4148 = vld [vmem:[%s4147] sm:$0xf]
      %v4149 = vld [vmem:[%s4147 + $0x4] sm:$0xf]
      %v4150 = vld [vmem:[%s4147 + $0x8] sm:$0xf]
      %v4151 = vld [vmem:[%s4147 + $0xc] sm:$0x3]
      %v4152 = vrot.slane %v1710, 3
      %v4157 = vunpack.c.l.b16 %v4148
      %v4158 = vunpack.c.l.b16 %v4149
      %v4159 = vunpack.c.l.b16 %v4150
      %v4160 = vunpack.c.l.b16 %v4151
      %v4161 = vpack.c.b16 %v4158, %v4157
      %v4162 = vpack.c.b16 %v4160, %v4159
      %v4165 = vsel %vm509, %v4152, 0
      %v4168 = vsel %vm462, %v4162, 0
      %4170 = vmatprep.subr.bf16.mxu0 0
      %4171 = vmatpush1.bf16.msra.mxu0 0
      %4172 = vmatprep.subr.bf16.mxu0 0
      %4173 = vmatpush1.bf16.msra.mxu0 0
      %4174 = vmatprep.subr.bf16.mxu0 0
      %4175 = vmatpush1.bf16.msra.mxu0 0
      %4176 = vmatprep.subr.bf16.mxu0 0
      %4177 = vmatpush1.bf16.msra.mxu0 0
      %4178 = vmatprep.subr.bf16.mxu0 0
      %4179 = vmatpush1.bf16.msra.mxu0 0
      %4180 = vmatprep.subr.bf16.mxu0 0
      %4181 = vmatpush1.bf16.msra.mxu0 0
      %4182 = vmatprep.subr.bf16.mxu0 0
      %4183 = vmatpush1.bf16.msra.mxu0 %v4168
      %4184 = vmatprep.subr.bf16.mxu0 0
      %4185 = vmatpush1.bf16.msra.mxu0 %v4161
      %4186 = vmatprep.subr.bf16.mxu0 0
      %4187 = vmatpush2.bf16.msra.mxu0 0
      %4188 = vmatprep.subr.bf16.mxu0 0
      %4189 = vmatpush2.bf16.msra.mxu0 0
      %4190 = vmatprep.subr.bf16.mxu0 0
      %4191 = vmatpush2.bf16.msra.mxu0 0
      %4192 = vmatprep.subr.bf16.mxu0 0
      %4193 = vmatpush2.bf16.msra.mxu0 0
      %4194 = vmatprep.subr.bf16.mxu0 0
      %4195 = vmatpush2.bf16.msra.mxu0 0
      %4196 = vmatprep.subr.bf16.mxu0 0
      %4197 = vmatpush2.bf16.msra.mxu0 0
      %4198 = vmatprep.subr.bf16.mxu0 0
      %4199 = vmatpush2.bf16.msra.mxu0 0
      %4200 = vmatprep.subr.bf16.mxu0 0
      %4201 = vmatpush2.bf16.msra.mxu0 0
      %4202 = vmatprep.mubr.bf16.mxu0 0
      %4203 = vmatmul.mubr.bf16.gmra.mxu0 %v4165
      %v4204 = vpop.f32.mrf.mxu0
      %v4205 = vadd.f32 0.0, %v4204
      %v4206 = vpop.f32.mrf.mxu0
      %v4207 = vpop.f32.mrf.mxu0
      %v4208 = vpop.f32.mrf.mxu0
      %4209 = vdwg.mxu0
      %v4210 = vadd.f32 %v4146, %v4205
      %s4211 = scalar_lea.vmem %s9, 624
      %v4212 = vld [vmem:[%s4211] sm:$0xf]
      %v4213 = vld [vmem:[%s4211 + $0x4] sm:$0xf]
      %v4214 = vld [vmem:[%s4211 + $0x8] sm:$0xf]
      %v4215 = vld [vmem:[%s4211 + $0xc] sm:$0x3]
      %v4216 = vrot.slane %v3830, 3
      %v4221 = vunpack.c.l.b16 %v4212
      %v4222 = vunpack.c.l.b16 %v4213
      %v4223 = vunpack.c.l.b16 %v4214
      %v4224 = vunpack.c.l.b16 %v4215
      %v4225 = vpack.c.b16 %v4222, %v4221
      %v4226 = vpack.c.b16 %v4224, %v4223
      %v4229 = vsel %vm509, %v4216, 0
      %v4232 = vsel %vm462, %v4226, 0
      %4234 = vmatprep.subr.bf16.mxu0 0
      %4235 = vmatpush1.bf16.msra.mxu0 0
      %4236 = vmatprep.subr.bf16.mxu0 0
      %4237 = vmatpush1.bf16.msra.mxu0 0
      %4238 = vmatprep.subr.bf16.mxu0 0
      %4239 = vmatpush1.bf16.msra.mxu0 0
      %4240 = vmatprep.subr.bf16.mxu0 0
      %4241 = vmatpush1.bf16.msra.mxu0 0
      %4242 = vmatprep.subr.bf16.mxu0 0
      %4243 = vmatpush1.bf16.msra.mxu0 0
      %4244 = vmatprep.subr.bf16.mxu0 0
      %4245 = vmatpush1.bf16.msra.mxu0 0
      %4246 = vmatprep.subr.bf16.mxu0 0
      %4247 = vmatpush1.bf16.msra.mxu0 %v4232
      %4248 = vmatprep.subr.bf16.mxu0 0
      %4249 = vmatpush1.bf16.msra.mxu0 %v4225
      %4250 = vmatprep.subr.bf16.mxu0 0
      %4251 = vmatpush2.bf16.msra.mxu0 0
      %4252 = vmatprep.subr.bf16.mxu0 0
      %4253 = vmatpush2.bf16.msra.mxu0 0
      %4254 = vmatprep.subr.bf16.mxu0 0
      %4255 = vmatpush2.bf16.msra.mxu0 0
      %4256 = vmatprep.subr.bf16.mxu0 0
      %4257 = vmatpush2.bf16.msra.mxu0 0
      %4258 = vmatprep.subr.bf16.mxu0 0
      %4259 = vmatpush2.bf16.msra.mxu0 0
      %4260 = vmatprep.subr.bf16.mxu0 0
      %4261 = vmatpush2.bf16.msra.mxu0 0
      %4262 = vmatprep.subr.bf16.mxu0 0
      %4263 = vmatpush2.bf16.msra.mxu0 0
      %4264 = vmatprep.subr.bf16.mxu0 0
      %4265 = vmatpush2.bf16.msra.mxu0 0
      %4266 = vmatprep.mubr.bf16.mxu0 0
      %4267 = vmatmul.mubr.bf16.gmra.mxu0 %v4229
      %v4268 = vpop.f32.mrf.mxu0
      %v4269 = vadd.f32 0.0, %v4268
      %v4270 = vpop.f32.mrf.mxu0
      %v4271 = vpop.f32.mrf.mxu0
      %v4272 = vpop.f32.mrf.mxu0
      %4273 = vdwg.mxu0
      %v4274 = vadd.f32 %v4210, %v4269
      %s4275 = scalar_lea.vmem %s9, 640
      %v4276 = vld [vmem:[%s4275] sm:$0xf]
      %v4277 = vld [vmem:[%s4275 + $0x4] sm:$0xf]
      %v4278 = vld [vmem:[%s4275 + $0x8] sm:$0xf]
      %v4279 = vld [vmem:[%s4275 + $0xc] sm:$0x3]
      %v4280 = vrot.slane %v1710, 4
      %v4285 = vunpack.c.l.b16 %v4276
      %v4286 = vunpack.c.l.b16 %v4277
      %v4287 = vunpack.c.l.b16 %v4278
      %v4288 = vunpack.c.l.b16 %v4279
      %v4289 = vpack.c.b16 %v4286, %v4285
      %v4290 = vpack.c.b16 %v4288, %v4287
      %v4293 = vsel %vm509, %v4280, 0
      %v4296 = vsel %vm462, %v4290, 0
      %4298 = vmatprep.subr.bf16.mxu0 0
      %4299 = vmatpush1.bf16.msra.mxu0 0
      %4300 = vmatprep.subr.bf16.mxu0 0
      %4301 = vmatpush1.bf16.msra.mxu0 0
      %4302 = vmatprep.subr.bf16.mxu0 0
      %4303 = vmatpush1.bf16.msra.mxu0 0
      %4304 = vmatprep.subr.bf16.mxu0 0
      %4305 = vmatpush1.bf16.msra.mxu0 0
      %4306 = vmatprep.subr.bf16.mxu0 0
      %4307 = vmatpush1.bf16.msra.mxu0 0
      %4308 = vmatprep.subr.bf16.mxu0 0
      %4309 = vmatpush1.bf16.msra.mxu0 0
      %4310 = vmatprep.subr.bf16.mxu0 0
      %4311 = vmatpush1.bf16.msra.mxu0 %v4296
      %4312 = vmatprep.subr.bf16.mxu0 0
      %4313 = vmatpush1.bf16.msra.mxu0 %v4289
      %4314 = vmatprep.subr.bf16.mxu0 0
      %4315 = vmatpush2.bf16.msra.mxu0 0
      %4316 = vmatprep.subr.bf16.mxu0 0
      %4317 = vmatpush2.bf16.msra.mxu0 0
      %4318 = vmatprep.subr.bf16.mxu0 0
      %4319 = vmatpush2.bf16.msra.mxu0 0
      %4320 = vmatprep.subr.bf16.mxu0 0
      %4321 = vmatpush2.bf16.msra.mxu0 0
      %4322 = vmatprep.subr.bf16.mxu0 0
      %4323 = vmatpush2.bf16.msra.mxu0 0
      %4324 = vmatprep.subr.bf16.mxu0 0
      %4325 = vmatpush2.bf16.msra.mxu0 0
      %4326 = vmatprep.subr.bf16.mxu0 0
      %4327 = vmatpush2.bf16.msra.mxu0 0
      %4328 = vmatprep.subr.bf16.mxu0 0
      %4329 = vmatpush2.bf16.msra.mxu0 0
      %4330 = vmatprep.mubr.bf16.mxu0 0
      %4331 = vmatmul.mubr.bf16.gmra.mxu0 %v4293
      %v4332 = vpop.f32.mrf.mxu0
      %v4333 = vadd.f32 0.0, %v4332
      %v4334 = vpop.f32.mrf.mxu0
      %v4335 = vpop.f32.mrf.mxu0
      %v4336 = vpop.f32.mrf.mxu0
      %4337 = vdwg.mxu0
      %v4338 = vadd.f32 %v4274, %v4333
      %s4339 = scalar_lea.vmem %s9, 656
      %v4340 = vld [vmem:[%s4339] sm:$0xf]
      %v4341 = vld [vmem:[%s4339 + $0x4] sm:$0xf]
      %v4342 = vld [vmem:[%s4339 + $0x8] sm:$0xf]
      %v4343 = vld [vmem:[%s4339 + $0xc] sm:$0x3]
      %v4344 = vrot.slane %v3830, 4
      %v4349 = vunpack.c.l.b16 %v4340
      %v4350 = vunpack.c.l.b16 %v4341
      %v4351 = vunpack.c.l.b16 %v4342
      %v4352 = vunpack.c.l.b16 %v4343
      %v4353 = vpack.c.b16 %v4350, %v4349
      %v4354 = vpack.c.b16 %v4352, %v4351
      %v4357 = vsel %vm509, %v4344, 0
      %v4360 = vsel %vm462, %v4354, 0
      %4362 = vmatprep.subr.bf16.mxu0 0
      %4363 = vmatpush1.bf16.msra.mxu0 0
      %4364 = vmatprep.subr.bf16.mxu0 0
      %4365 = vmatpush1.bf16.msra.mxu0 0
      %4366 = vmatprep.subr.bf16.mxu0 0
      %4367 = vmatpush1.bf16.msra.mxu0 0
      %4368 = vmatprep.subr.bf16.mxu0 0
      %4369 = vmatpush1.bf16.msra.mxu0 0
      %4370 = vmatprep.subr.bf16.mxu0 0
      %4371 = vmatpush1.bf16.msra.mxu0 0
      %4372 = vmatprep.subr.bf16.mxu0 0
      %4373 = vmatpush1.bf16.msra.mxu0 0
      %4374 = vmatprep.subr.bf16.mxu0 0
      %4375 = vmatpush1.bf16.msra.mxu0 %v4360
      %4376 = vmatprep.subr.bf16.mxu0 0
      %4377 = vmatpush1.bf16.msra.mxu0 %v4353
      %4378 = vmatprep.subr.bf16.mxu0 0
      %4379 = vmatpush2.bf16.msra.mxu0 0
      %4380 = vmatprep.subr.bf16.mxu0 0
      %4381 = vmatpush2.bf16.msra.mxu0 0
      %4382 = vmatprep.subr.bf16.mxu0 0
      %4383 = vmatpush2.bf16.msra.mxu0 0
      %4384 = vmatprep.subr.bf16.mxu0 0
      %4385 = vmatpush2.bf16.msra.mxu0 0
      %4386 = vmatprep.subr.bf16.mxu0 0
      %4387 = vmatpush2.bf16.msra.mxu0 0
      %4388 = vmatprep.subr.bf16.mxu0 0
      %4389 = vmatpush2.bf16.msra.mxu0 0
      %4390 = vmatprep.subr.bf16.mxu0 0
      %4391 = vmatpush2.bf16.msra.mxu0 0
      %4392 = vmatprep.subr.bf16.mxu0 0
      %4393 = vmatpush2.bf16.msra.mxu0 0
      %4394 = vmatprep.mubr.bf16.mxu0 0
      %4395 = vmatmul.mubr.bf16.gmra.mxu0 %v4357
      %v4396 = vpop.f32.mrf.mxu0
      %v4397 = vadd.f32 0.0, %v4396
      %v4398 = vpop.f32.mrf.mxu0
      %v4399 = vpop.f32.mrf.mxu0
      %v4400 = vpop.f32.mrf.mxu0
      %4401 = vdwg.mxu0
      %v4402 = vadd.f32 %v4338, %v4397
      %s4403 = scalar_lea.vmem %s9, 672
      %v4404 = vld [vmem:[%s4403] sm:$0xf]
      %v4405 = vld [vmem:[%s4403 + $0x4] sm:$0xf]
      %v4406 = vld [vmem:[%s4403 + $0x8] sm:$0xf]
      %v4407 = vld [vmem:[%s4403 + $0xc] sm:$0x3]
      %v4408 = vrot.slane %v1710, 5
      %v4413 = vunpack.c.l.b16 %v4404
      %v4414 = vunpack.c.l.b16 %v4405
      %v4415 = vunpack.c.l.b16 %v4406
      %v4416 = vunpack.c.l.b16 %v4407
      %v4417 = vpack.c.b16 %v4414, %v4413
      %v4418 = vpack.c.b16 %v4416, %v4415
      %v4421 = vsel %vm509, %v4408, 0
      %v4424 = vsel %vm462, %v4418, 0
      %4426 = vmatprep.subr.bf16.mxu0 0
      %4427 = vmatpush1.bf16.msra.mxu0 0
      %4428 = vmatprep.subr.bf16.mxu0 0
      %4429 = vmatpush1.bf16.msra.mxu0 0
      %4430 = vmatprep.subr.bf16.mxu0 0
      %4431 = vmatpush1.bf16.msra.mxu0 0
      %4432 = vmatprep.subr.bf16.mxu0 0
      %4433 = vmatpush1.bf16.msra.mxu0 0
      %4434 = vmatprep.subr.bf16.mxu0 0
      %4435 = vmatpush1.bf16.msra.mxu0 0
      %4436 = vmatprep.subr.bf16.mxu0 0
      %4437 = vmatpush1.bf16.msra.mxu0 0
      %4438 = vmatprep.subr.bf16.mxu0 0
      %4439 = vmatpush1.bf16.msra.mxu0 %v4424
      %4440 = vmatprep.subr.bf16.mxu0 0
      %4441 = vmatpush1.bf16.msra.mxu0 %v4417
      %4442 = vmatprep.subr.bf16.mxu0 0
      %4443 = vmatpush2.bf16.msra.mxu0 0
      %4444 = vmatprep.subr.bf16.mxu0 0
      %4445 = vmatpush2.bf16.msra.mxu0 0
      %4446 = vmatprep.subr.bf16.mxu0 0
      %4447 = vmatpush2.bf16.msra.mxu0 0
      %4448 = vmatprep.subr.bf16.mxu0 0
      %4449 = vmatpush2.bf16.msra.mxu0 0
      %4450 = vmatprep.subr.bf16.mxu0 0
      %4451 = vmatpush2.bf16.msra.mxu0 0
      %4452 = vmatprep.subr.bf16.mxu0 0
      %4453 = vmatpush2.bf16.msra.mxu0 0
      %4454 = vmatprep.subr.bf16.mxu0 0
      %4455 = vmatpush2.bf16.msra.mxu0 0
      %4456 = vmatprep.subr.bf16.mxu0 0
      %4457 = vmatpush2.bf16.msra.mxu0 0
      %4458 = vmatprep.mubr.bf16.mxu0 0
      %4459 = vmatmul.mubr.bf16.gmra.mxu0 %v4421
      %v4460 = vpop.f32.mrf.mxu0
      %v4461 = vadd.f32 0.0, %v4460
      %v4462 = vpop.f32.mrf.mxu0
      %v4463 = vpop.f32.mrf.mxu0
      %v4464 = vpop.f32.mrf.mxu0
      %4465 = vdwg.mxu0
      %v4466 = vadd.f32 %v4402, %v4461
      %s4467 = scalar_lea.vmem %s9, 688
      %v4468 = vld [vmem:[%s4467] sm:$0xf]
      %v4469 = vld [vmem:[%s4467 + $0x4] sm:$0xf]
      %v4470 = vld [vmem:[%s4467 + $0x8] sm:$0xf]
      %v4471 = vld [vmem:[%s4467 + $0xc] sm:$0x3]
      %v4472 = vrot.slane %v3830, 5
      %v4477 = vunpack.c.l.b16 %v4468
      %v4478 = vunpack.c.l.b16 %v4469
      %v4479 = vunpack.c.l.b16 %v4470
      %v4480 = vunpack.c.l.b16 %v4471
      %v4481 = vpack.c.b16 %v4478, %v4477
      %v4482 = vpack.c.b16 %v4480, %v4479
      %v4485 = vsel %vm509, %v4472, 0
      %v4488 = vsel %vm462, %v4482, 0
      %4490 = vmatprep.subr.bf16.mxu0 0
      %4491 = vmatpush1.bf16.msra.mxu0 0
      %4492 = vmatprep.subr.bf16.mxu0 0
      %4493 = vmatpush1.bf16.msra.mxu0 0
      %4494 = vmatprep.subr.bf16.mxu0 0
      %4495 = vmatpush1.bf16.msra.mxu0 0
      %4496 = vmatprep.subr.bf16.mxu0 0
      %4497 = vmatpush1.bf16.msra.mxu0 0
      %4498 = vmatprep.subr.bf16.mxu0 0
      %4499 = vmatpush1.bf16.msra.mxu0 0
      %4500 = vmatprep.subr.bf16.mxu0 0
      %4501 = vmatpush1.bf16.msra.mxu0 0
      %4502 = vmatprep.subr.bf16.mxu0 0
      %4503 = vmatpush1.bf16.msra.mxu0 %v4488
      %4504 = vmatprep.subr.bf16.mxu0 0
      %4505 = vmatpush1.bf16.msra.mxu0 %v4481
      %4506 = vmatprep.subr.bf16.mxu0 0
      %4507 = vmatpush2.bf16.msra.mxu0 0
      %4508 = vmatprep.subr.bf16.mxu0 0
      %4509 = vmatpush2.bf16.msra.mxu0 0
      %4510 = vmatprep.subr.bf16.mxu0 0
      %4511 = vmatpush2.bf16.msra.mxu0 0
      %4512 = vmatprep.subr.bf16.mxu0 0
      %4513 = vmatpush2.bf16.msra.mxu0 0
      %4514 = vmatprep.subr.bf16.mxu0 0
      %4515 = vmatpush2.bf16.msra.mxu0 0
      %4516 = vmatprep.subr.bf16.mxu0 0
      %4517 = vmatpush2.bf16.msra.mxu0 0
      %4518 = vmatprep.subr.bf16.mxu0 0
      %4519 = vmatpush2.bf16.msra.mxu0 0
      %4520 = vmatprep.subr.bf16.mxu0 0
      %4521 = vmatpush2.bf16.msra.mxu0 0
      %4522 = vmatprep.mubr.bf16.mxu0 0
      %4523 = vmatmul.mubr.bf16.gmra.mxu0 %v4485
      %v4524 = vpop.f32.mrf.mxu0
      %v4525 = vadd.f32 0.0, %v4524
      %v4526 = vpop.f32.mrf.mxu0
      %v4527 = vpop.f32.mrf.mxu0
      %v4528 = vpop.f32.mrf.mxu0
      %4529 = vdwg.mxu0
      %v4530 = vadd.f32 %v4466, %v4525
      %s4531 = scalar_lea.vmem %s9, 704
      %v4532 = vld [vmem:[%s4531] sm:$0xf]
      %v4533 = vld [vmem:[%s4531 + $0x4] sm:$0xf]
      %v4534 = vld [vmem:[%s4531 + $0x8] sm:$0xf]
      %v4535 = vld [vmem:[%s4531 + $0xc] sm:$0x3]
      %v4536 = vrot.slane %v1710, 6
      %v4541 = vunpack.c.l.b16 %v4532
      %v4542 = vunpack.c.l.b16 %v4533
      %v4543 = vunpack.c.l.b16 %v4534
      %v4544 = vunpack.c.l.b16 %v4535
      %v4545 = vpack.c.b16 %v4542, %v4541
      %v4546 = vpack.c.b16 %v4544, %v4543
      %v4549 = vsel %vm509, %v4536, 0
      %v4552 = vsel %vm462, %v4546, 0
      %4554 = vmatprep.subr.bf16.mxu0 0
      %4555 = vmatpush1.bf16.msra.mxu0 0
      %4556 = vmatprep.subr.bf16.mxu0 0
      %4557 = vmatpush1.bf16.msra.mxu0 0
      %4558 = vmatprep.subr.bf16.mxu0 0
      %4559 = vmatpush1.bf16.msra.mxu0 0
      %4560 = vmatprep.subr.bf16.mxu0 0
      %4561 = vmatpush1.bf16.msra.mxu0 0
      %4562 = vmatprep.subr.bf16.mxu0 0
      %4563 = vmatpush1.bf16.msra.mxu0 0
      %4564 = vmatprep.subr.bf16.mxu0 0
      %4565 = vmatpush1.bf16.msra.mxu0 0
      %4566 = vmatprep.subr.bf16.mxu0 0
      %4567 = vmatpush1.bf16.msra.mxu0 %v4552
      %4568 = vmatprep.subr.bf16.mxu0 0
      %4569 = vmatpush1.bf16.msra.mxu0 %v4545
      %4570 = vmatprep.subr.bf16.mxu0 0
      %4571 = vmatpush2.bf16.msra.mxu0 0
      %4572 = vmatprep.subr.bf16.mxu0 0
      %4573 = vmatpush2.bf16.msra.mxu0 0
      %4574 = vmatprep.subr.bf16.mxu0 0
      %4575 = vmatpush2.bf16.msra.mxu0 0
      %4576 = vmatprep.subr.bf16.mxu0 0
      %4577 = vmatpush2.bf16.msra.mxu0 0
      %4578 = vmatprep.subr.bf16.mxu0 0
      %4579 = vmatpush2.bf16.msra.mxu0 0
      %4580 = vmatprep.subr.bf16.mxu0 0
      %4581 = vmatpush2.bf16.msra.mxu0 0
      %4582 = vmatprep.subr.bf16.mxu0 0
      %4583 = vmatpush2.bf16.msra.mxu0 0
      %4584 = vmatprep.subr.bf16.mxu0 0
      %4585 = vmatpush2.bf16.msra.mxu0 0
      %4586 = vmatprep.mubr.bf16.mxu0 0
      %4587 = vmatmul.mubr.bf16.gmra.mxu0 %v4549
      %v4588 = vpop.f32.mrf.mxu0
      %v4589 = vadd.f32 0.0, %v4588
      %v4590 = vpop.f32.mrf.mxu0
      %v4591 = vpop.f32.mrf.mxu0
      %v4592 = vpop.f32.mrf.mxu0
      %4593 = vdwg.mxu0
      %v4594 = vadd.f32 %v4530, %v4589
      %s4595 = scalar_lea.vmem %s9, 720
      %v4596 = vld [vmem:[%s4595] sm:$0xf]
      %v4597 = vld [vmem:[%s4595 + $0x4] sm:$0xf]
      %v4598 = vld [vmem:[%s4595 + $0x8] sm:$0xf]
      %v4599 = vld [vmem:[%s4595 + $0xc] sm:$0x3]
      %v4600 = vrot.slane %v3830, 6
      %v4605 = vunpack.c.l.b16 %v4596
      %v4606 = vunpack.c.l.b16 %v4597
      %v4607 = vunpack.c.l.b16 %v4598
      %v4608 = vunpack.c.l.b16 %v4599
      %v4609 = vpack.c.b16 %v4606, %v4605
      %v4610 = vpack.c.b16 %v4608, %v4607
      %v4613 = vsel %vm509, %v4600, 0
      %v4616 = vsel %vm462, %v4610, 0
      %4618 = vmatprep.subr.bf16.mxu0 0
      %4619 = vmatpush1.bf16.msra.mxu0 0
      %4620 = vmatprep.subr.bf16.mxu0 0
      %4621 = vmatpush1.bf16.msra.mxu0 0
      %4622 = vmatprep.subr.bf16.mxu0 0
      %4623 = vmatpush1.bf16.msra.mxu0 0
      %4624 = vmatprep.subr.bf16.mxu0 0
      %4625 = vmatpush1.bf16.msra.mxu0 0
      %4626 = vmatprep.subr.bf16.mxu0 0
      %4627 = vmatpush1.bf16.msra.mxu0 0
      %4628 = vmatprep.subr.bf16.mxu0 0
      %4629 = vmatpush1.bf16.msra.mxu0 0
      %4630 = vmatprep.subr.bf16.mxu0 0
      %4631 = vmatpush1.bf16.msra.mxu0 %v4616
      %4632 = vmatprep.subr.bf16.mxu0 0
      %4633 = vmatpush1.bf16.msra.mxu0 %v4609
      %4634 = vmatprep.subr.bf16.mxu0 0
      %4635 = vmatpush2.bf16.msra.mxu0 0
      %4636 = vmatprep.subr.bf16.mxu0 0
      %4637 = vmatpush2.bf16.msra.mxu0 0
      %4638 = vmatprep.subr.bf16.mxu0 0
      %4639 = vmatpush2.bf16.msra.mxu0 0
      %4640 = vmatprep.subr.bf16.mxu0 0
      %4641 = vmatpush2.bf16.msra.mxu0 0
      %4642 = vmatprep.subr.bf16.mxu0 0
      %4643 = vmatpush2.bf16.msra.mxu0 0
      %4644 = vmatprep.subr.bf16.mxu0 0
      %4645 = vmatpush2.bf16.msra.mxu0 0
      %4646 = vmatprep.subr.bf16.mxu0 0
      %4647 = vmatpush2.bf16.msra.mxu0 0
      %4648 = vmatprep.subr.bf16.mxu0 0
      %4649 = vmatpush2.bf16.msra.mxu0 0
      %4650 = vmatprep.mubr.bf16.mxu0 0
      %4651 = vmatmul.mubr.bf16.gmra.mxu0 %v4613
      %v4652 = vpop.f32.mrf.mxu0
      %v4653 = vadd.f32 0.0, %v4652
      %v4654 = vpop.f32.mrf.mxu0
      %v4655 = vpop.f32.mrf.mxu0
      %v4656 = vpop.f32.mrf.mxu0
      %4657 = vdwg.mxu0
      %v4658 = vadd.f32 %v4594, %v4653
      %s4659 = scalar_lea.vmem %s9, 736
      %v4660 = vld [vmem:[%s4659] sm:$0xf]
      %v4661 = vld [vmem:[%s4659 + $0x4] sm:$0xf]
      %v4662 = vld [vmem:[%s4659 + $0x8] sm:$0xf]
      %v4663 = vld [vmem:[%s4659 + $0xc] sm:$0x3]
      %v4664 = vrot.slane %v1710, 7
      %v4669 = vunpack.c.l.b16 %v4660
      %v4670 = vunpack.c.l.b16 %v4661
      %v4671 = vunpack.c.l.b16 %v4662
      %v4672 = vunpack.c.l.b16 %v4663
      %v4673 = vpack.c.b16 %v4670, %v4669
      %v4674 = vpack.c.b16 %v4672, %v4671
      %v4677 = vsel %vm509, %v4664, 0
      %v4680 = vsel %vm462, %v4674, 0
      %4682 = vmatprep.subr.bf16.mxu0 0
      %4683 = vmatpush1.bf16.msra.mxu0 0
      %4684 = vmatprep.subr.bf16.mxu0 0
      %4685 = vmatpush1.bf16.msra.mxu0 0
      %4686 = vmatprep.subr.bf16.mxu0 0
      %4687 = vmatpush1.bf16.msra.mxu0 0
      %4688 = vmatprep.subr.bf16.mxu0 0
      %4689 = vmatpush1.bf16.msra.mxu0 0
      %4690 = vmatprep.subr.bf16.mxu0 0
      %4691 = vmatpush1.bf16.msra.mxu0 0
      %4692 = vmatprep.subr.bf16.mxu0 0
      %4693 = vmatpush1.bf16.msra.mxu0 0
      %4694 = vmatprep.subr.bf16.mxu0 0
      %4695 = vmatpush1.bf16.msra.mxu0 %v4680
      %4696 = vmatprep.subr.bf16.mxu0 0
      %4697 = vmatpush1.bf16.msra.mxu0 %v4673
      %4698 = vmatprep.subr.bf16.mxu0 0
      %4699 = vmatpush2.bf16.msra.mxu0 0
      %4700 = vmatprep.subr.bf16.mxu0 0
      %4701 = vmatpush2.bf16.msra.mxu0 0
      %4702 = vmatprep.subr.bf16.mxu0 0
      %4703 = vmatpush2.bf16.msra.mxu0 0
      %4704 = vmatprep.subr.bf16.mxu0 0
      %4705 = vmatpush2.bf16.msra.mxu0 0
      %4706 = vmatprep.subr.bf16.mxu0 0
      %4707 = vmatpush2.bf16.msra.mxu0 0
      %4708 = vmatprep.subr.bf16.mxu0 0
      %4709 = vmatpush2.bf16.msra.mxu0 0
      %4710 = vmatprep.subr.bf16.mxu0 0
      %4711 = vmatpush2.bf16.msra.mxu0 0
      %4712 = vmatprep.subr.bf16.mxu0 0
      %4713 = vmatpush2.bf16.msra.mxu0 0
      %4714 = vmatprep.mubr.bf16.mxu0 0
      %4715 = vmatmul.mubr.bf16.gmra.mxu0 %v4677
      %v4716 = vpop.f32.mrf.mxu0
      %v4717 = vadd.f32 0.0, %v4716
      %v4718 = vpop.f32.mrf.mxu0
      %v4719 = vpop.f32.mrf.mxu0
      %v4720 = vpop.f32.mrf.mxu0
      %4721 = vdwg.mxu0
      %v4722 = vadd.f32 %v4658, %v4717
      %s4723 = scalar_lea.vmem %s9, 752
      %v4724 = vld [vmem:[%s4723] sm:$0xf]
      %v4725 = vld [vmem:[%s4723 + $0x4] sm:$0xf]
      %v4726 = vld [vmem:[%s4723 + $0x8] sm:$0xf]
      %v4727 = vld [vmem:[%s4723 + $0xc] sm:$0x3]
      %v4728 = vrot.slane %v3830, 7
      %v4733 = vunpack.c.l.b16 %v4724
      %v4734 = vunpack.c.l.b16 %v4725
      %v4735 = vunpack.c.l.b16 %v4726
      %v4736 = vunpack.c.l.b16 %v4727
      %v4737 = vpack.c.b16 %v4734, %v4733
      %v4738 = vpack.c.b16 %v4736, %v4735
      %v4741 = vsel %vm509, %v4728, 0
      %v4744 = vsel %vm462, %v4738, 0
      %4746 = vmatprep.subr.bf16.mxu0 0
      %4747 = vmatpush1.bf16.msra.mxu0 0
      %4748 = vmatprep.subr.bf16.mxu0 0
      %4749 = vmatpush1.bf16.msra.mxu0 0
      %4750 = vmatprep.subr.bf16.mxu0 0
      %4751 = vmatpush1.bf16.msra.mxu0 0
      %4752 = vmatprep.subr.bf16.mxu0 0
      %4753 = vmatpush1.bf16.msra.mxu0 0
      %4754 = vmatprep.subr.bf16.mxu0 0
      %4755 = vmatpush1.bf16.msra.mxu0 0
      %4756 = vmatprep.subr.bf16.mxu0 0
      %4757 = vmatpush1.bf16.msra.mxu0 0
      %4758 = vmatprep.subr.bf16.mxu0 0
      %4759 = vmatpush1.bf16.msra.mxu0 %v4744
      %4760 = vmatprep.subr.bf16.mxu0 0
      %4761 = vmatpush1.bf16.msra.mxu0 %v4737
      %4762 = vmatprep.subr.bf16.mxu0 0
      %4763 = vmatpush2.bf16.msra.mxu0 0
      %4764 = vmatprep.subr.bf16.mxu0 0
      %4765 = vmatpush2.bf16.msra.mxu0 0
      %4766 = vmatprep.subr.bf16.mxu0 0
      %4767 = vmatpush2.bf16.msra.mxu0 0
      %4768 = vmatprep.subr.bf16.mxu0 0
      %4769 = vmatpush2.bf16.msra.mxu0 0
      %4770 = vmatprep.subr.bf16.mxu0 0
      %4771 = vmatpush2.bf16.msra.mxu0 0
      %4772 = vmatprep.subr.bf16.mxu0 0
      %4773 = vmatpush2.bf16.msra.mxu0 0
      %4774 = vmatprep.subr.bf16.mxu0 0
      %4775 = vmatpush2.bf16.msra.mxu0 0
      %4776 = vmatprep.subr.bf16.mxu0 0
      %4777 = vmatpush2.bf16.msra.mxu0 0
      %4778 = vmatprep.mubr.bf16.mxu0 0
      %4779 = vmatmul.mubr.bf16.gmra.mxu0 %v4741
      %v4780 = vpop.f32.mrf.mxu0
      %v4781 = vadd.f32 0.0, %v4780
      %v4782 = vpop.f32.mrf.mxu0
      %v4783 = vpop.f32.mrf.mxu0
      %v4784 = vpop.f32.mrf.mxu0
      %4785 = vdwg.mxu0
      %v4786 = vadd.f32 %v4722, %v4781
      %s4787 = scalar_lea.vmem %s9, 768
      %v4788 = vld [vmem:[%s4787] sm:$0xf]
      %v4789 = vld [vmem:[%s4787 + $0x4] sm:$0xf]
      %v4790 = vld [vmem:[%s4787 + $0x8] sm:$0xf]
      %v4791 = vld [vmem:[%s4787 + $0xc] sm:$0x3]
      %v4796 = vunpack.c.l.b16 %v4788
      %v4797 = vunpack.c.l.b16 %v4789
      %v4798 = vunpack.c.l.b16 %v4790
      %v4799 = vunpack.c.l.b16 %v4791
      %v4800 = vpack.c.b16 %v4797, %v4796
      %v4801 = vpack.c.b16 %v4799, %v4798
      %v4804 = vsel %vm509, %v1711, 0
      %v4807 = vsel %vm462, %v4801, 0
      %4809 = vmatprep.subr.bf16.mxu0 0
      %4810 = vmatpush1.bf16.msra.mxu0 0
      %4811 = vmatprep.subr.bf16.mxu0 0
      %4812 = vmatpush1.bf16.msra.mxu0 0
      %4813 = vmatprep.subr.bf16.mxu0 0
      %4814 = vmatpush1.bf16.msra.mxu0 0
      %4815 = vmatprep.subr.bf16.mxu0 0
      %4816 = vmatpush1.bf16.msra.mxu0 0
      %4817 = vmatprep.subr.bf16.mxu0 0
      %4818 = vmatpush1.bf16.msra.mxu0 0
      %4819 = vmatprep.subr.bf16.mxu0 0
      %4820 = vmatpush1.bf16.msra.mxu0 0
      %4821 = vmatprep.subr.bf16.mxu0 0
      %4822 = vmatpush1.bf16.msra.mxu0 %v4807
      %4823 = vmatprep.subr.bf16.mxu0 0
      %4824 = vmatpush1.bf16.msra.mxu0 %v4800
      %4825 = vmatprep.subr.bf16.mxu0 0
      %4826 = vmatpush2.bf16.msra.mxu0 0
      %4827 = vmatprep.subr.bf16.mxu0 0
      %4828 = vmatpush2.bf16.msra.mxu0 0
      %4829 = vmatprep.subr.bf16.mxu0 0
      %4830 = vmatpush2.bf16.msra.mxu0 0
      %4831 = vmatprep.subr.bf16.mxu0 0
      %4832 = vmatpush2.bf16.msra.mxu0 0
      %4833 = vmatprep.subr.bf16.mxu0 0
      %4834 = vmatpush2.bf16.msra.mxu0 0
      %4835 = vmatprep.subr.bf16.mxu0 0
      %4836 = vmatpush2.bf16.msra.mxu0 0
      %4837 = vmatprep.subr.bf16.mxu0 0
      %4838 = vmatpush2.bf16.msra.mxu0 0
      %4839 = vmatprep.subr.bf16.mxu0 0
      %4840 = vmatpush2.bf16.msra.mxu0 0
      %4841 = vmatprep.mubr.bf16.mxu0 0
      %4842 = vmatmul.mubr.bf16.gmra.mxu0 %v4804
      %v4843 = vpop.f32.mrf.mxu0
      %v4844 = vadd.f32 0.0, %v4843
      %v4845 = vpop.f32.mrf.mxu0
      %v4846 = vpop.f32.mrf.mxu0
      %v4847 = vpop.f32.mrf.mxu0
      %4848 = vdwg.mxu0
      %v4849 = vadd.f32 %v4786, %v4844
      %s4850 = scalar_lea.vmem %s9, 784
      %v4851 = vld [vmem:[%s4850] sm:$0xf]
      %v4852 = vld [vmem:[%s4850 + $0x4] sm:$0xf]
      %v4853 = vld [vmem:[%s4850 + $0x8] sm:$0xf]
      %v4854 = vld [vmem:[%s4850 + $0xc] sm:$0x3]
      %v4855 = vshrl.u32 %v1711, 16
      %v4861 = vunpack.c.l.b16 %v4851
      %v4862 = vunpack.c.l.b16 %v4852
      %v4863 = vunpack.c.l.b16 %v4853
      %v4864 = vunpack.c.l.b16 %v4854
      %v4865 = vpack.c.b16 %v4862, %v4861
      %v4866 = vpack.c.b16 %v4864, %v4863
      %v4869 = vsel %vm509, %v4855, 0
      %v4872 = vsel %vm462, %v4866, 0
      %4874 = vmatprep.subr.bf16.mxu0 0
      %4875 = vmatpush1.bf16.msra.mxu0 0
      %4876 = vmatprep.subr.bf16.mxu0 0
      %4877 = vmatpush1.bf16.msra.mxu0 0
      %4878 = vmatprep.subr.bf16.mxu0 0
      %4879 = vmatpush1.bf16.msra.mxu0 0
      %4880 = vmatprep.subr.bf16.mxu0 0
      %4881 = vmatpush1.bf16.msra.mxu0 0
      %4882 = vmatprep.subr.bf16.mxu0 0
      %4883 = vmatpush1.bf16.msra.mxu0 0
      %4884 = vmatprep.subr.bf16.mxu0 0
      %4885 = vmatpush1.bf16.msra.mxu0 0
      %4886 = vmatprep.subr.bf16.mxu0 0
      %4887 = vmatpush1.bf16.msra.mxu0 %v4872
      %4888 = vmatprep.subr.bf16.mxu0 0
      %4889 = vmatpush1.bf16.msra.mxu0 %v4865
      %4890 = vmatprep.subr.bf16.mxu0 0
      %4891 = vmatpush2.bf16.msra.mxu0 0
      %4892 = vmatprep.subr.bf16.mxu0 0
      %4893 = vmatpush2.bf16.msra.mxu0 0
      %4894 = vmatprep.subr.bf16.mxu0 0
      %4895 = vmatpush2.bf16.msra.mxu0 0
      %4896 = vmatprep.subr.bf16.mxu0 0
      %4897 = vmatpush2.bf16.msra.mxu0 0
      %4898 = vmatprep.subr.bf16.mxu0 0
      %4899 = vmatpush2.bf16.msra.mxu0 0
      %4900 = vmatprep.subr.bf16.mxu0 0
      %4901 = vmatpush2.bf16.msra.mxu0 0
      %4902 = vmatprep.subr.bf16.mxu0 0
      %4903 = vmatpush2.bf16.msra.mxu0 0
      %4904 = vmatprep.subr.bf16.mxu0 0
      %4905 = vmatpush2.bf16.msra.mxu0 0
      %4906 = vmatprep.mubr.bf16.mxu0 0
      %4907 = vmatmul.mubr.bf16.gmra.mxu0 %v4869
      %v4908 = vpop.f32.mrf.mxu0
      %v4909 = vadd.f32 0.0, %v4908
      %v4910 = vpop.f32.mrf.mxu0
      %v4911 = vpop.f32.mrf.mxu0
      %v4912 = vpop.f32.mrf.mxu0
      %4913 = vdwg.mxu0
      %v4914 = vadd.f32 %v4849, %v4909
      %s4915 = scalar_lea.vmem %s9, 800
      %v4916 = vld [vmem:[%s4915] sm:$0xf]
      %v4917 = vld [vmem:[%s4915 + $0x4] sm:$0xf]
      %v4918 = vld [vmem:[%s4915 + $0x8] sm:$0xf]
      %v4919 = vld [vmem:[%s4915 + $0xc] sm:$0x3]
      %v4921 = vrot.slane %v1711, 1
      %v4926 = vunpack.c.l.b16 %v4916
      %v4927 = vunpack.c.l.b16 %v4917
      %v4928 = vunpack.c.l.b16 %v4918
      %v4929 = vunpack.c.l.b16 %v4919
      %v4930 = vpack.c.b16 %v4927, %v4926
      %v4931 = vpack.c.b16 %v4929, %v4928
      %v4934 = vsel %vm509, %v4921, 0
      %v4937 = vsel %vm462, %v4931, 0
      %4939 = vmatprep.subr.bf16.mxu0 0
      %4940 = vmatpush1.bf16.msra.mxu0 0
      %4941 = vmatprep.subr.bf16.mxu0 0
      %4942 = vmatpush1.bf16.msra.mxu0 0
      %4943 = vmatprep.subr.bf16.mxu0 0
      %4944 = vmatpush1.bf16.msra.mxu0 0
      %4945 = vmatprep.subr.bf16.mxu0 0
      %4946 = vmatpush1.bf16.msra.mxu0 0
      %4947 = vmatprep.subr.bf16.mxu0 0
      %4948 = vmatpush1.bf16.msra.mxu0 0
      %4949 = vmatprep.subr.bf16.mxu0 0
      %4950 = vmatpush1.bf16.msra.mxu0 0
      %4951 = vmatprep.subr.bf16.mxu0 0
      %4952 = vmatpush1.bf16.msra.mxu0 %v4937
      %4953 = vmatprep.subr.bf16.mxu0 0
      %4954 = vmatpush1.bf16.msra.mxu0 %v4930
      %4955 = vmatprep.subr.bf16.mxu0 0
      %4956 = vmatpush2.bf16.msra.mxu0 0
      %4957 = vmatprep.subr.bf16.mxu0 0
      %4958 = vmatpush2.bf16.msra.mxu0 0
      %4959 = vmatprep.subr.bf16.mxu0 0
      %4960 = vmatpush2.bf16.msra.mxu0 0
      %4961 = vmatprep.subr.bf16.mxu0 0
      %4962 = vmatpush2.bf16.msra.mxu0 0
      %4963 = vmatprep.subr.bf16.mxu0 0
      %4964 = vmatpush2.bf16.msra.mxu0 0
      %4965 = vmatprep.subr.bf16.mxu0 0
      %4966 = vmatpush2.bf16.msra.mxu0 0
      %4967 = vmatprep.subr.bf16.mxu0 0
      %4968 = vmatpush2.bf16.msra.mxu0 0
      %4969 = vmatprep.subr.bf16.mxu0 0
      %4970 = vmatpush2.bf16.msra.mxu0 0
      %4971 = vmatprep.mubr.bf16.mxu0 0
      %4972 = vmatmul.mubr.bf16.gmra.mxu0 %v4934
      %v4973 = vpop.f32.mrf.mxu0
      %v4974 = vadd.f32 0.0, %v4973
      %v4975 = vpop.f32.mrf.mxu0
      %v4976 = vpop.f32.mrf.mxu0
      %v4977 = vpop.f32.mrf.mxu0
      %4978 = vdwg.mxu0
      %v4979 = vadd.f32 %v4914, %v4974
      %s4980 = scalar_lea.vmem %s9, 816
      %v4981 = vld [vmem:[%s4980] sm:$0xf]
      %v4982 = vld [vmem:[%s4980 + $0x4] sm:$0xf]
      %v4983 = vld [vmem:[%s4980 + $0x8] sm:$0xf]
      %v4984 = vld [vmem:[%s4980 + $0xc] sm:$0x3]
      %v4985 = vrot.slane %v4855, 1
      %v4990 = vunpack.c.l.b16 %v4981
      %v4991 = vunpack.c.l.b16 %v4982
      %v4992 = vunpack.c.l.b16 %v4983
      %v4993 = vunpack.c.l.b16 %v4984
      %v4994 = vpack.c.b16 %v4991, %v4990
      %v4995 = vpack.c.b16 %v4993, %v4992
      %v4998 = vsel %vm509, %v4985, 0
      %v5001 = vsel %vm462, %v4995, 0
      %5003 = vmatprep.subr.bf16.mxu0 0
      %5004 = vmatpush1.bf16.msra.mxu0 0
      %5005 = vmatprep.subr.bf16.mxu0 0
      %5006 = vmatpush1.bf16.msra.mxu0 0
      %5007 = vmatprep.subr.bf16.mxu0 0
      %5008 = vmatpush1.bf16.msra.mxu0 0
      %5009 = vmatprep.subr.bf16.mxu0 0
      %5010 = vmatpush1.bf16.msra.mxu0 0
      %5011 = vmatprep.subr.bf16.mxu0 0
      %5012 = vmatpush1.bf16.msra.mxu0 0
      %5013 = vmatprep.subr.bf16.mxu0 0
      %5014 = vmatpush1.bf16.msra.mxu0 0
      %5015 = vmatprep.subr.bf16.mxu0 0
      %5016 = vmatpush1.bf16.msra.mxu0 %v5001
      %5017 = vmatprep.subr.bf16.mxu0 0
      %5018 = vmatpush1.bf16.msra.mxu0 %v4994
      %5019 = vmatprep.subr.bf16.mxu0 0
      %5020 = vmatpush2.bf16.msra.mxu0 0
      %5021 = vmatprep.subr.bf16.mxu0 0
      %5022 = vmatpush2.bf16.msra.mxu0 0
      %5023 = vmatprep.subr.bf16.mxu0 0
      %5024 = vmatpush2.bf16.msra.mxu0 0
      %5025 = vmatprep.subr.bf16.mxu0 0
      %5026 = vmatpush2.bf16.msra.mxu0 0
      %5027 = vmatprep.subr.bf16.mxu0 0
      %5028 = vmatpush2.bf16.msra.mxu0 0
      %5029 = vmatprep.subr.bf16.mxu0 0
      %5030 = vmatpush2.bf16.msra.mxu0 0
      %5031 = vmatprep.subr.bf16.mxu0 0
      %5032 = vmatpush2.bf16.msra.mxu0 0
      %5033 = vmatprep.subr.bf16.mxu0 0
      %5034 = vmatpush2.bf16.msra.mxu0 0
      %5035 = vmatprep.mubr.bf16.mxu0 0
      %5036 = vmatmul.mubr.bf16.gmra.mxu0 %v4998
      %v5037 = vpop.f32.mrf.mxu0
      %v5038 = vadd.f32 0.0, %v5037
      %v5039 = vpop.f32.mrf.mxu0
      %v5040 = vpop.f32.mrf.mxu0
      %v5041 = vpop.f32.mrf.mxu0
      %5042 = vdwg.mxu0
      %v5043 = vadd.f32 %v4979, %v5038
      %s5044 = scalar_lea.vmem %s9, 832
      %v5045 = vld [vmem:[%s5044] sm:$0xf]
      %v5046 = vld [vmem:[%s5044 + $0x4] sm:$0xf]
      %v5047 = vld [vmem:[%s5044 + $0x8] sm:$0xf]
      %v5048 = vld [vmem:[%s5044 + $0xc] sm:$0x3]
      %v5049 = vrot.slane %v1711, 2
      %v5054 = vunpack.c.l.b16 %v5045
      %v5055 = vunpack.c.l.b16 %v5046
      %v5056 = vunpack.c.l.b16 %v5047
      %v5057 = vunpack.c.l.b16 %v5048
      %v5058 = vpack.c.b16 %v5055, %v5054
      %v5059 = vpack.c.b16 %v5057, %v5056
      %v5062 = vsel %vm509, %v5049, 0
      %v5065 = vsel %vm462, %v5059, 0
      %5067 = vmatprep.subr.bf16.mxu0 0
      %5068 = vmatpush1.bf16.msra.mxu0 0
      %5069 = vmatprep.subr.bf16.mxu0 0
      %5070 = vmatpush1.bf16.msra.mxu0 0
      %5071 = vmatprep.subr.bf16.mxu0 0
      %5072 = vmatpush1.bf16.msra.mxu0 0
      %5073 = vmatprep.subr.bf16.mxu0 0
      %5074 = vmatpush1.bf16.msra.mxu0 0
      %5075 = vmatprep.subr.bf16.mxu0 0
      %5076 = vmatpush1.bf16.msra.mxu0 0
      %5077 = vmatprep.subr.bf16.mxu0 0
      %5078 = vmatpush1.bf16.msra.mxu0 0
      %5079 = vmatprep.subr.bf16.mxu0 0
      %5080 = vmatpush1.bf16.msra.mxu0 %v5065
      %5081 = vmatprep.subr.bf16.mxu0 0
      %5082 = vmatpush1.bf16.msra.mxu0 %v5058
      %5083 = vmatprep.subr.bf16.mxu0 0
      %5084 = vmatpush2.bf16.msra.mxu0 0
      %5085 = vmatprep.subr.bf16.mxu0 0
      %5086 = vmatpush2.bf16.msra.mxu0 0
      %5087 = vmatprep.subr.bf16.mxu0 0
      %5088 = vmatpush2.bf16.msra.mxu0 0
      %5089 = vmatprep.subr.bf16.mxu0 0
      %5090 = vmatpush2.bf16.msra.mxu0 0
      %5091 = vmatprep.subr.bf16.mxu0 0
      %5092 = vmatpush2.bf16.msra.mxu0 0
      %5093 = vmatprep.subr.bf16.mxu0 0
      %5094 = vmatpush2.bf16.msra.mxu0 0
      %5095 = vmatprep.subr.bf16.mxu0 0
      %5096 = vmatpush2.bf16.msra.mxu0 0
      %5097 = vmatprep.subr.bf16.mxu0 0
      %5098 = vmatpush2.bf16.msra.mxu0 0
      %5099 = vmatprep.mubr.bf16.mxu0 0
      %5100 = vmatmul.mubr.bf16.gmra.mxu0 %v5062
      %v5101 = vpop.f32.mrf.mxu0
      %v5102 = vadd.f32 0.0, %v5101
      %v5103 = vpop.f32.mrf.mxu0
      %v5104 = vpop.f32.mrf.mxu0
      %v5105 = vpop.f32.mrf.mxu0
      %5106 = vdwg.mxu0
      %v5107 = vadd.f32 %v5043, %v5102
      %s5108 = scalar_lea.vmem %s9, 848
      %v5109 = vld [vmem:[%s5108] sm:$0xf]
      %v5110 = vld [vmem:[%s5108 + $0x4] sm:$0xf]
      %v5111 = vld [vmem:[%s5108 + $0x8] sm:$0xf]
      %v5112 = vld [vmem:[%s5108 + $0xc] sm:$0x3]
      %v5113 = vrot.slane %v4855, 2
      %v5118 = vunpack.c.l.b16 %v5109
      %v5119 = vunpack.c.l.b16 %v5110
      %v5120 = vunpack.c.l.b16 %v5111
      %v5121 = vunpack.c.l.b16 %v5112
      %v5122 = vpack.c.b16 %v5119, %v5118
      %v5123 = vpack.c.b16 %v5121, %v5120
      %v5126 = vsel %vm509, %v5113, 0
      %v5129 = vsel %vm462, %v5123, 0
      %5131 = vmatprep.subr.bf16.mxu0 0
      %5132 = vmatpush1.bf16.msra.mxu0 0
      %5133 = vmatprep.subr.bf16.mxu0 0
      %5134 = vmatpush1.bf16.msra.mxu0 0
      %5135 = vmatprep.subr.bf16.mxu0 0
      %5136 = vmatpush1.bf16.msra.mxu0 0
      %5137 = vmatprep.subr.bf16.mxu0 0
      %5138 = vmatpush1.bf16.msra.mxu0 0
      %5139 = vmatprep.subr.bf16.mxu0 0
      %5140 = vmatpush1.bf16.msra.mxu0 0
      %5141 = vmatprep.subr.bf16.mxu0 0
      %5142 = vmatpush1.bf16.msra.mxu0 0
      %5143 = vmatprep.subr.bf16.mxu0 0
      %5144 = vmatpush1.bf16.msra.mxu0 %v5129
      %5145 = vmatprep.subr.bf16.mxu0 0
      %5146 = vmatpush1.bf16.msra.mxu0 %v5122
      %5147 = vmatprep.subr.bf16.mxu0 0
      %5148 = vmatpush2.bf16.msra.mxu0 0
      %5149 = vmatprep.subr.bf16.mxu0 0
      %5150 = vmatpush2.bf16.msra.mxu0 0
      %5151 = vmatprep.subr.bf16.mxu0 0
      %5152 = vmatpush2.bf16.msra.mxu0 0
      %5153 = vmatprep.subr.bf16.mxu0 0
      %5154 = vmatpush2.bf16.msra.mxu0 0
      %5155 = vmatprep.subr.bf16.mxu0 0
      %5156 = vmatpush2.bf16.msra.mxu0 0
      %5157 = vmatprep.subr.bf16.mxu0 0
      %5158 = vmatpush2.bf16.msra.mxu0 0
      %5159 = vmatprep.subr.bf16.mxu0 0
      %5160 = vmatpush2.bf16.msra.mxu0 0
      %5161 = vmatprep.subr.bf16.mxu0 0
      %5162 = vmatpush2.bf16.msra.mxu0 0
      %5163 = vmatprep.mubr.bf16.mxu0 0
      %5164 = vmatmul.mubr.bf16.gmra.mxu0 %v5126
      %v5165 = vpop.f32.mrf.mxu0
      %v5166 = vadd.f32 0.0, %v5165
      %v5167 = vpop.f32.mrf.mxu0
      %v5168 = vpop.f32.mrf.mxu0
      %v5169 = vpop.f32.mrf.mxu0
      %5170 = vdwg.mxu0
      %v5171 = vadd.f32 %v5107, %v5166
      %s5172 = scalar_lea.vmem %s9, 864
      %v5173 = vld [vmem:[%s5172] sm:$0xf]
      %v5174 = vld [vmem:[%s5172 + $0x4] sm:$0xf]
      %v5175 = vld [vmem:[%s5172 + $0x8] sm:$0xf]
      %v5176 = vld [vmem:[%s5172 + $0xc] sm:$0x3]
      %v5177 = vrot.slane %v1711, 3
      %v5182 = vunpack.c.l.b16 %v5173
      %v5183 = vunpack.c.l.b16 %v5174
      %v5184 = vunpack.c.l.b16 %v5175
      %v5185 = vunpack.c.l.b16 %v5176
      %v5186 = vpack.c.b16 %v5183, %v5182
      %v5187 = vpack.c.b16 %v5185, %v5184
      %v5190 = vsel %vm509, %v5177, 0
      %v5193 = vsel %vm462, %v5187, 0
      %5195 = vmatprep.subr.bf16.mxu0 0
      %5196 = vmatpush1.bf16.msra.mxu0 0
      %5197 = vmatprep.subr.bf16.mxu0 0
      %5198 = vmatpush1.bf16.msra.mxu0 0
      %5199 = vmatprep.subr.bf16.mxu0 0
      %5200 = vmatpush1.bf16.msra.mxu0 0
      %5201 = vmatprep.subr.bf16.mxu0 0
      %5202 = vmatpush1.bf16.msra.mxu0 0
      %5203 = vmatprep.subr.bf16.mxu0 0
      %5204 = vmatpush1.bf16.msra.mxu0 0
      %5205 = vmatprep.subr.bf16.mxu0 0
      %5206 = vmatpush1.bf16.msra.mxu0 0
      %5207 = vmatprep.subr.bf16.mxu0 0
      %5208 = vmatpush1.bf16.msra.mxu0 %v5193
      %5209 = vmatprep.subr.bf16.mxu0 0
      %5210 = vmatpush1.bf16.msra.mxu0 %v5186
      %5211 = vmatprep.subr.bf16.mxu0 0
      %5212 = vmatpush2.bf16.msra.mxu0 0
      %5213 = vmatprep.subr.bf16.mxu0 0
      %5214 = vmatpush2.bf16.msra.mxu0 0
      %5215 = vmatprep.subr.bf16.mxu0 0
      %5216 = vmatpush2.bf16.msra.mxu0 0
      %5217 = vmatprep.subr.bf16.mxu0 0
      %5218 = vmatpush2.bf16.msra.mxu0 0
      %5219 = vmatprep.subr.bf16.mxu0 0
      %5220 = vmatpush2.bf16.msra.mxu0 0
      %5221 = vmatprep.subr.bf16.mxu0 0
      %5222 = vmatpush2.bf16.msra.mxu0 0
      %5223 = vmatprep.subr.bf16.mxu0 0
      %5224 = vmatpush2.bf16.msra.mxu0 0
      %5225 = vmatprep.subr.bf16.mxu0 0
      %5226 = vmatpush2.bf16.msra.mxu0 0
      %5227 = vmatprep.mubr.bf16.mxu0 0
      %5228 = vmatmul.mubr.bf16.gmra.mxu0 %v5190
      %v5229 = vpop.f32.mrf.mxu0
      %v5230 = vadd.f32 0.0, %v5229
      %v5231 = vpop.f32.mrf.mxu0
      %v5232 = vpop.f32.mrf.mxu0
      %v5233 = vpop.f32.mrf.mxu0
      %5234 = vdwg.mxu0
      %v5235 = vadd.f32 %v5171, %v5230
      %s5236 = scalar_lea.vmem %s9, 880
      %v5237 = vld [vmem:[%s5236] sm:$0xf]
      %v5238 = vld [vmem:[%s5236 + $0x4] sm:$0xf]
      %v5239 = vld [vmem:[%s5236 + $0x8] sm:$0xf]
      %v5240 = vld [vmem:[%s5236 + $0xc] sm:$0x3]
      %v5241 = vrot.slane %v4855, 3
      %v5246 = vunpack.c.l.b16 %v5237
      %v5247 = vunpack.c.l.b16 %v5238
      %v5248 = vunpack.c.l.b16 %v5239
      %v5249 = vunpack.c.l.b16 %v5240
      %v5250 = vpack.c.b16 %v5247, %v5246
      %v5251 = vpack.c.b16 %v5249, %v5248
      %v5254 = vsel %vm509, %v5241, 0
      %v5257 = vsel %vm462, %v5251, 0
      %5259 = vmatprep.subr.bf16.mxu0 0
      %5260 = vmatpush1.bf16.msra.mxu0 0
      %5261 = vmatprep.subr.bf16.mxu0 0
      %5262 = vmatpush1.bf16.msra.mxu0 0
      %5263 = vmatprep.subr.bf16.mxu0 0
      %5264 = vmatpush1.bf16.msra.mxu0 0
      %5265 = vmatprep.subr.bf16.mxu0 0
      %5266 = vmatpush1.bf16.msra.mxu0 0
      %5267 = vmatprep.subr.bf16.mxu0 0
      %5268 = vmatpush1.bf16.msra.mxu0 0
      %5269 = vmatprep.subr.bf16.mxu0 0
      %5270 = vmatpush1.bf16.msra.mxu0 0
      %5271 = vmatprep.subr.bf16.mxu0 0
      %5272 = vmatpush1.bf16.msra.mxu0 %v5257
      %5273 = vmatprep.subr.bf16.mxu0 0
      %5274 = vmatpush1.bf16.msra.mxu0 %v5250
      %5275 = vmatprep.subr.bf16.mxu0 0
      %5276 = vmatpush2.bf16.msra.mxu0 0
      %5277 = vmatprep.subr.bf16.mxu0 0
      %5278 = vmatpush2.bf16.msra.mxu0 0
      %5279 = vmatprep.subr.bf16.mxu0 0
      %5280 = vmatpush2.bf16.msra.mxu0 0
      %5281 = vmatprep.subr.bf16.mxu0 0
      %5282 = vmatpush2.bf16.msra.mxu0 0
      %5283 = vmatprep.subr.bf16.mxu0 0
      %5284 = vmatpush2.bf16.msra.mxu0 0
      %5285 = vmatprep.subr.bf16.mxu0 0
      %5286 = vmatpush2.bf16.msra.mxu0 0
      %5287 = vmatprep.subr.bf16.mxu0 0
      %5288 = vmatpush2.bf16.msra.mxu0 0
      %5289 = vmatprep.subr.bf16.mxu0 0
      %5290 = vmatpush2.bf16.msra.mxu0 0
      %5291 = vmatprep.mubr.bf16.mxu0 0
      %5292 = vmatmul.mubr.bf16.gmra.mxu0 %v5254
      %v5293 = vpop.f32.mrf.mxu0
      %v5294 = vadd.f32 0.0, %v5293
      %v5295 = vpop.f32.mrf.mxu0
      %v5296 = vpop.f32.mrf.mxu0
      %v5297 = vpop.f32.mrf.mxu0
      %5298 = vdwg.mxu0
      %v5299 = vadd.f32 %v5235, %v5294
      %s5300 = scalar_lea.vmem %s9, 896
      %v5301 = vld [vmem:[%s5300] sm:$0xf]
      %v5302 = vld [vmem:[%s5300 + $0x4] sm:$0xf]
      %v5303 = vld [vmem:[%s5300 + $0x8] sm:$0xf]
      %v5304 = vld [vmem:[%s5300 + $0xc] sm:$0x3]
      %v5305 = vrot.slane %v1711, 4
      %v5310 = vunpack.c.l.b16 %v5301
      %v5311 = vunpack.c.l.b16 %v5302
      %v5312 = vunpack.c.l.b16 %v5303
      %v5313 = vunpack.c.l.b16 %v5304
      %v5314 = vpack.c.b16 %v5311, %v5310
      %v5315 = vpack.c.b16 %v5313, %v5312
      %v5318 = vsel %vm509, %v5305, 0
      %v5321 = vsel %vm462, %v5315, 0
      %5323 = vmatprep.subr.bf16.mxu0 0
      %5324 = vmatpush1.bf16.msra.mxu0 0
      %5325 = vmatprep.subr.bf16.mxu0 0
      %5326 = vmatpush1.bf16.msra.mxu0 0
      %5327 = vmatprep.subr.bf16.mxu0 0
      %5328 = vmatpush1.bf16.msra.mxu0 0
      %5329 = vmatprep.subr.bf16.mxu0 0
      %5330 = vmatpush1.bf16.msra.mxu0 0
      %5331 = vmatprep.subr.bf16.mxu0 0
      %5332 = vmatpush1.bf16.msra.mxu0 0
      %5333 = vmatprep.subr.bf16.mxu0 0
      %5334 = vmatpush1.bf16.msra.mxu0 0
      %5335 = vmatprep.subr.bf16.mxu0 0
      %5336 = vmatpush1.bf16.msra.mxu0 %v5321
      %5337 = vmatprep.subr.bf16.mxu0 0
      %5338 = vmatpush1.bf16.msra.mxu0 %v5314
      %5339 = vmatprep.subr.bf16.mxu0 0
      %5340 = vmatpush2.bf16.msra.mxu0 0
      %5341 = vmatprep.subr.bf16.mxu0 0
      %5342 = vmatpush2.bf16.msra.mxu0 0
      %5343 = vmatprep.subr.bf16.mxu0 0
      %5344 = vmatpush2.bf16.msra.mxu0 0
      %5345 = vmatprep.subr.bf16.mxu0 0
      %5346 = vmatpush2.bf16.msra.mxu0 0
      %5347 = vmatprep.subr.bf16.mxu0 0
      %5348 = vmatpush2.bf16.msra.mxu0 0
      %5349 = vmatprep.subr.bf16.mxu0 0
      %5350 = vmatpush2.bf16.msra.mxu0 0
      %5351 = vmatprep.subr.bf16.mxu0 0
      %5352 = vmatpush2.bf16.msra.mxu0 0
      %5353 = vmatprep.subr.bf16.mxu0 0
      %5354 = vmatpush2.bf16.msra.mxu0 0
      %5355 = vmatprep.mubr.bf16.mxu0 0
      %5356 = vmatmul.mubr.bf16.gmra.mxu0 %v5318
      %v5357 = vpop.f32.mrf.mxu0
      %v5358 = vadd.f32 0.0, %v5357
      %v5359 = vpop.f32.mrf.mxu0
      %v5360 = vpop.f32.mrf.mxu0
      %v5361 = vpop.f32.mrf.mxu0
      %5362 = vdwg.mxu0
      %v5363 = vadd.f32 %v5299, %v5358
      %s5364 = scalar_lea.vmem %s9, 912
      %v5365 = vld [vmem:[%s5364] sm:$0xf]
      %v5366 = vld [vmem:[%s5364 + $0x4] sm:$0xf]
      %v5367 = vld [vmem:[%s5364 + $0x8] sm:$0xf]
      %v5368 = vld [vmem:[%s5364 + $0xc] sm:$0x3]
      %v5369 = vrot.slane %v4855, 4
      %v5374 = vunpack.c.l.b16 %v5365
      %v5375 = vunpack.c.l.b16 %v5366
      %v5376 = vunpack.c.l.b16 %v5367
      %v5377 = vunpack.c.l.b16 %v5368
      %v5378 = vpack.c.b16 %v5375, %v5374
      %v5379 = vpack.c.b16 %v5377, %v5376
      %v5382 = vsel %vm509, %v5369, 0
      %v5385 = vsel %vm462, %v5379, 0
      %5387 = vmatprep.subr.bf16.mxu0 0
      %5388 = vmatpush1.bf16.msra.mxu0 0
      %5389 = vmatprep.subr.bf16.mxu0 0
      %5390 = vmatpush1.bf16.msra.mxu0 0
      %5391 = vmatprep.subr.bf16.mxu0 0
      %5392 = vmatpush1.bf16.msra.mxu0 0
      %5393 = vmatprep.subr.bf16.mxu0 0
      %5394 = vmatpush1.bf16.msra.mxu0 0
      %5395 = vmatprep.subr.bf16.mxu0 0
      %5396 = vmatpush1.bf16.msra.mxu0 0
      %5397 = vmatprep.subr.bf16.mxu0 0
      %5398 = vmatpush1.bf16.msra.mxu0 0
      %5399 = vmatprep.subr.bf16.mxu0 0
      %5400 = vmatpush1.bf16.msra.mxu0 %v5385
      %5401 = vmatprep.subr.bf16.mxu0 0
      %5402 = vmatpush1.bf16.msra.mxu0 %v5378
      %5403 = vmatprep.subr.bf16.mxu0 0
      %5404 = vmatpush2.bf16.msra.mxu0 0
      %5405 = vmatprep.subr.bf16.mxu0 0
      %5406 = vmatpush2.bf16.msra.mxu0 0
      %5407 = vmatprep.subr.bf16.mxu0 0
      %5408 = vmatpush2.bf16.msra.mxu0 0
      %5409 = vmatprep.subr.bf16.mxu0 0
      %5410 = vmatpush2.bf16.msra.mxu0 0
      %5411 = vmatprep.subr.bf16.mxu0 0
      %5412 = vmatpush2.bf16.msra.mxu0 0
      %5413 = vmatprep.subr.bf16.mxu0 0
      %5414 = vmatpush2.bf16.msra.mxu0 0
      %5415 = vmatprep.subr.bf16.mxu0 0
      %5416 = vmatpush2.bf16.msra.mxu0 0
      %5417 = vmatprep.subr.bf16.mxu0 0
      %5418 = vmatpush2.bf16.msra.mxu0 0
      %5419 = vmatprep.mubr.bf16.mxu0 0
      %5420 = vmatmul.mubr.bf16.gmra.mxu0 %v5382
      %v5421 = vpop.f32.mrf.mxu0
      %v5422 = vadd.f32 0.0, %v5421
      %v5423 = vpop.f32.mrf.mxu0
      %v5424 = vpop.f32.mrf.mxu0
      %v5425 = vpop.f32.mrf.mxu0
      %5426 = vdwg.mxu0
      %v5427 = vadd.f32 %v5363, %v5422
      %s5428 = scalar_lea.vmem %s9, 928
      %v5429 = vld [vmem:[%s5428] sm:$0xf]
      %v5430 = vld [vmem:[%s5428 + $0x4] sm:$0xf]
      %v5431 = vld [vmem:[%s5428 + $0x8] sm:$0xf]
      %v5432 = vld [vmem:[%s5428 + $0xc] sm:$0x3]
      %v5433 = vrot.slane %v1711, 5
      %v5438 = vunpack.c.l.b16 %v5429
      %v5439 = vunpack.c.l.b16 %v5430
      %v5440 = vunpack.c.l.b16 %v5431
      %v5441 = vunpack.c.l.b16 %v5432
      %v5442 = vpack.c.b16 %v5439, %v5438
      %v5443 = vpack.c.b16 %v5441, %v5440
      %v5446 = vsel %vm509, %v5433, 0
      %v5449 = vsel %vm462, %v5443, 0
      %5451 = vmatprep.subr.bf16.mxu0 0
      %5452 = vmatpush1.bf16.msra.mxu0 0
      %5453 = vmatprep.subr.bf16.mxu0 0
      %5454 = vmatpush1.bf16.msra.mxu0 0
      %5455 = vmatprep.subr.bf16.mxu0 0
      %5456 = vmatpush1.bf16.msra.mxu0 0
      %5457 = vmatprep.subr.bf16.mxu0 0
      %5458 = vmatpush1.bf16.msra.mxu0 0
      %5459 = vmatprep.subr.bf16.mxu0 0
      %5460 = vmatpush1.bf16.msra.mxu0 0
      %5461 = vmatprep.subr.bf16.mxu0 0
      %5462 = vmatpush1.bf16.msra.mxu0 0
      %5463 = vmatprep.subr.bf16.mxu0 0
      %5464 = vmatpush1.bf16.msra.mxu0 %v5449
      %5465 = vmatprep.subr.bf16.mxu0 0
      %5466 = vmatpush1.bf16.msra.mxu0 %v5442
      %5467 = vmatprep.subr.bf16.mxu0 0
      %5468 = vmatpush2.bf16.msra.mxu0 0
      %5469 = vmatprep.subr.bf16.mxu0 0
      %5470 = vmatpush2.bf16.msra.mxu0 0
      %5471 = vmatprep.subr.bf16.mxu0 0
      %5472 = vmatpush2.bf16.msra.mxu0 0
      %5473 = vmatprep.subr.bf16.mxu0 0
      %5474 = vmatpush2.bf16.msra.mxu0 0
      %5475 = vmatprep.subr.bf16.mxu0 0
      %5476 = vmatpush2.bf16.msra.mxu0 0
      %5477 = vmatprep.subr.bf16.mxu0 0
      %5478 = vmatpush2.bf16.msra.mxu0 0
      %5479 = vmatprep.subr.bf16.mxu0 0
      %5480 = vmatpush2.bf16.msra.mxu0 0
      %5481 = vmatprep.subr.bf16.mxu0 0
      %5482 = vmatpush2.bf16.msra.mxu0 0
      %5483 = vmatprep.mubr.bf16.mxu0 0
      %5484 = vmatmul.mubr.bf16.gmra.mxu0 %v5446
      %v5485 = vpop.f32.mrf.mxu0
      %v5486 = vadd.f32 0.0, %v5485
      %v5487 = vpop.f32.mrf.mxu0
      %v5488 = vpop.f32.mrf.mxu0
      %v5489 = vpop.f32.mrf.mxu0
      %5490 = vdwg.mxu0
      %v5491 = vadd.f32 %v5427, %v5486
      %s5492 = scalar_lea.vmem %s9, 944
      %v5493 = vld [vmem:[%s5492] sm:$0xf]
      %v5494 = vld [vmem:[%s5492 + $0x4] sm:$0xf]
      %v5495 = vld [vmem:[%s5492 + $0x8] sm:$0xf]
      %v5496 = vld [vmem:[%s5492 + $0xc] sm:$0x3]
      %v5497 = vrot.slane %v4855, 5
      %v5502 = vunpack.c.l.b16 %v5493
      %v5503 = vunpack.c.l.b16 %v5494
      %v5504 = vunpack.c.l.b16 %v5495
      %v5505 = vunpack.c.l.b16 %v5496
      %v5506 = vpack.c.b16 %v5503, %v5502
      %v5507 = vpack.c.b16 %v5505, %v5504
      %v5510 = vsel %vm509, %v5497, 0
      %v5513 = vsel %vm462, %v5507, 0
      %5515 = vmatprep.subr.bf16.mxu0 0
      %5516 = vmatpush1.bf16.msra.mxu0 0
      %5517 = vmatprep.subr.bf16.mxu0 0
      %5518 = vmatpush1.bf16.msra.mxu0 0
      %5519 = vmatprep.subr.bf16.mxu0 0
      %5520 = vmatpush1.bf16.msra.mxu0 0
      %5521 = vmatprep.subr.bf16.mxu0 0
      %5522 = vmatpush1.bf16.msra.mxu0 0
      %5523 = vmatprep.subr.bf16.mxu0 0
      %5524 = vmatpush1.bf16.msra.mxu0 0
      %5525 = vmatprep.subr.bf16.mxu0 0
      %5526 = vmatpush1.bf16.msra.mxu0 0
      %5527 = vmatprep.subr.bf16.mxu0 0
      %5528 = vmatpush1.bf16.msra.mxu0 %v5513
      %5529 = vmatprep.subr.bf16.mxu0 0
      %5530 = vmatpush1.bf16.msra.mxu0 %v5506
      %5531 = vmatprep.subr.bf16.mxu0 0
      %5532 = vmatpush2.bf16.msra.mxu0 0
      %5533 = vmatprep.subr.bf16.mxu0 0
      %5534 = vmatpush2.bf16.msra.mxu0 0
      %5535 = vmatprep.subr.bf16.mxu0 0
      %5536 = vmatpush2.bf16.msra.mxu0 0
      %5537 = vmatprep.subr.bf16.mxu0 0
      %5538 = vmatpush2.bf16.msra.mxu0 0
      %5539 = vmatprep.subr.bf16.mxu0 0
      %5540 = vmatpush2.bf16.msra.mxu0 0
      %5541 = vmatprep.subr.bf16.mxu0 0
      %5542 = vmatpush2.bf16.msra.mxu0 0
      %5543 = vmatprep.subr.bf16.mxu0 0
      %5544 = vmatpush2.bf16.msra.mxu0 0
      %5545 = vmatprep.subr.bf16.mxu0 0
      %5546 = vmatpush2.bf16.msra.mxu0 0
      %5547 = vmatprep.mubr.bf16.mxu0 0
      %5548 = vmatmul.mubr.bf16.gmra.mxu0 %v5510
      %v5549 = vpop.f32.mrf.mxu0
      %v5550 = vadd.f32 0.0, %v5549
      %v5551 = vpop.f32.mrf.mxu0
      %v5552 = vpop.f32.mrf.mxu0
      %v5553 = vpop.f32.mrf.mxu0
      %5554 = vdwg.mxu0
      %v5555 = vadd.f32 %v5491, %v5550
      %s5556 = scalar_lea.vmem %s9, 960
      %v5557 = vld [vmem:[%s5556] sm:$0xf]
      %v5558 = vld [vmem:[%s5556 + $0x4] sm:$0xf]
      %v5559 = vld [vmem:[%s5556 + $0x8] sm:$0xf]
      %v5560 = vld [vmem:[%s5556 + $0xc] sm:$0x3]
      %v5561 = vrot.slane %v1711, 6
      %v5566 = vunpack.c.l.b16 %v5557
      %v5567 = vunpack.c.l.b16 %v5558
      %v5568 = vunpack.c.l.b16 %v5559
      %v5569 = vunpack.c.l.b16 %v5560
      %v5570 = vpack.c.b16 %v5567, %v5566
      %v5571 = vpack.c.b16 %v5569, %v5568
      %v5574 = vsel %vm509, %v5561, 0
      %v5577 = vsel %vm462, %v5571, 0
      %5579 = vmatprep.subr.bf16.mxu0 0
      %5580 = vmatpush1.bf16.msra.mxu0 0
      %5581 = vmatprep.subr.bf16.mxu0 0
      %5582 = vmatpush1.bf16.msra.mxu0 0
      %5583 = vmatprep.subr.bf16.mxu0 0
      %5584 = vmatpush1.bf16.msra.mxu0 0
      %5585 = vmatprep.subr.bf16.mxu0 0
      %5586 = vmatpush1.bf16.msra.mxu0 0
      %5587 = vmatprep.subr.bf16.mxu0 0
      %5588 = vmatpush1.bf16.msra.mxu0 0
      %5589 = vmatprep.subr.bf16.mxu0 0
      %5590 = vmatpush1.bf16.msra.mxu0 0
      %5591 = vmatprep.subr.bf16.mxu0 0
      %5592 = vmatpush1.bf16.msra.mxu0 %v5577
      %5593 = vmatprep.subr.bf16.mxu0 0
      %5594 = vmatpush1.bf16.msra.mxu0 %v5570
      %5595 = vmatprep.subr.bf16.mxu0 0
      %5596 = vmatpush2.bf16.msra.mxu0 0
      %5597 = vmatprep.subr.bf16.mxu0 0
      %5598 = vmatpush2.bf16.msra.mxu0 0
      %5599 = vmatprep.subr.bf16.mxu0 0
      %5600 = vmatpush2.bf16.msra.mxu0 0
      %5601 = vmatprep.subr.bf16.mxu0 0
      %5602 = vmatpush2.bf16.msra.mxu0 0
      %5603 = vmatprep.subr.bf16.mxu0 0
      %5604 = vmatpush2.bf16.msra.mxu0 0
      %5605 = vmatprep.subr.bf16.mxu0 0
      %5606 = vmatpush2.bf16.msra.mxu0 0
      %5607 = vmatprep.subr.bf16.mxu0 0
      %5608 = vmatpush2.bf16.msra.mxu0 0
      %5609 = vmatprep.subr.bf16.mxu0 0
      %5610 = vmatpush2.bf16.msra.mxu0 0
      %5611 = vmatprep.mubr.bf16.mxu0 0
      %5612 = vmatmul.mubr.bf16.gmra.mxu0 %v5574
      %v5613 = vpop.f32.mrf.mxu0
      %v5614 = vadd.f32 0.0, %v5613
      %v5615 = vpop.f32.mrf.mxu0
      %v5616 = vpop.f32.mrf.mxu0
      %v5617 = vpop.f32.mrf.mxu0
      %5618 = vdwg.mxu0
      %v5619 = vadd.f32 %v5555, %v5614
      %s5620 = scalar_lea.vmem %s9, 976
      %v5621 = vld [vmem:[%s5620] sm:$0xf]
      %v5622 = vld [vmem:[%s5620 + $0x4] sm:$0xf]
      %v5623 = vld [vmem:[%s5620 + $0x8] sm:$0xf]
      %v5624 = vld [vmem:[%s5620 + $0xc] sm:$0x3]
      %v5625 = vrot.slane %v4855, 6
      %v5630 = vunpack.c.l.b16 %v5621
      %v5631 = vunpack.c.l.b16 %v5622
      %v5632 = vunpack.c.l.b16 %v5623
      %v5633 = vunpack.c.l.b16 %v5624
      %v5634 = vpack.c.b16 %v5631, %v5630
      %v5635 = vpack.c.b16 %v5633, %v5632
      %v5638 = vsel %vm509, %v5625, 0
      %v5641 = vsel %vm462, %v5635, 0
      %5643 = vmatprep.subr.bf16.mxu0 0
      %5644 = vmatpush1.bf16.msra.mxu0 0
      %5645 = vmatprep.subr.bf16.mxu0 0
      %5646 = vmatpush1.bf16.msra.mxu0 0
      %5647 = vmatprep.subr.bf16.mxu0 0
      %5648 = vmatpush1.bf16.msra.mxu0 0
      %5649 = vmatprep.subr.bf16.mxu0 0
      %5650 = vmatpush1.bf16.msra.mxu0 0
      %5651 = vmatprep.subr.bf16.mxu0 0
      %5652 = vmatpush1.bf16.msra.mxu0 0
      %5653 = vmatprep.subr.bf16.mxu0 0
      %5654 = vmatpush1.bf16.msra.mxu0 0
      %5655 = vmatprep.subr.bf16.mxu0 0
      %5656 = vmatpush1.bf16.msra.mxu0 %v5641
      %5657 = vmatprep.subr.bf16.mxu0 0
      %5658 = vmatpush1.bf16.msra.mxu0 %v5634
      %5659 = vmatprep.subr.bf16.mxu0 0
      %5660 = vmatpush2.bf16.msra.mxu0 0
      %5661 = vmatprep.subr.bf16.mxu0 0
      %5662 = vmatpush2.bf16.msra.mxu0 0
      %5663 = vmatprep.subr.bf16.mxu0 0
      %5664 = vmatpush2.bf16.msra.mxu0 0
      %5665 = vmatprep.subr.bf16.mxu0 0
      %5666 = vmatpush2.bf16.msra.mxu0 0
      %5667 = vmatprep.subr.bf16.mxu0 0
      %5668 = vmatpush2.bf16.msra.mxu0 0
      %5669 = vmatprep.subr.bf16.mxu0 0
      %5670 = vmatpush2.bf16.msra.mxu0 0
      %5671 = vmatprep.subr.bf16.mxu0 0
      %5672 = vmatpush2.bf16.msra.mxu0 0
      %5673 = vmatprep.subr.bf16.mxu0 0
      %5674 = vmatpush2.bf16.msra.mxu0 0
      %5675 = vmatprep.mubr.bf16.mxu0 0
      %5676 = vmatmul.mubr.bf16.gmra.mxu0 %v5638
      %v5677 = vpop.f32.mrf.mxu0
      %v5678 = vadd.f32 0.0, %v5677
      %v5679 = vpop.f32.mrf.mxu0
      %v5680 = vpop.f32.mrf.mxu0
      %v5681 = vpop.f32.mrf.mxu0
      %5682 = vdwg.mxu0
      %v5683 = vadd.f32 %v5619, %v5678
      %s5684 = scalar_lea.vmem %s9, 992
      %v5685 = vld [vmem:[%s5684] sm:$0xf]
      %v5686 = vld [vmem:[%s5684 + $0x4] sm:$0xf]
      %v5687 = vld [vmem:[%s5684 + $0x8] sm:$0xf]
      %v5688 = vld [vmem:[%s5684 + $0xc] sm:$0x3]
      %v5689 = vrot.slane %v1711, 7
      %v5694 = vunpack.c.l.b16 %v5685
      %v5695 = vunpack.c.l.b16 %v5686
      %v5696 = vunpack.c.l.b16 %v5687
      %v5697 = vunpack.c.l.b16 %v5688
      %v5698 = vpack.c.b16 %v5695, %v5694
      %v5699 = vpack.c.b16 %v5697, %v5696
      %v5702 = vsel %vm509, %v5689, 0
      %v5705 = vsel %vm462, %v5699, 0
      %5707 = vmatprep.subr.bf16.mxu0 0
      %5708 = vmatpush1.bf16.msra.mxu0 0
      %5709 = vmatprep.subr.bf16.mxu0 0
      %5710 = vmatpush1.bf16.msra.mxu0 0
      %5711 = vmatprep.subr.bf16.mxu0 0
      %5712 = vmatpush1.bf16.msra.mxu0 0
      %5713 = vmatprep.subr.bf16.mxu0 0
      %5714 = vmatpush1.bf16.msra.mxu0 0
      %5715 = vmatprep.subr.bf16.mxu0 0
      %5716 = vmatpush1.bf16.msra.mxu0 0
      %5717 = vmatprep.subr.bf16.mxu0 0
      %5718 = vmatpush1.bf16.msra.mxu0 0
      %5719 = vmatprep.subr.bf16.mxu0 0
      %5720 = vmatpush1.bf16.msra.mxu0 %v5705
      %5721 = vmatprep.subr.bf16.mxu0 0
      %5722 = vmatpush1.bf16.msra.mxu0 %v5698
      %5723 = vmatprep.subr.bf16.mxu0 0
      %5724 = vmatpush2.bf16.msra.mxu0 0
      %5725 = vmatprep.subr.bf16.mxu0 0
      %5726 = vmatpush2.bf16.msra.mxu0 0
      %5727 = vmatprep.subr.bf16.mxu0 0
      %5728 = vmatpush2.bf16.msra.mxu0 0
      %5729 = vmatprep.subr.bf16.mxu0 0
      %5730 = vmatpush2.bf16.msra.mxu0 0
      %5731 = vmatprep.subr.bf16.mxu0 0
      %5732 = vmatpush2.bf16.msra.mxu0 0
      %5733 = vmatprep.subr.bf16.mxu0 0
      %5734 = vmatpush2.bf16.msra.mxu0 0
      %5735 = vmatprep.subr.bf16.mxu0 0
      %5736 = vmatpush2.bf16.msra.mxu0 0
      %5737 = vmatprep.subr.bf16.mxu0 0
      %5738 = vmatpush2.bf16.msra.mxu0 0
      %5739 = vmatprep.mubr.bf16.mxu0 0
      %5740 = vmatmul.mubr.bf16.gmra.mxu0 %v5702
      %v5741 = vpop.f32.mrf.mxu0
      %v5742 = vadd.f32 0.0, %v5741
      %v5743 = vpop.f32.mrf.mxu0
      %v5744 = vpop.f32.mrf.mxu0
      %v5745 = vpop.f32.mrf.mxu0
      %5746 = vdwg.mxu0
      %v5747 = vadd.f32 %v5683, %v5742
      %s5748 = scalar_lea.vmem %s9, 1008
      %v5749 = vld [vmem:[%s5748] sm:$0xf]
      %v5750 = vld [vmem:[%s5748 + $0x4] sm:$0xf]
      %v5751 = vld [vmem:[%s5748 + $0x8] sm:$0xf]
      %v5752 = vld [vmem:[%s5748 + $0xc] sm:$0x3]
      %v5753 = vrot.slane %v4855, 7
      %v5758 = vunpack.c.l.b16 %v5749
      %v5759 = vunpack.c.l.b16 %v5750
      %v5760 = vunpack.c.l.b16 %v5751
      %v5761 = vunpack.c.l.b16 %v5752
      %v5762 = vpack.c.b16 %v5759, %v5758
      %v5763 = vpack.c.b16 %v5761, %v5760
      %v5766 = vsel %vm509, %v5753, 0
      %v5769 = vsel %vm462, %v5763, 0
      %5771 = vmatprep.subr.bf16.mxu0 0
      %5772 = vmatpush1.bf16.msra.mxu0 0
      %5773 = vmatprep.subr.bf16.mxu0 0
      %5774 = vmatpush1.bf16.msra.mxu0 0
      %5775 = vmatprep.subr.bf16.mxu0 0
      %5776 = vmatpush1.bf16.msra.mxu0 0
      %5777 = vmatprep.subr.bf16.mxu0 0
      %5778 = vmatpush1.bf16.msra.mxu0 0
      %5779 = vmatprep.subr.bf16.mxu0 0
      %5780 = vmatpush1.bf16.msra.mxu0 0
      %5781 = vmatprep.subr.bf16.mxu0 0
      %5782 = vmatpush1.bf16.msra.mxu0 0
      %5783 = vmatprep.subr.bf16.mxu0 0
      %5784 = vmatpush1.bf16.msra.mxu0 %v5769
      %5785 = vmatprep.subr.bf16.mxu0 0
      %5786 = vmatpush1.bf16.msra.mxu0 %v5762
      %5787 = vmatprep.subr.bf16.mxu0 0
      %5788 = vmatpush2.bf16.msra.mxu0 0
      %5789 = vmatprep.subr.bf16.mxu0 0
      %5790 = vmatpush2.bf16.msra.mxu0 0
      %5791 = vmatprep.subr.bf16.mxu0 0
      %5792 = vmatpush2.bf16.msra.mxu0 0
      %5793 = vmatprep.subr.bf16.mxu0 0
      %5794 = vmatpush2.bf16.msra.mxu0 0
      %5795 = vmatprep.subr.bf16.mxu0 0
      %5796 = vmatpush2.bf16.msra.mxu0 0
      %5797 = vmatprep.subr.bf16.mxu0 0
      %5798 = vmatpush2.bf16.msra.mxu0 0
      %5799 = vmatprep.subr.bf16.mxu0 0
      %5800 = vmatpush2.bf16.msra.mxu0 0
      %5801 = vmatprep.subr.bf16.mxu0 0
      %5802 = vmatpush2.bf16.msra.mxu0 0
      %5803 = vmatprep.mubr.bf16.mxu0 0
      %5804 = vmatmul.mubr.bf16.gmra.mxu0 %v5766
      %v5805 = vpop.f32.mrf.mxu0
      %v5806 = vadd.f32 0.0, %v5805
      %v5807 = vpop.f32.mrf.mxu0
      %v5808 = vpop.f32.mrf.mxu0
      %v5809 = vpop.f32.mrf.mxu0
      %5810 = vdwg.mxu0
      %v5811 = vadd.f32 %v5747, %v5806
      %v5812 = vmax.f32 %v5811, 0.0
      %v5813 = vld [vmem:[%s11] sm:$0xff]
      %v5814 = vld [vmem:[%s11 + $0x8] sm:$0xff]
      %v5815 = vld [vmem:[%s11 + $0x10] sm:$0xff]
      %v5816 = vld [vmem:[%s11 + $0x18] sm:$0xff]
      %v5817 = vld [vmem:[%s11 + $0x20] sm:$0xff]
      %v5818 = vld [vmem:[%s11 + $0x28] sm:$0xff]
      %v5819 = vld [vmem:[%s11 + $0x30] sm:$0xff]
      %v5820 = vld [vmem:[%s11 + $0x38] sm:$0xff]
      %v5821 = vld [vmem:[%s11 + $0x40] sm:$0xff]
      %v5822 = vld [vmem:[%s11 + $0x48] sm:$0xff]
      %v5823 = vld [vmem:[%s11 + $0x50] sm:$0xff]
      %v5824 = vld [vmem:[%s11 + $0x58] sm:$0xff]
      %v5825 = vld [vmem:[%s11 + $0x60] sm:$0xff]
      %v5826 = vld [vmem:[%s11 + $0x68] sm:$0xff]
      %v5827 = vld [vmem:[%s11 + $0x70] sm:$0xff]
      %v5828 = vld [vmem:[%s11 + $0x78] sm:$0xff]
      %v5829 = vld [vmem:[#allocation3] sm:$0x1]
      %5830 = vmatprep.subr.mxu0 0.0
      %5831 = vmatpush1.msra.mxu0 %v5828
      %5832 = vmatprep.subr.mxu0 0.0
      %5833 = vmatpush1.msra.mxu0 %v5827
      %5834 = vmatprep.subr.mxu0 0.0
      %5835 = vmatpush1.msra.mxu0 %v5826
      %5836 = vmatprep.subr.mxu0 0.0
      %5837 = vmatpush1.msra.mxu0 %v5825
      %5838 = vmatprep.subr.mxu0 0.0
      %5839 = vmatpush1.msra.mxu0 %v5824
      %5840 = vmatprep.subr.mxu0 0.0
      %5841 = vmatpush1.msra.mxu0 %v5823
      %5842 = vmatprep.subr.mxu0 0.0
      %5843 = vmatpush1.msra.mxu0 %v5822
      %5844 = vmatprep.subr.mxu0 0.0
      %5845 = vmatpush1.msra.mxu0 %v5821
      %5846 = vmatprep.subr.mxu0 0.0
      %5847 = vmatpush1.msra.mxu0 %v5820
      %5848 = vmatprep.subr.mxu0 0.0
      %5849 = vmatpush1.msra.mxu0 %v5819
      %5850 = vmatprep.subr.mxu0 0.0
      %5851 = vmatpush1.msra.mxu0 %v5818
      %5852 = vmatprep.subr.mxu0 0.0
      %5853 = vmatpush1.msra.mxu0 %v5817
      %5854 = vmatprep.subr.mxu0 0.0
      %5855 = vmatpush1.msra.mxu0 %v5816
      %5856 = vmatprep.subr.mxu0 0.0
      %5857 = vmatpush1.msra.mxu0 %v5815
      %5858 = vmatprep.subr.mxu0 0.0
      %5859 = vmatpush1.msra.mxu0 %v5814
      %5860 = vmatprep.subr.mxu0 0.0
      %5861 = vmatpush1.msra.mxu0 %v5813
      %5862 = vmatprep.subr.mxu0 0.0
      %5863 = vmatpush2.msra.mxu0 0.0
      %5864 = vmatprep.subr.mxu0 0.0
      %5865 = vmatpush2.msra.mxu0 0.0
      %5866 = vmatprep.subr.mxu0 0.0
      %5867 = vmatpush2.msra.mxu0 0.0
      %5868 = vmatprep.subr.mxu0 0.0
      %5869 = vmatpush2.msra.mxu0 0.0
      %5870 = vmatprep.subr.mxu0 0.0
      %5871 = vmatpush2.msra.mxu0 0.0
      %5872 = vmatprep.subr.mxu0 0.0
      %5873 = vmatpush2.msra.mxu0 0.0
      %5874 = vmatprep.subr.mxu0 0.0
      %5875 = vmatpush2.msra.mxu0 0.0
      %5876 = vmatprep.subr.mxu0 0.0
      %5877 = vmatpush2.msra.mxu0 0.0
      %5878 = vmatprep.subr.mxu0 0.0
      %5879 = vmatpush2.msra.mxu0 0.0
      %5880 = vmatprep.subr.mxu0 0.0
      %5881 = vmatpush2.msra.mxu0 0.0
      %5882 = vmatprep.subr.mxu0 0.0
      %5883 = vmatpush2.msra.mxu0 0.0
      %5884 = vmatprep.subr.mxu0 0.0
      %5885 = vmatpush2.msra.mxu0 0.0
      %5886 = vmatprep.subr.mxu0 0.0
      %5887 = vmatpush2.msra.mxu0 0.0
      %5888 = vmatprep.subr.mxu0 0.0
      %5889 = vmatpush2.msra.mxu0 0.0
      %5890 = vmatprep.subr.mxu0 0.0
      %5891 = vmatpush2.msra.mxu0 0.0
      %5892 = vmatprep.subr.mxu0 0.0
      %5893 = vmatpush2.msra.mxu0 0.0
      %5894 = vmatprep.mubr.f32.mxu0 0.0
      %5895 = vmatmul.mubr.f32.gmra.mxu0 %v5812
      %v5896 = vpop.f32.mrf.mxu0
      %v5897 = vadd.f32 %v5829, %v5896
      %v5898 = vpop.f32.mrf.mxu0
      %5899 = vdwg.mxu0
      %v5900 = vsub.f32 0.0, %v5897
      %v5901 = vmul.f32 %v5900, 1.442695
      %v5902 = vpow.pop %v5901
      %v5903 = vadd.f32 %v5902, 1.0
      %v5904 = vrcp.pop %v5903
      %v5905 = vmul.f32 1.0, %v5904
      %5907 = vset.pattern.permute.xlu0 0
      %5908 = vperm.xlu0 %5907, %v5905
      %v5909 = vpop.permute.xlu0 %5908
      %5911 = vst [vmem:[%s435] sm:$0x1] %v5909
      %p5912 = scmp.lt.s32.totalorder %s26, 1
      %s5913 = scalar_select %p5912, %s26, 1
      %s5914 = scalar_lea.vmem %s13, %s5913
      // Predicated region
      $region73: #{eeg_sex_net_forward.1} parent=71 // pred_check
        %p5915 = pneg %p322
      $region74: #{eeg_sex_net_forward.1} parent=71 // pred_check_branch
        %5917 = sbr.rel (%p5915) target = $region76
      $region75: #{eeg_sex_net_forward.1} parent=71 // pred_region
        _
      $region76: #{eeg_sex_net_forward.1} parent=71 // pred_fallthru
        _
    $region72: #{eeg_sex_net_forward.1} parent=5 // pred_fallthru
      _
    %p5918 = scmp.le.s32.totalorder 2, %s21
    // Predicated region
    $region77: #{eeg_sex_net_forward.1} parent=5 // pred_check
      %p5919 = pneg %p5918
    $region78: #{eeg_sex_net_forward.1} parent=5 // pred_check_branch
      %5921 = sbr.rel (%p5919) target = $region80
    $region79: #{eeg_sex_net_forward.1} parent=5 // pred_region
      %s5922 = ssub.s32 %s21, 2
      // Predicated region
      $region81: #{eeg_sex_net_forward.1} parent=79 // pred_check
        %p5923 = pneg %p328
      $region82: #{eeg_sex_net_forward.1} parent=79 // pred_check_branch
        %5925 = sbr.rel (%p5923) target = $region84
      $region83: #{eeg_sex_net_forward.1} parent=79 // pred_region
        %p5926 = scmp.lt.s32.totalorder %s27, 1
        %s5927 = scalar_select %p5926, %s27, 1
        %s5928 = scalar_lea.vmem %s13, %s5927
      $region84: #{eeg_sex_net_forward.1} parent=79 // pred_fallthru
        _
    $region80: #{eeg_sex_net_forward.1} parent=5 // pred_fallthru
      _
  $region6: #{eeg_sex_net_forward.1} parent=0 // loop_footer
    %s25 = sadd.s32 1, %s21
  $region7: #{eeg_sex_net_forward.1} parent=0 // loop_footer_branch
    %20 = sbr.rel target = $region3
  $region8: #{eeg_sex_net_forward.1} parent=0 // loop_exit
    _

</llo_original>
